<compile_context>
chip_gen: v5e
topology: v5e:2x2
jax: 0.10.0
libtpu: 0.0.40
codegen_flags: <defaults>
</compile_context>

<pallas_src>
import jax
import jax.numpy as jnp
import numpy as np
from jax import lax
from jax.experimental import pallas as pl
from jax.experimental.pallas import tpu as pltpu


# -----------------------------------------------------------------------------
# Kernel factory
# -----------------------------------------------------------------------------
def _make_siren_kernel(*, in_features, hidden_layers, first_omega_0,
                       hidden_omega_0, outermost_linear, transposed,
                       vpu_first, reduce_final, has_hidden, use_bf16):
    def kernel(*refs):
        if has_hidden:
            (coords_ref, w0_ref, b0_ref, wh_ref, bh_ref,
             wf_ref, bf_ref, out_ref) = refs
        else:
            coords_ref, w0_ref, b0_ref, wf_ref, bf_ref, out_ref = refs
            wh_ref = bh_ref = None

        x = coords_ref[...]

        # ---- first layer ----------------------------------------------------
        if transposed:
            # x: (in_f, tile_n), w0: (hidden, in_f), b0: (hidden, 1)
            if vpu_first:
                # K = in_features is tiny (2..4): broadcast multiply-adds on
                # the VPU instead of a degenerate-K MXU matmul.
                h = w0_ref[:, 0:1] * x[0:1, :]
                for d in range(1, in_features):
                    h = h + w0_ref[:, d:d + 1] * x[d:d + 1, :]
                h = h + b0_ref[...]
            else:
                h = jnp.dot(w0_ref[...], x,
                            preferred_element_type=jnp.float32) + b0_ref[...]
        else:
            # x: (tile_n, in_f), w0t: (in_f, hidden), b0: (1, hidden)
            if vpu_first:
                h = x[:, 0:1] * w0_ref[0:1, :]
                for d in range(1, in_features):
                    h = h + x[:, d:d + 1] * w0_ref[d:d + 1, :]
                h = h + b0_ref[...]
            else:
                h = jnp.dot(x, w0_ref[...],
                            preferred_element_type=jnp.float32) + b0_ref[...]
        h = jnp.sin(first_omega_0 * h)

        # ---- hidden layers ---------------------------------------------------
        if has_hidden:
            def hidden_layer(l, h):
                w = wh_ref[l]
                b = bh_ref[l]
                h_in = h.astype(jnp.bfloat16) if use_bf16 else h
                if transposed:
                    z = jnp.dot(w, h_in,
                                preferred_element_type=jnp.float32) + b
                else:
                    z = jnp.dot(h_in, w,
                                preferred_element_type=jnp.float32) + b
                return jnp.sin(hidden_omega_0 * z)

            if hidden_layers <= 4:
                for l in range(hidden_layers):
                    h = hidden_layer(l, h)
            else:
                # fori_loop bounds the live set to ~2 activation copies for
                # deep networks (VMEM-spill protection, worst on v7x).
                h = lax.fori_loop(0, hidden_layers, hidden_layer, h)

        # ---- final layer ------------------------------------------------------
        if reduce_final:
            if transposed:
                # wf: (hidden, 1) -> lane-dense (1, tile_n) output row.
                out = jnp.sum(wf_ref[...] * h, axis=0, keepdims=True) + bf_ref[...]
            else:
                # wf: (1, hidden) -> (tile_n, 1) cross-lane reduction.
                out = jnp.sum(h * wf_ref[...], axis=-1, keepdims=True) + bf_ref[...]
        else:
            h_in = h.astype(jnp.bfloat16) if use_bf16 else h
            if transposed:
                out = jnp.dot(wf_ref[...], h_in,
                              preferred_element_type=jnp.float32) + bf_ref[...]
            else:
                out = jnp.dot(h_in, wf_ref[...],
                              preferred_element_type=jnp.float32) + bf_ref[...]
        if not outermost_linear:
            out = jnp.sin(hidden_omega_0 * out)
        out_ref[...] = out.astype(out_ref.dtype)

    return kernel


# -----------------------------------------------------------------------------
# Hardware / tile sizing
# -----------------------------------------------------------------------------
def _tpu_vmem_and_cores():
    """(physical VMEM bytes per core, TensorCores per chip) — conservative fallback."""
    vmem_cap = 64 << 20
    num_cores = 1
    try:
        vmem_cap = int(pltpu.get_tpu_info().vmem_capacity_bytes)
    except Exception:
        pass
    try:
        kind = jax.devices()[0].device_kind.lower()
        if "v7" in kind:
            num_cores = 2
    except Exception:
        pass
    return vmem_cap, num_cores


def _choose_vmem_limit(vmem_cap):
    if vmem_cap <= (64 << 20) + (1 << 20):          # v7x-class: 64 MiB physical
        limit = min(50 << 20, vmem_cap - (12 << 20))
    else:                                           # v5e/v6e: 128 MiB physical
        limit = min(100 << 20, vmem_cap - (24 << 20))
    return int(max(limit, 32 << 20))


def _choose_tile_n(n, in_f, hidden, out_f, weight_bytes, vmem_limit, num_cores):
    """Point-axis tile: as large as the (weight-aware) VMEM budget allows.
    On megacore chips keep >= 2 grid steps per TensorCore so each core still
    pipelines coords/out DMA against compute; on single-TC chips prefer the
    single biggest tile (per-step overhead ~0.35us is pure loss there)."""
    bytes_per_row = 4 * (2 * in_f + 2 * out_f + 3 * max(hidden, 1))
    budget = max(vmem_limit - 2 * weight_bytes - (4 << 20), 2 << 20)
    cap = max(128, (budget // bytes_per_row) // 128 * 128)
    n128 = int(pl.cdiv(n, 128)) * 128
    tile = min(cap, 8192, n128)
    if num_cores >= 2:
        min_steps = 2 * num_cores
        if n128 >= min_steps * 128:
            tile = min(tile, max(128, (n128 // min_steps) // 128 * 128))
    return int(max(tile, 128))


# -----------------------------------------------------------------------------
# Wrapper
# -----------------------------------------------------------------------------
def siren_forward(coords, params, *, hidden_layers, first_omega_0,
                  hidden_omega_0, outermost_linear, tile_n=None,
                  use_bf16=False):
    """SIREN forward pass with a Pallas TPU kernel.

    coords: (N, in_features) float32
    params: raw (PyTorch-oriented) weights:
        w0 (hidden, in)   b0 (hidden,)
        wh (L, hidden, hidden) or None    bh (L, hidden) or None
        wf (out, hidden)  bf (out,)
    """
    n, in_f = coords.shape
    hidden = params["w0"].shape[0]
    out_f = params["wf"].shape[0]
    has_hidden = hidden_layers > 0

    transposed = hidden <= 128          # lane-dense layout for small hidden
    vpu_first = in_f <= 4
    reduce_final = out_f == 1

    # --- kernel-facing weight layouts ---------------------------------------
    if transposed:
        w0_k = params["w0"]                                   # (hidden, in)
        b0_k = params["b0"].reshape(hidden, 1)
        if has_hidden:
            wh_k = params["wh"]                               # (L, hidden, hidden)
            bh_k = params["bh"].reshape(hidden_layers, hidden, 1)
        wf_k = params["wf"].T if reduce_final else params["wf"]
        bf_k = params["bf"].reshape(out_f, 1)
        coords_in = coords.T                                  # (in, N)
    else:
        w0_k = params["w0"].T                                 # (in, hidden)
        b0_k = params["b0"].reshape(1, hidden)
        if has_hidden:
            wh_k = jnp.transpose(params["wh"], (0, 2, 1))     # (L, hidden, hidden)
            bh_k = params["bh"].reshape(hidden_layers, 1, hidden)
        wf_k = params["wf"] if reduce_final else params["wf"].T
        bf_k = params["bf"].reshape(1, out_f)
        coords_in = coords

    if use_bf16:
        # bf16 MXU path for large-hidden configs (v6e/v7x); first layer and
        # the tiny reduce-final weights stay f32.
        if has_hidden:
            wh_k = wh_k.astype(jnp.bfloat16)
        if not reduce_final:
            wf_k = wf_k.astype(jnp.bfloat16)

    weight_arrays = [w0_k, b0_k]
    if has_hidden:
        weight_arrays += [wh_k, bh_k]
    weight_arrays += [wf_k, bf_k]
    weight_bytes = int(sum(int(a.size) * a.dtype.itemsize for a in weight_arrays))

    # --- generation-aware sizing ---------------------------------------------
    vmem_cap, num_cores = _tpu_vmem_and_cores()
    vmem_limit = _choose_vmem_limit(vmem_cap)
    if tile_n is None:
        tile_n = _choose_tile_n(n, in_f, hidden, out_f, weight_bytes,
                                vmem_limit, num_cores)

    n_pad = int(pl.cdiv(n, tile_n)) * tile_n
    if transposed:
        if n_pad != n:
            coords_in = jnp.pad(coords_in, ((0, 0), (0, n_pad - n)))
        coords_spec = pl.BlockSpec((in_f, tile_n), lambda i: (0, i))
        out_spec = pl.BlockSpec((out_f, tile_n), lambda i: (0, i))
        out_shape = jax.ShapeDtypeStruct((out_f, n_pad), jnp.float32)
    else:
        if n_pad != n:
            coords_in = jnp.pad(coords_in, ((0, n_pad - n), (0, 0)))
        coords_spec = pl.BlockSpec((tile_n, in_f), lambda i: (i, 0))
        out_spec = pl.BlockSpec((tile_n, out_f), lambda i: (i, 0))
        out_shape = jax.ShapeDtypeStruct((n_pad, out_f), jnp.float32)

    kernel = _make_siren_kernel(
        in_features=in_f, hidden_layers=hidden_layers,
        first_omega_0=first_omega_0, hidden_omega_0=hidden_omega_0,
        outermost_linear=outermost_linear, transposed=transposed,
        vpu_first=vpu_first, reduce_final=reduce_final,
        has_hidden=has_hidden, use_bf16=use_bf16)

    # --- cost estimate --------------------------------------------------------
    flops = 2 * n_pad * (in_f * hidden + hidden_layers * hidden * hidden
                         + hidden * out_f)
    transcendentals = n_pad * ((1 + hidden_layers) * hidden
                               + (0 if outermost_linear else out_f))
    bytes_accessed = 4 * n_pad * (in_f + out_f) + weight_bytes
    cost = pl.CostEstimate(flops=int(flops), transcendentals=int(transcendentals),
                           bytes_accessed=int(bytes_accessed))

    def _const_spec(shape, buffered):
        nd = len(shape)
        idx = lambda i, _nd=nd: (0,) * _nd
        if buffered:
            # Constant-index weights are never re-fetched; single-buffering
            # halves their resident VMEM.
            return pl.BlockSpec(shape, idx, pipeline_mode=pl.Buffered(1))
        return pl.BlockSpec(shape, idx)

    def _run(weight_buffered):
        in_specs = [coords_spec] + [_const_spec(tuple(a.shape), weight_buffered)
                                    for a in weight_arrays]
        return pl.pallas_call(
            kernel,
            out_shape=out_shape,
            grid_spec=pltpu.PrefetchScalarGridSpec(
                num_scalar_prefetch=0,
                grid=(n_pad // tile_n,),
                in_specs=in_specs,
                out_specs=out_spec),
            compiler_params=pltpu.CompilerParams(
                dimension_semantics=("parallel",),
                vmem_limit_bytes=int(vmem_limit)),
            cost_estimate=cost,
        )(coords_in, *weight_arrays)

    try:
        out = _run(True)
    except Exception:
        # Fallback if single-buffered (Buffered(1)) pipeline_mode is unsupported.
        out = _run(False)

    if transposed:
        return out[:, :n].T
    return out[:n]


# -----------------------------------------------------------------------------
# Parameter init (matches the PyTorch init distributions, deterministic)
# -----------------------------------------------------------------------------
def init_siren_params(key, in_features, hidden_features, hidden_layers,
                      out_features, first_omega_0, hidden_omega_0):
    keys = jax.random.split(key, 2 * (hidden_layers + 2))
    ki = iter(keys)

    def uniform(k, shape, bound):
        return jax.random.uniform(k, shape, jnp.float32, -bound, bound)

    # First SineLayer: W ~ U(-1/in, 1/in); bias keeps nn.Linear default range.
    w0 = uniform(next(ki), (hidden_features, in_features), 1.0 / in_features)
    b0 = uniform(next(ki), (hidden_features,), 1.0 / np.sqrt(in_features))

    # Hidden SineLayers / final layer: W ~ U(-sqrt(6/in)/omega, sqrt(6/in)/omega)
    wb = float(np.sqrt(6.0 / hidden_features) / hidden_omega_0)
    bb = float(1.0 / np.sqrt(hidden_features))
    wh, bh = [], []
    for _ in range(hidden_layers):
        wh.append(uniform(next(ki), (hidden_features, hidden_features), wb))
        bh.append(uniform(next(ki), (hidden_features,), bb))

    wf = uniform(next(ki), (out_features, hidden_features), wb)
    bf = uniform(next(ki), (out_features,), bb)

    return {
        "w0": w0, "b0": b0,
        "wh": jnp.stack(wh) if hidden_layers > 0 else None,
        "bh": jnp.stack(bh) if hidden_layers > 0 else None,
        "wf": wf, "bf": bf,
    }


def get_mgrid(sidelen, dim=2):
    """Matches Siren_Network.get_mgrid (torch.linspace includes endpoint, 'ij')."""
    t = jnp.linspace(0.0, 1.0, sidelen)
    grids = jnp.meshgrid(*([t] * dim), indexing="ij")
    return jnp.stack(grids, axis=-1).reshape(-1, dim).astype(jnp.float32)


# -----------------------------------------------------------------------------
# Pure-JAX reference (for verification)
# -----------------------------------------------------------------------------
def siren_reference(coords, params, *, hidden_layers, first_omega_0,
                    hidden_omega_0, outermost_linear):
    h = jnp.sin(first_omega_0 * (coords @ params["w0"].T + params["b0"]))
    for l in range(hidden_layers):
        h = jnp.sin(hidden_omega_0 * (h @ params["wh"][l].T + params["bh"][l]))
    out = h @ params["wf"].T + params["bf"]
    if not outermost_linear:
        out = jnp.sin(hidden_omega_0 * out)
    return out


def _run_case(coords, params, cfg, rtol, atol):
    out = jax.block_until_ready(siren_forward(
        coords, params, hidden_layers=cfg["hidden_layers"],
        first_omega_0=cfg["first_omega_0"],
        hidden_omega_0=cfg["hidden_omega_0"],
        outermost_linear=cfg["outermost_linear"]))
    ref = siren_reference(coords, params,
                          hidden_layers=cfg["hidden_layers"],
                          first_omega_0=cfg["first_omega_0"],
                          hidden_omega_0=cfg["hidden_omega_0"],
                          outermost_linear=cfg["outermost_linear"])
    assert out.shape == (coords.shape[0], cfg["out_features"])
    np.testing.assert_allclose(np.asarray(out), np.asarray(ref),
                               rtol=rtol, atol=atol)
    return out


# -----------------------------------------------------------------------------
if __name__ == "__main__":
    key = jax.random.PRNGKey(0)
    image_width = 16

    # Config 1: the module's default forward path (coords=None -> mgrid,
    # in_features=2, sine output, out_features=1). Exercises the transposed
    # lane-dense layout + VPU first layer + sublane-reduction final layer.
    cfg1 = dict(in_features=2, hidden_features=32, hidden_layers=2,
                out_features=1, first_omega_0=30.0, hidden_omega_0=30.0,
                outermost_linear=False)
    params1 = init_siren_params(key, cfg1["in_features"], cfg1["hidden_features"],
                                cfg1["hidden_layers"], cfg1["out_features"],
                                cfg1["first_omega_0"], cfg1["hidden_omega_0"])
    coords1 = get_mgrid(image_width, dim=2)          # (256, 2)
    _run_case(coords1, params1, cfg1, rtol=1e-4, atol=1e-4)

    # Config 2: outermost_linear=True, out_features>1, hidden_layers=0.
    # Exercises the no-hidden kernel variant + transposed matmul final layer.
    cfg2 = dict(in_features=2, hidden_features=32, hidden_layers=0,
                out_features=4, first_omega_0=30.0, hidden_omega_0=30.0,
                outermost_linear=True)
    params2 = init_siren_params(jax.random.PRNGKey(1), cfg2["in_features"],
                                cfg2["hidden_features"], cfg2["hidden_layers"],
                                cfg2["out_features"], cfg2["first_omega_0"],
                                cfg2["hidden_omega_0"])
    coords2 = get_mgrid(image_width, dim=2)          # (256, 2)
    _run_case(coords2, params2, cfg2, rtol=1e-4, atol=1e-4)

    # Config 3: has_time-style input (in_features=3), larger hidden (256) and
    # a deeper stack (5 layers) with N not a multiple of 128. Exercises the
    # non-transposed layout, the fori_loop hidden-layer path, and row padding.
    cfg3 = dict(in_features=3, hidden_features=256, hidden_layers=5,
                out_features=3, first_omega_0=30.0, hidden_omega_0=30.0,
                outermost_linear=True)
    params3 = init_siren_params(jax.random.PRNGKey(2), cfg3["in_features"],
                                cfg3["hidden_features"], cfg3["hidden_layers"],
                                cfg3["out_features"], cfg3["first_omega_0"],
                                cfg3["hidden_omega_0"])
    coords3 = jax.random.uniform(jax.random.PRNGKey(3), (300, 3), jnp.float32)
    _run_case(coords3, params3, cfg3, rtol=5e-3, atol=5e-3)

    print("KERNEL_OK")
</pallas_src>

<mosaic_0001>
module attributes {stable_mosaic.version = 11 : i64} {
  func.func @kernel(%arg0: i32, %arg1: memref<2x256xf32, #tpu.memory_space<vmem>>, %arg2: memref<32x2xf32, #tpu.memory_space<vmem>>, %arg3: memref<32x1xf32, #tpu.memory_space<vmem>>, %arg4: memref<2x32x32xf32, #tpu.memory_space<vmem>>, %arg5: memref<2x32x1xf32, #tpu.memory_space<vmem>>, %arg6: memref<32x1xf32, #tpu.memory_space<vmem>>, %arg7: memref<1x1xf32, #tpu.memory_space<vmem>>, %arg8: memref<1x256xf32, #tpu.memory_space<vmem>>) attributes {dimension_semantics = [#tpu.dimension_semantics<parallel>], iteration_bounds = array<i64: 1>, scalar_prefetch = 0 : i64, scratch_operands = 0 : i64, tpu.core_type = #tpu.core_type<tc>, window_params = [{transform_indices = @transform_0, window_bounds = array<i64: 2, 256>}, {pipeline_mode = #tpu.pipeline_mode<synchronous>, transform_indices = @transform_1, window_bounds = array<i64: 32, 2>}, {pipeline_mode = #tpu.pipeline_mode<synchronous>, transform_indices = @transform_2, window_bounds = array<i64: 32, 1>}, {pipeline_mode = #tpu.pipeline_mode<synchronous>, transform_indices = @transform_3, window_bounds = array<i64: 2, 32, 32>}, {pipeline_mode = #tpu.pipeline_mode<synchronous>, transform_indices = @transform_4, window_bounds = array<i64: 2, 32, 1>}, {pipeline_mode = #tpu.pipeline_mode<synchronous>, transform_indices = @transform_5, window_bounds = array<i64: 32, 1>}, {pipeline_mode = #tpu.pipeline_mode<synchronous>, transform_indices = @transform_6, window_bounds = array<i64: 1, 1>}, {transform_indices = @transform_7, window_bounds = array<i64: 1, 256>}]} {
    %c0 = arith.constant 0 : index
    %c0_0 = arith.constant 0 : index
    %0 = vector.load %arg1[%c0, %c0_0] : memref<2x256xf32, #tpu.memory_space<vmem>>, vector<2x256xf32>
    %c0_1 = arith.constant 0 : index
    %c0_2 = arith.constant 0 : index
    %1 = vector.load %arg2[%c0_1, %c0_2] : memref<32x2xf32, #tpu.memory_space<vmem>>, vector<32x1xf32>
    %2 = vector.extract_strided_slice %0 {offsets = [0, 0], sizes = [1, 256], strides = [1, 1]} : vector<2x256xf32> to vector<1x256xf32>
    %3 = vector.broadcast %1 : vector<32x1xf32> to vector<32x256xf32>
    %4 = vector.broadcast %2 : vector<1x256xf32> to vector<32x256xf32>
    %5 = arith.mulf %3, %4 : vector<32x256xf32>
    %c0_3 = arith.constant 0 : index
    %c1 = arith.constant 1 : index
    %6 = vector.load %arg2[%c0_3, %c1] : memref<32x2xf32, #tpu.memory_space<vmem>>, vector<32x1xf32>
    %7 = vector.extract_strided_slice %0 {offsets = [1, 0], sizes = [1, 256], strides = [1, 1]} : vector<2x256xf32> to vector<1x256xf32>
    %8 = vector.broadcast %6 : vector<32x1xf32> to vector<32x256xf32>
    %9 = vector.broadcast %7 : vector<1x256xf32> to vector<32x256xf32>
    %10 = arith.mulf %8, %9 : vector<32x256xf32>
    %11 = arith.addf %5, %10 : vector<32x256xf32>
    %c0_4 = arith.constant 0 : index
    %c0_5 = arith.constant 0 : index
    %12 = vector.load %arg3[%c0_4, %c0_5] : memref<32x1xf32, #tpu.memory_space<vmem>>, vector<32x1xf32>
    %13 = vector.broadcast %12 : vector<32x1xf32> to vector<32x256xf32>
    %14 = arith.addf %11, %13 : vector<32x256xf32>
    %cst = arith.constant 3.000000e+01 : f32
    %15 = vector.broadcast %cst : f32 to vector<32x256xf32>
    %16 = arith.mulf %15, %14 : vector<32x256xf32>
    %17 = math.sin %16 : vector<32x256xf32>
    %c0_6 = arith.constant 0 : index
    %c0_7 = arith.constant 0 : index
    %c0_8 = arith.constant 0 : index
    %18 = vector.load %arg4[%c0_6, %c0_7, %c0_8] : memref<2x32x32xf32, #tpu.memory_space<vmem>>, vector<1x32x32xf32>
    %19 = vector.shape_cast %18 : vector<1x32x32xf32> to vector<32x32xf32>
    %c0_9 = arith.constant 0 : index
    %c0_10 = arith.constant 0 : index
    %c0_11 = arith.constant 0 : index
    %20 = vector.load %arg5[%c0_9, %c0_10, %c0_11] : memref<2x32x1xf32, #tpu.memory_space<vmem>>, vector<1x32x1xf32>
    %21 = vector.shape_cast %20 : vector<1x32x1xf32> to vector<32x1xf32>
    %cst_12 = arith.constant dense<0.000000e+00> : vector<32x256xf32>
    %22 = tpu.matmul %19, %17, %cst_12 {dimension_numbers = #tpu.dot_dimension_numbers<[1], [0], [0], [1], [0, 0, 1, 1], [], []>} : vector<32x32xf32>, vector<32x256xf32>, vector<32x256xf32> -> vector<32x256xf32>
    %23 = vector.broadcast %21 : vector<32x1xf32> to vector<32x256xf32>
    %24 = arith.addf %22, %23 : vector<32x256xf32>
    %cst_13 = arith.constant 3.000000e+01 : f32
    %25 = vector.broadcast %cst_13 : f32 to vector<32x256xf32>
    %26 = arith.mulf %25, %24 : vector<32x256xf32>
    %27 = math.sin %26 : vector<32x256xf32>
    %c1_14 = arith.constant 1 : index
    %c0_15 = arith.constant 0 : index
    %c0_16 = arith.constant 0 : index
    %28 = vector.load %arg4[%c1_14, %c0_15, %c0_16] : memref<2x32x32xf32, #tpu.memory_space<vmem>>, vector<1x32x32xf32>
    %29 = vector.shape_cast %28 : vector<1x32x32xf32> to vector<32x32xf32>
    %c1_17 = arith.constant 1 : index
    %c0_18 = arith.constant 0 : index
    %c0_19 = arith.constant 0 : index
    %30 = vector.load %arg5[%c1_17, %c0_18, %c0_19] : memref<2x32x1xf32, #tpu.memory_space<vmem>>, vector<1x32x1xf32>
    %31 = vector.shape_cast %30 : vector<1x32x1xf32> to vector<32x1xf32>
    %cst_20 = arith.constant dense<0.000000e+00> : vector<32x256xf32>
    %32 = tpu.matmul %29, %27, %cst_20 {dimension_numbers = #tpu.dot_dimension_numbers<[1], [0], [0], [1], [0, 0, 1, 1], [], []>} : vector<32x32xf32>, vector<32x256xf32>, vector<32x256xf32> -> vector<32x256xf32>
    %33 = vector.broadcast %31 : vector<32x1xf32> to vector<32x256xf32>
    %34 = arith.addf %32, %33 : vector<32x256xf32>
    %cst_21 = arith.constant 3.000000e+01 : f32
    %35 = vector.broadcast %cst_21 : f32 to vector<32x256xf32>
    %36 = arith.mulf %35, %34 : vector<32x256xf32>
    %37 = math.sin %36 : vector<32x256xf32>
    %c0_22 = arith.constant 0 : index
    %c0_23 = arith.constant 0 : index
    %38 = vector.load %arg6[%c0_22, %c0_23] : memref<32x1xf32, #tpu.memory_space<vmem>>, vector<32x1xf32>
    %39 = vector.broadcast %38 : vector<32x1xf32> to vector<32x256xf32>
    %40 = arith.mulf %39, %37 : vector<32x256xf32>
    %cst_24 = arith.constant dense<0.000000e+00> : vector<256xf32>
    %41 = vector.multi_reduction <add>, %40, %cst_24 [0] : vector<32x256xf32> to vector<256xf32>
    %42 = vector.shape_cast %41 : vector<256xf32> to vector<1x256xf32>
    %c0_25 = arith.constant 0 : index
    %c0_26 = arith.constant 0 : index
    %43 = vector.load %arg7[%c0_25, %c0_26] : memref<1x1xf32, #tpu.memory_space<vmem>>, vector<1x1xf32>
    %44 = vector.broadcast %43 : vector<1x1xf32> to vector<1x256xf32>
    %45 = arith.addf %42, %44 : vector<1x256xf32>
    %cst_27 = arith.constant 3.000000e+01 : f32
    %46 = vector.broadcast %cst_27 : f32 to vector<1x256xf32>
    %47 = arith.mulf %46, %45 : vector<1x256xf32>
    %48 = math.sin %47 : vector<1x256xf32>
    %c0_28 = arith.constant 0 : index
    %c0_29 = arith.constant 0 : index
    %49 = vector.load %arg8[%c0_28, %c0_29] : memref<1x256xf32, #tpu.memory_space<vmem>>, vector<1x256xf32>
    tpu.vector_store %arg8[%c0_28, %c0_29], %48 {strides = array<i32>} : memref<1x256xf32, #tpu.memory_space<vmem>>, vector<1x256xf32>,
    return
  }
  func.func @transform_0(%arg0: i32) -> (i32, i32) {
    %c0_i32 = arith.constant 0 : i32
    %c0_i32_0 = arith.constant 0 : i32
    return %c0_i32, %arg0 : i32, i32
  }
  func.func @transform_1(%arg0: i32) -> (i32, i32) {
    %c0_i32 = arith.constant 0 : i32
    %c0_i32_0 = arith.constant 0 : i32
    %c0_i32_1 = arith.constant 0 : i32
    return %c0_i32, %c0_i32_0 : i32, i32
  }
  func.func @transform_2(%arg0: i32) -> (i32, i32) {
    %c0_i32 = arith.constant 0 : i32
    %c0_i32_0 = arith.constant 0 : i32
    %c0_i32_1 = arith.constant 0 : i32
    return %c0_i32, %c0_i32_0 : i32, i32
  }
  func.func @transform_3(%arg0: i32) -> (i32, i32, i32) {
    %c0_i32 = arith.constant 0 : i32
    %c0_i32_0 = arith.constant 0 : i32
    %c0_i32_1 = arith.constant 0 : i32
    %c0_i32_2 = arith.constant 0 : i32
    return %c0_i32, %c0_i32_0, %c0_i32_1 : i32, i32, i32
  }
  func.func @transform_4(%arg0: i32) -> (i32, i32, i32) {
    %c0_i32 = arith.constant 0 : i32
    %c0_i32_0 = arith.constant 0 : i32
    %c0_i32_1 = arith.constant 0 : i32
    %c0_i32_2 = arith.constant 0 : i32
    return %c0_i32, %c0_i32_0, %c0_i32_1 : i32, i32, i32
  }
  func.func @transform_5(%arg0: i32) -> (i32, i32) {
    %c0_i32 = arith.constant 0 : i32
    %c0_i32_0 = arith.constant 0 : i32
    %c0_i32_1 = arith.constant 0 : i32
    return %c0_i32, %c0_i32_0 : i32, i32
  }
  func.func @transform_6(%arg0: i32) -> (i32, i32) {
    %c0_i32 = arith.constant 0 : i32
    %c0_i32_0 = arith.constant 0 : i32
    %c0_i32_1 = arith.constant 0 : i32
    return %c0_i32, %c0_i32_0 : i32, i32
  }
  func.func @transform_7(%arg0: i32) -> (i32, i32) {
    %c0_i32 = arith.constant 0 : i32
    %c0_i32_0 = arith.constant 0 : i32
    return %c0_i32, %arg0 : i32, i32
  }
}

module attributes {stable_mosaic.version = 11 : i64} {
  func.func @kernel(%arg0: i32, %arg1: memref<2x256xf32, #tpu.memory_space<vmem>>, %arg2: memref<32x2xf32, #tpu.memory_space<vmem>>, %arg3: memref<32x1xf32, #tpu.memory_space<vmem>>, %arg4: memref<2x32x32xf32, #tpu.memory_space<vmem>>, %arg5: memref<2x32x1xf32, #tpu.memory_space<vmem>>, %arg6: memref<32x1xf32, #tpu.memory_space<vmem>>, %arg7: memref<1x1xf32, #tpu.memory_space<vmem>>, %arg8: memref<1x256xf32, #tpu.memory_space<vmem>>) attributes {dimension_semantics = [#tpu.dimension_semantics<parallel>], iteration_bounds = array<i64: 1>, scalar_prefetch = 0 : i64, scratch_operands = 0 : i64, tpu.core_type = #tpu.core_type<tc>, window_params = [{transform_indices = @transform_0, window_bounds = array<i64: 2, 256>}, {pipeline_mode = #tpu.pipeline_mode<synchronous>, transform_indices = @transform_1, window_bounds = array<i64: 32, 2>}, {pipeline_mode = #tpu.pipeline_mode<synchronous>, transform_indices = @transform_2, window_bounds = array<i64: 32, 1>}, {pipeline_mode = #tpu.pipeline_mode<synchronous>, transform_indices = @transform_3, window_bounds = array<i64: 2, 32, 32>}, {pipeline_mode = #tpu.pipeline_mode<synchronous>, transform_indices = @transform_4, window_bounds = array<i64: 2, 32, 1>}, {pipeline_mode = #tpu.pipeline_mode<synchronous>, transform_indices = @transform_5, window_bounds = array<i64: 32, 1>}, {pipeline_mode = #tpu.pipeline_mode<synchronous>, transform_indices = @transform_6, window_bounds = array<i64: 1, 1>}, {transform_indices = @transform_7, window_bounds = array<i64: 1, 256>}]} {
    %c0 = arith.constant 0 : index
    %c0_0 = arith.constant 0 : index
    %0 = vector.load %arg1[%c0, %c0_0] : memref<2x256xf32, #tpu.memory_space<vmem>>, vector<2x256xf32>
    %c0_1 = arith.constant 0 : index
    %c0_2 = arith.constant 0 : index
    %1 = vector.load %arg2[%c0_1, %c0_2] : memref<32x2xf32, #tpu.memory_space<vmem>>, vector<32x1xf32>
    %2 = vector.extract_strided_slice %0 {offsets = [0, 0], sizes = [1, 256], strides = [1, 1]} : vector<2x256xf32> to vector<1x256xf32>
    %3 = vector.broadcast %1 : vector<32x1xf32> to vector<32x256xf32>
    %4 = vector.broadcast %2 : vector<1x256xf32> to vector<32x256xf32>
    %5 = arith.mulf %3, %4 : vector<32x256xf32>
    %c0_3 = arith.constant 0 : index
    %c1 = arith.constant 1 : index
    %6 = vector.load %arg2[%c0_3, %c1] : memref<32x2xf32, #tpu.memory_space<vmem>>, vector<32x1xf32>
    %7 = vector.extract_strided_slice %0 {offsets = [1, 0], sizes = [1, 256], strides = [1, 1]} : vector<2x256xf32> to vector<1x256xf32>
    %8 = vector.broadcast %6 : vector<32x1xf32> to vector<32x256xf32>
    %9 = vector.broadcast %7 : vector<1x256xf32> to vector<32x256xf32>
    %10 = arith.mulf %8, %9 : vector<32x256xf32>
    %11 = arith.addf %5, %10 : vector<32x256xf32>
    %c0_4 = arith.constant 0 : index
    %c0_5 = arith.constant 0 : index
    %12 = vector.load %arg3[%c0_4, %c0_5] : memref<32x1xf32, #tpu.memory_space<vmem>>, vector<32x1xf32>
    %13 = vector.broadcast %12 : vector<32x1xf32> to vector<32x256xf32>
    %14 = arith.addf %11, %13 : vector<32x256xf32>
    %cst = arith.constant 3.000000e+01 : f32
    %15 = vector.broadcast %cst : f32 to vector<32x256xf32>
    %16 = arith.mulf %15, %14 : vector<32x256xf32>
    %17 = math.sin %16 : vector<32x256xf32>
    %c0_6 = arith.constant 0 : index
    %c0_7 = arith.constant 0 : index
    %c0_8 = arith.constant 0 : index
    %18 = vector.load %arg4[%c0_6, %c0_7, %c0_8] : memref<2x32x32xf32, #tpu.memory_space<vmem>>, vector<1x32x32xf32>
    %19 = vector.shape_cast %18 : vector<1x32x32xf32> to vector<32x32xf32>
    %c0_9 = arith.constant 0 : index
    %c0_10 = arith.constant 0 : index
    %c0_11 = arith.constant 0 : index
    %20 = vector.load %arg5[%c0_9, %c0_10, %c0_11] : memref<2x32x1xf32, #tpu.memory_space<vmem>>, vector<1x32x1xf32>
    %21 = vector.shape_cast %20 : vector<1x32x1xf32> to vector<32x1xf32>
    %cst_12 = arith.constant dense<0.000000e+00> : vector<32x256xf32>
    %22 = tpu.matmul %19, %17, %cst_12 {dimension_numbers = #tpu.dot_dimension_numbers<[1], [0], [0], [1], [0, 0, 1, 1], [], []>} : vector<32x32xf32>, vector<32x256xf32>, vector<32x256xf32> -> vector<32x256xf32>
    %23 = vector.broadcast %21 : vector<32x1xf32> to vector<32x256xf32>
    %24 = arith.addf %22, %23 : vector<32x256xf32>
    %cst_13 = arith.constant 3.000000e+01 : f32
    %25 = vector.broadcast %cst_13 : f32 to vector<32x256xf32>
    %26 = arith.mulf %25, %24 : vector<32x256xf32>
    %27 = math.sin %26 : vector<32x256xf32>
    %c1_14 = arith.constant 1 : index
    %c0_15 = arith.constant 0 : index
    %c0_16 = arith.constant 0 : index
    %28 = vector.load %arg4[%c1_14, %c0_15, %c0_16] : memref<2x32x32xf32, #tpu.memory_space<vmem>>, vector<1x32x32xf32>
    %29 = vector.shape_cast %28 : vector<1x32x32xf32> to vector<32x32xf32>
    %c1_17 = arith.constant 1 : index
    %c0_18 = arith.constant 0 : index
    %c0_19 = arith.constant 0 : index
    %30 = vector.load %arg5[%c1_17, %c0_18, %c0_19] : memref<2x32x1xf32, #tpu.memory_space<vmem>>, vector<1x32x1xf32>
    %31 = vector.shape_cast %30 : vector<1x32x1xf32> to vector<32x1xf32>
    %cst_20 = arith.constant dense<0.000000e+00> : vector<32x256xf32>
    %32 = tpu.matmul %29, %27, %cst_20 {dimension_numbers = #tpu.dot_dimension_numbers<[1], [0], [0], [1], [0, 0, 1, 1], [], []>} : vector<32x32xf32>, vector<32x256xf32>, vector<32x256xf32> -> vector<32x256xf32>
    %33 = vector.broadcast %31 : vector<32x1xf32> to vector<32x256xf32>
    %34 = arith.addf %32, %33 : vector<32x256xf32>
    %cst_21 = arith.constant 3.000000e+01 : f32
    %35 = vector.broadcast %cst_21 : f32 to vector<32x256xf32>
    %36 = arith.mulf %35, %34 : vector<32x256xf32>
    %37 = math.sin %36 : vector<32x256xf32>
    %c0_22 = arith.constant 0 : index
    %c0_23 = arith.constant 0 : index
    %38 = vector.load %arg6[%c0_22, %c0_23] : memref<32x1xf32, #tpu.memory_space<vmem>>, vector<32x1xf32>
    %39 = vector.broadcast %38 : vector<32x1xf32> to vector<32x256xf32>
    %40 = arith.mulf %39, %37 : vector<32x256xf32>
    %cst_24 = arith.constant dense<0.000000e+00> : vector<256xf32>
    %41 = vector.multi_reduction <add>, %40, %cst_24 [0] : vector<32x256xf32> to vector<256xf32>
    %42 = vector.shape_cast %41 : vector<256xf32> to vector<1x256xf32>
    %c0_25 = arith.constant 0 : index
    %c0_26 = arith.constant 0 : index
    %43 = vector.load %arg7[%c0_25, %c0_26] : memref<1x1xf32, #tpu.memory_space<vmem>>, vector<1x1xf32>
    %44 = vector.broadcast %43 : vector<1x1xf32> to vector<1x256xf32>
    %45 = arith.addf %42, %44 : vector<1x256xf32>
    %cst_27 = arith.constant 3.000000e+01 : f32
    %46 = vector.broadcast %cst_27 : f32 to vector<1x256xf32>
    %47 = arith.mulf %46, %45 : vector<1x256xf32>
    %48 = math.sin %47 : vector<1x256xf32>
    %c0_28 = arith.constant 0 : index
    %c0_29 = arith.constant 0 : index
    %49 = vector.load %arg8[%c0_28, %c0_29] : memref<1x256xf32, #tpu.memory_space<vmem>>, vector<1x256xf32>
    tpu.vector_store %arg8[%c0_28, %c0_29], %48 {strides = array<i32>} : memref<1x256xf32, #tpu.memory_space<vmem>>, vector<1x256xf32>,
    return
  }
  func.func @transform_0(%arg0: i32) -> (i32, i32) {
    %c0_i32 = arith.constant 0 : i32
    %c0_i32_0 = arith.constant 0 : i32
    return %c0_i32, %arg0 : i32, i32
  }
  func.func @transform_1(%arg0: i32) -> (i32, i32) {
    %c0_i32 = arith.constant 0 : i32
    %c0_i32_0 = arith.constant 0 : i32
    %c0_i32_1 = arith.constant 0 : i32
    return %c0_i32, %c0_i32_0 : i32, i32
  }
  func.func @transform_2(%arg0: i32) -> (i32, i32) {
    %c0_i32 = arith.constant 0 : i32
    %c0_i32_0 = arith.constant 0 : i32
    %c0_i32_1 = arith.constant 0 : i32
    return %c0_i32, %c0_i32_0 : i32, i32
  }
  func.func @transform_3(%arg0: i32) -> (i32, i32, i32) {
    %c0_i32 = arith.constant 0 : i32
    %c0_i32_0 = arith.constant 0 : i32
    %c0_i32_1 = arith.constant 0 : i32
    %c0_i32_2 = arith.constant 0 : i32
    return %c0_i32, %c0_i32_0, %c0_i32_1 : i32, i32, i32
  }
  func.func @transform_4(%arg0: i32) -> (i32, i32, i32) {
    %c0_i32 = arith.constant 0 : i32
    %c0_i32_0 = arith.constant 0 : i32
    %c0_i32_1 = arith.constant 0 : i32
    %c0_i32_2 = arith.constant 0 : i32
    return %c0_i32, %c0_i32_0, %c0_i32_1 : i32, i32, i32
  }
  func.func @transform_5(%arg0: i32) -> (i32, i32) {
    %c0_i32 = arith.constant 0 : i32
    %c0_i32_0 = arith.constant 0 : i32
    %c0_i32_1 = arith.constant 0 : i32
    return %c0_i32, %c0_i32_0 : i32, i32
  }
  func.func @transform_6(%arg0: i32) -> (i32, i32) {
    %c0_i32 = arith.constant 0 : i32
    %c0_i32_0 = arith.constant 0 : i32
    %c0_i32_1 = arith.constant 0 : i32
    return %c0_i32, %c0_i32_0 : i32, i32
  }
  func.func @transform_7(%arg0: i32) -> (i32, i32) {
    %c0_i32 = arith.constant 0 : i32
    %c0_i32_0 = arith.constant 0 : i32
    return %c0_i32, %arg0 : i32, i32
  }
}

</mosaic_0001>

<llo_original>
// kernel: tpu_custom_call.1
$region0: #{tpu_custom_call.1}
  #allocation0 [shape = 'u32[]', space=smem, size = 0x4, offset = 0x4, fixed_abs, tag = 'smem constant byte address 0x4 - core index']
  #allocation1 [shape = 'u32[72,128]{1,0:T(1,128)}', space=vmem, size = 0x9000, scoped, tag = 'internal scratch']
  #allocation2 [shape = 'f32[1,1]{1,0:T(1,128)S(1)}', space=vmem, size = 0x200, scoped, tag = 'scoped memory for tpu_custom_call.1']
  %s0 = inlined_call_operand.vmem [shape: f32[2,256], index: 0, kind: input, shape index: {}]
  %s1 = inlined_call_operand.vmem [shape: f32[32,2], index: 1, kind: input, shape index: {}]
  %s2 = inlined_call_operand.vmem [shape: f32[32,1], index: 2, kind: input, shape index: {}]
  %s3 = inlined_call_operand.vmem [shape: f32[2,32,32], index: 3, kind: input, shape index: {}]
  %s4 = inlined_call_operand.vmem [shape: f32[2,32,1], index: 4, kind: input, shape index: {}]
  %s5 = inlined_call_operand.vmem [shape: f32[32,1], index: 5, kind: input, shape index: {}]
  %s6 = inlined_call_operand.<no memory space> [shape: f32[1,1], index: 6, kind: input, shape index: {}]
  %s7 = inlined_call_operand.hbm [shape: f32[1,256], index: 7, kind: output, shape index: {}]
  %s8 = sld [smem:[#allocation0]]
  $region38: #{tpu_custom_call.1} parent=0
    _
  %s10 = ssub.s32 1, %s8
  %s11 = scalar_select 0, %s10, %s8
  %v12 = vstv %s6
  %13 = vst [vmem:[#allocation2] sm:$0x1] %v12
  $region1: #{tpu_custom_call.1} parent=0
    #allocation3 [shape = 'u8[1024]{0}', space=vmem, size = 0x400, scoped, tag = 'output window, operand 0, single buffered']
    #allocation4 [shape = 's32[1]{0}', space=sflag, size = 0x4, scoped, tag = 'scoped memory for tpu_custom_call.1']
    %14 = vsyncpa [#allocation4], 0
    // Predicated region
    $region2: #{tpu_custom_call.1} parent=1 // pred_check
      _
    $region3: #{tpu_custom_call.1} parent=1 // pred_check_branch
      %16 = sbr.rel (0) target = $region5
    $region4: #{tpu_custom_call.1} parent=1 // pred_region
      _
    $region5: #{tpu_custom_call.1} parent=1 // pred_fallthru
      _
    // Predicated region
    $region6: #{tpu_custom_call.1} parent=1 // pred_check
      _
    $region7: #{tpu_custom_call.1} parent=1 // pred_check_branch
      %18 = sbr.rel (0) target = $region9
    $region8: #{tpu_custom_call.1} parent=1 // pred_region
      _
    $region9: #{tpu_custom_call.1} parent=1 // pred_fallthru
      _
    // Predicated region
    $region10: #{tpu_custom_call.1} parent=1 // pred_check
      _
    $region11: #{tpu_custom_call.1} parent=1 // pred_check_branch
      %20 = sbr.rel (0) target = $region13
    $region12: #{tpu_custom_call.1} parent=1 // pred_region
      _
    $region13: #{tpu_custom_call.1} parent=1 // pred_fallthru
      _
    // Predicated region
    $region14: #{tpu_custom_call.1} parent=1 // pred_check
      _
    $region15: #{tpu_custom_call.1} parent=1 // pred_check_branch
      %22 = sbr.rel (0) target = $region17
    $region16: #{tpu_custom_call.1} parent=1 // pred_region
      _
    $region17: #{tpu_custom_call.1} parent=1 // pred_fallthru
      _
    // Predicated region
    $region18: #{tpu_custom_call.1} parent=1 // pred_check
      _
    $region19: #{tpu_custom_call.1} parent=1 // pred_check_branch
      %24 = sbr.rel (0) target = $region21
    $region20: #{tpu_custom_call.1} parent=1 // pred_region
      _
    $region21: #{tpu_custom_call.1} parent=1 // pred_fallthru
      _
    // Predicated region
    $region22: #{tpu_custom_call.1} parent=1 // pred_check
      _
    $region23: #{tpu_custom_call.1} parent=1 // pred_check_branch
      %26 = sbr.rel (0) target = $region25
    $region24: #{tpu_custom_call.1} parent=1 // pred_region
      _
    $region25: #{tpu_custom_call.1} parent=1 // pred_fallthru
      _
    // Predicated region
    $region26: #{tpu_custom_call.1} parent=1 // pred_check
      _
    $region27: #{tpu_custom_call.1} parent=1 // pred_check_branch
      %28 = sbr.rel (0) target = $region29
    $region28: #{tpu_custom_call.1} parent=1 // pred_region
      _
    $region29: #{tpu_custom_call.1} parent=1 // pred_fallthru
      _
    %v29 = vld [vmem:[%s0] sm:$0xf]
    %v30 = vld [vmem:[%s1] sm:$0xff]
    %v31 = vld [vmem:[%s1 + $0x8] sm:$0xff]
    %v32 = vld [vmem:[%s1 + $0x10] sm:$0xff]
    %v33 = vld [vmem:[%s1 + $0x18] sm:$0xff]
    %35 = vset.pattern.permute.xlu0 0
    %36 = vperm.xlu0 %35, %v30
    %v37 = vpop.permute.xlu0 %36
    %40 = vset.pattern.permute.xlu0 0
    %41 = vperm.xlu0 %40, %v31
    %v42 = vpop.permute.xlu0 %41
    %45 = vset.pattern.permute.xlu0 0
    %46 = vperm.xlu0 %45, %v32
    %v47 = vpop.permute.xlu0 %46
    %50 = vset.pattern.permute.xlu0 0
    %51 = vperm.xlu0 %50, %v33
    %v52 = vpop.permute.xlu0 %51
    %v55 = vperm.slane %v29, 0
    %v56 = vperm.slane %v29, 2
    %v59 = vperm.slane %v55, 0
    %v60 = vperm.slane %v56, 0
    %v61 = vmul.f32 %v37, %v59
    %v62 = vmul.f32 %v37, %v60
    %v63 = vmul.f32 %v42, %v59
    %v64 = vmul.f32 %v42, %v60
    %v65 = vmul.f32 %v47, %v59
    %v66 = vmul.f32 %v47, %v60
    %v67 = vmul.f32 %v52, %v59
    %v68 = vmul.f32 %v52, %v60
    %69 = vset.pattern.permute.xlu0 1
    %70 = vperm.xlu0 %69, %v30
    %v71 = vpop.permute.xlu0 %70
    %73 = vset.pattern.permute.xlu0 1
    %74 = vperm.xlu0 %73, %v31
    %v75 = vpop.permute.xlu0 %74
    %77 = vset.pattern.permute.xlu0 1
    %78 = vperm.xlu0 %77, %v32
    %v79 = vpop.permute.xlu0 %78
    %81 = vset.pattern.permute.xlu0 1
    %82 = vperm.xlu0 %81, %v33
    %v83 = vpop.permute.xlu0 %82
    %v85 = vperm.slane %v29, 1
    %v86 = vperm.slane %v29, 3
    %v89 = vperm.slane %v85, 1
    %v90 = vperm.slane %v86, 1
    %v91 = vmul.f32 %v71, %v89
    %v92 = vmul.f32 %v71, %v90
    %v93 = vmul.f32 %v75, %v89
    %v94 = vmul.f32 %v75, %v90
    %v95 = vmul.f32 %v79, %v89
    %v96 = vmul.f32 %v79, %v90
    %v97 = vmul.f32 %v83, %v89
    %v98 = vmul.f32 %v83, %v90
    %v99 = vadd.f32 %v61, %v91
    %v100 = vadd.f32 %v62, %v92
    %v101 = vadd.f32 %v63, %v93
    %v102 = vadd.f32 %v64, %v94
    %v103 = vadd.f32 %v65, %v95
    %v104 = vadd.f32 %v66, %v96
    %v105 = vadd.f32 %v67, %v97
    %v106 = vadd.f32 %v68, %v98
    %v107 = vld [vmem:[%s2] sm:$0xff]
    %v108 = vld [vmem:[%s2 + $0x8] sm:$0xff]
    %v109 = vld [vmem:[%s2 + $0x10] sm:$0xff]
    %v110 = vld [vmem:[%s2 + $0x18] sm:$0xff]
    %112 = vset.pattern.permute.xlu0 0
    %113 = vperm.xlu0 %112, %v107
    %v114 = vpop.permute.xlu0 %113
    %117 = vset.pattern.permute.xlu0 0
    %118 = vperm.xlu0 %117, %v108
    %v119 = vpop.permute.xlu0 %118
    %122 = vset.pattern.permute.xlu0 0
    %123 = vperm.xlu0 %122, %v109
    %v124 = vpop.permute.xlu0 %123
    %127 = vset.pattern.permute.xlu0 0
    %128 = vperm.xlu0 %127, %v110
    %v129 = vpop.permute.xlu0 %128
    %v131 = vadd.f32 %v99, %v114
    %v132 = vadd.f32 %v100, %v114
    %v133 = vadd.f32 %v101, %v119
    %v134 = vadd.f32 %v102, %v119
    %v135 = vadd.f32 %v103, %v124
    %v136 = vadd.f32 %v104, %v124
    %v137 = vadd.f32 %v105, %v129
    %v138 = vadd.f32 %v106, %v129
    %v139 = vmul.f32 %v131, 30.0
    %v140 = vmul.f32 %v132, 30.0
    %v141 = vmul.f32 %v133, 30.0
    %v142 = vmul.f32 %v134, 30.0
    %v143 = vmul.f32 %v135, 30.0
    %v144 = vmul.f32 %v136, 30.0
    %v145 = vmul.f32 %v137, 30.0
    %v146 = vmul.f32 %v138, 30.0
    %v147 = vand.u32 2147483647, %v139
    %vm148 = vcmp.le.f32.partialorder %v147, 0.7853982
    %vm149 = vcmp.lt.s32.totalorder %v139, 0
    %v150 = vand.u32 %v139, 2139095040
    %v151 = vshrl.u32 %v150, 23
    %v152 = vsub.s32 %v151, 127
    %v153 = vand.u32 2147483647, %v139
    %v154 = vand.u32 %v153, 8388607
    %v155 = vor.u32 %v154, 8388608
    %v156 = vsub.s32 0, %v155
    %v157 = vadd.s32 %v152, 1
    %vm158 = vcmp.gt.s32.totalorder %v157, 0
    %v159 = vsel %vm158, %v157, 0
    %v160 = vshrl.u32 %v159, 5
    %v161 = vand.u32 %v159, 31
    %v162 = vsub.s32 32, %v161
    %v163 = vshrl.u32 683565275, %v162
    %v164 = vshll.u32 683565275, %v161
    %v165 = vshrl.u32 2475754826, %v162
    %v166 = vor.u32 %v164, %v165
    %v167 = vshll.u32 2475754826, %v161
    %v168 = vshrl.u32 2131351028, %v162
    %v169 = vor.u32 %v167, %v168
    %v170 = vshll.u32 2131351028, %v161
    %v171 = vshrl.u32 2102212464, %v162
    %v172 = vor.u32 %v170, %v171
    %v173 = vshll.u32 2102212464, %v161
    %v174 = vshrl.u32 920167782, %v162
    %v175 = vor.u32 %v173, %v174
    %v176 = vshll.u32 920167782, %v161
    %v177 = vshrl.u32 1326507024, %v162
    %v178 = vor.u32 %v176, %v177
    %vm179 = vcmp.lt.s32.totalorder %v160, 1
    %vm180 = vcmp.lt.s32.totalorder %v160, 2
    %vm181 = vcmp.lt.s32.totalorder %v160, 3
    %vm182 = vcmp.lt.s32.totalorder %v160, 4
    %v183 = vsel %vm179, %v163, %v166
    %v184 = vsel %vm182, %v172, 2102212464
    %v185 = vsel %vm181, %v169, %v184
    %v186 = vsel %vm180, %v183, %v185
    %v187 = vsel %vm179, %v166, %v169
    %v188 = vsel %vm182, %v175, 920167782
    %v189 = vsel %vm181, %v172, %v188
    %v190 = vsel %vm180, %v187, %v189
    %v191 = vsel %vm179, %v169, %v172
    %v192 = vsel %vm182, %v178, 1326507024
    %v193 = vsel %vm181, %v175, %v192
    %v194 = vsel %vm180, %v191, %v193
    %v195 = vshll.u32 %v155, 8
    %v196 = vand.u32 %v195, 65535
    %v197 = vshrl.u32 %v195, 16
    %v198 = vand.u32 %v194, 65535
    %v199 = vshrl.u32 %v194, 16
    %v200 = vmul.u32 %v196, %v198
    %v201 = vmul.u32 %v196, %v199
    %v202 = vmul.u32 %v197, %v198
    %v203 = vmul.u32 %v197, %v199
    %v204 = vshll.u32 %v201, 16
    %v205 = vshrl.u32 %v201, 16
    %v206 = vshll.u32 %v202, 16
    %v207 = vshrl.u32 %v202, 16
    %vm208 = vc.u32 %v200, %v204
    %v209 = vsel %vm208, 1, 0
    %v210 = vadd.s32 %v200, %v204
    %v211 = vadd.s32 %v203, %v209
    %vm212 = vc.u32 %v210, %v206
    %v213 = vsel %vm212, 1, 0
    %v214 = vadd.s32 %v210, %v206
    %v215 = vadd.s32 %v211, %v213
    %v216 = vadd.s32 %v215, %v205
    %v217 = vadd.s32 %v216, %v207
    %v218 = vand.u32 %v195, 65535
    %v219 = vshrl.u32 %v195, 16
    %v220 = vand.u32 %v190, 65535
    %v221 = vshrl.u32 %v190, 16
    %v222 = vmul.u32 %v218, %v220
    %v223 = vmul.u32 %v218, %v221
    %v224 = vmul.u32 %v219, %v220
    %v225 = vmul.u32 %v219, %v221
    %v226 = vshll.u32 %v223, 16
    %v227 = vshrl.u32 %v223, 16
    %v228 = vshll.u32 %v224, 16
    %v229 = vshrl.u32 %v224, 16
    %vm230 = vc.u32 %v222, %v226
    %v231 = vsel %vm230, 1, 0
    %v232 = vadd.s32 %v222, %v226
    %v233 = vadd.s32 %v225, %v231
    %vm234 = vc.u32 %v232, %v228
    %v235 = vsel %vm234, 1, 0
    %v236 = vadd.s32 %v232, %v228
    %v237 = vadd.s32 %v233, %v235
    %v238 = vadd.s32 %v237, %v227
    %v239 = vadd.s32 %v238, %v229
    %v240 = vmul.u32 %v195, %v186
    %v241 = vadd.s32 %v217, %v236
    %vm242 = vc.u32 %v217, %v236
    %v243 = vadd.s32 %v239, 1
    %v244 = vsel %vm242, %v243, %v239
    %v245 = vadd.s32 %v240, %v244
    %v246 = vadd.s32 %v245, 536870912
    %v247 = vshrl.u32 %v246, 30
    %v248 = vshll.u32 %v247, 30
    %v249 = vsub.s32 %v245, %v248
    %vm250 = vcmp.lt.s32.totalorder %v249, 0
    %v251 = vsub.s32 0, %v249
    %v252 = vsel %vm250, %v251, %v249
    %v253 = vclz %v252
    %v254 = vsub.s32 %v253, 2
    %vm255 = vcmp.gt.s32.totalorder 0, %v254
    %v256 = vsel %vm255, 0, %v254
    %v257 = vsub.s32 32, %v256
    %v258 = vshll.u32 %v249, %v256
    %v259 = vshrl.u32 %v241, %v257
    %v260 = vor.u32 %v258, %v259
    %v261 = vsub.s32 4294967266, %v256
    %v262 = vadd.s32 %v261, 127
    %v263 = vshll.u32 %v262, 23
    %v264 = vor.u32 4788187, %v263
    %v265 = vand.u32 2147483647, %v264
    %v267 = vcvt.s32.f32 %v260
    %v268 = vmul.f32 %v267, %v265
    %v269 = vxor.u32 %v268, 2147483648
    %v270 = vsel %vm149, %v269, %v268
    %v271 = vsub.s32 4, %v247
    %v272 = vsel %vm149, %v271, %v247
    %v273 = vsel %vm148, %v139, %v270
    %v274 = vsel %vm148, 0, %v272
    %v275 = vmul.f32 %v273, %v273
    %v276 = vmul.f32 %v275, -0.001358992
    %v277 = vadd.f32 %v276, 0.041655596
    %v278 = vmul.f32 %v275, %v277
    %v279 = vadd.f32 %v278, -0.4999988
    %v280 = vmul.f32 %v275, %v279
    %v281 = vadd.f32 1.0, %v280
    %v282 = vmul.f32 %v273, %v273
    %v283 = vmul.f32 %v282, -0.00019511016
    %v284 = vadd.f32 %v283, 0.008332121
    %v285 = vmul.f32 %v282, %v284
    %v286 = vadd.f32 %v285, -0.16666654
    %v287 = vmul.f32 %v282, %v286
    %v288 = vadd.f32 %v287, 1.0
    %v289 = vmul.f32 %v288, %v273
    %vm290 = vweird.f32 %v139
    %v291 = vadd.s32 %v274, 3
    %v292 = vand.u32 %v291, 3
    %vm293 = vcmp.lt.s32.totalorder %v292, 2
    %vm294 = vcmp.eq.s32.totalorder %v292, 0
    %v295 = vxor.u32 %v289, 2147483648
    %v296 = vsel %vm294, %v281, %v295
    %vm297 = vcmp.eq.s32.totalorder %v292, 2
    %v298 = vxor.u32 %v281, 2147483648
    %v299 = vsel %vm297, %v298, %v289
    %v300 = vsel %vm293, %v296, %v299
    %v301 = vsel %vm290, nan, %v300
    %v302 = vand.u32 2147483647, %v140
    %vm303 = vcmp.le.f32.partialorder %v302, 0.7853982
    %vm304 = vcmp.lt.s32.totalorder %v140, 0
    %v305 = vand.u32 %v140, 2139095040
    %v306 = vshrl.u32 %v305, 23
    %v307 = vsub.s32 %v306, 127
    %v308 = vand.u32 2147483647, %v140
    %v309 = vand.u32 %v308, 8388607
    %v310 = vor.u32 %v309, 8388608
    %v311 = vsub.s32 0, %v310
    %v312 = vadd.s32 %v307, 1
    %vm313 = vcmp.gt.s32.totalorder %v312, 0
    %v314 = vsel %vm313, %v312, 0
    %v315 = vshrl.u32 %v314, 5
    %v316 = vand.u32 %v314, 31
    %v317 = vsub.s32 32, %v316
    %v318 = vshrl.u32 683565275, %v317
    %v319 = vshll.u32 683565275, %v316
    %v320 = vshrl.u32 2475754826, %v317
    %v321 = vor.u32 %v319, %v320
    %v322 = vshll.u32 2475754826, %v316
    %v323 = vshrl.u32 2131351028, %v317
    %v324 = vor.u32 %v322, %v323
    %v325 = vshll.u32 2131351028, %v316
    %v326 = vshrl.u32 2102212464, %v317
    %v327 = vor.u32 %v325, %v326
    %v328 = vshll.u32 2102212464, %v316
    %v329 = vshrl.u32 920167782, %v317
    %v330 = vor.u32 %v328, %v329
    %v331 = vshll.u32 920167782, %v316
    %v332 = vshrl.u32 1326507024, %v317
    %v333 = vor.u32 %v331, %v332
    %vm334 = vcmp.lt.s32.totalorder %v315, 1
    %vm335 = vcmp.lt.s32.totalorder %v315, 2
    %vm336 = vcmp.lt.s32.totalorder %v315, 3
    %vm337 = vcmp.lt.s32.totalorder %v315, 4
    %v338 = vsel %vm334, %v318, %v321
    %v339 = vsel %vm337, %v327, 2102212464
    %v340 = vsel %vm336, %v324, %v339
    %v341 = vsel %vm335, %v338, %v340
    %v342 = vsel %vm334, %v321, %v324
    %v343 = vsel %vm337, %v330, 920167782
    %v344 = vsel %vm336, %v327, %v343
    %v345 = vsel %vm335, %v342, %v344
    %v346 = vsel %vm334, %v324, %v327
    %v347 = vsel %vm337, %v333, 1326507024
    %v348 = vsel %vm336, %v330, %v347
    %v349 = vsel %vm335, %v346, %v348
    %v350 = vshll.u32 %v310, 8
    %v351 = vand.u32 %v350, 65535
    %v352 = vshrl.u32 %v350, 16
    %v353 = vand.u32 %v349, 65535
    %v354 = vshrl.u32 %v349, 16
    %v355 = vmul.u32 %v351, %v353
    %v356 = vmul.u32 %v351, %v354
    %v357 = vmul.u32 %v352, %v353
    %v358 = vmul.u32 %v352, %v354
    %v359 = vshll.u32 %v356, 16
    %v360 = vshrl.u32 %v356, 16
    %v361 = vshll.u32 %v357, 16
    %v362 = vshrl.u32 %v357, 16
    %vm363 = vc.u32 %v355, %v359
    %v364 = vsel %vm363, 1, 0
    %v365 = vadd.s32 %v355, %v359
    %v366 = vadd.s32 %v358, %v364
    %vm367 = vc.u32 %v365, %v361
    %v368 = vsel %vm367, 1, 0
    %v369 = vadd.s32 %v365, %v361
    %v370 = vadd.s32 %v366, %v368
    %v371 = vadd.s32 %v370, %v360
    %v372 = vadd.s32 %v371, %v362
    %v373 = vand.u32 %v350, 65535
    %v374 = vshrl.u32 %v350, 16
    %v375 = vand.u32 %v345, 65535
    %v376 = vshrl.u32 %v345, 16
    %v377 = vmul.u32 %v373, %v375
    %v378 = vmul.u32 %v373, %v376
    %v379 = vmul.u32 %v374, %v375
    %v380 = vmul.u32 %v374, %v376
    %v381 = vshll.u32 %v378, 16
    %v382 = vshrl.u32 %v378, 16
    %v383 = vshll.u32 %v379, 16
    %v384 = vshrl.u32 %v379, 16
    %vm385 = vc.u32 %v377, %v381
    %v386 = vsel %vm385, 1, 0
    %v387 = vadd.s32 %v377, %v381
    %v388 = vadd.s32 %v380, %v386
    %vm389 = vc.u32 %v387, %v383
    %v390 = vsel %vm389, 1, 0
    %v391 = vadd.s32 %v387, %v383
    %v392 = vadd.s32 %v388, %v390
    %v393 = vadd.s32 %v392, %v382
    %v394 = vadd.s32 %v393, %v384
    %v395 = vmul.u32 %v350, %v341
    %v396 = vadd.s32 %v372, %v391
    %vm397 = vc.u32 %v372, %v391
    %v398 = vadd.s32 %v394, 1
    %v399 = vsel %vm397, %v398, %v394
    %v400 = vadd.s32 %v395, %v399
    %v401 = vadd.s32 %v400, 536870912
    %v402 = vshrl.u32 %v401, 30
    %v403 = vshll.u32 %v402, 30
    %v404 = vsub.s32 %v400, %v403
    %vm405 = vcmp.lt.s32.totalorder %v404, 0
    %v406 = vsub.s32 0, %v404
    %v407 = vsel %vm405, %v406, %v404
    %v408 = vclz %v407
    %v409 = vsub.s32 %v408, 2
    %vm410 = vcmp.gt.s32.totalorder 0, %v409
    %v411 = vsel %vm410, 0, %v409
    %v412 = vsub.s32 32, %v411
    %v413 = vshll.u32 %v404, %v411
    %v414 = vshrl.u32 %v396, %v412
    %v415 = vor.u32 %v413, %v414
    %v416 = vsub.s32 4294967266, %v411
    %v417 = vadd.s32 %v416, 127
    %v418 = vshll.u32 %v417, 23
    %v419 = vor.u32 4788187, %v418
    %v420 = vand.u32 2147483647, %v419
    %v422 = vcvt.s32.f32 %v415
    %v423 = vmul.f32 %v422, %v420
    %v424 = vxor.u32 %v423, 2147483648
    %v425 = vsel %vm304, %v424, %v423
    %v426 = vsub.s32 4, %v402
    %v427 = vsel %vm304, %v426, %v402
    %v428 = vsel %vm303, %v140, %v425
    %v429 = vsel %vm303, 0, %v427
    %v430 = vmul.f32 %v428, %v428
    %v431 = vmul.f32 %v430, -0.001358992
    %v432 = vadd.f32 %v431, 0.041655596
    %v433 = vmul.f32 %v430, %v432
    %v434 = vadd.f32 %v433, -0.4999988
    %v435 = vmul.f32 %v430, %v434
    %v436 = vadd.f32 1.0, %v435
    %v437 = vmul.f32 %v428, %v428
    %v438 = vmul.f32 %v437, -0.00019511016
    %v439 = vadd.f32 %v438, 0.008332121
    %v440 = vmul.f32 %v437, %v439
    %v441 = vadd.f32 %v440, -0.16666654
    %v442 = vmul.f32 %v437, %v441
    %v443 = vadd.f32 %v442, 1.0
    %v444 = vmul.f32 %v443, %v428
    %vm445 = vweird.f32 %v140
    %v446 = vadd.s32 %v429, 3
    %v447 = vand.u32 %v446, 3
    %vm448 = vcmp.lt.s32.totalorder %v447, 2
    %vm449 = vcmp.eq.s32.totalorder %v447, 0
    %v450 = vxor.u32 %v444, 2147483648
    %v451 = vsel %vm449, %v436, %v450
    %vm452 = vcmp.eq.s32.totalorder %v447, 2
    %v453 = vxor.u32 %v436, 2147483648
    %v454 = vsel %vm452, %v453, %v444
    %v455 = vsel %vm448, %v451, %v454
    %v456 = vsel %vm445, nan, %v455
    %v457 = vand.u32 2147483647, %v141
    %vm458 = vcmp.le.f32.partialorder %v457, 0.7853982
    %vm459 = vcmp.lt.s32.totalorder %v141, 0
    %v460 = vand.u32 %v141, 2139095040
    %v461 = vshrl.u32 %v460, 23
    %v462 = vsub.s32 %v461, 127
    %v463 = vand.u32 2147483647, %v141
    %v464 = vand.u32 %v463, 8388607
    %v465 = vor.u32 %v464, 8388608
    %v466 = vsub.s32 0, %v465
    %v467 = vadd.s32 %v462, 1
    %vm468 = vcmp.gt.s32.totalorder %v467, 0
    %v469 = vsel %vm468, %v467, 0
    %v470 = vshrl.u32 %v469, 5
    %v471 = vand.u32 %v469, 31
    %v472 = vsub.s32 32, %v471
    %v473 = vshrl.u32 683565275, %v472
    %v474 = vshll.u32 683565275, %v471
    %v475 = vshrl.u32 2475754826, %v472
    %v476 = vor.u32 %v474, %v475
    %v477 = vshll.u32 2475754826, %v471
    %v478 = vshrl.u32 2131351028, %v472
    %v479 = vor.u32 %v477, %v478
    %v480 = vshll.u32 2131351028, %v471
    %v481 = vshrl.u32 2102212464, %v472
    %v482 = vor.u32 %v480, %v481
    %v483 = vshll.u32 2102212464, %v471
    %v484 = vshrl.u32 920167782, %v472
    %v485 = vor.u32 %v483, %v484
    %v486 = vshll.u32 920167782, %v471
    %v487 = vshrl.u32 1326507024, %v472
    %v488 = vor.u32 %v486, %v487
    %vm489 = vcmp.lt.s32.totalorder %v470, 1
    %vm490 = vcmp.lt.s32.totalorder %v470, 2
    %vm491 = vcmp.lt.s32.totalorder %v470, 3
    %vm492 = vcmp.lt.s32.totalorder %v470, 4
    %v493 = vsel %vm489, %v473, %v476
    %v494 = vsel %vm492, %v482, 2102212464
    %v495 = vsel %vm491, %v479, %v494
    %v496 = vsel %vm490, %v493, %v495
    %v497 = vsel %vm489, %v476, %v479
    %v498 = vsel %vm492, %v485, 920167782
    %v499 = vsel %vm491, %v482, %v498
    %v500 = vsel %vm490, %v497, %v499
    %v501 = vsel %vm489, %v479, %v482
    %v502 = vsel %vm492, %v488, 1326507024
    %v503 = vsel %vm491, %v485, %v502
    %v504 = vsel %vm490, %v501, %v503
    %v505 = vshll.u32 %v465, 8
    %v506 = vand.u32 %v505, 65535
    %v507 = vshrl.u32 %v505, 16
    %v508 = vand.u32 %v504, 65535
    %v509 = vshrl.u32 %v504, 16
    %v510 = vmul.u32 %v506, %v508
    %v511 = vmul.u32 %v506, %v509
    %v512 = vmul.u32 %v507, %v508
    %v513 = vmul.u32 %v507, %v509
    %v514 = vshll.u32 %v511, 16
    %v515 = vshrl.u32 %v511, 16
    %v516 = vshll.u32 %v512, 16
    %v517 = vshrl.u32 %v512, 16
    %vm518 = vc.u32 %v510, %v514
    %v519 = vsel %vm518, 1, 0
    %v520 = vadd.s32 %v510, %v514
    %v521 = vadd.s32 %v513, %v519
    %vm522 = vc.u32 %v520, %v516
    %v523 = vsel %vm522, 1, 0
    %v524 = vadd.s32 %v520, %v516
    %v525 = vadd.s32 %v521, %v523
    %v526 = vadd.s32 %v525, %v515
    %v527 = vadd.s32 %v526, %v517
    %v528 = vand.u32 %v505, 65535
    %v529 = vshrl.u32 %v505, 16
    %v530 = vand.u32 %v500, 65535
    %v531 = vshrl.u32 %v500, 16
    %v532 = vmul.u32 %v528, %v530
    %v533 = vmul.u32 %v528, %v531
    %v534 = vmul.u32 %v529, %v530
    %v535 = vmul.u32 %v529, %v531
    %v536 = vshll.u32 %v533, 16
    %v537 = vshrl.u32 %v533, 16
    %v538 = vshll.u32 %v534, 16
    %v539 = vshrl.u32 %v534, 16
    %vm540 = vc.u32 %v532, %v536
    %v541 = vsel %vm540, 1, 0
    %v542 = vadd.s32 %v532, %v536
    %v543 = vadd.s32 %v535, %v541
    %vm544 = vc.u32 %v542, %v538
    %v545 = vsel %vm544, 1, 0
    %v546 = vadd.s32 %v542, %v538
    %v547 = vadd.s32 %v543, %v545
    %v548 = vadd.s32 %v547, %v537
    %v549 = vadd.s32 %v548, %v539
    %v550 = vmul.u32 %v505, %v496
    %v551 = vadd.s32 %v527, %v546
    %vm552 = vc.u32 %v527, %v546
    %v553 = vadd.s32 %v549, 1
    %v554 = vsel %vm552, %v553, %v549
    %v555 = vadd.s32 %v550, %v554
    %v556 = vadd.s32 %v555, 536870912
    %v557 = vshrl.u32 %v556, 30
    %v558 = vshll.u32 %v557, 30
    %v559 = vsub.s32 %v555, %v558
    %vm560 = vcmp.lt.s32.totalorder %v559, 0
    %v561 = vsub.s32 0, %v559
    %v562 = vsel %vm560, %v561, %v559
    %v563 = vclz %v562
    %v564 = vsub.s32 %v563, 2
    %vm565 = vcmp.gt.s32.totalorder 0, %v564
    %v566 = vsel %vm565, 0, %v564
    %v567 = vsub.s32 32, %v566
    %v568 = vshll.u32 %v559, %v566
    %v569 = vshrl.u32 %v551, %v567
    %v570 = vor.u32 %v568, %v569
    %v571 = vsub.s32 4294967266, %v566
    %v572 = vadd.s32 %v571, 127
    %v573 = vshll.u32 %v572, 23
    %v574 = vor.u32 4788187, %v573
    %v575 = vand.u32 2147483647, %v574
    %v577 = vcvt.s32.f32 %v570
    %v578 = vmul.f32 %v577, %v575
    %v579 = vxor.u32 %v578, 2147483648
    %v580 = vsel %vm459, %v579, %v578
    %v581 = vsub.s32 4, %v557
    %v582 = vsel %vm459, %v581, %v557
    %v583 = vsel %vm458, %v141, %v580
    %v584 = vsel %vm458, 0, %v582
    %v585 = vmul.f32 %v583, %v583
    %v586 = vmul.f32 %v585, -0.001358992
    %v587 = vadd.f32 %v586, 0.041655596
    %v588 = vmul.f32 %v585, %v587
    %v589 = vadd.f32 %v588, -0.4999988
    %v590 = vmul.f32 %v585, %v589
    %v591 = vadd.f32 1.0, %v590
    %v592 = vmul.f32 %v583, %v583
    %v593 = vmul.f32 %v592, -0.00019511016
    %v594 = vadd.f32 %v593, 0.008332121
    %v595 = vmul.f32 %v592, %v594
    %v596 = vadd.f32 %v595, -0.16666654
    %v597 = vmul.f32 %v592, %v596
    %v598 = vadd.f32 %v597, 1.0
    %v599 = vmul.f32 %v598, %v583
    %vm600 = vweird.f32 %v141
    %v601 = vadd.s32 %v584, 3
    %v602 = vand.u32 %v601, 3
    %vm603 = vcmp.lt.s32.totalorder %v602, 2
    %vm604 = vcmp.eq.s32.totalorder %v602, 0
    %v605 = vxor.u32 %v599, 2147483648
    %v606 = vsel %vm604, %v591, %v605
    %vm607 = vcmp.eq.s32.totalorder %v602, 2
    %v608 = vxor.u32 %v591, 2147483648
    %v609 = vsel %vm607, %v608, %v599
    %v610 = vsel %vm603, %v606, %v609
    %v611 = vsel %vm600, nan, %v610
    %v612 = vand.u32 2147483647, %v142
    %vm613 = vcmp.le.f32.partialorder %v612, 0.7853982
    %vm614 = vcmp.lt.s32.totalorder %v142, 0
    %v615 = vand.u32 %v142, 2139095040
    %v616 = vshrl.u32 %v615, 23
    %v617 = vsub.s32 %v616, 127
    %v618 = vand.u32 2147483647, %v142
    %v619 = vand.u32 %v618, 8388607
    %v620 = vor.u32 %v619, 8388608
    %v621 = vsub.s32 0, %v620
    %v622 = vadd.s32 %v617, 1
    %vm623 = vcmp.gt.s32.totalorder %v622, 0
    %v624 = vsel %vm623, %v622, 0
    %v625 = vshrl.u32 %v624, 5
    %v626 = vand.u32 %v624, 31
    %v627 = vsub.s32 32, %v626
    %v628 = vshrl.u32 683565275, %v627
    %v629 = vshll.u32 683565275, %v626
    %v630 = vshrl.u32 2475754826, %v627
    %v631 = vor.u32 %v629, %v630
    %v632 = vshll.u32 2475754826, %v626
    %v633 = vshrl.u32 2131351028, %v627
    %v634 = vor.u32 %v632, %v633
    %v635 = vshll.u32 2131351028, %v626
    %v636 = vshrl.u32 2102212464, %v627
    %v637 = vor.u32 %v635, %v636
    %v638 = vshll.u32 2102212464, %v626
    %v639 = vshrl.u32 920167782, %v627
    %v640 = vor.u32 %v638, %v639
    %v641 = vshll.u32 920167782, %v626
    %v642 = vshrl.u32 1326507024, %v627
    %v643 = vor.u32 %v641, %v642
    %vm644 = vcmp.lt.s32.totalorder %v625, 1
    %vm645 = vcmp.lt.s32.totalorder %v625, 2
    %vm646 = vcmp.lt.s32.totalorder %v625, 3
    %vm647 = vcmp.lt.s32.totalorder %v625, 4
    %v648 = vsel %vm644, %v628, %v631
    %v649 = vsel %vm647, %v637, 2102212464
    %v650 = vsel %vm646, %v634, %v649
    %v651 = vsel %vm645, %v648, %v650
    %v652 = vsel %vm644, %v631, %v634
    %v653 = vsel %vm647, %v640, 920167782
    %v654 = vsel %vm646, %v637, %v653
    %v655 = vsel %vm645, %v652, %v654
    %v656 = vsel %vm644, %v634, %v637
    %v657 = vsel %vm647, %v643, 1326507024
    %v658 = vsel %vm646, %v640, %v657
    %v659 = vsel %vm645, %v656, %v658
    %v660 = vshll.u32 %v620, 8
    %v661 = vand.u32 %v660, 65535
    %v662 = vshrl.u32 %v660, 16
    %v663 = vand.u32 %v659, 65535
    %v664 = vshrl.u32 %v659, 16
    %v665 = vmul.u32 %v661, %v663
    %v666 = vmul.u32 %v661, %v664
    %v667 = vmul.u32 %v662, %v663
    %v668 = vmul.u32 %v662, %v664
    %v669 = vshll.u32 %v666, 16
    %v670 = vshrl.u32 %v666, 16
    %v671 = vshll.u32 %v667, 16
    %v672 = vshrl.u32 %v667, 16
    %vm673 = vc.u32 %v665, %v669
    %v674 = vsel %vm673, 1, 0
    %v675 = vadd.s32 %v665, %v669
    %v676 = vadd.s32 %v668, %v674
    %vm677 = vc.u32 %v675, %v671
    %v678 = vsel %vm677, 1, 0
    %v679 = vadd.s32 %v675, %v671
    %v680 = vadd.s32 %v676, %v678
    %v681 = vadd.s32 %v680, %v670
    %v682 = vadd.s32 %v681, %v672
    %v683 = vand.u32 %v660, 65535
    %v684 = vshrl.u32 %v660, 16
    %v685 = vand.u32 %v655, 65535
    %v686 = vshrl.u32 %v655, 16
    %v687 = vmul.u32 %v683, %v685
    %v688 = vmul.u32 %v683, %v686
    %v689 = vmul.u32 %v684, %v685
    %v690 = vmul.u32 %v684, %v686
    %v691 = vshll.u32 %v688, 16
    %v692 = vshrl.u32 %v688, 16
    %v693 = vshll.u32 %v689, 16
    %v694 = vshrl.u32 %v689, 16
    %vm695 = vc.u32 %v687, %v691
    %v696 = vsel %vm695, 1, 0
    %v697 = vadd.s32 %v687, %v691
    %v698 = vadd.s32 %v690, %v696
    %vm699 = vc.u32 %v697, %v693
    %v700 = vsel %vm699, 1, 0
    %v701 = vadd.s32 %v697, %v693
    %v702 = vadd.s32 %v698, %v700
    %v703 = vadd.s32 %v702, %v692
    %v704 = vadd.s32 %v703, %v694
    %v705 = vmul.u32 %v660, %v651
    %v706 = vadd.s32 %v682, %v701
    %vm707 = vc.u32 %v682, %v701
    %v708 = vadd.s32 %v704, 1
    %v709 = vsel %vm707, %v708, %v704
    %v710 = vadd.s32 %v705, %v709
    %v711 = vadd.s32 %v710, 536870912
    %v712 = vshrl.u32 %v711, 30
    %v713 = vshll.u32 %v712, 30
    %v714 = vsub.s32 %v710, %v713
    %vm715 = vcmp.lt.s32.totalorder %v714, 0
    %v716 = vsub.s32 0, %v714
    %v717 = vsel %vm715, %v716, %v714
    %v718 = vclz %v717
    %v719 = vsub.s32 %v718, 2
    %vm720 = vcmp.gt.s32.totalorder 0, %v719
    %v721 = vsel %vm720, 0, %v719
    %v722 = vsub.s32 32, %v721
    %v723 = vshll.u32 %v714, %v721
    %v724 = vshrl.u32 %v706, %v722
    %v725 = vor.u32 %v723, %v724
    %v726 = vsub.s32 4294967266, %v721
    %v727 = vadd.s32 %v726, 127
    %v728 = vshll.u32 %v727, 23
    %v729 = vor.u32 4788187, %v728
    %v730 = vand.u32 2147483647, %v729
    %v732 = vcvt.s32.f32 %v725
    %v733 = vmul.f32 %v732, %v730
    %v734 = vxor.u32 %v733, 2147483648
    %v735 = vsel %vm614, %v734, %v733
    %v736 = vsub.s32 4, %v712
    %v737 = vsel %vm614, %v736, %v712
    %v738 = vsel %vm613, %v142, %v735
    %v739 = vsel %vm613, 0, %v737
    %v740 = vmul.f32 %v738, %v738
    %v741 = vmul.f32 %v740, -0.001358992
    %v742 = vadd.f32 %v741, 0.041655596
    %v743 = vmul.f32 %v740, %v742
    %v744 = vadd.f32 %v743, -0.4999988
    %v745 = vmul.f32 %v740, %v744
    %v746 = vadd.f32 1.0, %v745
    %v747 = vmul.f32 %v738, %v738
    %v748 = vmul.f32 %v747, -0.00019511016
    %v749 = vadd.f32 %v748, 0.008332121
    %v750 = vmul.f32 %v747, %v749
    %v751 = vadd.f32 %v750, -0.16666654
    %v752 = vmul.f32 %v747, %v751
    %v753 = vadd.f32 %v752, 1.0
    %v754 = vmul.f32 %v753, %v738
    %vm755 = vweird.f32 %v142
    %v756 = vadd.s32 %v739, 3
    %v757 = vand.u32 %v756, 3
    %vm758 = vcmp.lt.s32.totalorder %v757, 2
    %vm759 = vcmp.eq.s32.totalorder %v757, 0
    %v760 = vxor.u32 %v754, 2147483648
    %v761 = vsel %vm759, %v746, %v760
    %vm762 = vcmp.eq.s32.totalorder %v757, 2
    %v763 = vxor.u32 %v746, 2147483648
    %v764 = vsel %vm762, %v763, %v754
    %v765 = vsel %vm758, %v761, %v764
    %v766 = vsel %vm755, nan, %v765
    %v767 = vand.u32 2147483647, %v143
    %vm768 = vcmp.le.f32.partialorder %v767, 0.7853982
    %vm769 = vcmp.lt.s32.totalorder %v143, 0
    %v770 = vand.u32 %v143, 2139095040
    %v771 = vshrl.u32 %v770, 23
    %v772 = vsub.s32 %v771, 127
    %v773 = vand.u32 2147483647, %v143
    %v774 = vand.u32 %v773, 8388607
    %v775 = vor.u32 %v774, 8388608
    %v776 = vsub.s32 0, %v775
    %v777 = vadd.s32 %v772, 1
    %vm778 = vcmp.gt.s32.totalorder %v777, 0
    %v779 = vsel %vm778, %v777, 0
    %v780 = vshrl.u32 %v779, 5
    %v781 = vand.u32 %v779, 31
    %v782 = vsub.s32 32, %v781
    %v783 = vshrl.u32 683565275, %v782
    %v784 = vshll.u32 683565275, %v781
    %v785 = vshrl.u32 2475754826, %v782
    %v786 = vor.u32 %v784, %v785
    %v787 = vshll.u32 2475754826, %v781
    %v788 = vshrl.u32 2131351028, %v782
    %v789 = vor.u32 %v787, %v788
    %v790 = vshll.u32 2131351028, %v781
    %v791 = vshrl.u32 2102212464, %v782
    %v792 = vor.u32 %v790, %v791
    %v793 = vshll.u32 2102212464, %v781
    %v794 = vshrl.u32 920167782, %v782
    %v795 = vor.u32 %v793, %v794
    %v796 = vshll.u32 920167782, %v781
    %v797 = vshrl.u32 1326507024, %v782
    %v798 = vor.u32 %v796, %v797
    %vm799 = vcmp.lt.s32.totalorder %v780, 1
    %vm800 = vcmp.lt.s32.totalorder %v780, 2
    %vm801 = vcmp.lt.s32.totalorder %v780, 3
    %vm802 = vcmp.lt.s32.totalorder %v780, 4
    %v803 = vsel %vm799, %v783, %v786
    %v804 = vsel %vm802, %v792, 2102212464
    %v805 = vsel %vm801, %v789, %v804
    %v806 = vsel %vm800, %v803, %v805
    %v807 = vsel %vm799, %v786, %v789
    %v808 = vsel %vm802, %v795, 920167782
    %v809 = vsel %vm801, %v792, %v808
    %v810 = vsel %vm800, %v807, %v809
    %v811 = vsel %vm799, %v789, %v792
    %v812 = vsel %vm802, %v798, 1326507024
    %v813 = vsel %vm801, %v795, %v812
    %v814 = vsel %vm800, %v811, %v813
    %v815 = vshll.u32 %v775, 8
    %v816 = vand.u32 %v815, 65535
    %v817 = vshrl.u32 %v815, 16
    %v818 = vand.u32 %v814, 65535
    %v819 = vshrl.u32 %v814, 16
    %v820 = vmul.u32 %v816, %v818
    %v821 = vmul.u32 %v816, %v819
    %v822 = vmul.u32 %v817, %v818
    %v823 = vmul.u32 %v817, %v819
    %v824 = vshll.u32 %v821, 16
    %v825 = vshrl.u32 %v821, 16
    %v826 = vshll.u32 %v822, 16
    %v827 = vshrl.u32 %v822, 16
    %vm828 = vc.u32 %v820, %v824
    %v829 = vsel %vm828, 1, 0
    %v830 = vadd.s32 %v820, %v824
    %v831 = vadd.s32 %v823, %v829
    %vm832 = vc.u32 %v830, %v826
    %v833 = vsel %vm832, 1, 0
    %v834 = vadd.s32 %v830, %v826
    %v835 = vadd.s32 %v831, %v833
    %v836 = vadd.s32 %v835, %v825
    %v837 = vadd.s32 %v836, %v827
    %v838 = vand.u32 %v815, 65535
    %v839 = vshrl.u32 %v815, 16
    %v840 = vand.u32 %v810, 65535
    %v841 = vshrl.u32 %v810, 16
    %v842 = vmul.u32 %v838, %v840
    %v843 = vmul.u32 %v838, %v841
    %v844 = vmul.u32 %v839, %v840
    %v845 = vmul.u32 %v839, %v841
    %v846 = vshll.u32 %v843, 16
    %v847 = vshrl.u32 %v843, 16
    %v848 = vshll.u32 %v844, 16
    %v849 = vshrl.u32 %v844, 16
    %vm850 = vc.u32 %v842, %v846
    %v851 = vsel %vm850, 1, 0
    %v852 = vadd.s32 %v842, %v846
    %v853 = vadd.s32 %v845, %v851
    %vm854 = vc.u32 %v852, %v848
    %v855 = vsel %vm854, 1, 0
    %v856 = vadd.s32 %v852, %v848
    %v857 = vadd.s32 %v853, %v855
    %v858 = vadd.s32 %v857, %v847
    %v859 = vadd.s32 %v858, %v849
    %v860 = vmul.u32 %v815, %v806
    %v861 = vadd.s32 %v837, %v856
    %vm862 = vc.u32 %v837, %v856
    %v863 = vadd.s32 %v859, 1
    %v864 = vsel %vm862, %v863, %v859
    %v865 = vadd.s32 %v860, %v864
    %v866 = vadd.s32 %v865, 536870912
    %v867 = vshrl.u32 %v866, 30
    %v868 = vshll.u32 %v867, 30
    %v869 = vsub.s32 %v865, %v868
    %vm870 = vcmp.lt.s32.totalorder %v869, 0
    %v871 = vsub.s32 0, %v869
    %v872 = vsel %vm870, %v871, %v869
    %v873 = vclz %v872
    %v874 = vsub.s32 %v873, 2
    %vm875 = vcmp.gt.s32.totalorder 0, %v874
    %v876 = vsel %vm875, 0, %v874
    %v877 = vsub.s32 32, %v876
    %v878 = vshll.u32 %v869, %v876
    %v879 = vshrl.u32 %v861, %v877
    %v880 = vor.u32 %v878, %v879
    %v881 = vsub.s32 4294967266, %v876
    %v882 = vadd.s32 %v881, 127
    %v883 = vshll.u32 %v882, 23
    %v884 = vor.u32 4788187, %v883
    %v885 = vand.u32 2147483647, %v884
    %v887 = vcvt.s32.f32 %v880
    %v888 = vmul.f32 %v887, %v885
    %v889 = vxor.u32 %v888, 2147483648
    %v890 = vsel %vm769, %v889, %v888
    %v891 = vsub.s32 4, %v867
    %v892 = vsel %vm769, %v891, %v867
    %v893 = vsel %vm768, %v143, %v890
    %v894 = vsel %vm768, 0, %v892
    %v895 = vmul.f32 %v893, %v893
    %v896 = vmul.f32 %v895, -0.001358992
    %v897 = vadd.f32 %v896, 0.041655596
    %v898 = vmul.f32 %v895, %v897
    %v899 = vadd.f32 %v898, -0.4999988
    %v900 = vmul.f32 %v895, %v899
    %v901 = vadd.f32 1.0, %v900
    %v902 = vmul.f32 %v893, %v893
    %v903 = vmul.f32 %v902, -0.00019511016
    %v904 = vadd.f32 %v903, 0.008332121
    %v905 = vmul.f32 %v902, %v904
    %v906 = vadd.f32 %v905, -0.16666654
    %v907 = vmul.f32 %v902, %v906
    %v908 = vadd.f32 %v907, 1.0
    %v909 = vmul.f32 %v908, %v893
    %vm910 = vweird.f32 %v143
    %v911 = vadd.s32 %v894, 3
    %v912 = vand.u32 %v911, 3
    %vm913 = vcmp.lt.s32.totalorder %v912, 2
    %vm914 = vcmp.eq.s32.totalorder %v912, 0
    %v915 = vxor.u32 %v909, 2147483648
    %v916 = vsel %vm914, %v901, %v915
    %vm917 = vcmp.eq.s32.totalorder %v912, 2
    %v918 = vxor.u32 %v901, 2147483648
    %v919 = vsel %vm917, %v918, %v909
    %v920 = vsel %vm913, %v916, %v919
    %v921 = vsel %vm910, nan, %v920
    %v922 = vand.u32 2147483647, %v144
    %vm923 = vcmp.le.f32.partialorder %v922, 0.7853982
    %vm924 = vcmp.lt.s32.totalorder %v144, 0
    %v925 = vand.u32 %v144, 2139095040
    %v926 = vshrl.u32 %v925, 23
    %v927 = vsub.s32 %v926, 127
    %v928 = vand.u32 2147483647, %v144
    %v929 = vand.u32 %v928, 8388607
    %v930 = vor.u32 %v929, 8388608
    %v931 = vsub.s32 0, %v930
    %v932 = vadd.s32 %v927, 1
    %vm933 = vcmp.gt.s32.totalorder %v932, 0
    %v934 = vsel %vm933, %v932, 0
    %v935 = vshrl.u32 %v934, 5
    %v936 = vand.u32 %v934, 31
    %v937 = vsub.s32 32, %v936
    %v938 = vshrl.u32 683565275, %v937
    %v939 = vshll.u32 683565275, %v936
    %v940 = vshrl.u32 2475754826, %v937
    %v941 = vor.u32 %v939, %v940
    %v942 = vshll.u32 2475754826, %v936
    %v943 = vshrl.u32 2131351028, %v937
    %v944 = vor.u32 %v942, %v943
    %v945 = vshll.u32 2131351028, %v936
    %v946 = vshrl.u32 2102212464, %v937
    %v947 = vor.u32 %v945, %v946
    %v948 = vshll.u32 2102212464, %v936
    %v949 = vshrl.u32 920167782, %v937
    %v950 = vor.u32 %v948, %v949
    %v951 = vshll.u32 920167782, %v936
    %v952 = vshrl.u32 1326507024, %v937
    %v953 = vor.u32 %v951, %v952
    %vm954 = vcmp.lt.s32.totalorder %v935, 1
    %vm955 = vcmp.lt.s32.totalorder %v935, 2
    %vm956 = vcmp.lt.s32.totalorder %v935, 3
    %vm957 = vcmp.lt.s32.totalorder %v935, 4
    %v958 = vsel %vm954, %v938, %v941
    %v959 = vsel %vm957, %v947, 2102212464
    %v960 = vsel %vm956, %v944, %v959
    %v961 = vsel %vm955, %v958, %v960
    %v962 = vsel %vm954, %v941, %v944
    %v963 = vsel %vm957, %v950, 920167782
    %v964 = vsel %vm956, %v947, %v963
    %v965 = vsel %vm955, %v962, %v964
    %v966 = vsel %vm954, %v944, %v947
    %v967 = vsel %vm957, %v953, 1326507024
    %v968 = vsel %vm956, %v950, %v967
    %v969 = vsel %vm955, %v966, %v968
    %v970 = vshll.u32 %v930, 8
    %v971 = vand.u32 %v970, 65535
    %v972 = vshrl.u32 %v970, 16
    %v973 = vand.u32 %v969, 65535
    %v974 = vshrl.u32 %v969, 16
    %v975 = vmul.u32 %v971, %v973
    %v976 = vmul.u32 %v971, %v974
    %v977 = vmul.u32 %v972, %v973
    %v978 = vmul.u32 %v972, %v974
    %v979 = vshll.u32 %v976, 16
    %v980 = vshrl.u32 %v976, 16
    %v981 = vshll.u32 %v977, 16
    %v982 = vshrl.u32 %v977, 16
    %vm983 = vc.u32 %v975, %v979
    %v984 = vsel %vm983, 1, 0
    %v985 = vadd.s32 %v975, %v979
    %v986 = vadd.s32 %v978, %v984
    %vm987 = vc.u32 %v985, %v981
    %v988 = vsel %vm987, 1, 0
    %v989 = vadd.s32 %v985, %v981
    %v990 = vadd.s32 %v986, %v988
    %v991 = vadd.s32 %v990, %v980
    %v992 = vadd.s32 %v991, %v982
    %v993 = vand.u32 %v970, 65535
    %v994 = vshrl.u32 %v970, 16
    %v995 = vand.u32 %v965, 65535
    %v996 = vshrl.u32 %v965, 16
    %v997 = vmul.u32 %v993, %v995
    %v998 = vmul.u32 %v993, %v996
    %v999 = vmul.u32 %v994, %v995
    %v1000 = vmul.u32 %v994, %v996
    %v1001 = vshll.u32 %v998, 16
    %v1002 = vshrl.u32 %v998, 16
    %v1003 = vshll.u32 %v999, 16
    %v1004 = vshrl.u32 %v999, 16
    %vm1005 = vc.u32 %v997, %v1001
    %v1006 = vsel %vm1005, 1, 0
    %v1007 = vadd.s32 %v997, %v1001
    %v1008 = vadd.s32 %v1000, %v1006
    %vm1009 = vc.u32 %v1007, %v1003
    %v1010 = vsel %vm1009, 1, 0
    %v1011 = vadd.s32 %v1007, %v1003
    %v1012 = vadd.s32 %v1008, %v1010
    %v1013 = vadd.s32 %v1012, %v1002
    %v1014 = vadd.s32 %v1013, %v1004
    %v1015 = vmul.u32 %v970, %v961
    %v1016 = vadd.s32 %v992, %v1011
    %vm1017 = vc.u32 %v992, %v1011
    %v1018 = vadd.s32 %v1014, 1
    %v1019 = vsel %vm1017, %v1018, %v1014
    %v1020 = vadd.s32 %v1015, %v1019
    %v1021 = vadd.s32 %v1020, 536870912
    %v1022 = vshrl.u32 %v1021, 30
    %v1023 = vshll.u32 %v1022, 30
    %v1024 = vsub.s32 %v1020, %v1023
    %vm1025 = vcmp.lt.s32.totalorder %v1024, 0
    %v1026 = vsub.s32 0, %v1024
    %v1027 = vsel %vm1025, %v1026, %v1024
    %v1028 = vclz %v1027
    %v1029 = vsub.s32 %v1028, 2
    %vm1030 = vcmp.gt.s32.totalorder 0, %v1029
    %v1031 = vsel %vm1030, 0, %v1029
    %v1032 = vsub.s32 32, %v1031
    %v1033 = vshll.u32 %v1024, %v1031
    %v1034 = vshrl.u32 %v1016, %v1032
    %v1035 = vor.u32 %v1033, %v1034
    %v1036 = vsub.s32 4294967266, %v1031
    %v1037 = vadd.s32 %v1036, 127
    %v1038 = vshll.u32 %v1037, 23
    %v1039 = vor.u32 4788187, %v1038
    %v1040 = vand.u32 2147483647, %v1039
    %v1042 = vcvt.s32.f32 %v1035
    %v1043 = vmul.f32 %v1042, %v1040
    %v1044 = vxor.u32 %v1043, 2147483648
    %v1045 = vsel %vm924, %v1044, %v1043
    %v1046 = vsub.s32 4, %v1022
    %v1047 = vsel %vm924, %v1046, %v1022
    %v1048 = vsel %vm923, %v144, %v1045
    %v1049 = vsel %vm923, 0, %v1047
    %v1050 = vmul.f32 %v1048, %v1048
    %v1051 = vmul.f32 %v1050, -0.001358992
    %v1052 = vadd.f32 %v1051, 0.041655596
    %v1053 = vmul.f32 %v1050, %v1052
    %v1054 = vadd.f32 %v1053, -0.4999988
    %v1055 = vmul.f32 %v1050, %v1054
    %v1056 = vadd.f32 1.0, %v1055
    %v1057 = vmul.f32 %v1048, %v1048
    %v1058 = vmul.f32 %v1057, -0.00019511016
    %v1059 = vadd.f32 %v1058, 0.008332121
    %v1060 = vmul.f32 %v1057, %v1059
    %v1061 = vadd.f32 %v1060, -0.16666654
    %v1062 = vmul.f32 %v1057, %v1061
    %v1063 = vadd.f32 %v1062, 1.0
    %v1064 = vmul.f32 %v1063, %v1048
    %vm1065 = vweird.f32 %v144
    %v1066 = vadd.s32 %v1049, 3
    %v1067 = vand.u32 %v1066, 3
    %vm1068 = vcmp.lt.s32.totalorder %v1067, 2
    %vm1069 = vcmp.eq.s32.totalorder %v1067, 0
    %v1070 = vxor.u32 %v1064, 2147483648
    %v1071 = vsel %vm1069, %v1056, %v1070
    %vm1072 = vcmp.eq.s32.totalorder %v1067, 2
    %v1073 = vxor.u32 %v1056, 2147483648
    %v1074 = vsel %vm1072, %v1073, %v1064
    %v1075 = vsel %vm1068, %v1071, %v1074
    %v1076 = vsel %vm1065, nan, %v1075
    %v1077 = vand.u32 2147483647, %v145
    %vm1078 = vcmp.le.f32.partialorder %v1077, 0.7853982
    %vm1079 = vcmp.lt.s32.totalorder %v145, 0
    %v1080 = vand.u32 %v145, 2139095040
    %v1081 = vshrl.u32 %v1080, 23
    %v1082 = vsub.s32 %v1081, 127
    %v1083 = vand.u32 2147483647, %v145
    %v1084 = vand.u32 %v1083, 8388607
    %v1085 = vor.u32 %v1084, 8388608
    %v1086 = vsub.s32 0, %v1085
    %v1087 = vadd.s32 %v1082, 1
    %vm1088 = vcmp.gt.s32.totalorder %v1087, 0
    %v1089 = vsel %vm1088, %v1087, 0
    %v1090 = vshrl.u32 %v1089, 5
    %v1091 = vand.u32 %v1089, 31
    %v1092 = vsub.s32 32, %v1091
    %v1093 = vshrl.u32 683565275, %v1092
    %v1094 = vshll.u32 683565275, %v1091
    %v1095 = vshrl.u32 2475754826, %v1092
    %v1096 = vor.u32 %v1094, %v1095
    %v1097 = vshll.u32 2475754826, %v1091
    %v1098 = vshrl.u32 2131351028, %v1092
    %v1099 = vor.u32 %v1097, %v1098
    %v1100 = vshll.u32 2131351028, %v1091
    %v1101 = vshrl.u32 2102212464, %v1092
    %v1102 = vor.u32 %v1100, %v1101
    %v1103 = vshll.u32 2102212464, %v1091
    %v1104 = vshrl.u32 920167782, %v1092
    %v1105 = vor.u32 %v1103, %v1104
    %v1106 = vshll.u32 920167782, %v1091
    %v1107 = vshrl.u32 1326507024, %v1092
    %v1108 = vor.u32 %v1106, %v1107
    %vm1109 = vcmp.lt.s32.totalorder %v1090, 1
    %vm1110 = vcmp.lt.s32.totalorder %v1090, 2
    %vm1111 = vcmp.lt.s32.totalorder %v1090, 3
    %vm1112 = vcmp.lt.s32.totalorder %v1090, 4
    %v1113 = vsel %vm1109, %v1093, %v1096
    %v1114 = vsel %vm1112, %v1102, 2102212464
    %v1115 = vsel %vm1111, %v1099, %v1114
    %v1116 = vsel %vm1110, %v1113, %v1115
    %v1117 = vsel %vm1109, %v1096, %v1099
    %v1118 = vsel %vm1112, %v1105, 920167782
    %v1119 = vsel %vm1111, %v1102, %v1118
    %v1120 = vsel %vm1110, %v1117, %v1119
    %v1121 = vsel %vm1109, %v1099, %v1102
    %v1122 = vsel %vm1112, %v1108, 1326507024
    %v1123 = vsel %vm1111, %v1105, %v1122
    %v1124 = vsel %vm1110, %v1121, %v1123
    %v1125 = vshll.u32 %v1085, 8
    %v1126 = vand.u32 %v1125, 65535
    %v1127 = vshrl.u32 %v1125, 16
    %v1128 = vand.u32 %v1124, 65535
    %v1129 = vshrl.u32 %v1124, 16
    %v1130 = vmul.u32 %v1126, %v1128
    %v1131 = vmul.u32 %v1126, %v1129
    %v1132 = vmul.u32 %v1127, %v1128
    %v1133 = vmul.u32 %v1127, %v1129
    %v1134 = vshll.u32 %v1131, 16
    %v1135 = vshrl.u32 %v1131, 16
    %v1136 = vshll.u32 %v1132, 16
    %v1137 = vshrl.u32 %v1132, 16
    %vm1138 = vc.u32 %v1130, %v1134
    %v1139 = vsel %vm1138, 1, 0
    %v1140 = vadd.s32 %v1130, %v1134
    %v1141 = vadd.s32 %v1133, %v1139
    %vm1142 = vc.u32 %v1140, %v1136
    %v1143 = vsel %vm1142, 1, 0
    %v1144 = vadd.s32 %v1140, %v1136
    %v1145 = vadd.s32 %v1141, %v1143
    %v1146 = vadd.s32 %v1145, %v1135
    %v1147 = vadd.s32 %v1146, %v1137
    %v1148 = vand.u32 %v1125, 65535
    %v1149 = vshrl.u32 %v1125, 16
    %v1150 = vand.u32 %v1120, 65535
    %v1151 = vshrl.u32 %v1120, 16
    %v1152 = vmul.u32 %v1148, %v1150
    %v1153 = vmul.u32 %v1148, %v1151
    %v1154 = vmul.u32 %v1149, %v1150
    %v1155 = vmul.u32 %v1149, %v1151
    %v1156 = vshll.u32 %v1153, 16
    %v1157 = vshrl.u32 %v1153, 16
    %v1158 = vshll.u32 %v1154, 16
    %v1159 = vshrl.u32 %v1154, 16
    %vm1160 = vc.u32 %v1152, %v1156
    %v1161 = vsel %vm1160, 1, 0
    %v1162 = vadd.s32 %v1152, %v1156
    %v1163 = vadd.s32 %v1155, %v1161
    %vm1164 = vc.u32 %v1162, %v1158
    %v1165 = vsel %vm1164, 1, 0
    %v1166 = vadd.s32 %v1162, %v1158
    %v1167 = vadd.s32 %v1163, %v1165
    %v1168 = vadd.s32 %v1167, %v1157
    %v1169 = vadd.s32 %v1168, %v1159
    %v1170 = vmul.u32 %v1125, %v1116
    %v1171 = vadd.s32 %v1147, %v1166
    %vm1172 = vc.u32 %v1147, %v1166
    %v1173 = vadd.s32 %v1169, 1
    %v1174 = vsel %vm1172, %v1173, %v1169
    %v1175 = vadd.s32 %v1170, %v1174
    %v1176 = vadd.s32 %v1175, 536870912
    %v1177 = vshrl.u32 %v1176, 30
    %v1178 = vshll.u32 %v1177, 30
    %v1179 = vsub.s32 %v1175, %v1178
    %vm1180 = vcmp.lt.s32.totalorder %v1179, 0
    %v1181 = vsub.s32 0, %v1179
    %v1182 = vsel %vm1180, %v1181, %v1179
    %v1183 = vclz %v1182
    %v1184 = vsub.s32 %v1183, 2
    %vm1185 = vcmp.gt.s32.totalorder 0, %v1184
    %v1186 = vsel %vm1185, 0, %v1184
    %v1187 = vsub.s32 32, %v1186
    %v1188 = vshll.u32 %v1179, %v1186
    %v1189 = vshrl.u32 %v1171, %v1187
    %v1190 = vor.u32 %v1188, %v1189
    %v1191 = vsub.s32 4294967266, %v1186
    %v1192 = vadd.s32 %v1191, 127
    %v1193 = vshll.u32 %v1192, 23
    %v1194 = vor.u32 4788187, %v1193
    %v1195 = vand.u32 2147483647, %v1194
    %v1197 = vcvt.s32.f32 %v1190
    %v1198 = vmul.f32 %v1197, %v1195
    %v1199 = vxor.u32 %v1198, 2147483648
    %v1200 = vsel %vm1079, %v1199, %v1198
    %v1201 = vsub.s32 4, %v1177
    %v1202 = vsel %vm1079, %v1201, %v1177
    %v1203 = vsel %vm1078, %v145, %v1200
    %v1204 = vsel %vm1078, 0, %v1202
    %v1205 = vmul.f32 %v1203, %v1203
    %v1206 = vmul.f32 %v1205, -0.001358992
    %v1207 = vadd.f32 %v1206, 0.041655596
    %v1208 = vmul.f32 %v1205, %v1207
    %v1209 = vadd.f32 %v1208, -0.4999988
    %v1210 = vmul.f32 %v1205, %v1209
    %v1211 = vadd.f32 1.0, %v1210
    %v1212 = vmul.f32 %v1203, %v1203
    %v1213 = vmul.f32 %v1212, -0.00019511016
    %v1214 = vadd.f32 %v1213, 0.008332121
    %v1215 = vmul.f32 %v1212, %v1214
    %v1216 = vadd.f32 %v1215, -0.16666654
    %v1217 = vmul.f32 %v1212, %v1216
    %v1218 = vadd.f32 %v1217, 1.0
    %v1219 = vmul.f32 %v1218, %v1203
    %vm1220 = vweird.f32 %v145
    %v1221 = vadd.s32 %v1204, 3
    %v1222 = vand.u32 %v1221, 3
    %vm1223 = vcmp.lt.s32.totalorder %v1222, 2
    %vm1224 = vcmp.eq.s32.totalorder %v1222, 0
    %v1225 = vxor.u32 %v1219, 2147483648
    %v1226 = vsel %vm1224, %v1211, %v1225
    %vm1227 = vcmp.eq.s32.totalorder %v1222, 2
    %v1228 = vxor.u32 %v1211, 2147483648
    %v1229 = vsel %vm1227, %v1228, %v1219
    %v1230 = vsel %vm1223, %v1226, %v1229
    %v1231 = vsel %vm1220, nan, %v1230
    %v1232 = vand.u32 2147483647, %v146
    %vm1233 = vcmp.le.f32.partialorder %v1232, 0.7853982
    %vm1234 = vcmp.lt.s32.totalorder %v146, 0
    %v1235 = vand.u32 %v146, 2139095040
    %v1236 = vshrl.u32 %v1235, 23
    %v1237 = vsub.s32 %v1236, 127
    %v1238 = vand.u32 2147483647, %v146
    %v1239 = vand.u32 %v1238, 8388607
    %v1240 = vor.u32 %v1239, 8388608
    %v1241 = vsub.s32 0, %v1240
    %v1242 = vadd.s32 %v1237, 1
    %vm1243 = vcmp.gt.s32.totalorder %v1242, 0
    %v1244 = vsel %vm1243, %v1242, 0
    %v1245 = vshrl.u32 %v1244, 5
    %v1246 = vand.u32 %v1244, 31
    %v1247 = vsub.s32 32, %v1246
    %v1248 = vshrl.u32 683565275, %v1247
    %v1249 = vshll.u32 683565275, %v1246
    %v1250 = vshrl.u32 2475754826, %v1247
    %v1251 = vor.u32 %v1249, %v1250
    %v1252 = vshll.u32 2475754826, %v1246
    %v1253 = vshrl.u32 2131351028, %v1247
    %v1254 = vor.u32 %v1252, %v1253
    %v1255 = vshll.u32 2131351028, %v1246
    %v1256 = vshrl.u32 2102212464, %v1247
    %v1257 = vor.u32 %v1255, %v1256
    %v1258 = vshll.u32 2102212464, %v1246
    %v1259 = vshrl.u32 920167782, %v1247
    %v1260 = vor.u32 %v1258, %v1259
    %v1261 = vshll.u32 920167782, %v1246
    %v1262 = vshrl.u32 1326507024, %v1247
    %v1263 = vor.u32 %v1261, %v1262
    %vm1264 = vcmp.lt.s32.totalorder %v1245, 1
    %vm1265 = vcmp.lt.s32.totalorder %v1245, 2
    %vm1266 = vcmp.lt.s32.totalorder %v1245, 3
    %vm1267 = vcmp.lt.s32.totalorder %v1245, 4
    %v1268 = vsel %vm1264, %v1248, %v1251
    %v1269 = vsel %vm1267, %v1257, 2102212464
    %v1270 = vsel %vm1266, %v1254, %v1269
    %v1271 = vsel %vm1265, %v1268, %v1270
    %v1272 = vsel %vm1264, %v1251, %v1254
    %v1273 = vsel %vm1267, %v1260, 920167782
    %v1274 = vsel %vm1266, %v1257, %v1273
    %v1275 = vsel %vm1265, %v1272, %v1274
    %v1276 = vsel %vm1264, %v1254, %v1257
    %v1277 = vsel %vm1267, %v1263, 1326507024
    %v1278 = vsel %vm1266, %v1260, %v1277
    %v1279 = vsel %vm1265, %v1276, %v1278
    %v1280 = vshll.u32 %v1240, 8
    %v1281 = vand.u32 %v1280, 65535
    %v1282 = vshrl.u32 %v1280, 16
    %v1283 = vand.u32 %v1279, 65535
    %v1284 = vshrl.u32 %v1279, 16
    %v1285 = vmul.u32 %v1281, %v1283
    %v1286 = vmul.u32 %v1281, %v1284
    %v1287 = vmul.u32 %v1282, %v1283
    %v1288 = vmul.u32 %v1282, %v1284
    %v1289 = vshll.u32 %v1286, 16
    %v1290 = vshrl.u32 %v1286, 16
    %v1291 = vshll.u32 %v1287, 16
    %v1292 = vshrl.u32 %v1287, 16
    %vm1293 = vc.u32 %v1285, %v1289
    %v1294 = vsel %vm1293, 1, 0
    %v1295 = vadd.s32 %v1285, %v1289
    %v1296 = vadd.s32 %v1288, %v1294
    %vm1297 = vc.u32 %v1295, %v1291
    %v1298 = vsel %vm1297, 1, 0
    %v1299 = vadd.s32 %v1295, %v1291
    %v1300 = vadd.s32 %v1296, %v1298
    %v1301 = vadd.s32 %v1300, %v1290
    %v1302 = vadd.s32 %v1301, %v1292
    %v1303 = vand.u32 %v1280, 65535
    %v1304 = vshrl.u32 %v1280, 16
    %v1305 = vand.u32 %v1275, 65535
    %v1306 = vshrl.u32 %v1275, 16
    %v1307 = vmul.u32 %v1303, %v1305
    %v1308 = vmul.u32 %v1303, %v1306
    %v1309 = vmul.u32 %v1304, %v1305
    %v1310 = vmul.u32 %v1304, %v1306
    %v1311 = vshll.u32 %v1308, 16
    %v1312 = vshrl.u32 %v1308, 16
    %v1313 = vshll.u32 %v1309, 16
    %v1314 = vshrl.u32 %v1309, 16
    %vm1315 = vc.u32 %v1307, %v1311
    %v1316 = vsel %vm1315, 1, 0
    %v1317 = vadd.s32 %v1307, %v1311
    %v1318 = vadd.s32 %v1310, %v1316
    %vm1319 = vc.u32 %v1317, %v1313
    %v1320 = vsel %vm1319, 1, 0
    %v1321 = vadd.s32 %v1317, %v1313
    %v1322 = vadd.s32 %v1318, %v1320
    %v1323 = vadd.s32 %v1322, %v1312
    %v1324 = vadd.s32 %v1323, %v1314
    %v1325 = vmul.u32 %v1280, %v1271
    %v1326 = vadd.s32 %v1302, %v1321
    %vm1327 = vc.u32 %v1302, %v1321
    %v1328 = vadd.s32 %v1324, 1
    %v1329 = vsel %vm1327, %v1328, %v1324
    %v1330 = vadd.s32 %v1325, %v1329
    %v1331 = vadd.s32 %v1330, 536870912
    %v1332 = vshrl.u32 %v1331, 30
    %v1333 = vshll.u32 %v1332, 30
    %v1334 = vsub.s32 %v1330, %v1333
    %vm1335 = vcmp.lt.s32.totalorder %v1334, 0
    %v1336 = vsub.s32 0, %v1334
    %v1337 = vsel %vm1335, %v1336, %v1334
    %v1338 = vclz %v1337
    %v1339 = vsub.s32 %v1338, 2
    %vm1340 = vcmp.gt.s32.totalorder 0, %v1339
    %v1341 = vsel %vm1340, 0, %v1339
    %v1342 = vsub.s32 32, %v1341
    %v1343 = vshll.u32 %v1334, %v1341
    %v1344 = vshrl.u32 %v1326, %v1342
    %v1345 = vor.u32 %v1343, %v1344
    %v1346 = vsub.s32 4294967266, %v1341
    %v1347 = vadd.s32 %v1346, 127
    %v1348 = vshll.u32 %v1347, 23
    %v1349 = vor.u32 4788187, %v1348
    %v1350 = vand.u32 2147483647, %v1349
    %v1352 = vcvt.s32.f32 %v1345
    %v1353 = vmul.f32 %v1352, %v1350
    %v1354 = vxor.u32 %v1353, 2147483648
    %v1355 = vsel %vm1234, %v1354, %v1353
    %v1356 = vsub.s32 4, %v1332
    %v1357 = vsel %vm1234, %v1356, %v1332
    %v1358 = vsel %vm1233, %v146, %v1355
    %v1359 = vsel %vm1233, 0, %v1357
    %v1360 = vmul.f32 %v1358, %v1358
    %v1361 = vmul.f32 %v1360, -0.001358992
    %v1362 = vadd.f32 %v1361, 0.041655596
    %v1363 = vmul.f32 %v1360, %v1362
    %v1364 = vadd.f32 %v1363, -0.4999988
    %v1365 = vmul.f32 %v1360, %v1364
    %v1366 = vadd.f32 1.0, %v1365
    %v1367 = vmul.f32 %v1358, %v1358
    %v1368 = vmul.f32 %v1367, -0.00019511016
    %v1369 = vadd.f32 %v1368, 0.008332121
    %v1370 = vmul.f32 %v1367, %v1369
    %v1371 = vadd.f32 %v1370, -0.16666654
    %v1372 = vmul.f32 %v1367, %v1371
    %v1373 = vadd.f32 %v1372, 1.0
    %v1374 = vmul.f32 %v1373, %v1358
    %vm1375 = vweird.f32 %v146
    %v1376 = vadd.s32 %v1359, 3
    %v1377 = vand.u32 %v1376, 3
    %vm1378 = vcmp.lt.s32.totalorder %v1377, 2
    %vm1379 = vcmp.eq.s32.totalorder %v1377, 0
    %v1380 = vxor.u32 %v1374, 2147483648
    %v1381 = vsel %vm1379, %v1366, %v1380
    %vm1382 = vcmp.eq.s32.totalorder %v1377, 2
    %v1383 = vxor.u32 %v1366, 2147483648
    %v1384 = vsel %vm1382, %v1383, %v1374
    %v1385 = vsel %vm1378, %v1381, %v1384
    %v1386 = vsel %vm1375, nan, %v1385
    %v1387 = vld [vmem:[%s3] sm:$0xff]
    %v1388 = vld [vmem:[%s3 + $0x8] sm:$0xff]
    %v1389 = vld [vmem:[%s3 + $0x10] sm:$0xff]
    %v1390 = vld [vmem:[%s3 + $0x18] sm:$0xff]
    %v1391 = vld [vmem:[%s4] sm:$0xff]
    %v1392 = vld [vmem:[%s4 + $0x8] sm:$0xff]
    %v1393 = vld [vmem:[%s4 + $0x10] sm:$0xff]
    %v1394 = vld [vmem:[%s4 + $0x18] sm:$0xff]
    %1396 = vset.pattern.permute.xlu0 0
    %1397 = vperm.xlu0 %1396, %v1391
    %v1398 = vpop.permute.xlu0 %1397
    %1401 = vset.pattern.permute.xlu0 0
    %1402 = vperm.xlu0 %1401, %v1392
    %v1403 = vpop.permute.xlu0 %1402
    %1406 = vset.pattern.permute.xlu0 0
    %1407 = vperm.xlu0 %1406, %v1393
    %v1408 = vpop.permute.xlu0 %1407
    %1411 = vset.pattern.permute.xlu0 0
    %1412 = vperm.xlu0 %1411, %v1394
    %v1413 = vpop.permute.xlu0 %1412
    %vm1415 = vcmask 261120
    %v1417 = vsel %vm1415, %v1387, 0
    %v1420 = vsel %vm1415, %v1388, 0
    %v1423 = vsel %vm1415, %v1389, 0
    %v1426 = vsel %vm1415, %v1390, 0
    %1428 = vmatpush.msra.mxu0 0.0
    %1429 = vmatpush.msra.mxu0 0.0
    %1430 = vmatpush.msra.mxu0 0.0
    %1431 = vmatpush.msra.mxu0 0.0
    %1432 = vmatpush.msra.mxu0 0.0
    %1433 = vmatpush.msra.mxu0 0.0
    %1434 = vmatpush.msra.mxu0 0.0
    %1435 = vmatpush.msra.mxu0 0.0
    %1436 = vmatpush.msra.mxu0 0.0
    %1437 = vmatpush.msra.mxu0 0.0
    %1438 = vmatpush.msra.mxu0 0.0
    %1439 = vmatpush.msra.mxu0 0.0
    %1440 = vmatpush.msra.mxu0 %v1231
    %1441 = vmatpush.msra.mxu0 %v921
    %1442 = vmatpush.msra.mxu0 %v611
    %1443 = vmatpush.msra.mxu0 %v301
    %1444 = vmatmul.f32.gmra.mxu0 %v1417
    %v1445 = vpop.f32.mrf.mxu0
    %v1446 = vadd.f32 %v1398, %v1445
    %1447 = vmatmul.f32.gmra.mxu0 %v1420
    %v1448 = vpop.f32.mrf.mxu0
    %v1449 = vadd.f32 %v1403, %v1448
    %1450 = vmatmul.f32.gmra.mxu0 %v1423
    %v1451 = vpop.f32.mrf.mxu0
    %v1452 = vadd.f32 %v1408, %v1451
    %1453 = vmatmul.f32.gmra.mxu0 %v1426
    %v1454 = vpop.f32.mrf.mxu0
    %v1455 = vadd.f32 %v1413, %v1454
    %1456 = vdwg.mxu0
    %1457 = vmatpush.msra.mxu0 0.0
    %1458 = vmatpush.msra.mxu0 0.0
    %1459 = vmatpush.msra.mxu0 0.0
    %1460 = vmatpush.msra.mxu0 0.0
    %1461 = vmatpush.msra.mxu0 0.0
    %1462 = vmatpush.msra.mxu0 0.0
    %1463 = vmatpush.msra.mxu0 0.0
    %1464 = vmatpush.msra.mxu0 0.0
    %1465 = vmatpush.msra.mxu0 0.0
    %1466 = vmatpush.msra.mxu0 0.0
    %1467 = vmatpush.msra.mxu0 0.0
    %1468 = vmatpush.msra.mxu0 0.0
    %1469 = vmatpush.msra.mxu0 %v1386
    %1470 = vmatpush.msra.mxu0 %v1076
    %1471 = vmatpush.msra.mxu0 %v766
    %1472 = vmatpush.msra.mxu0 %v456
    %1473 = vmatmul.f32.gmra.mxu0 %v1417
    %v1474 = vpop.f32.mrf.mxu0
    %v1475 = vadd.f32 %v1398, %v1474
    %1476 = vmatmul.f32.gmra.mxu0 %v1420
    %v1477 = vpop.f32.mrf.mxu0
    %v1478 = vadd.f32 %v1403, %v1477
    %1479 = vmatmul.f32.gmra.mxu0 %v1423
    %v1480 = vpop.f32.mrf.mxu0
    %v1481 = vadd.f32 %v1408, %v1480
    %1482 = vmatmul.f32.gmra.mxu0 %v1426
    %v1483 = vpop.f32.mrf.mxu0
    %v1484 = vadd.f32 %v1413, %v1483
    %1485 = vdwg.mxu0
    %v1486 = vmul.f32 %v1446, 30.0
    %v1487 = vmul.f32 %v1475, 30.0
    %v1488 = vmul.f32 %v1449, 30.0
    %v1489 = vmul.f32 %v1478, 30.0
    %v1490 = vmul.f32 %v1452, 30.0
    %v1491 = vmul.f32 %v1481, 30.0
    %v1492 = vmul.f32 %v1455, 30.0
    %v1493 = vmul.f32 %v1484, 30.0
    %v1494 = vand.u32 2147483647, %v1486
    %vm1495 = vcmp.le.f32.partialorder %v1494, 0.7853982
    %vm1496 = vcmp.lt.s32.totalorder %v1486, 0
    %v1497 = vand.u32 %v1486, 2139095040
    %v1498 = vshrl.u32 %v1497, 23
    %v1499 = vsub.s32 %v1498, 127
    %v1500 = vand.u32 2147483647, %v1486
    %v1501 = vand.u32 %v1500, 8388607
    %v1502 = vor.u32 %v1501, 8388608
    %v1503 = vsub.s32 0, %v1502
    %v1504 = vadd.s32 %v1499, 1
    %vm1505 = vcmp.gt.s32.totalorder %v1504, 0
    %v1506 = vsel %vm1505, %v1504, 0
    %v1507 = vshrl.u32 %v1506, 5
    %v1508 = vand.u32 %v1506, 31
    %v1509 = vsub.s32 32, %v1508
    %v1510 = vshrl.u32 683565275, %v1509
    %v1511 = vshll.u32 683565275, %v1508
    %v1512 = vshrl.u32 2475754826, %v1509
    %v1513 = vor.u32 %v1511, %v1512
    %v1514 = vshll.u32 2475754826, %v1508
    %v1515 = vshrl.u32 2131351028, %v1509
    %v1516 = vor.u32 %v1514, %v1515
    %v1517 = vshll.u32 2131351028, %v1508
    %v1518 = vshrl.u32 2102212464, %v1509
    %v1519 = vor.u32 %v1517, %v1518
    %v1520 = vshll.u32 2102212464, %v1508
    %v1521 = vshrl.u32 920167782, %v1509
    %v1522 = vor.u32 %v1520, %v1521
    %v1523 = vshll.u32 920167782, %v1508
    %v1524 = vshrl.u32 1326507024, %v1509
    %v1525 = vor.u32 %v1523, %v1524
    %vm1526 = vcmp.lt.s32.totalorder %v1507, 1
    %vm1527 = vcmp.lt.s32.totalorder %v1507, 2
    %vm1528 = vcmp.lt.s32.totalorder %v1507, 3
    %vm1529 = vcmp.lt.s32.totalorder %v1507, 4
    %v1530 = vsel %vm1526, %v1510, %v1513
    %v1531 = vsel %vm1529, %v1519, 2102212464
    %v1532 = vsel %vm1528, %v1516, %v1531
    %v1533 = vsel %vm1527, %v1530, %v1532
    %v1534 = vsel %vm1526, %v1513, %v1516
    %v1535 = vsel %vm1529, %v1522, 920167782
    %v1536 = vsel %vm1528, %v1519, %v1535
    %v1537 = vsel %vm1527, %v1534, %v1536
    %v1538 = vsel %vm1526, %v1516, %v1519
    %v1539 = vsel %vm1529, %v1525, 1326507024
    %v1540 = vsel %vm1528, %v1522, %v1539
    %v1541 = vsel %vm1527, %v1538, %v1540
    %v1542 = vshll.u32 %v1502, 8
    %v1543 = vand.u32 %v1542, 65535
    %v1544 = vshrl.u32 %v1542, 16
    %v1545 = vand.u32 %v1541, 65535
    %v1546 = vshrl.u32 %v1541, 16
    %v1547 = vmul.u32 %v1543, %v1545
    %v1548 = vmul.u32 %v1543, %v1546
    %v1549 = vmul.u32 %v1544, %v1545
    %v1550 = vmul.u32 %v1544, %v1546
    %v1551 = vshll.u32 %v1548, 16
    %v1552 = vshrl.u32 %v1548, 16
    %v1553 = vshll.u32 %v1549, 16
    %v1554 = vshrl.u32 %v1549, 16
    %vm1555 = vc.u32 %v1547, %v1551
    %v1556 = vsel %vm1555, 1, 0
    %v1557 = vadd.s32 %v1547, %v1551
    %v1558 = vadd.s32 %v1550, %v1556
    %vm1559 = vc.u32 %v1557, %v1553
    %v1560 = vsel %vm1559, 1, 0
    %v1561 = vadd.s32 %v1557, %v1553
    %v1562 = vadd.s32 %v1558, %v1560
    %v1563 = vadd.s32 %v1562, %v1552
    %v1564 = vadd.s32 %v1563, %v1554
    %v1565 = vand.u32 %v1542, 65535
    %v1566 = vshrl.u32 %v1542, 16
    %v1567 = vand.u32 %v1537, 65535
    %v1568 = vshrl.u32 %v1537, 16
    %v1569 = vmul.u32 %v1565, %v1567
    %v1570 = vmul.u32 %v1565, %v1568
    %v1571 = vmul.u32 %v1566, %v1567
    %v1572 = vmul.u32 %v1566, %v1568
    %v1573 = vshll.u32 %v1570, 16
    %v1574 = vshrl.u32 %v1570, 16
    %v1575 = vshll.u32 %v1571, 16
    %v1576 = vshrl.u32 %v1571, 16
    %vm1577 = vc.u32 %v1569, %v1573
    %v1578 = vsel %vm1577, 1, 0
    %v1579 = vadd.s32 %v1569, %v1573
    %v1580 = vadd.s32 %v1572, %v1578
    %vm1581 = vc.u32 %v1579, %v1575
    %v1582 = vsel %vm1581, 1, 0
    %v1583 = vadd.s32 %v1579, %v1575
    %v1584 = vadd.s32 %v1580, %v1582
    %v1585 = vadd.s32 %v1584, %v1574
    %v1586 = vadd.s32 %v1585, %v1576
    %v1587 = vmul.u32 %v1542, %v1533
    %v1588 = vadd.s32 %v1564, %v1583
    %vm1589 = vc.u32 %v1564, %v1583
    %v1590 = vadd.s32 %v1586, 1
    %v1591 = vsel %vm1589, %v1590, %v1586
    %v1592 = vadd.s32 %v1587, %v1591
    %v1593 = vadd.s32 %v1592, 536870912
    %v1594 = vshrl.u32 %v1593, 30
    %v1595 = vshll.u32 %v1594, 30
    %v1596 = vsub.s32 %v1592, %v1595
    %vm1597 = vcmp.lt.s32.totalorder %v1596, 0
    %v1598 = vsub.s32 0, %v1596
    %v1599 = vsel %vm1597, %v1598, %v1596
    %v1600 = vclz %v1599
    %v1601 = vsub.s32 %v1600, 2
    %vm1602 = vcmp.gt.s32.totalorder 0, %v1601
    %v1603 = vsel %vm1602, 0, %v1601
    %v1604 = vsub.s32 32, %v1603
    %v1605 = vshll.u32 %v1596, %v1603
    %v1606 = vshrl.u32 %v1588, %v1604
    %v1607 = vor.u32 %v1605, %v1606
    %v1608 = vsub.s32 4294967266, %v1603
    %v1609 = vadd.s32 %v1608, 127
    %v1610 = vshll.u32 %v1609, 23
    %v1611 = vor.u32 4788187, %v1610
    %v1612 = vand.u32 2147483647, %v1611
    %v1614 = vcvt.s32.f32 %v1607
    %v1615 = vmul.f32 %v1614, %v1612
    %v1616 = vxor.u32 %v1615, 2147483648
    %v1617 = vsel %vm1496, %v1616, %v1615
    %v1618 = vsub.s32 4, %v1594
    %v1619 = vsel %vm1496, %v1618, %v1594
    %v1620 = vsel %vm1495, %v1486, %v1617
    %v1621 = vsel %vm1495, 0, %v1619
    %v1622 = vmul.f32 %v1620, %v1620
    %v1623 = vmul.f32 %v1622, -0.001358992
    %v1624 = vadd.f32 %v1623, 0.041655596
    %v1625 = vmul.f32 %v1622, %v1624
    %v1626 = vadd.f32 %v1625, -0.4999988
    %v1627 = vmul.f32 %v1622, %v1626
    %v1628 = vadd.f32 1.0, %v1627
    %v1629 = vmul.f32 %v1620, %v1620
    %v1630 = vmul.f32 %v1629, -0.00019511016
    %v1631 = vadd.f32 %v1630, 0.008332121
    %v1632 = vmul.f32 %v1629, %v1631
    %v1633 = vadd.f32 %v1632, -0.16666654
    %v1634 = vmul.f32 %v1629, %v1633
    %v1635 = vadd.f32 %v1634, 1.0
    %v1636 = vmul.f32 %v1635, %v1620
    %vm1637 = vweird.f32 %v1486
    %v1638 = vadd.s32 %v1621, 3
    %v1639 = vand.u32 %v1638, 3
    %vm1640 = vcmp.lt.s32.totalorder %v1639, 2
    %vm1641 = vcmp.eq.s32.totalorder %v1639, 0
    %v1642 = vxor.u32 %v1636, 2147483648
    %v1643 = vsel %vm1641, %v1628, %v1642
    %vm1644 = vcmp.eq.s32.totalorder %v1639, 2
    %v1645 = vxor.u32 %v1628, 2147483648
    %v1646 = vsel %vm1644, %v1645, %v1636
    %v1647 = vsel %vm1640, %v1643, %v1646
    %v1648 = vsel %vm1637, nan, %v1647
    %v1649 = vand.u32 2147483647, %v1487
    %vm1650 = vcmp.le.f32.partialorder %v1649, 0.7853982
    %vm1651 = vcmp.lt.s32.totalorder %v1487, 0
    %v1652 = vand.u32 %v1487, 2139095040
    %v1653 = vshrl.u32 %v1652, 23
    %v1654 = vsub.s32 %v1653, 127
    %v1655 = vand.u32 2147483647, %v1487
    %v1656 = vand.u32 %v1655, 8388607
    %v1657 = vor.u32 %v1656, 8388608
    %v1658 = vsub.s32 0, %v1657
    %v1659 = vadd.s32 %v1654, 1
    %vm1660 = vcmp.gt.s32.totalorder %v1659, 0
    %v1661 = vsel %vm1660, %v1659, 0
    %v1662 = vshrl.u32 %v1661, 5
    %v1663 = vand.u32 %v1661, 31
    %v1664 = vsub.s32 32, %v1663
    %v1665 = vshrl.u32 683565275, %v1664
    %v1666 = vshll.u32 683565275, %v1663
    %v1667 = vshrl.u32 2475754826, %v1664
    %v1668 = vor.u32 %v1666, %v1667
    %v1669 = vshll.u32 2475754826, %v1663
    %v1670 = vshrl.u32 2131351028, %v1664
    %v1671 = vor.u32 %v1669, %v1670
    %v1672 = vshll.u32 2131351028, %v1663
    %v1673 = vshrl.u32 2102212464, %v1664
    %v1674 = vor.u32 %v1672, %v1673
    %v1675 = vshll.u32 2102212464, %v1663
    %v1676 = vshrl.u32 920167782, %v1664
    %v1677 = vor.u32 %v1675, %v1676
    %v1678 = vshll.u32 920167782, %v1663
    %v1679 = vshrl.u32 1326507024, %v1664
    %v1680 = vor.u32 %v1678, %v1679
    %vm1681 = vcmp.lt.s32.totalorder %v1662, 1
    %vm1682 = vcmp.lt.s32.totalorder %v1662, 2
    %vm1683 = vcmp.lt.s32.totalorder %v1662, 3
    %vm1684 = vcmp.lt.s32.totalorder %v1662, 4
    %v1685 = vsel %vm1681, %v1665, %v1668
    %v1686 = vsel %vm1684, %v1674, 2102212464
    %v1687 = vsel %vm1683, %v1671, %v1686
    %v1688 = vsel %vm1682, %v1685, %v1687
    %v1689 = vsel %vm1681, %v1668, %v1671
    %v1690 = vsel %vm1684, %v1677, 920167782
    %v1691 = vsel %vm1683, %v1674, %v1690
    %v1692 = vsel %vm1682, %v1689, %v1691
    %v1693 = vsel %vm1681, %v1671, %v1674
    %v1694 = vsel %vm1684, %v1680, 1326507024
    %v1695 = vsel %vm1683, %v1677, %v1694
    %v1696 = vsel %vm1682, %v1693, %v1695
    %v1697 = vshll.u32 %v1657, 8
    %v1698 = vand.u32 %v1697, 65535
    %v1699 = vshrl.u32 %v1697, 16
    %v1700 = vand.u32 %v1696, 65535
    %v1701 = vshrl.u32 %v1696, 16
    %v1702 = vmul.u32 %v1698, %v1700
    %v1703 = vmul.u32 %v1698, %v1701
    %v1704 = vmul.u32 %v1699, %v1700
    %v1705 = vmul.u32 %v1699, %v1701
    %v1706 = vshll.u32 %v1703, 16
    %v1707 = vshrl.u32 %v1703, 16
    %v1708 = vshll.u32 %v1704, 16
    %v1709 = vshrl.u32 %v1704, 16
    %vm1710 = vc.u32 %v1702, %v1706
    %v1711 = vsel %vm1710, 1, 0
    %v1712 = vadd.s32 %v1702, %v1706
    %v1713 = vadd.s32 %v1705, %v1711
    %vm1714 = vc.u32 %v1712, %v1708
    %v1715 = vsel %vm1714, 1, 0
    %v1716 = vadd.s32 %v1712, %v1708
    %v1717 = vadd.s32 %v1713, %v1715
    %v1718 = vadd.s32 %v1717, %v1707
    %v1719 = vadd.s32 %v1718, %v1709
    %v1720 = vand.u32 %v1697, 65535
    %v1721 = vshrl.u32 %v1697, 16
    %v1722 = vand.u32 %v1692, 65535
    %v1723 = vshrl.u32 %v1692, 16
    %v1724 = vmul.u32 %v1720, %v1722
    %v1725 = vmul.u32 %v1720, %v1723
    %v1726 = vmul.u32 %v1721, %v1722
    %v1727 = vmul.u32 %v1721, %v1723
    %v1728 = vshll.u32 %v1725, 16
    %v1729 = vshrl.u32 %v1725, 16
    %v1730 = vshll.u32 %v1726, 16
    %v1731 = vshrl.u32 %v1726, 16
    %vm1732 = vc.u32 %v1724, %v1728
    %v1733 = vsel %vm1732, 1, 0
    %v1734 = vadd.s32 %v1724, %v1728
    %v1735 = vadd.s32 %v1727, %v1733
    %vm1736 = vc.u32 %v1734, %v1730
    %v1737 = vsel %vm1736, 1, 0
    %v1738 = vadd.s32 %v1734, %v1730
    %v1739 = vadd.s32 %v1735, %v1737
    %v1740 = vadd.s32 %v1739, %v1729
    %v1741 = vadd.s32 %v1740, %v1731
    %v1742 = vmul.u32 %v1697, %v1688
    %v1743 = vadd.s32 %v1719, %v1738
    %vm1744 = vc.u32 %v1719, %v1738
    %v1745 = vadd.s32 %v1741, 1
    %v1746 = vsel %vm1744, %v1745, %v1741
    %v1747 = vadd.s32 %v1742, %v1746
    %v1748 = vadd.s32 %v1747, 536870912
    %v1749 = vshrl.u32 %v1748, 30
    %v1750 = vshll.u32 %v1749, 30
    %v1751 = vsub.s32 %v1747, %v1750
    %vm1752 = vcmp.lt.s32.totalorder %v1751, 0
    %v1753 = vsub.s32 0, %v1751
    %v1754 = vsel %vm1752, %v1753, %v1751
    %v1755 = vclz %v1754
    %v1756 = vsub.s32 %v1755, 2
    %vm1757 = vcmp.gt.s32.totalorder 0, %v1756
    %v1758 = vsel %vm1757, 0, %v1756
    %v1759 = vsub.s32 32, %v1758
    %v1760 = vshll.u32 %v1751, %v1758
    %v1761 = vshrl.u32 %v1743, %v1759
    %v1762 = vor.u32 %v1760, %v1761
    %v1763 = vsub.s32 4294967266, %v1758
    %v1764 = vadd.s32 %v1763, 127
    %v1765 = vshll.u32 %v1764, 23
    %v1766 = vor.u32 4788187, %v1765
    %v1767 = vand.u32 2147483647, %v1766
    %v1769 = vcvt.s32.f32 %v1762
    %v1770 = vmul.f32 %v1769, %v1767
    %v1771 = vxor.u32 %v1770, 2147483648
    %v1772 = vsel %vm1651, %v1771, %v1770
    %v1773 = vsub.s32 4, %v1749
    %v1774 = vsel %vm1651, %v1773, %v1749
    %v1775 = vsel %vm1650, %v1487, %v1772
    %v1776 = vsel %vm1650, 0, %v1774
    %v1777 = vmul.f32 %v1775, %v1775
    %v1778 = vmul.f32 %v1777, -0.001358992
    %v1779 = vadd.f32 %v1778, 0.041655596
    %v1780 = vmul.f32 %v1777, %v1779
    %v1781 = vadd.f32 %v1780, -0.4999988
    %v1782 = vmul.f32 %v1777, %v1781
    %v1783 = vadd.f32 1.0, %v1782
    %v1784 = vmul.f32 %v1775, %v1775
    %v1785 = vmul.f32 %v1784, -0.00019511016
    %v1786 = vadd.f32 %v1785, 0.008332121
    %v1787 = vmul.f32 %v1784, %v1786
    %v1788 = vadd.f32 %v1787, -0.16666654
    %v1789 = vmul.f32 %v1784, %v1788
    %v1790 = vadd.f32 %v1789, 1.0
    %v1791 = vmul.f32 %v1790, %v1775
    %vm1792 = vweird.f32 %v1487
    %v1793 = vadd.s32 %v1776, 3
    %v1794 = vand.u32 %v1793, 3
    %vm1795 = vcmp.lt.s32.totalorder %v1794, 2
    %vm1796 = vcmp.eq.s32.totalorder %v1794, 0
    %v1797 = vxor.u32 %v1791, 2147483648
    %v1798 = vsel %vm1796, %v1783, %v1797
    %vm1799 = vcmp.eq.s32.totalorder %v1794, 2
    %v1800 = vxor.u32 %v1783, 2147483648
    %v1801 = vsel %vm1799, %v1800, %v1791
    %v1802 = vsel %vm1795, %v1798, %v1801
    %v1803 = vsel %vm1792, nan, %v1802
    %v1804 = vand.u32 2147483647, %v1488
    %vm1805 = vcmp.le.f32.partialorder %v1804, 0.7853982
    %vm1806 = vcmp.lt.s32.totalorder %v1488, 0
    %v1807 = vand.u32 %v1488, 2139095040
    %v1808 = vshrl.u32 %v1807, 23
    %v1809 = vsub.s32 %v1808, 127
    %v1810 = vand.u32 2147483647, %v1488
    %v1811 = vand.u32 %v1810, 8388607
    %v1812 = vor.u32 %v1811, 8388608
    %v1813 = vsub.s32 0, %v1812
    %v1814 = vadd.s32 %v1809, 1
    %vm1815 = vcmp.gt.s32.totalorder %v1814, 0
    %v1816 = vsel %vm1815, %v1814, 0
    %v1817 = vshrl.u32 %v1816, 5
    %v1818 = vand.u32 %v1816, 31
    %v1819 = vsub.s32 32, %v1818
    %v1820 = vshrl.u32 683565275, %v1819
    %v1821 = vshll.u32 683565275, %v1818
    %v1822 = vshrl.u32 2475754826, %v1819
    %v1823 = vor.u32 %v1821, %v1822
    %v1824 = vshll.u32 2475754826, %v1818
    %v1825 = vshrl.u32 2131351028, %v1819
    %v1826 = vor.u32 %v1824, %v1825
    %v1827 = vshll.u32 2131351028, %v1818
    %v1828 = vshrl.u32 2102212464, %v1819
    %v1829 = vor.u32 %v1827, %v1828
    %v1830 = vshll.u32 2102212464, %v1818
    %v1831 = vshrl.u32 920167782, %v1819
    %v1832 = vor.u32 %v1830, %v1831
    %v1833 = vshll.u32 920167782, %v1818
    %v1834 = vshrl.u32 1326507024, %v1819
    %v1835 = vor.u32 %v1833, %v1834
    %vm1836 = vcmp.lt.s32.totalorder %v1817, 1
    %vm1837 = vcmp.lt.s32.totalorder %v1817, 2
    %vm1838 = vcmp.lt.s32.totalorder %v1817, 3
    %vm1839 = vcmp.lt.s32.totalorder %v1817, 4
    %v1840 = vsel %vm1836, %v1820, %v1823
    %v1841 = vsel %vm1839, %v1829, 2102212464
    %v1842 = vsel %vm1838, %v1826, %v1841
    %v1843 = vsel %vm1837, %v1840, %v1842
    %v1844 = vsel %vm1836, %v1823, %v1826
    %v1845 = vsel %vm1839, %v1832, 920167782
    %v1846 = vsel %vm1838, %v1829, %v1845
    %v1847 = vsel %vm1837, %v1844, %v1846
    %v1848 = vsel %vm1836, %v1826, %v1829
    %v1849 = vsel %vm1839, %v1835, 1326507024
    %v1850 = vsel %vm1838, %v1832, %v1849
    %v1851 = vsel %vm1837, %v1848, %v1850
    %v1852 = vshll.u32 %v1812, 8
    %v1853 = vand.u32 %v1852, 65535
    %v1854 = vshrl.u32 %v1852, 16
    %v1855 = vand.u32 %v1851, 65535
    %v1856 = vshrl.u32 %v1851, 16
    %v1857 = vmul.u32 %v1853, %v1855
    %v1858 = vmul.u32 %v1853, %v1856
    %v1859 = vmul.u32 %v1854, %v1855
    %v1860 = vmul.u32 %v1854, %v1856
    %v1861 = vshll.u32 %v1858, 16
    %v1862 = vshrl.u32 %v1858, 16
    %v1863 = vshll.u32 %v1859, 16
    %v1864 = vshrl.u32 %v1859, 16
    %vm1865 = vc.u32 %v1857, %v1861
    %v1866 = vsel %vm1865, 1, 0
    %v1867 = vadd.s32 %v1857, %v1861
    %v1868 = vadd.s32 %v1860, %v1866
    %vm1869 = vc.u32 %v1867, %v1863
    %v1870 = vsel %vm1869, 1, 0
    %v1871 = vadd.s32 %v1867, %v1863
    %v1872 = vadd.s32 %v1868, %v1870
    %v1873 = vadd.s32 %v1872, %v1862
    %v1874 = vadd.s32 %v1873, %v1864
    %v1875 = vand.u32 %v1852, 65535
    %v1876 = vshrl.u32 %v1852, 16
    %v1877 = vand.u32 %v1847, 65535
    %v1878 = vshrl.u32 %v1847, 16
    %v1879 = vmul.u32 %v1875, %v1877
    %v1880 = vmul.u32 %v1875, %v1878
    %v1881 = vmul.u32 %v1876, %v1877
    %v1882 = vmul.u32 %v1876, %v1878
    %v1883 = vshll.u32 %v1880, 16
    %v1884 = vshrl.u32 %v1880, 16
    %v1885 = vshll.u32 %v1881, 16
    %v1886 = vshrl.u32 %v1881, 16
    %vm1887 = vc.u32 %v1879, %v1883
    %v1888 = vsel %vm1887, 1, 0
    %v1889 = vadd.s32 %v1879, %v1883
    %v1890 = vadd.s32 %v1882, %v1888
    %vm1891 = vc.u32 %v1889, %v1885
    %v1892 = vsel %vm1891, 1, 0
    %v1893 = vadd.s32 %v1889, %v1885
    %v1894 = vadd.s32 %v1890, %v1892
    %v1895 = vadd.s32 %v1894, %v1884
    %v1896 = vadd.s32 %v1895, %v1886
    %v1897 = vmul.u32 %v1852, %v1843
    %v1898 = vadd.s32 %v1874, %v1893
    %vm1899 = vc.u32 %v1874, %v1893
    %v1900 = vadd.s32 %v1896, 1
    %v1901 = vsel %vm1899, %v1900, %v1896
    %v1902 = vadd.s32 %v1897, %v1901
    %v1903 = vadd.s32 %v1902, 536870912
    %v1904 = vshrl.u32 %v1903, 30
    %v1905 = vshll.u32 %v1904, 30
    %v1906 = vsub.s32 %v1902, %v1905
    %vm1907 = vcmp.lt.s32.totalorder %v1906, 0
    %v1908 = vsub.s32 0, %v1906
    %v1909 = vsel %vm1907, %v1908, %v1906
    %v1910 = vclz %v1909
    %v1911 = vsub.s32 %v1910, 2
    %vm1912 = vcmp.gt.s32.totalorder 0, %v1911
    %v1913 = vsel %vm1912, 0, %v1911
    %v1914 = vsub.s32 32, %v1913
    %v1915 = vshll.u32 %v1906, %v1913
    %v1916 = vshrl.u32 %v1898, %v1914
    %v1917 = vor.u32 %v1915, %v1916
    %v1918 = vsub.s32 4294967266, %v1913
    %v1919 = vadd.s32 %v1918, 127
    %v1920 = vshll.u32 %v1919, 23
    %v1921 = vor.u32 4788187, %v1920
    %v1922 = vand.u32 2147483647, %v1921
    %v1924 = vcvt.s32.f32 %v1917
    %v1925 = vmul.f32 %v1924, %v1922
    %v1926 = vxor.u32 %v1925, 2147483648
    %v1927 = vsel %vm1806, %v1926, %v1925
    %v1928 = vsub.s32 4, %v1904
    %v1929 = vsel %vm1806, %v1928, %v1904
    %v1930 = vsel %vm1805, %v1488, %v1927
    %v1931 = vsel %vm1805, 0, %v1929
    %v1932 = vmul.f32 %v1930, %v1930
    %v1933 = vmul.f32 %v1932, -0.001358992
    %v1934 = vadd.f32 %v1933, 0.041655596
    %v1935 = vmul.f32 %v1932, %v1934
    %v1936 = vadd.f32 %v1935, -0.4999988
    %v1937 = vmul.f32 %v1932, %v1936
    %v1938 = vadd.f32 1.0, %v1937
    %v1939 = vmul.f32 %v1930, %v1930
    %v1940 = vmul.f32 %v1939, -0.00019511016
    %v1941 = vadd.f32 %v1940, 0.008332121
    %v1942 = vmul.f32 %v1939, %v1941
    %v1943 = vadd.f32 %v1942, -0.16666654
    %v1944 = vmul.f32 %v1939, %v1943
    %v1945 = vadd.f32 %v1944, 1.0
    %v1946 = vmul.f32 %v1945, %v1930
    %vm1947 = vweird.f32 %v1488
    %v1948 = vadd.s32 %v1931, 3
    %v1949 = vand.u32 %v1948, 3
    %vm1950 = vcmp.lt.s32.totalorder %v1949, 2
    %vm1951 = vcmp.eq.s32.totalorder %v1949, 0
    %v1952 = vxor.u32 %v1946, 2147483648
    %v1953 = vsel %vm1951, %v1938, %v1952
    %vm1954 = vcmp.eq.s32.totalorder %v1949, 2
    %v1955 = vxor.u32 %v1938, 2147483648
    %v1956 = vsel %vm1954, %v1955, %v1946
    %v1957 = vsel %vm1950, %v1953, %v1956
    %v1958 = vsel %vm1947, nan, %v1957
    %v1959 = vand.u32 2147483647, %v1489
    %vm1960 = vcmp.le.f32.partialorder %v1959, 0.7853982
    %vm1961 = vcmp.lt.s32.totalorder %v1489, 0
    %v1962 = vand.u32 %v1489, 2139095040
    %v1963 = vshrl.u32 %v1962, 23
    %v1964 = vsub.s32 %v1963, 127
    %v1965 = vand.u32 2147483647, %v1489
    %v1966 = vand.u32 %v1965, 8388607
    %v1967 = vor.u32 %v1966, 8388608
    %v1968 = vsub.s32 0, %v1967
    %v1969 = vadd.s32 %v1964, 1
    %vm1970 = vcmp.gt.s32.totalorder %v1969, 0
    %v1971 = vsel %vm1970, %v1969, 0
    %v1972 = vshrl.u32 %v1971, 5
    %v1973 = vand.u32 %v1971, 31
    %v1974 = vsub.s32 32, %v1973
    %v1975 = vshrl.u32 683565275, %v1974
    %v1976 = vshll.u32 683565275, %v1973
    %v1977 = vshrl.u32 2475754826, %v1974
    %v1978 = vor.u32 %v1976, %v1977
    %v1979 = vshll.u32 2475754826, %v1973
    %v1980 = vshrl.u32 2131351028, %v1974
    %v1981 = vor.u32 %v1979, %v1980
    %v1982 = vshll.u32 2131351028, %v1973
    %v1983 = vshrl.u32 2102212464, %v1974
    %v1984 = vor.u32 %v1982, %v1983
    %v1985 = vshll.u32 2102212464, %v1973
    %v1986 = vshrl.u32 920167782, %v1974
    %v1987 = vor.u32 %v1985, %v1986
    %v1988 = vshll.u32 920167782, %v1973
    %v1989 = vshrl.u32 1326507024, %v1974
    %v1990 = vor.u32 %v1988, %v1989
    %vm1991 = vcmp.lt.s32.totalorder %v1972, 1
    %vm1992 = vcmp.lt.s32.totalorder %v1972, 2
    %vm1993 = vcmp.lt.s32.totalorder %v1972, 3
    %vm1994 = vcmp.lt.s32.totalorder %v1972, 4
    %v1995 = vsel %vm1991, %v1975, %v1978
    %v1996 = vsel %vm1994, %v1984, 2102212464
    %v1997 = vsel %vm1993, %v1981, %v1996
    %v1998 = vsel %vm1992, %v1995, %v1997
    %v1999 = vsel %vm1991, %v1978, %v1981
    %v2000 = vsel %vm1994, %v1987, 920167782
    %v2001 = vsel %vm1993, %v1984, %v2000
    %v2002 = vsel %vm1992, %v1999, %v2001
    %v2003 = vsel %vm1991, %v1981, %v1984
    %v2004 = vsel %vm1994, %v1990, 1326507024
    %v2005 = vsel %vm1993, %v1987, %v2004
    %v2006 = vsel %vm1992, %v2003, %v2005
    %v2007 = vshll.u32 %v1967, 8
    %v2008 = vand.u32 %v2007, 65535
    %v2009 = vshrl.u32 %v2007, 16
    %v2010 = vand.u32 %v2006, 65535
    %v2011 = vshrl.u32 %v2006, 16
    %v2012 = vmul.u32 %v2008, %v2010
    %v2013 = vmul.u32 %v2008, %v2011
    %v2014 = vmul.u32 %v2009, %v2010
    %v2015 = vmul.u32 %v2009, %v2011
    %v2016 = vshll.u32 %v2013, 16
    %v2017 = vshrl.u32 %v2013, 16
    %v2018 = vshll.u32 %v2014, 16
    %v2019 = vshrl.u32 %v2014, 16
    %vm2020 = vc.u32 %v2012, %v2016
    %v2021 = vsel %vm2020, 1, 0
    %v2022 = vadd.s32 %v2012, %v2016
    %v2023 = vadd.s32 %v2015, %v2021
    %vm2024 = vc.u32 %v2022, %v2018
    %v2025 = vsel %vm2024, 1, 0
    %v2026 = vadd.s32 %v2022, %v2018
    %v2027 = vadd.s32 %v2023, %v2025
    %v2028 = vadd.s32 %v2027, %v2017
    %v2029 = vadd.s32 %v2028, %v2019
    %v2030 = vand.u32 %v2007, 65535
    %v2031 = vshrl.u32 %v2007, 16
    %v2032 = vand.u32 %v2002, 65535
    %v2033 = vshrl.u32 %v2002, 16
    %v2034 = vmul.u32 %v2030, %v2032
    %v2035 = vmul.u32 %v2030, %v2033
    %v2036 = vmul.u32 %v2031, %v2032
    %v2037 = vmul.u32 %v2031, %v2033
    %v2038 = vshll.u32 %v2035, 16
    %v2039 = vshrl.u32 %v2035, 16
    %v2040 = vshll.u32 %v2036, 16
    %v2041 = vshrl.u32 %v2036, 16
    %vm2042 = vc.u32 %v2034, %v2038
    %v2043 = vsel %vm2042, 1, 0
    %v2044 = vadd.s32 %v2034, %v2038
    %v2045 = vadd.s32 %v2037, %v2043
    %vm2046 = vc.u32 %v2044, %v2040
    %v2047 = vsel %vm2046, 1, 0
    %v2048 = vadd.s32 %v2044, %v2040
    %v2049 = vadd.s32 %v2045, %v2047
    %v2050 = vadd.s32 %v2049, %v2039
    %v2051 = vadd.s32 %v2050, %v2041
    %v2052 = vmul.u32 %v2007, %v1998
    %v2053 = vadd.s32 %v2029, %v2048
    %vm2054 = vc.u32 %v2029, %v2048
    %v2055 = vadd.s32 %v2051, 1
    %v2056 = vsel %vm2054, %v2055, %v2051
    %v2057 = vadd.s32 %v2052, %v2056
    %v2058 = vadd.s32 %v2057, 536870912
    %v2059 = vshrl.u32 %v2058, 30
    %v2060 = vshll.u32 %v2059, 30
    %v2061 = vsub.s32 %v2057, %v2060
    %vm2062 = vcmp.lt.s32.totalorder %v2061, 0
    %v2063 = vsub.s32 0, %v2061
    %v2064 = vsel %vm2062, %v2063, %v2061
    %v2065 = vclz %v2064
    %v2066 = vsub.s32 %v2065, 2
    %vm2067 = vcmp.gt.s32.totalorder 0, %v2066
    %v2068 = vsel %vm2067, 0, %v2066
    %v2069 = vsub.s32 32, %v2068
    %v2070 = vshll.u32 %v2061, %v2068
    %v2071 = vshrl.u32 %v2053, %v2069
    %v2072 = vor.u32 %v2070, %v2071
    %v2073 = vsub.s32 4294967266, %v2068
    %v2074 = vadd.s32 %v2073, 127
    %v2075 = vshll.u32 %v2074, 23
    %v2076 = vor.u32 4788187, %v2075
    %v2077 = vand.u32 2147483647, %v2076
    %v2079 = vcvt.s32.f32 %v2072
    %v2080 = vmul.f32 %v2079, %v2077
    %v2081 = vxor.u32 %v2080, 2147483648
    %v2082 = vsel %vm1961, %v2081, %v2080
    %v2083 = vsub.s32 4, %v2059
    %v2084 = vsel %vm1961, %v2083, %v2059
    %v2085 = vsel %vm1960, %v1489, %v2082
    %v2086 = vsel %vm1960, 0, %v2084
    %v2087 = vmul.f32 %v2085, %v2085
    %v2088 = vmul.f32 %v2087, -0.001358992
    %v2089 = vadd.f32 %v2088, 0.041655596
    %v2090 = vmul.f32 %v2087, %v2089
    %v2091 = vadd.f32 %v2090, -0.4999988
    %v2092 = vmul.f32 %v2087, %v2091
    %v2093 = vadd.f32 1.0, %v2092
    %v2094 = vmul.f32 %v2085, %v2085
    %v2095 = vmul.f32 %v2094, -0.00019511016
    %v2096 = vadd.f32 %v2095, 0.008332121
    %v2097 = vmul.f32 %v2094, %v2096
    %v2098 = vadd.f32 %v2097, -0.16666654
    %v2099 = vmul.f32 %v2094, %v2098
    %v2100 = vadd.f32 %v2099, 1.0
    %v2101 = vmul.f32 %v2100, %v2085
    %vm2102 = vweird.f32 %v1489
    %v2103 = vadd.s32 %v2086, 3
    %v2104 = vand.u32 %v2103, 3
    %vm2105 = vcmp.lt.s32.totalorder %v2104, 2
    %vm2106 = vcmp.eq.s32.totalorder %v2104, 0
    %v2107 = vxor.u32 %v2101, 2147483648
    %v2108 = vsel %vm2106, %v2093, %v2107
    %vm2109 = vcmp.eq.s32.totalorder %v2104, 2
    %v2110 = vxor.u32 %v2093, 2147483648
    %v2111 = vsel %vm2109, %v2110, %v2101
    %v2112 = vsel %vm2105, %v2108, %v2111
    %v2113 = vsel %vm2102, nan, %v2112
    %v2114 = vand.u32 2147483647, %v1490
    %vm2115 = vcmp.le.f32.partialorder %v2114, 0.7853982
    %vm2116 = vcmp.lt.s32.totalorder %v1490, 0
    %v2117 = vand.u32 %v1490, 2139095040
    %v2118 = vshrl.u32 %v2117, 23
    %v2119 = vsub.s32 %v2118, 127
    %v2120 = vand.u32 2147483647, %v1490
    %v2121 = vand.u32 %v2120, 8388607
    %v2122 = vor.u32 %v2121, 8388608
    %v2123 = vsub.s32 0, %v2122
    %v2124 = vadd.s32 %v2119, 1
    %vm2125 = vcmp.gt.s32.totalorder %v2124, 0
    %v2126 = vsel %vm2125, %v2124, 0
    %v2127 = vshrl.u32 %v2126, 5
    %v2128 = vand.u32 %v2126, 31
    %v2129 = vsub.s32 32, %v2128
    %v2130 = vshrl.u32 683565275, %v2129
    %v2131 = vshll.u32 683565275, %v2128
    %v2132 = vshrl.u32 2475754826, %v2129
    %v2133 = vor.u32 %v2131, %v2132
    %v2134 = vshll.u32 2475754826, %v2128
    %v2135 = vshrl.u32 2131351028, %v2129
    %v2136 = vor.u32 %v2134, %v2135
    %v2137 = vshll.u32 2131351028, %v2128
    %v2138 = vshrl.u32 2102212464, %v2129
    %v2139 = vor.u32 %v2137, %v2138
    %v2140 = vshll.u32 2102212464, %v2128
    %v2141 = vshrl.u32 920167782, %v2129
    %v2142 = vor.u32 %v2140, %v2141
    %v2143 = vshll.u32 920167782, %v2128
    %v2144 = vshrl.u32 1326507024, %v2129
    %v2145 = vor.u32 %v2143, %v2144
    %vm2146 = vcmp.lt.s32.totalorder %v2127, 1
    %vm2147 = vcmp.lt.s32.totalorder %v2127, 2
    %vm2148 = vcmp.lt.s32.totalorder %v2127, 3
    %vm2149 = vcmp.lt.s32.totalorder %v2127, 4
    %v2150 = vsel %vm2146, %v2130, %v2133
    %v2151 = vsel %vm2149, %v2139, 2102212464
    %v2152 = vsel %vm2148, %v2136, %v2151
    %v2153 = vsel %vm2147, %v2150, %v2152
    %v2154 = vsel %vm2146, %v2133, %v2136
    %v2155 = vsel %vm2149, %v2142, 920167782
    %v2156 = vsel %vm2148, %v2139, %v2155
    %v2157 = vsel %vm2147, %v2154, %v2156
    %v2158 = vsel %vm2146, %v2136, %v2139
    %v2159 = vsel %vm2149, %v2145, 1326507024
    %v2160 = vsel %vm2148, %v2142, %v2159
    %v2161 = vsel %vm2147, %v2158, %v2160
    %v2162 = vshll.u32 %v2122, 8
    %v2163 = vand.u32 %v2162, 65535
    %v2164 = vshrl.u32 %v2162, 16
    %v2165 = vand.u32 %v2161, 65535
    %v2166 = vshrl.u32 %v2161, 16
    %v2167 = vmul.u32 %v2163, %v2165
    %v2168 = vmul.u32 %v2163, %v2166
    %v2169 = vmul.u32 %v2164, %v2165
    %v2170 = vmul.u32 %v2164, %v2166
    %v2171 = vshll.u32 %v2168, 16
    %v2172 = vshrl.u32 %v2168, 16
    %v2173 = vshll.u32 %v2169, 16
    %v2174 = vshrl.u32 %v2169, 16
    %vm2175 = vc.u32 %v2167, %v2171
    %v2176 = vsel %vm2175, 1, 0
    %v2177 = vadd.s32 %v2167, %v2171
    %v2178 = vadd.s32 %v2170, %v2176
    %vm2179 = vc.u32 %v2177, %v2173
    %v2180 = vsel %vm2179, 1, 0
    %v2181 = vadd.s32 %v2177, %v2173
    %v2182 = vadd.s32 %v2178, %v2180
    %v2183 = vadd.s32 %v2182, %v2172
    %v2184 = vadd.s32 %v2183, %v2174
    %v2185 = vand.u32 %v2162, 65535
    %v2186 = vshrl.u32 %v2162, 16
    %v2187 = vand.u32 %v2157, 65535
    %v2188 = vshrl.u32 %v2157, 16
    %v2189 = vmul.u32 %v2185, %v2187
    %v2190 = vmul.u32 %v2185, %v2188
    %v2191 = vmul.u32 %v2186, %v2187
    %v2192 = vmul.u32 %v2186, %v2188
    %v2193 = vshll.u32 %v2190, 16
    %v2194 = vshrl.u32 %v2190, 16
    %v2195 = vshll.u32 %v2191, 16
    %v2196 = vshrl.u32 %v2191, 16
    %vm2197 = vc.u32 %v2189, %v2193
    %v2198 = vsel %vm2197, 1, 0
    %v2199 = vadd.s32 %v2189, %v2193
    %v2200 = vadd.s32 %v2192, %v2198
    %vm2201 = vc.u32 %v2199, %v2195
    %v2202 = vsel %vm2201, 1, 0
    %v2203 = vadd.s32 %v2199, %v2195
    %v2204 = vadd.s32 %v2200, %v2202
    %v2205 = vadd.s32 %v2204, %v2194
    %v2206 = vadd.s32 %v2205, %v2196
    %v2207 = vmul.u32 %v2162, %v2153
    %v2208 = vadd.s32 %v2184, %v2203
    %vm2209 = vc.u32 %v2184, %v2203
    %v2210 = vadd.s32 %v2206, 1
    %v2211 = vsel %vm2209, %v2210, %v2206
    %v2212 = vadd.s32 %v2207, %v2211
    %v2213 = vadd.s32 %v2212, 536870912
    %v2214 = vshrl.u32 %v2213, 30
    %v2215 = vshll.u32 %v2214, 30
    %v2216 = vsub.s32 %v2212, %v2215
    %vm2217 = vcmp.lt.s32.totalorder %v2216, 0
    %v2218 = vsub.s32 0, %v2216
    %v2219 = vsel %vm2217, %v2218, %v2216
    %v2220 = vclz %v2219
    %v2221 = vsub.s32 %v2220, 2
    %vm2222 = vcmp.gt.s32.totalorder 0, %v2221
    %v2223 = vsel %vm2222, 0, %v2221
    %v2224 = vsub.s32 32, %v2223
    %v2225 = vshll.u32 %v2216, %v2223
    %v2226 = vshrl.u32 %v2208, %v2224
    %v2227 = vor.u32 %v2225, %v2226
    %v2228 = vsub.s32 4294967266, %v2223
    %v2229 = vadd.s32 %v2228, 127
    %v2230 = vshll.u32 %v2229, 23
    %v2231 = vor.u32 4788187, %v2230
    %v2232 = vand.u32 2147483647, %v2231
    %v2234 = vcvt.s32.f32 %v2227
    %v2235 = vmul.f32 %v2234, %v2232
    %v2236 = vxor.u32 %v2235, 2147483648
    %v2237 = vsel %vm2116, %v2236, %v2235
    %v2238 = vsub.s32 4, %v2214
    %v2239 = vsel %vm2116, %v2238, %v2214
    %v2240 = vsel %vm2115, %v1490, %v2237
    %v2241 = vsel %vm2115, 0, %v2239
    %v2242 = vmul.f32 %v2240, %v2240
    %v2243 = vmul.f32 %v2242, -0.001358992
    %v2244 = vadd.f32 %v2243, 0.041655596
    %v2245 = vmul.f32 %v2242, %v2244
    %v2246 = vadd.f32 %v2245, -0.4999988
    %v2247 = vmul.f32 %v2242, %v2246
    %v2248 = vadd.f32 1.0, %v2247
    %v2249 = vmul.f32 %v2240, %v2240
    %v2250 = vmul.f32 %v2249, -0.00019511016
    %v2251 = vadd.f32 %v2250, 0.008332121
    %v2252 = vmul.f32 %v2249, %v2251
    %v2253 = vadd.f32 %v2252, -0.16666654
    %v2254 = vmul.f32 %v2249, %v2253
    %v2255 = vadd.f32 %v2254, 1.0
    %v2256 = vmul.f32 %v2255, %v2240
    %vm2257 = vweird.f32 %v1490
    %v2258 = vadd.s32 %v2241, 3
    %v2259 = vand.u32 %v2258, 3
    %vm2260 = vcmp.lt.s32.totalorder %v2259, 2
    %vm2261 = vcmp.eq.s32.totalorder %v2259, 0
    %v2262 = vxor.u32 %v2256, 2147483648
    %v2263 = vsel %vm2261, %v2248, %v2262
    %vm2264 = vcmp.eq.s32.totalorder %v2259, 2
    %v2265 = vxor.u32 %v2248, 2147483648
    %v2266 = vsel %vm2264, %v2265, %v2256
    %v2267 = vsel %vm2260, %v2263, %v2266
    %v2268 = vsel %vm2257, nan, %v2267
    %v2269 = vand.u32 2147483647, %v1491
    %vm2270 = vcmp.le.f32.partialorder %v2269, 0.7853982
    %vm2271 = vcmp.lt.s32.totalorder %v1491, 0
    %v2272 = vand.u32 %v1491, 2139095040
    %v2273 = vshrl.u32 %v2272, 23
    %v2274 = vsub.s32 %v2273, 127
    %v2275 = vand.u32 2147483647, %v1491
    %v2276 = vand.u32 %v2275, 8388607
    %v2277 = vor.u32 %v2276, 8388608
    %v2278 = vsub.s32 0, %v2277
    %v2279 = vadd.s32 %v2274, 1
    %vm2280 = vcmp.gt.s32.totalorder %v2279, 0
    %v2281 = vsel %vm2280, %v2279, 0
    %v2282 = vshrl.u32 %v2281, 5
    %v2283 = vand.u32 %v2281, 31
    %v2284 = vsub.s32 32, %v2283
    %v2285 = vshrl.u32 683565275, %v2284
    %v2286 = vshll.u32 683565275, %v2283
    %v2287 = vshrl.u32 2475754826, %v2284
    %v2288 = vor.u32 %v2286, %v2287
    %v2289 = vshll.u32 2475754826, %v2283
    %v2290 = vshrl.u32 2131351028, %v2284
    %v2291 = vor.u32 %v2289, %v2290
    %v2292 = vshll.u32 2131351028, %v2283
    %v2293 = vshrl.u32 2102212464, %v2284
    %v2294 = vor.u32 %v2292, %v2293
    %v2295 = vshll.u32 2102212464, %v2283
    %v2296 = vshrl.u32 920167782, %v2284
    %v2297 = vor.u32 %v2295, %v2296
    %v2298 = vshll.u32 920167782, %v2283
    %v2299 = vshrl.u32 1326507024, %v2284
    %v2300 = vor.u32 %v2298, %v2299
    %vm2301 = vcmp.lt.s32.totalorder %v2282, 1
    %vm2302 = vcmp.lt.s32.totalorder %v2282, 2
    %vm2303 = vcmp.lt.s32.totalorder %v2282, 3
    %vm2304 = vcmp.lt.s32.totalorder %v2282, 4
    %v2305 = vsel %vm2301, %v2285, %v2288
    %v2306 = vsel %vm2304, %v2294, 2102212464
    %v2307 = vsel %vm2303, %v2291, %v2306
    %v2308 = vsel %vm2302, %v2305, %v2307
    %v2309 = vsel %vm2301, %v2288, %v2291
    %v2310 = vsel %vm2304, %v2297, 920167782
    %v2311 = vsel %vm2303, %v2294, %v2310
    %v2312 = vsel %vm2302, %v2309, %v2311
    %v2313 = vsel %vm2301, %v2291, %v2294
    %v2314 = vsel %vm2304, %v2300, 1326507024
    %v2315 = vsel %vm2303, %v2297, %v2314
    %v2316 = vsel %vm2302, %v2313, %v2315
    %v2317 = vshll.u32 %v2277, 8
    %v2318 = vand.u32 %v2317, 65535
    %v2319 = vshrl.u32 %v2317, 16
    %v2320 = vand.u32 %v2316, 65535
    %v2321 = vshrl.u32 %v2316, 16
    %v2322 = vmul.u32 %v2318, %v2320
    %v2323 = vmul.u32 %v2318, %v2321
    %v2324 = vmul.u32 %v2319, %v2320
    %v2325 = vmul.u32 %v2319, %v2321
    %v2326 = vshll.u32 %v2323, 16
    %v2327 = vshrl.u32 %v2323, 16
    %v2328 = vshll.u32 %v2324, 16
    %v2329 = vshrl.u32 %v2324, 16
    %vm2330 = vc.u32 %v2322, %v2326
    %v2331 = vsel %vm2330, 1, 0
    %v2332 = vadd.s32 %v2322, %v2326
    %v2333 = vadd.s32 %v2325, %v2331
    %vm2334 = vc.u32 %v2332, %v2328
    %v2335 = vsel %vm2334, 1, 0
    %v2336 = vadd.s32 %v2332, %v2328
    %v2337 = vadd.s32 %v2333, %v2335
    %v2338 = vadd.s32 %v2337, %v2327
    %v2339 = vadd.s32 %v2338, %v2329
    %v2340 = vand.u32 %v2317, 65535
    %v2341 = vshrl.u32 %v2317, 16
    %v2342 = vand.u32 %v2312, 65535
    %v2343 = vshrl.u32 %v2312, 16
    %v2344 = vmul.u32 %v2340, %v2342
    %v2345 = vmul.u32 %v2340, %v2343
    %v2346 = vmul.u32 %v2341, %v2342
    %v2347 = vmul.u32 %v2341, %v2343
    %v2348 = vshll.u32 %v2345, 16
    %v2349 = vshrl.u32 %v2345, 16
    %v2350 = vshll.u32 %v2346, 16
    %v2351 = vshrl.u32 %v2346, 16
    %vm2352 = vc.u32 %v2344, %v2348
    %v2353 = vsel %vm2352, 1, 0
    %v2354 = vadd.s32 %v2344, %v2348
    %v2355 = vadd.s32 %v2347, %v2353
    %vm2356 = vc.u32 %v2354, %v2350
    %v2357 = vsel %vm2356, 1, 0
    %v2358 = vadd.s32 %v2354, %v2350
    %v2359 = vadd.s32 %v2355, %v2357
    %v2360 = vadd.s32 %v2359, %v2349
    %v2361 = vadd.s32 %v2360, %v2351
    %v2362 = vmul.u32 %v2317, %v2308
    %v2363 = vadd.s32 %v2339, %v2358
    %vm2364 = vc.u32 %v2339, %v2358
    %v2365 = vadd.s32 %v2361, 1
    %v2366 = vsel %vm2364, %v2365, %v2361
    %v2367 = vadd.s32 %v2362, %v2366
    %v2368 = vadd.s32 %v2367, 536870912
    %v2369 = vshrl.u32 %v2368, 30
    %v2370 = vshll.u32 %v2369, 30
    %v2371 = vsub.s32 %v2367, %v2370
    %vm2372 = vcmp.lt.s32.totalorder %v2371, 0
    %v2373 = vsub.s32 0, %v2371
    %v2374 = vsel %vm2372, %v2373, %v2371
    %v2375 = vclz %v2374
    %v2376 = vsub.s32 %v2375, 2
    %vm2377 = vcmp.gt.s32.totalorder 0, %v2376
    %v2378 = vsel %vm2377, 0, %v2376
    %v2379 = vsub.s32 32, %v2378
    %v2380 = vshll.u32 %v2371, %v2378
    %v2381 = vshrl.u32 %v2363, %v2379
    %v2382 = vor.u32 %v2380, %v2381
    %v2383 = vsub.s32 4294967266, %v2378
    %v2384 = vadd.s32 %v2383, 127
    %v2385 = vshll.u32 %v2384, 23
    %v2386 = vor.u32 4788187, %v2385
    %v2387 = vand.u32 2147483647, %v2386
    %v2389 = vcvt.s32.f32 %v2382
    %v2390 = vmul.f32 %v2389, %v2387
    %v2391 = vxor.u32 %v2390, 2147483648
    %v2392 = vsel %vm2271, %v2391, %v2390
    %v2393 = vsub.s32 4, %v2369
    %v2394 = vsel %vm2271, %v2393, %v2369
    %v2395 = vsel %vm2270, %v1491, %v2392
    %v2396 = vsel %vm2270, 0, %v2394
    %v2397 = vmul.f32 %v2395, %v2395
    %v2398 = vmul.f32 %v2397, -0.001358992
    %v2399 = vadd.f32 %v2398, 0.041655596
    %v2400 = vmul.f32 %v2397, %v2399
    %v2401 = vadd.f32 %v2400, -0.4999988
    %v2402 = vmul.f32 %v2397, %v2401
    %v2403 = vadd.f32 1.0, %v2402
    %v2404 = vmul.f32 %v2395, %v2395
    %v2405 = vmul.f32 %v2404, -0.00019511016
    %v2406 = vadd.f32 %v2405, 0.008332121
    %v2407 = vmul.f32 %v2404, %v2406
    %v2408 = vadd.f32 %v2407, -0.16666654
    %v2409 = vmul.f32 %v2404, %v2408
    %v2410 = vadd.f32 %v2409, 1.0
    %v2411 = vmul.f32 %v2410, %v2395
    %vm2412 = vweird.f32 %v1491
    %v2413 = vadd.s32 %v2396, 3
    %v2414 = vand.u32 %v2413, 3
    %vm2415 = vcmp.lt.s32.totalorder %v2414, 2
    %vm2416 = vcmp.eq.s32.totalorder %v2414, 0
    %v2417 = vxor.u32 %v2411, 2147483648
    %v2418 = vsel %vm2416, %v2403, %v2417
    %vm2419 = vcmp.eq.s32.totalorder %v2414, 2
    %v2420 = vxor.u32 %v2403, 2147483648
    %v2421 = vsel %vm2419, %v2420, %v2411
    %v2422 = vsel %vm2415, %v2418, %v2421
    %v2423 = vsel %vm2412, nan, %v2422
    %v2424 = vand.u32 2147483647, %v1492
    %vm2425 = vcmp.le.f32.partialorder %v2424, 0.7853982
    %vm2426 = vcmp.lt.s32.totalorder %v1492, 0
    %v2427 = vand.u32 %v1492, 2139095040
    %v2428 = vshrl.u32 %v2427, 23
    %v2429 = vsub.s32 %v2428, 127
    %v2430 = vand.u32 2147483647, %v1492
    %v2431 = vand.u32 %v2430, 8388607
    %v2432 = vor.u32 %v2431, 8388608
    %v2433 = vsub.s32 0, %v2432
    %v2434 = vadd.s32 %v2429, 1
    %vm2435 = vcmp.gt.s32.totalorder %v2434, 0
    %v2436 = vsel %vm2435, %v2434, 0
    %v2437 = vshrl.u32 %v2436, 5
    %v2438 = vand.u32 %v2436, 31
    %v2439 = vsub.s32 32, %v2438
    %v2440 = vshrl.u32 683565275, %v2439
    %v2441 = vshll.u32 683565275, %v2438
    %v2442 = vshrl.u32 2475754826, %v2439
    %v2443 = vor.u32 %v2441, %v2442
    %v2444 = vshll.u32 2475754826, %v2438
    %v2445 = vshrl.u32 2131351028, %v2439
    %v2446 = vor.u32 %v2444, %v2445
    %v2447 = vshll.u32 2131351028, %v2438
    %v2448 = vshrl.u32 2102212464, %v2439
    %v2449 = vor.u32 %v2447, %v2448
    %v2450 = vshll.u32 2102212464, %v2438
    %v2451 = vshrl.u32 920167782, %v2439
    %v2452 = vor.u32 %v2450, %v2451
    %v2453 = vshll.u32 920167782, %v2438
    %v2454 = vshrl.u32 1326507024, %v2439
    %v2455 = vor.u32 %v2453, %v2454
    %vm2456 = vcmp.lt.s32.totalorder %v2437, 1
    %vm2457 = vcmp.lt.s32.totalorder %v2437, 2
    %vm2458 = vcmp.lt.s32.totalorder %v2437, 3
    %vm2459 = vcmp.lt.s32.totalorder %v2437, 4
    %v2460 = vsel %vm2456, %v2440, %v2443
    %v2461 = vsel %vm2459, %v2449, 2102212464
    %v2462 = vsel %vm2458, %v2446, %v2461
    %v2463 = vsel %vm2457, %v2460, %v2462
    %v2464 = vsel %vm2456, %v2443, %v2446
    %v2465 = vsel %vm2459, %v2452, 920167782
    %v2466 = vsel %vm2458, %v2449, %v2465
    %v2467 = vsel %vm2457, %v2464, %v2466
    %v2468 = vsel %vm2456, %v2446, %v2449
    %v2469 = vsel %vm2459, %v2455, 1326507024
    %v2470 = vsel %vm2458, %v2452, %v2469
    %v2471 = vsel %vm2457, %v2468, %v2470
    %v2472 = vshll.u32 %v2432, 8
    %v2473 = vand.u32 %v2472, 65535
    %v2474 = vshrl.u32 %v2472, 16
    %v2475 = vand.u32 %v2471, 65535
    %v2476 = vshrl.u32 %v2471, 16
    %v2477 = vmul.u32 %v2473, %v2475
    %v2478 = vmul.u32 %v2473, %v2476
    %v2479 = vmul.u32 %v2474, %v2475
    %v2480 = vmul.u32 %v2474, %v2476
    %v2481 = vshll.u32 %v2478, 16
    %v2482 = vshrl.u32 %v2478, 16
    %v2483 = vshll.u32 %v2479, 16
    %v2484 = vshrl.u32 %v2479, 16
    %vm2485 = vc.u32 %v2477, %v2481
    %v2486 = vsel %vm2485, 1, 0
    %v2487 = vadd.s32 %v2477, %v2481
    %v2488 = vadd.s32 %v2480, %v2486
    %vm2489 = vc.u32 %v2487, %v2483
    %v2490 = vsel %vm2489, 1, 0
    %v2491 = vadd.s32 %v2487, %v2483
    %v2492 = vadd.s32 %v2488, %v2490
    %v2493 = vadd.s32 %v2492, %v2482
    %v2494 = vadd.s32 %v2493, %v2484
    %v2495 = vand.u32 %v2472, 65535
    %v2496 = vshrl.u32 %v2472, 16
    %v2497 = vand.u32 %v2467, 65535
    %v2498 = vshrl.u32 %v2467, 16
    %v2499 = vmul.u32 %v2495, %v2497
    %v2500 = vmul.u32 %v2495, %v2498
    %v2501 = vmul.u32 %v2496, %v2497
    %v2502 = vmul.u32 %v2496, %v2498
    %v2503 = vshll.u32 %v2500, 16
    %v2504 = vshrl.u32 %v2500, 16
    %v2505 = vshll.u32 %v2501, 16
    %v2506 = vshrl.u32 %v2501, 16
    %vm2507 = vc.u32 %v2499, %v2503
    %v2508 = vsel %vm2507, 1, 0
    %v2509 = vadd.s32 %v2499, %v2503
    %v2510 = vadd.s32 %v2502, %v2508
    %vm2511 = vc.u32 %v2509, %v2505
    %v2512 = vsel %vm2511, 1, 0
    %v2513 = vadd.s32 %v2509, %v2505
    %v2514 = vadd.s32 %v2510, %v2512
    %v2515 = vadd.s32 %v2514, %v2504
    %v2516 = vadd.s32 %v2515, %v2506
    %v2517 = vmul.u32 %v2472, %v2463
    %v2518 = vadd.s32 %v2494, %v2513
    %vm2519 = vc.u32 %v2494, %v2513
    %v2520 = vadd.s32 %v2516, 1
    %v2521 = vsel %vm2519, %v2520, %v2516
    %v2522 = vadd.s32 %v2517, %v2521
    %v2523 = vadd.s32 %v2522, 536870912
    %v2524 = vshrl.u32 %v2523, 30
    %v2525 = vshll.u32 %v2524, 30
    %v2526 = vsub.s32 %v2522, %v2525
    %vm2527 = vcmp.lt.s32.totalorder %v2526, 0
    %v2528 = vsub.s32 0, %v2526
    %v2529 = vsel %vm2527, %v2528, %v2526
    %v2530 = vclz %v2529
    %v2531 = vsub.s32 %v2530, 2
    %vm2532 = vcmp.gt.s32.totalorder 0, %v2531
    %v2533 = vsel %vm2532, 0, %v2531
    %v2534 = vsub.s32 32, %v2533
    %v2535 = vshll.u32 %v2526, %v2533
    %v2536 = vshrl.u32 %v2518, %v2534
    %v2537 = vor.u32 %v2535, %v2536
    %v2538 = vsub.s32 4294967266, %v2533
    %v2539 = vadd.s32 %v2538, 127
    %v2540 = vshll.u32 %v2539, 23
    %v2541 = vor.u32 4788187, %v2540
    %v2542 = vand.u32 2147483647, %v2541
    %v2544 = vcvt.s32.f32 %v2537
    %v2545 = vmul.f32 %v2544, %v2542
    %v2546 = vxor.u32 %v2545, 2147483648
    %v2547 = vsel %vm2426, %v2546, %v2545
    %v2548 = vsub.s32 4, %v2524
    %v2549 = vsel %vm2426, %v2548, %v2524
    %v2550 = vsel %vm2425, %v1492, %v2547
    %v2551 = vsel %vm2425, 0, %v2549
    %v2552 = vmul.f32 %v2550, %v2550
    %v2553 = vmul.f32 %v2552, -0.001358992
    %v2554 = vadd.f32 %v2553, 0.041655596
    %v2555 = vmul.f32 %v2552, %v2554
    %v2556 = vadd.f32 %v2555, -0.4999988
    %v2557 = vmul.f32 %v2552, %v2556
    %v2558 = vadd.f32 1.0, %v2557
    %v2559 = vmul.f32 %v2550, %v2550
    %v2560 = vmul.f32 %v2559, -0.00019511016
    %v2561 = vadd.f32 %v2560, 0.008332121
    %v2562 = vmul.f32 %v2559, %v2561
    %v2563 = vadd.f32 %v2562, -0.16666654
    %v2564 = vmul.f32 %v2559, %v2563
    %v2565 = vadd.f32 %v2564, 1.0
    %v2566 = vmul.f32 %v2565, %v2550
    %vm2567 = vweird.f32 %v1492
    %v2568 = vadd.s32 %v2551, 3
    %v2569 = vand.u32 %v2568, 3
    %vm2570 = vcmp.lt.s32.totalorder %v2569, 2
    %vm2571 = vcmp.eq.s32.totalorder %v2569, 0
    %v2572 = vxor.u32 %v2566, 2147483648
    %v2573 = vsel %vm2571, %v2558, %v2572
    %vm2574 = vcmp.eq.s32.totalorder %v2569, 2
    %v2575 = vxor.u32 %v2558, 2147483648
    %v2576 = vsel %vm2574, %v2575, %v2566
    %v2577 = vsel %vm2570, %v2573, %v2576
    %v2578 = vsel %vm2567, nan, %v2577
    %v2579 = vand.u32 2147483647, %v1493
    %vm2580 = vcmp.le.f32.partialorder %v2579, 0.7853982
    %vm2581 = vcmp.lt.s32.totalorder %v1493, 0
    %v2582 = vand.u32 %v1493, 2139095040
    %v2583 = vshrl.u32 %v2582, 23
    %v2584 = vsub.s32 %v2583, 127
    %v2585 = vand.u32 2147483647, %v1493
    %v2586 = vand.u32 %v2585, 8388607
    %v2587 = vor.u32 %v2586, 8388608
    %v2588 = vsub.s32 0, %v2587
    %v2589 = vadd.s32 %v2584, 1
    %vm2590 = vcmp.gt.s32.totalorder %v2589, 0
    %v2591 = vsel %vm2590, %v2589, 0
    %v2592 = vshrl.u32 %v2591, 5
    %v2593 = vand.u32 %v2591, 31
    %v2594 = vsub.s32 32, %v2593
    %v2595 = vshrl.u32 683565275, %v2594
    %v2596 = vshll.u32 683565275, %v2593
    %v2597 = vshrl.u32 2475754826, %v2594
    %v2598 = vor.u32 %v2596, %v2597
    %v2599 = vshll.u32 2475754826, %v2593
    %v2600 = vshrl.u32 2131351028, %v2594
    %v2601 = vor.u32 %v2599, %v2600
    %v2602 = vshll.u32 2131351028, %v2593
    %v2603 = vshrl.u32 2102212464, %v2594
    %v2604 = vor.u32 %v2602, %v2603
    %v2605 = vshll.u32 2102212464, %v2593
    %v2606 = vshrl.u32 920167782, %v2594
    %v2607 = vor.u32 %v2605, %v2606
    %v2608 = vshll.u32 920167782, %v2593
    %v2609 = vshrl.u32 1326507024, %v2594
    %v2610 = vor.u32 %v2608, %v2609
    %vm2611 = vcmp.lt.s32.totalorder %v2592, 1
    %vm2612 = vcmp.lt.s32.totalorder %v2592, 2
    %vm2613 = vcmp.lt.s32.totalorder %v2592, 3
    %vm2614 = vcmp.lt.s32.totalorder %v2592, 4
    %v2615 = vsel %vm2611, %v2595, %v2598
    %v2616 = vsel %vm2614, %v2604, 2102212464
    %v2617 = vsel %vm2613, %v2601, %v2616
    %v2618 = vsel %vm2612, %v2615, %v2617
    %v2619 = vsel %vm2611, %v2598, %v2601
    %v2620 = vsel %vm2614, %v2607, 920167782
    %v2621 = vsel %vm2613, %v2604, %v2620
    %v2622 = vsel %vm2612, %v2619, %v2621
    %v2623 = vsel %vm2611, %v2601, %v2604
    %v2624 = vsel %vm2614, %v2610, 1326507024
    %v2625 = vsel %vm2613, %v2607, %v2624
    %v2626 = vsel %vm2612, %v2623, %v2625
    %v2627 = vshll.u32 %v2587, 8
    %v2628 = vand.u32 %v2627, 65535
    %v2629 = vshrl.u32 %v2627, 16
    %v2630 = vand.u32 %v2626, 65535
    %v2631 = vshrl.u32 %v2626, 16
    %v2632 = vmul.u32 %v2628, %v2630
    %v2633 = vmul.u32 %v2628, %v2631
    %v2634 = vmul.u32 %v2629, %v2630
    %v2635 = vmul.u32 %v2629, %v2631
    %v2636 = vshll.u32 %v2633, 16
    %v2637 = vshrl.u32 %v2633, 16
    %v2638 = vshll.u32 %v2634, 16
    %v2639 = vshrl.u32 %v2634, 16
    %vm2640 = vc.u32 %v2632, %v2636
    %v2641 = vsel %vm2640, 1, 0
    %v2642 = vadd.s32 %v2632, %v2636
    %v2643 = vadd.s32 %v2635, %v2641
    %vm2644 = vc.u32 %v2642, %v2638
    %v2645 = vsel %vm2644, 1, 0
    %v2646 = vadd.s32 %v2642, %v2638
    %v2647 = vadd.s32 %v2643, %v2645
    %v2648 = vadd.s32 %v2647, %v2637
    %v2649 = vadd.s32 %v2648, %v2639
    %v2650 = vand.u32 %v2627, 65535
    %v2651 = vshrl.u32 %v2627, 16
    %v2652 = vand.u32 %v2622, 65535
    %v2653 = vshrl.u32 %v2622, 16
    %v2654 = vmul.u32 %v2650, %v2652
    %v2655 = vmul.u32 %v2650, %v2653
    %v2656 = vmul.u32 %v2651, %v2652
    %v2657 = vmul.u32 %v2651, %v2653
    %v2658 = vshll.u32 %v2655, 16
    %v2659 = vshrl.u32 %v2655, 16
    %v2660 = vshll.u32 %v2656, 16
    %v2661 = vshrl.u32 %v2656, 16
    %vm2662 = vc.u32 %v2654, %v2658
    %v2663 = vsel %vm2662, 1, 0
    %v2664 = vadd.s32 %v2654, %v2658
    %v2665 = vadd.s32 %v2657, %v2663
    %vm2666 = vc.u32 %v2664, %v2660
    %v2667 = vsel %vm2666, 1, 0
    %v2668 = vadd.s32 %v2664, %v2660
    %v2669 = vadd.s32 %v2665, %v2667
    %v2670 = vadd.s32 %v2669, %v2659
    %v2671 = vadd.s32 %v2670, %v2661
    %v2672 = vmul.u32 %v2627, %v2618
    %v2673 = vadd.s32 %v2649, %v2668
    %vm2674 = vc.u32 %v2649, %v2668
    %v2675 = vadd.s32 %v2671, 1
    %v2676 = vsel %vm2674, %v2675, %v2671
    %v2677 = vadd.s32 %v2672, %v2676
    %v2678 = vadd.s32 %v2677, 536870912
    %v2679 = vshrl.u32 %v2678, 30
    %v2680 = vshll.u32 %v2679, 30
    %v2681 = vsub.s32 %v2677, %v2680
    %vm2682 = vcmp.lt.s32.totalorder %v2681, 0
    %v2683 = vsub.s32 0, %v2681
    %v2684 = vsel %vm2682, %v2683, %v2681
    %v2685 = vclz %v2684
    %v2686 = vsub.s32 %v2685, 2
    %vm2687 = vcmp.gt.s32.totalorder 0, %v2686
    %v2688 = vsel %vm2687, 0, %v2686
    %v2689 = vsub.s32 32, %v2688
    %v2690 = vshll.u32 %v2681, %v2688
    %v2691 = vshrl.u32 %v2673, %v2689
    %v2692 = vor.u32 %v2690, %v2691
    %v2693 = vsub.s32 4294967266, %v2688
    %v2694 = vadd.s32 %v2693, 127
    %v2695 = vshll.u32 %v2694, 23
    %v2696 = vor.u32 4788187, %v2695
    %v2697 = vand.u32 2147483647, %v2696
    %v2699 = vcvt.s32.f32 %v2692
    %v2700 = vmul.f32 %v2699, %v2697
    %v2701 = vxor.u32 %v2700, 2147483648
    %v2702 = vsel %vm2581, %v2701, %v2700
    %v2703 = vsub.s32 4, %v2679
    %v2704 = vsel %vm2581, %v2703, %v2679
    %v2705 = vsel %vm2580, %v1493, %v2702
    %v2706 = vsel %vm2580, 0, %v2704
    %v2707 = vmul.f32 %v2705, %v2705
    %v2708 = vmul.f32 %v2707, -0.001358992
    %v2709 = vadd.f32 %v2708, 0.041655596
    %v2710 = vmul.f32 %v2707, %v2709
    %v2711 = vadd.f32 %v2710, -0.4999988
    %v2712 = vmul.f32 %v2707, %v2711
    %v2713 = vadd.f32 1.0, %v2712
    %v2714 = vmul.f32 %v2705, %v2705
    %v2715 = vmul.f32 %v2714, -0.00019511016
    %v2716 = vadd.f32 %v2715, 0.008332121
    %v2717 = vmul.f32 %v2714, %v2716
    %v2718 = vadd.f32 %v2717, -0.16666654
    %v2719 = vmul.f32 %v2714, %v2718
    %v2720 = vadd.f32 %v2719, 1.0
    %v2721 = vmul.f32 %v2720, %v2705
    %vm2722 = vweird.f32 %v1493
    %v2723 = vadd.s32 %v2706, 3
    %v2724 = vand.u32 %v2723, 3
    %vm2725 = vcmp.lt.s32.totalorder %v2724, 2
    %vm2726 = vcmp.eq.s32.totalorder %v2724, 0
    %v2727 = vxor.u32 %v2721, 2147483648
    %v2728 = vsel %vm2726, %v2713, %v2727
    %vm2729 = vcmp.eq.s32.totalorder %v2724, 2
    %v2730 = vxor.u32 %v2713, 2147483648
    %v2731 = vsel %vm2729, %v2730, %v2721
    %v2732 = vsel %vm2725, %v2728, %v2731
    %v2733 = vsel %vm2722, nan, %v2732
    %s2734 = scalar_lea.vmem %s3, 32
    %v2735 = vld [vmem:[%s2734] sm:$0xff]
    %v2736 = vld [vmem:[%s2734 + $0x8] sm:$0xff]
    %v2737 = vld [vmem:[%s2734 + $0x10] sm:$0xff]
    %v2738 = vld [vmem:[%s2734 + $0x18] sm:$0xff]
    %s2739 = scalar_lea.vmem %s4, 32
    %v2740 = vld [vmem:[%s2739] sm:$0xff]
    %v2741 = vld [vmem:[%s2739 + $0x8] sm:$0xff]
    %v2742 = vld [vmem:[%s2739 + $0x10] sm:$0xff]
    %v2743 = vld [vmem:[%s2739 + $0x18] sm:$0xff]
    %2745 = vset.pattern.permute.xlu0 0
    %2746 = vperm.xlu0 %2745, %v2740
    %v2747 = vpop.permute.xlu0 %2746
    %2750 = vset.pattern.permute.xlu0 0
    %2751 = vperm.xlu0 %2750, %v2741
    %v2752 = vpop.permute.xlu0 %2751
    %2755 = vset.pattern.permute.xlu0 0
    %2756 = vperm.xlu0 %2755, %v2742
    %v2757 = vpop.permute.xlu0 %2756
    %2760 = vset.pattern.permute.xlu0 0
    %2761 = vperm.xlu0 %2760, %v2743
    %v2762 = vpop.permute.xlu0 %2761
    %v2765 = vsel %vm1415, %v2735, 0
    %v2768 = vsel %vm1415, %v2736, 0
    %v2771 = vsel %vm1415, %v2737, 0
    %v2774 = vsel %vm1415, %v2738, 0
    %2776 = vmatpush.msra.mxu0 0.0
    %2777 = vmatpush.msra.mxu0 0.0
    %2778 = vmatpush.msra.mxu0 0.0
    %2779 = vmatpush.msra.mxu0 0.0
    %2780 = vmatpush.msra.mxu0 0.0
    %2781 = vmatpush.msra.mxu0 0.0
    %2782 = vmatpush.msra.mxu0 0.0
    %2783 = vmatpush.msra.mxu0 0.0
    %2784 = vmatpush.msra.mxu0 0.0
    %2785 = vmatpush.msra.mxu0 0.0
    %2786 = vmatpush.msra.mxu0 0.0
    %2787 = vmatpush.msra.mxu0 0.0
    %2788 = vmatpush.msra.mxu0 %v2578
    %2789 = vmatpush.msra.mxu0 %v2268
    %2790 = vmatpush.msra.mxu0 %v1958
    %2791 = vmatpush.msra.mxu0 %v1648
    %2792 = vmatmul.f32.gmra.mxu0 %v2765
    %v2793 = vpop.f32.mrf.mxu0
    %v2794 = vadd.f32 %v2747, %v2793
    %2795 = vmatmul.f32.gmra.mxu0 %v2768
    %v2796 = vpop.f32.mrf.mxu0
    %v2797 = vadd.f32 %v2752, %v2796
    %2798 = vmatmul.f32.gmra.mxu0 %v2771
    %v2799 = vpop.f32.mrf.mxu0
    %v2800 = vadd.f32 %v2757, %v2799
    %2801 = vmatmul.f32.gmra.mxu0 %v2774
    %v2802 = vpop.f32.mrf.mxu0
    %v2803 = vadd.f32 %v2762, %v2802
    %2804 = vdwg.mxu0
    %2805 = vmatpush.msra.mxu0 0.0
    %2806 = vmatpush.msra.mxu0 0.0
    %2807 = vmatpush.msra.mxu0 0.0
    %2808 = vmatpush.msra.mxu0 0.0
    %2809 = vmatpush.msra.mxu0 0.0
    %2810 = vmatpush.msra.mxu0 0.0
    %2811 = vmatpush.msra.mxu0 0.0
    %2812 = vmatpush.msra.mxu0 0.0
    %2813 = vmatpush.msra.mxu0 0.0
    %2814 = vmatpush.msra.mxu0 0.0
    %2815 = vmatpush.msra.mxu0 0.0
    %2816 = vmatpush.msra.mxu0 0.0
    %2817 = vmatpush.msra.mxu0 %v2733
    %2818 = vmatpush.msra.mxu0 %v2423
    %2819 = vmatpush.msra.mxu0 %v2113
    %2820 = vmatpush.msra.mxu0 %v1803
    %2821 = vmatmul.f32.gmra.mxu0 %v2765
    %v2822 = vpop.f32.mrf.mxu0
    %v2823 = vadd.f32 %v2747, %v2822
    %2824 = vmatmul.f32.gmra.mxu0 %v2768
    %v2825 = vpop.f32.mrf.mxu0
    %v2826 = vadd.f32 %v2752, %v2825
    %2827 = vmatmul.f32.gmra.mxu0 %v2771
    %v2828 = vpop.f32.mrf.mxu0
    %v2829 = vadd.f32 %v2757, %v2828
    %2830 = vmatmul.f32.gmra.mxu0 %v2774
    %v2831 = vpop.f32.mrf.mxu0
    %v2832 = vadd.f32 %v2762, %v2831
    %2833 = vdwg.mxu0
    %v2834 = vmul.f32 %v2794, 30.0
    %v2835 = vmul.f32 %v2823, 30.0
    %v2836 = vmul.f32 %v2797, 30.0
    %v2837 = vmul.f32 %v2826, 30.0
    %v2838 = vmul.f32 %v2800, 30.0
    %v2839 = vmul.f32 %v2829, 30.0
    %v2840 = vmul.f32 %v2803, 30.0
    %v2841 = vmul.f32 %v2832, 30.0
    %v2842 = vand.u32 2147483647, %v2834
    %vm2843 = vcmp.le.f32.partialorder %v2842, 0.7853982
    %vm2844 = vcmp.lt.s32.totalorder %v2834, 0
    %v2845 = vand.u32 %v2834, 2139095040
    %v2846 = vshrl.u32 %v2845, 23
    %v2847 = vsub.s32 %v2846, 127
    %v2848 = vand.u32 2147483647, %v2834
    %v2849 = vand.u32 %v2848, 8388607
    %v2850 = vor.u32 %v2849, 8388608
    %v2851 = vsub.s32 0, %v2850
    %v2852 = vadd.s32 %v2847, 1
    %vm2853 = vcmp.gt.s32.totalorder %v2852, 0
    %v2854 = vsel %vm2853, %v2852, 0
    %v2855 = vshrl.u32 %v2854, 5
    %v2856 = vand.u32 %v2854, 31
    %v2857 = vsub.s32 32, %v2856
    %v2858 = vshrl.u32 683565275, %v2857
    %v2859 = vshll.u32 683565275, %v2856
    %v2860 = vshrl.u32 2475754826, %v2857
    %v2861 = vor.u32 %v2859, %v2860
    %v2862 = vshll.u32 2475754826, %v2856
    %v2863 = vshrl.u32 2131351028, %v2857
    %v2864 = vor.u32 %v2862, %v2863
    %v2865 = vshll.u32 2131351028, %v2856
    %v2866 = vshrl.u32 2102212464, %v2857
    %v2867 = vor.u32 %v2865, %v2866
    %v2868 = vshll.u32 2102212464, %v2856
    %v2869 = vshrl.u32 920167782, %v2857
    %v2870 = vor.u32 %v2868, %v2869
    %v2871 = vshll.u32 920167782, %v2856
    %v2872 = vshrl.u32 1326507024, %v2857
    %v2873 = vor.u32 %v2871, %v2872
    %vm2874 = vcmp.lt.s32.totalorder %v2855, 1
    %vm2875 = vcmp.lt.s32.totalorder %v2855, 2
    %vm2876 = vcmp.lt.s32.totalorder %v2855, 3
    %vm2877 = vcmp.lt.s32.totalorder %v2855, 4
    %v2878 = vsel %vm2874, %v2858, %v2861
    %v2879 = vsel %vm2877, %v2867, 2102212464
    %v2880 = vsel %vm2876, %v2864, %v2879
    %v2881 = vsel %vm2875, %v2878, %v2880
    %v2882 = vsel %vm2874, %v2861, %v2864
    %v2883 = vsel %vm2877, %v2870, 920167782
    %v2884 = vsel %vm2876, %v2867, %v2883
    %v2885 = vsel %vm2875, %v2882, %v2884
    %v2886 = vsel %vm2874, %v2864, %v2867
    %v2887 = vsel %vm2877, %v2873, 1326507024
    %v2888 = vsel %vm2876, %v2870, %v2887
    %v2889 = vsel %vm2875, %v2886, %v2888
    %v2890 = vshll.u32 %v2850, 8
    %v2891 = vand.u32 %v2890, 65535
    %v2892 = vshrl.u32 %v2890, 16
    %v2893 = vand.u32 %v2889, 65535
    %v2894 = vshrl.u32 %v2889, 16
    %v2895 = vmul.u32 %v2891, %v2893
    %v2896 = vmul.u32 %v2891, %v2894
    %v2897 = vmul.u32 %v2892, %v2893
    %v2898 = vmul.u32 %v2892, %v2894
    %v2899 = vshll.u32 %v2896, 16
    %v2900 = vshrl.u32 %v2896, 16
    %v2901 = vshll.u32 %v2897, 16
    %v2902 = vshrl.u32 %v2897, 16
    %vm2903 = vc.u32 %v2895, %v2899
    %v2904 = vsel %vm2903, 1, 0
    %v2905 = vadd.s32 %v2895, %v2899
    %v2906 = vadd.s32 %v2898, %v2904
    %vm2907 = vc.u32 %v2905, %v2901
    %v2908 = vsel %vm2907, 1, 0
    %v2909 = vadd.s32 %v2905, %v2901
    %v2910 = vadd.s32 %v2906, %v2908
    %v2911 = vadd.s32 %v2910, %v2900
    %v2912 = vadd.s32 %v2911, %v2902
    %v2913 = vand.u32 %v2890, 65535
    %v2914 = vshrl.u32 %v2890, 16
    %v2915 = vand.u32 %v2885, 65535
    %v2916 = vshrl.u32 %v2885, 16
    %v2917 = vmul.u32 %v2913, %v2915
    %v2918 = vmul.u32 %v2913, %v2916
    %v2919 = vmul.u32 %v2914, %v2915
    %v2920 = vmul.u32 %v2914, %v2916
    %v2921 = vshll.u32 %v2918, 16
    %v2922 = vshrl.u32 %v2918, 16
    %v2923 = vshll.u32 %v2919, 16
    %v2924 = vshrl.u32 %v2919, 16
    %vm2925 = vc.u32 %v2917, %v2921
    %v2926 = vsel %vm2925, 1, 0
    %v2927 = vadd.s32 %v2917, %v2921
    %v2928 = vadd.s32 %v2920, %v2926
    %vm2929 = vc.u32 %v2927, %v2923
    %v2930 = vsel %vm2929, 1, 0
    %v2931 = vadd.s32 %v2927, %v2923
    %v2932 = vadd.s32 %v2928, %v2930
    %v2933 = vadd.s32 %v2932, %v2922
    %v2934 = vadd.s32 %v2933, %v2924
    %v2935 = vmul.u32 %v2890, %v2881
    %v2936 = vadd.s32 %v2912, %v2931
    %vm2937 = vc.u32 %v2912, %v2931
    %v2938 = vadd.s32 %v2934, 1
    %v2939 = vsel %vm2937, %v2938, %v2934
    %v2940 = vadd.s32 %v2935, %v2939
    %v2941 = vadd.s32 %v2940, 536870912
    %v2942 = vshrl.u32 %v2941, 30
    %v2943 = vshll.u32 %v2942, 30
    %v2944 = vsub.s32 %v2940, %v2943
    %vm2945 = vcmp.lt.s32.totalorder %v2944, 0
    %v2946 = vsub.s32 0, %v2944
    %v2947 = vsel %vm2945, %v2946, %v2944
    %v2948 = vclz %v2947
    %v2949 = vsub.s32 %v2948, 2
    %vm2950 = vcmp.gt.s32.totalorder 0, %v2949
    %v2951 = vsel %vm2950, 0, %v2949
    %v2952 = vsub.s32 32, %v2951
    %v2953 = vshll.u32 %v2944, %v2951
    %v2954 = vshrl.u32 %v2936, %v2952
    %v2955 = vor.u32 %v2953, %v2954
    %v2956 = vsub.s32 4294967266, %v2951
    %v2957 = vadd.s32 %v2956, 127
    %v2958 = vshll.u32 %v2957, 23
    %v2959 = vor.u32 4788187, %v2958
    %v2960 = vand.u32 2147483647, %v2959
    %v2962 = vcvt.s32.f32 %v2955
    %v2963 = vmul.f32 %v2962, %v2960
    %v2964 = vxor.u32 %v2963, 2147483648
    %v2965 = vsel %vm2844, %v2964, %v2963
    %v2966 = vsub.s32 4, %v2942
    %v2967 = vsel %vm2844, %v2966, %v2942
    %v2968 = vsel %vm2843, %v2834, %v2965
    %v2969 = vsel %vm2843, 0, %v2967
    %v2970 = vmul.f32 %v2968, %v2968
    %v2971 = vmul.f32 %v2970, -0.001358992
    %v2972 = vadd.f32 %v2971, 0.041655596
    %v2973 = vmul.f32 %v2970, %v2972
    %v2974 = vadd.f32 %v2973, -0.4999988
    %v2975 = vmul.f32 %v2970, %v2974
    %v2976 = vadd.f32 1.0, %v2975
    %v2977 = vmul.f32 %v2968, %v2968
    %v2978 = vmul.f32 %v2977, -0.00019511016
    %v2979 = vadd.f32 %v2978, 0.008332121
    %v2980 = vmul.f32 %v2977, %v2979
    %v2981 = vadd.f32 %v2980, -0.16666654
    %v2982 = vmul.f32 %v2977, %v2981
    %v2983 = vadd.f32 %v2982, 1.0
    %v2984 = vmul.f32 %v2983, %v2968
    %vm2985 = vweird.f32 %v2834
    %v2986 = vadd.s32 %v2969, 3
    %v2987 = vand.u32 %v2986, 3
    %vm2988 = vcmp.lt.s32.totalorder %v2987, 2
    %vm2989 = vcmp.eq.s32.totalorder %v2987, 0
    %v2990 = vxor.u32 %v2984, 2147483648
    %v2991 = vsel %vm2989, %v2976, %v2990
    %vm2992 = vcmp.eq.s32.totalorder %v2987, 2
    %v2993 = vxor.u32 %v2976, 2147483648
    %v2994 = vsel %vm2992, %v2993, %v2984
    %v2995 = vsel %vm2988, %v2991, %v2994
    %v2996 = vsel %vm2985, nan, %v2995
    %v2997 = vand.u32 2147483647, %v2835
    %vm2998 = vcmp.le.f32.partialorder %v2997, 0.7853982
    %vm2999 = vcmp.lt.s32.totalorder %v2835, 0
    %v3000 = vand.u32 %v2835, 2139095040
    %v3001 = vshrl.u32 %v3000, 23
    %v3002 = vsub.s32 %v3001, 127
    %v3003 = vand.u32 2147483647, %v2835
    %v3004 = vand.u32 %v3003, 8388607
    %v3005 = vor.u32 %v3004, 8388608
    %v3006 = vsub.s32 0, %v3005
    %v3007 = vadd.s32 %v3002, 1
    %vm3008 = vcmp.gt.s32.totalorder %v3007, 0
    %v3009 = vsel %vm3008, %v3007, 0
    %v3010 = vshrl.u32 %v3009, 5
    %v3011 = vand.u32 %v3009, 31
    %v3012 = vsub.s32 32, %v3011
    %v3013 = vshrl.u32 683565275, %v3012
    %v3014 = vshll.u32 683565275, %v3011
    %v3015 = vshrl.u32 2475754826, %v3012
    %v3016 = vor.u32 %v3014, %v3015
    %v3017 = vshll.u32 2475754826, %v3011
    %v3018 = vshrl.u32 2131351028, %v3012
    %v3019 = vor.u32 %v3017, %v3018
    %v3020 = vshll.u32 2131351028, %v3011
    %v3021 = vshrl.u32 2102212464, %v3012
    %v3022 = vor.u32 %v3020, %v3021
    %v3023 = vshll.u32 2102212464, %v3011
    %v3024 = vshrl.u32 920167782, %v3012
    %v3025 = vor.u32 %v3023, %v3024
    %v3026 = vshll.u32 920167782, %v3011
    %v3027 = vshrl.u32 1326507024, %v3012
    %v3028 = vor.u32 %v3026, %v3027
    %vm3029 = vcmp.lt.s32.totalorder %v3010, 1
    %vm3030 = vcmp.lt.s32.totalorder %v3010, 2
    %vm3031 = vcmp.lt.s32.totalorder %v3010, 3
    %vm3032 = vcmp.lt.s32.totalorder %v3010, 4
    %v3033 = vsel %vm3029, %v3013, %v3016
    %v3034 = vsel %vm3032, %v3022, 2102212464
    %v3035 = vsel %vm3031, %v3019, %v3034
    %v3036 = vsel %vm3030, %v3033, %v3035
    %v3037 = vsel %vm3029, %v3016, %v3019
    %v3038 = vsel %vm3032, %v3025, 920167782
    %v3039 = vsel %vm3031, %v3022, %v3038
    %v3040 = vsel %vm3030, %v3037, %v3039
    %v3041 = vsel %vm3029, %v3019, %v3022
    %v3042 = vsel %vm3032, %v3028, 1326507024
    %v3043 = vsel %vm3031, %v3025, %v3042
    %v3044 = vsel %vm3030, %v3041, %v3043
    %v3045 = vshll.u32 %v3005, 8
    %v3046 = vand.u32 %v3045, 65535
    %v3047 = vshrl.u32 %v3045, 16
    %v3048 = vand.u32 %v3044, 65535
    %v3049 = vshrl.u32 %v3044, 16
    %v3050 = vmul.u32 %v3046, %v3048
    %v3051 = vmul.u32 %v3046, %v3049
    %v3052 = vmul.u32 %v3047, %v3048
    %v3053 = vmul.u32 %v3047, %v3049
    %v3054 = vshll.u32 %v3051, 16
    %v3055 = vshrl.u32 %v3051, 16
    %v3056 = vshll.u32 %v3052, 16
    %v3057 = vshrl.u32 %v3052, 16
    %vm3058 = vc.u32 %v3050, %v3054
    %v3059 = vsel %vm3058, 1, 0
    %v3060 = vadd.s32 %v3050, %v3054
    %v3061 = vadd.s32 %v3053, %v3059
    %vm3062 = vc.u32 %v3060, %v3056
    %v3063 = vsel %vm3062, 1, 0
    %v3064 = vadd.s32 %v3060, %v3056
    %v3065 = vadd.s32 %v3061, %v3063
    %v3066 = vadd.s32 %v3065, %v3055
    %v3067 = vadd.s32 %v3066, %v3057
    %v3068 = vand.u32 %v3045, 65535
    %v3069 = vshrl.u32 %v3045, 16
    %v3070 = vand.u32 %v3040, 65535
    %v3071 = vshrl.u32 %v3040, 16
    %v3072 = vmul.u32 %v3068, %v3070
    %v3073 = vmul.u32 %v3068, %v3071
    %v3074 = vmul.u32 %v3069, %v3070
    %v3075 = vmul.u32 %v3069, %v3071
    %v3076 = vshll.u32 %v3073, 16
    %v3077 = vshrl.u32 %v3073, 16
    %v3078 = vshll.u32 %v3074, 16
    %v3079 = vshrl.u32 %v3074, 16
    %vm3080 = vc.u32 %v3072, %v3076
    %v3081 = vsel %vm3080, 1, 0
    %v3082 = vadd.s32 %v3072, %v3076
    %v3083 = vadd.s32 %v3075, %v3081
    %vm3084 = vc.u32 %v3082, %v3078
    %v3085 = vsel %vm3084, 1, 0
    %v3086 = vadd.s32 %v3082, %v3078
    %v3087 = vadd.s32 %v3083, %v3085
    %v3088 = vadd.s32 %v3087, %v3077
    %v3089 = vadd.s32 %v3088, %v3079
    %v3090 = vmul.u32 %v3045, %v3036
    %v3091 = vadd.s32 %v3067, %v3086
    %vm3092 = vc.u32 %v3067, %v3086
    %v3093 = vadd.s32 %v3089, 1
    %v3094 = vsel %vm3092, %v3093, %v3089
    %v3095 = vadd.s32 %v3090, %v3094
    %v3096 = vadd.s32 %v3095, 536870912
    %v3097 = vshrl.u32 %v3096, 30
    %v3098 = vshll.u32 %v3097, 30
    %v3099 = vsub.s32 %v3095, %v3098
    %vm3100 = vcmp.lt.s32.totalorder %v3099, 0
    %v3101 = vsub.s32 0, %v3099
    %v3102 = vsel %vm3100, %v3101, %v3099
    %v3103 = vclz %v3102
    %v3104 = vsub.s32 %v3103, 2
    %vm3105 = vcmp.gt.s32.totalorder 0, %v3104
    %v3106 = vsel %vm3105, 0, %v3104
    %v3107 = vsub.s32 32, %v3106
    %v3108 = vshll.u32 %v3099, %v3106
    %v3109 = vshrl.u32 %v3091, %v3107
    %v3110 = vor.u32 %v3108, %v3109
    %v3111 = vsub.s32 4294967266, %v3106
    %v3112 = vadd.s32 %v3111, 127
    %v3113 = vshll.u32 %v3112, 23
    %v3114 = vor.u32 4788187, %v3113
    %v3115 = vand.u32 2147483647, %v3114
    %v3117 = vcvt.s32.f32 %v3110
    %v3118 = vmul.f32 %v3117, %v3115
    %v3119 = vxor.u32 %v3118, 2147483648
    %v3120 = vsel %vm2999, %v3119, %v3118
    %v3121 = vsub.s32 4, %v3097
    %v3122 = vsel %vm2999, %v3121, %v3097
    %v3123 = vsel %vm2998, %v2835, %v3120
    %v3124 = vsel %vm2998, 0, %v3122
    %v3125 = vmul.f32 %v3123, %v3123
    %v3126 = vmul.f32 %v3125, -0.001358992
    %v3127 = vadd.f32 %v3126, 0.041655596
    %v3128 = vmul.f32 %v3125, %v3127
    %v3129 = vadd.f32 %v3128, -0.4999988
    %v3130 = vmul.f32 %v3125, %v3129
    %v3131 = vadd.f32 1.0, %v3130
    %v3132 = vmul.f32 %v3123, %v3123
    %v3133 = vmul.f32 %v3132, -0.00019511016
    %v3134 = vadd.f32 %v3133, 0.008332121
    %v3135 = vmul.f32 %v3132, %v3134
    %v3136 = vadd.f32 %v3135, -0.16666654
    %v3137 = vmul.f32 %v3132, %v3136
    %v3138 = vadd.f32 %v3137, 1.0
    %v3139 = vmul.f32 %v3138, %v3123
    %vm3140 = vweird.f32 %v2835
    %v3141 = vadd.s32 %v3124, 3
    %v3142 = vand.u32 %v3141, 3
    %vm3143 = vcmp.lt.s32.totalorder %v3142, 2
    %vm3144 = vcmp.eq.s32.totalorder %v3142, 0
    %v3145 = vxor.u32 %v3139, 2147483648
    %v3146 = vsel %vm3144, %v3131, %v3145
    %vm3147 = vcmp.eq.s32.totalorder %v3142, 2
    %v3148 = vxor.u32 %v3131, 2147483648
    %v3149 = vsel %vm3147, %v3148, %v3139
    %v3150 = vsel %vm3143, %v3146, %v3149
    %v3151 = vsel %vm3140, nan, %v3150
    %v3152 = vand.u32 2147483647, %v2836
    %vm3153 = vcmp.le.f32.partialorder %v3152, 0.7853982
    %vm3154 = vcmp.lt.s32.totalorder %v2836, 0
    %v3155 = vand.u32 %v2836, 2139095040
    %v3156 = vshrl.u32 %v3155, 23
    %v3157 = vsub.s32 %v3156, 127
    %v3158 = vand.u32 2147483647, %v2836
    %v3159 = vand.u32 %v3158, 8388607
    %v3160 = vor.u32 %v3159, 8388608
    %v3161 = vsub.s32 0, %v3160
    %v3162 = vadd.s32 %v3157, 1
    %vm3163 = vcmp.gt.s32.totalorder %v3162, 0
    %v3164 = vsel %vm3163, %v3162, 0
    %v3165 = vshrl.u32 %v3164, 5
    %v3166 = vand.u32 %v3164, 31
    %v3167 = vsub.s32 32, %v3166
    %v3168 = vshrl.u32 683565275, %v3167
    %v3169 = vshll.u32 683565275, %v3166
    %v3170 = vshrl.u32 2475754826, %v3167
    %v3171 = vor.u32 %v3169, %v3170
    %v3172 = vshll.u32 2475754826, %v3166
    %v3173 = vshrl.u32 2131351028, %v3167
    %v3174 = vor.u32 %v3172, %v3173
    %v3175 = vshll.u32 2131351028, %v3166
    %v3176 = vshrl.u32 2102212464, %v3167
    %v3177 = vor.u32 %v3175, %v3176
    %v3178 = vshll.u32 2102212464, %v3166
    %v3179 = vshrl.u32 920167782, %v3167
    %v3180 = vor.u32 %v3178, %v3179
    %v3181 = vshll.u32 920167782, %v3166
    %v3182 = vshrl.u32 1326507024, %v3167
    %v3183 = vor.u32 %v3181, %v3182
    %vm3184 = vcmp.lt.s32.totalorder %v3165, 1
    %vm3185 = vcmp.lt.s32.totalorder %v3165, 2
    %vm3186 = vcmp.lt.s32.totalorder %v3165, 3
    %vm3187 = vcmp.lt.s32.totalorder %v3165, 4
    %v3188 = vsel %vm3184, %v3168, %v3171
    %v3189 = vsel %vm3187, %v3177, 2102212464
    %v3190 = vsel %vm3186, %v3174, %v3189
    %v3191 = vsel %vm3185, %v3188, %v3190
    %v3192 = vsel %vm3184, %v3171, %v3174
    %v3193 = vsel %vm3187, %v3180, 920167782
    %v3194 = vsel %vm3186, %v3177, %v3193
    %v3195 = vsel %vm3185, %v3192, %v3194
    %v3196 = vsel %vm3184, %v3174, %v3177
    %v3197 = vsel %vm3187, %v3183, 1326507024
    %v3198 = vsel %vm3186, %v3180, %v3197
    %v3199 = vsel %vm3185, %v3196, %v3198
    %v3200 = vshll.u32 %v3160, 8
    %v3201 = vand.u32 %v3200, 65535
    %v3202 = vshrl.u32 %v3200, 16
    %v3203 = vand.u32 %v3199, 65535
    %v3204 = vshrl.u32 %v3199, 16
    %v3205 = vmul.u32 %v3201, %v3203
    %v3206 = vmul.u32 %v3201, %v3204
    %v3207 = vmul.u32 %v3202, %v3203
    %v3208 = vmul.u32 %v3202, %v3204
    %v3209 = vshll.u32 %v3206, 16
    %v3210 = vshrl.u32 %v3206, 16
    %v3211 = vshll.u32 %v3207, 16
    %v3212 = vshrl.u32 %v3207, 16
    %vm3213 = vc.u32 %v3205, %v3209
    %v3214 = vsel %vm3213, 1, 0
    %v3215 = vadd.s32 %v3205, %v3209
    %v3216 = vadd.s32 %v3208, %v3214
    %vm3217 = vc.u32 %v3215, %v3211
    %v3218 = vsel %vm3217, 1, 0
    %v3219 = vadd.s32 %v3215, %v3211
    %v3220 = vadd.s32 %v3216, %v3218
    %v3221 = vadd.s32 %v3220, %v3210
    %v3222 = vadd.s32 %v3221, %v3212
    %v3223 = vand.u32 %v3200, 65535
    %v3224 = vshrl.u32 %v3200, 16
    %v3225 = vand.u32 %v3195, 65535
    %v3226 = vshrl.u32 %v3195, 16
    %v3227 = vmul.u32 %v3223, %v3225
    %v3228 = vmul.u32 %v3223, %v3226
    %v3229 = vmul.u32 %v3224, %v3225
    %v3230 = vmul.u32 %v3224, %v3226
    %v3231 = vshll.u32 %v3228, 16
    %v3232 = vshrl.u32 %v3228, 16
    %v3233 = vshll.u32 %v3229, 16
    %v3234 = vshrl.u32 %v3229, 16
    %vm3235 = vc.u32 %v3227, %v3231
    %v3236 = vsel %vm3235, 1, 0
    %v3237 = vadd.s32 %v3227, %v3231
    %v3238 = vadd.s32 %v3230, %v3236
    %vm3239 = vc.u32 %v3237, %v3233
    %v3240 = vsel %vm3239, 1, 0
    %v3241 = vadd.s32 %v3237, %v3233
    %v3242 = vadd.s32 %v3238, %v3240
    %v3243 = vadd.s32 %v3242, %v3232
    %v3244 = vadd.s32 %v3243, %v3234
    %v3245 = vmul.u32 %v3200, %v3191
    %v3246 = vadd.s32 %v3222, %v3241
    %vm3247 = vc.u32 %v3222, %v3241
    %v3248 = vadd.s32 %v3244, 1
    %v3249 = vsel %vm3247, %v3248, %v3244
    %v3250 = vadd.s32 %v3245, %v3249
    %v3251 = vadd.s32 %v3250, 536870912
    %v3252 = vshrl.u32 %v3251, 30
    %v3253 = vshll.u32 %v3252, 30
    %v3254 = vsub.s32 %v3250, %v3253
    %vm3255 = vcmp.lt.s32.totalorder %v3254, 0
    %v3256 = vsub.s32 0, %v3254
    %v3257 = vsel %vm3255, %v3256, %v3254
    %v3258 = vclz %v3257
    %v3259 = vsub.s32 %v3258, 2
    %vm3260 = vcmp.gt.s32.totalorder 0, %v3259
    %v3261 = vsel %vm3260, 0, %v3259
    %v3262 = vsub.s32 32, %v3261
    %v3263 = vshll.u32 %v3254, %v3261
    %v3264 = vshrl.u32 %v3246, %v3262
    %v3265 = vor.u32 %v3263, %v3264
    %v3266 = vsub.s32 4294967266, %v3261
    %v3267 = vadd.s32 %v3266, 127
    %v3268 = vshll.u32 %v3267, 23
    %v3269 = vor.u32 4788187, %v3268
    %v3270 = vand.u32 2147483647, %v3269
    %v3272 = vcvt.s32.f32 %v3265
    %v3273 = vmul.f32 %v3272, %v3270
    %v3274 = vxor.u32 %v3273, 2147483648
    %v3275 = vsel %vm3154, %v3274, %v3273
    %v3276 = vsub.s32 4, %v3252
    %v3277 = vsel %vm3154, %v3276, %v3252
    %v3278 = vsel %vm3153, %v2836, %v3275
    %v3279 = vsel %vm3153, 0, %v3277
    %v3280 = vmul.f32 %v3278, %v3278
    %v3281 = vmul.f32 %v3280, -0.001358992
    %v3282 = vadd.f32 %v3281, 0.041655596
    %v3283 = vmul.f32 %v3280, %v3282
    %v3284 = vadd.f32 %v3283, -0.4999988
    %v3285 = vmul.f32 %v3280, %v3284
    %v3286 = vadd.f32 1.0, %v3285
    %v3287 = vmul.f32 %v3278, %v3278
    %v3288 = vmul.f32 %v3287, -0.00019511016
    %v3289 = vadd.f32 %v3288, 0.008332121
    %v3290 = vmul.f32 %v3287, %v3289
    %v3291 = vadd.f32 %v3290, -0.16666654
    %v3292 = vmul.f32 %v3287, %v3291
    %v3293 = vadd.f32 %v3292, 1.0
    %v3294 = vmul.f32 %v3293, %v3278
    %vm3295 = vweird.f32 %v2836
    %v3296 = vadd.s32 %v3279, 3
    %v3297 = vand.u32 %v3296, 3
    %vm3298 = vcmp.lt.s32.totalorder %v3297, 2
    %vm3299 = vcmp.eq.s32.totalorder %v3297, 0
    %v3300 = vxor.u32 %v3294, 2147483648
    %v3301 = vsel %vm3299, %v3286, %v3300
    %vm3302 = vcmp.eq.s32.totalorder %v3297, 2
    %v3303 = vxor.u32 %v3286, 2147483648
    %v3304 = vsel %vm3302, %v3303, %v3294
    %v3305 = vsel %vm3298, %v3301, %v3304
    %v3306 = vsel %vm3295, nan, %v3305
    %v3307 = vand.u32 2147483647, %v2837
    %vm3308 = vcmp.le.f32.partialorder %v3307, 0.7853982
    %vm3309 = vcmp.lt.s32.totalorder %v2837, 0
    %v3310 = vand.u32 %v2837, 2139095040
    %v3311 = vshrl.u32 %v3310, 23
    %v3312 = vsub.s32 %v3311, 127
    %v3313 = vand.u32 2147483647, %v2837
    %v3314 = vand.u32 %v3313, 8388607
    %v3315 = vor.u32 %v3314, 8388608
    %v3316 = vsub.s32 0, %v3315
    %v3317 = vadd.s32 %v3312, 1
    %vm3318 = vcmp.gt.s32.totalorder %v3317, 0
    %v3319 = vsel %vm3318, %v3317, 0
    %v3320 = vshrl.u32 %v3319, 5
    %v3321 = vand.u32 %v3319, 31
    %v3322 = vsub.s32 32, %v3321
    %v3323 = vshrl.u32 683565275, %v3322
    %v3324 = vshll.u32 683565275, %v3321
    %v3325 = vshrl.u32 2475754826, %v3322
    %v3326 = vor.u32 %v3324, %v3325
    %v3327 = vshll.u32 2475754826, %v3321
    %v3328 = vshrl.u32 2131351028, %v3322
    %v3329 = vor.u32 %v3327, %v3328
    %v3330 = vshll.u32 2131351028, %v3321
    %v3331 = vshrl.u32 2102212464, %v3322
    %v3332 = vor.u32 %v3330, %v3331
    %v3333 = vshll.u32 2102212464, %v3321
    %v3334 = vshrl.u32 920167782, %v3322
    %v3335 = vor.u32 %v3333, %v3334
    %v3336 = vshll.u32 920167782, %v3321
    %v3337 = vshrl.u32 1326507024, %v3322
    %v3338 = vor.u32 %v3336, %v3337
    %vm3339 = vcmp.lt.s32.totalorder %v3320, 1
    %vm3340 = vcmp.lt.s32.totalorder %v3320, 2
    %vm3341 = vcmp.lt.s32.totalorder %v3320, 3
    %vm3342 = vcmp.lt.s32.totalorder %v3320, 4
    %v3343 = vsel %vm3339, %v3323, %v3326
    %v3344 = vsel %vm3342, %v3332, 2102212464
    %v3345 = vsel %vm3341, %v3329, %v3344
    %v3346 = vsel %vm3340, %v3343, %v3345
    %v3347 = vsel %vm3339, %v3326, %v3329
    %v3348 = vsel %vm3342, %v3335, 920167782
    %v3349 = vsel %vm3341, %v3332, %v3348
    %v3350 = vsel %vm3340, %v3347, %v3349
    %v3351 = vsel %vm3339, %v3329, %v3332
    %v3352 = vsel %vm3342, %v3338, 1326507024
    %v3353 = vsel %vm3341, %v3335, %v3352
    %v3354 = vsel %vm3340, %v3351, %v3353
    %v3355 = vshll.u32 %v3315, 8
    %v3356 = vand.u32 %v3355, 65535
    %v3357 = vshrl.u32 %v3355, 16
    %v3358 = vand.u32 %v3354, 65535
    %v3359 = vshrl.u32 %v3354, 16
    %v3360 = vmul.u32 %v3356, %v3358
    %v3361 = vmul.u32 %v3356, %v3359
    %v3362 = vmul.u32 %v3357, %v3358
    %v3363 = vmul.u32 %v3357, %v3359
    %v3364 = vshll.u32 %v3361, 16
    %v3365 = vshrl.u32 %v3361, 16
    %v3366 = vshll.u32 %v3362, 16
    %v3367 = vshrl.u32 %v3362, 16
    %vm3368 = vc.u32 %v3360, %v3364
    %v3369 = vsel %vm3368, 1, 0
    %v3370 = vadd.s32 %v3360, %v3364
    %v3371 = vadd.s32 %v3363, %v3369
    %vm3372 = vc.u32 %v3370, %v3366
    %v3373 = vsel %vm3372, 1, 0
    %v3374 = vadd.s32 %v3370, %v3366
    %v3375 = vadd.s32 %v3371, %v3373
    %v3376 = vadd.s32 %v3375, %v3365
    %v3377 = vadd.s32 %v3376, %v3367
    %v3378 = vand.u32 %v3355, 65535
    %v3379 = vshrl.u32 %v3355, 16
    %v3380 = vand.u32 %v3350, 65535
    %v3381 = vshrl.u32 %v3350, 16
    %v3382 = vmul.u32 %v3378, %v3380
    %v3383 = vmul.u32 %v3378, %v3381
    %v3384 = vmul.u32 %v3379, %v3380
    %v3385 = vmul.u32 %v3379, %v3381
    %v3386 = vshll.u32 %v3383, 16
    %v3387 = vshrl.u32 %v3383, 16
    %v3388 = vshll.u32 %v3384, 16
    %v3389 = vshrl.u32 %v3384, 16
    %vm3390 = vc.u32 %v3382, %v3386
    %v3391 = vsel %vm3390, 1, 0
    %v3392 = vadd.s32 %v3382, %v3386
    %v3393 = vadd.s32 %v3385, %v3391
    %vm3394 = vc.u32 %v3392, %v3388
    %v3395 = vsel %vm3394, 1, 0
    %v3396 = vadd.s32 %v3392, %v3388
    %v3397 = vadd.s32 %v3393, %v3395
    %v3398 = vadd.s32 %v3397, %v3387
    %v3399 = vadd.s32 %v3398, %v3389
    %v3400 = vmul.u32 %v3355, %v3346
    %v3401 = vadd.s32 %v3377, %v3396
    %vm3402 = vc.u32 %v3377, %v3396
    %v3403 = vadd.s32 %v3399, 1
    %v3404 = vsel %vm3402, %v3403, %v3399
    %v3405 = vadd.s32 %v3400, %v3404
    %v3406 = vadd.s32 %v3405, 536870912
    %v3407 = vshrl.u32 %v3406, 30
    %v3408 = vshll.u32 %v3407, 30
    %v3409 = vsub.s32 %v3405, %v3408
    %vm3410 = vcmp.lt.s32.totalorder %v3409, 0
    %v3411 = vsub.s32 0, %v3409
    %v3412 = vsel %vm3410, %v3411, %v3409
    %v3413 = vclz %v3412
    %v3414 = vsub.s32 %v3413, 2
    %vm3415 = vcmp.gt.s32.totalorder 0, %v3414
    %v3416 = vsel %vm3415, 0, %v3414
    %v3417 = vsub.s32 32, %v3416
    %v3418 = vshll.u32 %v3409, %v3416
    %v3419 = vshrl.u32 %v3401, %v3417
    %v3420 = vor.u32 %v3418, %v3419
    %v3421 = vsub.s32 4294967266, %v3416
    %v3422 = vadd.s32 %v3421, 127
    %v3423 = vshll.u32 %v3422, 23
    %v3424 = vor.u32 4788187, %v3423
    %v3425 = vand.u32 2147483647, %v3424
    %v3427 = vcvt.s32.f32 %v3420
    %v3428 = vmul.f32 %v3427, %v3425
    %v3429 = vxor.u32 %v3428, 2147483648
    %v3430 = vsel %vm3309, %v3429, %v3428
    %v3431 = vsub.s32 4, %v3407
    %v3432 = vsel %vm3309, %v3431, %v3407
    %v3433 = vsel %vm3308, %v2837, %v3430
    %v3434 = vsel %vm3308, 0, %v3432
    %v3435 = vmul.f32 %v3433, %v3433
    %v3436 = vmul.f32 %v3435, -0.001358992
    %v3437 = vadd.f32 %v3436, 0.041655596
    %v3438 = vmul.f32 %v3435, %v3437
    %v3439 = vadd.f32 %v3438, -0.4999988
    %v3440 = vmul.f32 %v3435, %v3439
    %v3441 = vadd.f32 1.0, %v3440
    %v3442 = vmul.f32 %v3433, %v3433
    %v3443 = vmul.f32 %v3442, -0.00019511016
    %v3444 = vadd.f32 %v3443, 0.008332121
    %v3445 = vmul.f32 %v3442, %v3444
    %v3446 = vadd.f32 %v3445, -0.16666654
    %v3447 = vmul.f32 %v3442, %v3446
    %v3448 = vadd.f32 %v3447, 1.0
    %v3449 = vmul.f32 %v3448, %v3433
    %vm3450 = vweird.f32 %v2837
    %v3451 = vadd.s32 %v3434, 3
    %v3452 = vand.u32 %v3451, 3
    %vm3453 = vcmp.lt.s32.totalorder %v3452, 2
    %vm3454 = vcmp.eq.s32.totalorder %v3452, 0
    %v3455 = vxor.u32 %v3449, 2147483648
    %v3456 = vsel %vm3454, %v3441, %v3455
    %vm3457 = vcmp.eq.s32.totalorder %v3452, 2
    %v3458 = vxor.u32 %v3441, 2147483648
    %v3459 = vsel %vm3457, %v3458, %v3449
    %v3460 = vsel %vm3453, %v3456, %v3459
    %v3461 = vsel %vm3450, nan, %v3460
    %v3462 = vand.u32 2147483647, %v2838
    %vm3463 = vcmp.le.f32.partialorder %v3462, 0.7853982
    %vm3464 = vcmp.lt.s32.totalorder %v2838, 0
    %v3465 = vand.u32 %v2838, 2139095040
    %v3466 = vshrl.u32 %v3465, 23
    %v3467 = vsub.s32 %v3466, 127
    %v3468 = vand.u32 2147483647, %v2838
    %v3469 = vand.u32 %v3468, 8388607
    %v3470 = vor.u32 %v3469, 8388608
    %v3471 = vsub.s32 0, %v3470
    %v3472 = vadd.s32 %v3467, 1
    %vm3473 = vcmp.gt.s32.totalorder %v3472, 0
    %v3474 = vsel %vm3473, %v3472, 0
    %v3475 = vshrl.u32 %v3474, 5
    %v3476 = vand.u32 %v3474, 31
    %v3477 = vsub.s32 32, %v3476
    %v3478 = vshrl.u32 683565275, %v3477
    %v3479 = vshll.u32 683565275, %v3476
    %v3480 = vshrl.u32 2475754826, %v3477
    %v3481 = vor.u32 %v3479, %v3480
    %v3482 = vshll.u32 2475754826, %v3476
    %v3483 = vshrl.u32 2131351028, %v3477
    %v3484 = vor.u32 %v3482, %v3483
    %v3485 = vshll.u32 2131351028, %v3476
    %v3486 = vshrl.u32 2102212464, %v3477
    %v3487 = vor.u32 %v3485, %v3486
    %v3488 = vshll.u32 2102212464, %v3476
    %v3489 = vshrl.u32 920167782, %v3477
    %v3490 = vor.u32 %v3488, %v3489
    %v3491 = vshll.u32 920167782, %v3476
    %v3492 = vshrl.u32 1326507024, %v3477
    %v3493 = vor.u32 %v3491, %v3492
    %vm3494 = vcmp.lt.s32.totalorder %v3475, 1
    %vm3495 = vcmp.lt.s32.totalorder %v3475, 2
    %vm3496 = vcmp.lt.s32.totalorder %v3475, 3
    %vm3497 = vcmp.lt.s32.totalorder %v3475, 4
    %v3498 = vsel %vm3494, %v3478, %v3481
    %v3499 = vsel %vm3497, %v3487, 2102212464
    %v3500 = vsel %vm3496, %v3484, %v3499
    %v3501 = vsel %vm3495, %v3498, %v3500
    %v3502 = vsel %vm3494, %v3481, %v3484
    %v3503 = vsel %vm3497, %v3490, 920167782
    %v3504 = vsel %vm3496, %v3487, %v3503
    %v3505 = vsel %vm3495, %v3502, %v3504
    %v3506 = vsel %vm3494, %v3484, %v3487
    %v3507 = vsel %vm3497, %v3493, 1326507024
    %v3508 = vsel %vm3496, %v3490, %v3507
    %v3509 = vsel %vm3495, %v3506, %v3508
    %v3510 = vshll.u32 %v3470, 8
    %v3511 = vand.u32 %v3510, 65535
    %v3512 = vshrl.u32 %v3510, 16
    %v3513 = vand.u32 %v3509, 65535
    %v3514 = vshrl.u32 %v3509, 16
    %v3515 = vmul.u32 %v3511, %v3513
    %v3516 = vmul.u32 %v3511, %v3514
    %v3517 = vmul.u32 %v3512, %v3513
    %v3518 = vmul.u32 %v3512, %v3514
    %v3519 = vshll.u32 %v3516, 16
    %v3520 = vshrl.u32 %v3516, 16
    %v3521 = vshll.u32 %v3517, 16
    %v3522 = vshrl.u32 %v3517, 16
    %vm3523 = vc.u32 %v3515, %v3519
    %v3524 = vsel %vm3523, 1, 0
    %v3525 = vadd.s32 %v3515, %v3519
    %v3526 = vadd.s32 %v3518, %v3524
    %vm3527 = vc.u32 %v3525, %v3521
    %v3528 = vsel %vm3527, 1, 0
    %v3529 = vadd.s32 %v3525, %v3521
    %v3530 = vadd.s32 %v3526, %v3528
    %v3531 = vadd.s32 %v3530, %v3520
    %v3532 = vadd.s32 %v3531, %v3522
    %v3533 = vand.u32 %v3510, 65535
    %v3534 = vshrl.u32 %v3510, 16
    %v3535 = vand.u32 %v3505, 65535
    %v3536 = vshrl.u32 %v3505, 16
    %v3537 = vmul.u32 %v3533, %v3535
    %v3538 = vmul.u32 %v3533, %v3536
    %v3539 = vmul.u32 %v3534, %v3535
    %v3540 = vmul.u32 %v3534, %v3536
    %v3541 = vshll.u32 %v3538, 16
    %v3542 = vshrl.u32 %v3538, 16
    %v3543 = vshll.u32 %v3539, 16
    %v3544 = vshrl.u32 %v3539, 16
    %vm3545 = vc.u32 %v3537, %v3541
    %v3546 = vsel %vm3545, 1, 0
    %v3547 = vadd.s32 %v3537, %v3541
    %v3548 = vadd.s32 %v3540, %v3546
    %vm3549 = vc.u32 %v3547, %v3543
    %v3550 = vsel %vm3549, 1, 0
    %v3551 = vadd.s32 %v3547, %v3543
    %v3552 = vadd.s32 %v3548, %v3550
    %v3553 = vadd.s32 %v3552, %v3542
    %v3554 = vadd.s32 %v3553, %v3544
    %v3555 = vmul.u32 %v3510, %v3501
    %v3556 = vadd.s32 %v3532, %v3551
    %vm3557 = vc.u32 %v3532, %v3551
    %v3558 = vadd.s32 %v3554, 1
    %v3559 = vsel %vm3557, %v3558, %v3554
    %v3560 = vadd.s32 %v3555, %v3559
    %v3561 = vadd.s32 %v3560, 536870912
    %v3562 = vshrl.u32 %v3561, 30
    %v3563 = vshll.u32 %v3562, 30
    %v3564 = vsub.s32 %v3560, %v3563
    %vm3565 = vcmp.lt.s32.totalorder %v3564, 0
    %v3566 = vsub.s32 0, %v3564
    %v3567 = vsel %vm3565, %v3566, %v3564
    %v3568 = vclz %v3567
    %v3569 = vsub.s32 %v3568, 2
    %vm3570 = vcmp.gt.s32.totalorder 0, %v3569
    %v3571 = vsel %vm3570, 0, %v3569
    %v3572 = vsub.s32 32, %v3571
    %v3573 = vshll.u32 %v3564, %v3571
    %v3574 = vshrl.u32 %v3556, %v3572
    %v3575 = vor.u32 %v3573, %v3574
    %v3576 = vsub.s32 4294967266, %v3571
    %v3577 = vadd.s32 %v3576, 127
    %v3578 = vshll.u32 %v3577, 23
    %v3579 = vor.u32 4788187, %v3578
    %v3580 = vand.u32 2147483647, %v3579
    %v3582 = vcvt.s32.f32 %v3575
    %v3583 = vmul.f32 %v3582, %v3580
    %v3584 = vxor.u32 %v3583, 2147483648
    %v3585 = vsel %vm3464, %v3584, %v3583
    %v3586 = vsub.s32 4, %v3562
    %v3587 = vsel %vm3464, %v3586, %v3562
    %v3588 = vsel %vm3463, %v2838, %v3585
    %v3589 = vsel %vm3463, 0, %v3587
    %v3590 = vmul.f32 %v3588, %v3588
    %v3591 = vmul.f32 %v3590, -0.001358992
    %v3592 = vadd.f32 %v3591, 0.041655596
    %v3593 = vmul.f32 %v3590, %v3592
    %v3594 = vadd.f32 %v3593, -0.4999988
    %v3595 = vmul.f32 %v3590, %v3594
    %v3596 = vadd.f32 1.0, %v3595
    %v3597 = vmul.f32 %v3588, %v3588
    %v3598 = vmul.f32 %v3597, -0.00019511016
    %v3599 = vadd.f32 %v3598, 0.008332121
    %v3600 = vmul.f32 %v3597, %v3599
    %v3601 = vadd.f32 %v3600, -0.16666654
    %v3602 = vmul.f32 %v3597, %v3601
    %v3603 = vadd.f32 %v3602, 1.0
    %v3604 = vmul.f32 %v3603, %v3588
    %vm3605 = vweird.f32 %v2838
    %v3606 = vadd.s32 %v3589, 3
    %v3607 = vand.u32 %v3606, 3
    %vm3608 = vcmp.lt.s32.totalorder %v3607, 2
    %vm3609 = vcmp.eq.s32.totalorder %v3607, 0
    %v3610 = vxor.u32 %v3604, 2147483648
    %v3611 = vsel %vm3609, %v3596, %v3610
    %vm3612 = vcmp.eq.s32.totalorder %v3607, 2
    %v3613 = vxor.u32 %v3596, 2147483648
    %v3614 = vsel %vm3612, %v3613, %v3604
    %v3615 = vsel %vm3608, %v3611, %v3614
    %v3616 = vsel %vm3605, nan, %v3615
    %v3617 = vand.u32 2147483647, %v2839
    %vm3618 = vcmp.le.f32.partialorder %v3617, 0.7853982
    %vm3619 = vcmp.lt.s32.totalorder %v2839, 0
    %v3620 = vand.u32 %v2839, 2139095040
    %v3621 = vshrl.u32 %v3620, 23
    %v3622 = vsub.s32 %v3621, 127
    %v3623 = vand.u32 2147483647, %v2839
    %v3624 = vand.u32 %v3623, 8388607
    %v3625 = vor.u32 %v3624, 8388608
    %v3626 = vsub.s32 0, %v3625
    %v3627 = vadd.s32 %v3622, 1
    %vm3628 = vcmp.gt.s32.totalorder %v3627, 0
    %v3629 = vsel %vm3628, %v3627, 0
    %v3630 = vshrl.u32 %v3629, 5
    %v3631 = vand.u32 %v3629, 31
    %v3632 = vsub.s32 32, %v3631
    %v3633 = vshrl.u32 683565275, %v3632
    %v3634 = vshll.u32 683565275, %v3631
    %v3635 = vshrl.u32 2475754826, %v3632
    %v3636 = vor.u32 %v3634, %v3635
    %v3637 = vshll.u32 2475754826, %v3631
    %v3638 = vshrl.u32 2131351028, %v3632
    %v3639 = vor.u32 %v3637, %v3638
    %v3640 = vshll.u32 2131351028, %v3631
    %v3641 = vshrl.u32 2102212464, %v3632
    %v3642 = vor.u32 %v3640, %v3641
    %v3643 = vshll.u32 2102212464, %v3631
    %v3644 = vshrl.u32 920167782, %v3632
    %v3645 = vor.u32 %v3643, %v3644
    %v3646 = vshll.u32 920167782, %v3631
    %v3647 = vshrl.u32 1326507024, %v3632
    %v3648 = vor.u32 %v3646, %v3647
    %vm3649 = vcmp.lt.s32.totalorder %v3630, 1
    %vm3650 = vcmp.lt.s32.totalorder %v3630, 2
    %vm3651 = vcmp.lt.s32.totalorder %v3630, 3
    %vm3652 = vcmp.lt.s32.totalorder %v3630, 4
    %v3653 = vsel %vm3649, %v3633, %v3636
    %v3654 = vsel %vm3652, %v3642, 2102212464
    %v3655 = vsel %vm3651, %v3639, %v3654
    %v3656 = vsel %vm3650, %v3653, %v3655
    %v3657 = vsel %vm3649, %v3636, %v3639
    %v3658 = vsel %vm3652, %v3645, 920167782
    %v3659 = vsel %vm3651, %v3642, %v3658
    %v3660 = vsel %vm3650, %v3657, %v3659
    %v3661 = vsel %vm3649, %v3639, %v3642
    %v3662 = vsel %vm3652, %v3648, 1326507024
    %v3663 = vsel %vm3651, %v3645, %v3662
    %v3664 = vsel %vm3650, %v3661, %v3663
    %v3665 = vshll.u32 %v3625, 8
    %v3666 = vand.u32 %v3665, 65535
    %v3667 = vshrl.u32 %v3665, 16
    %v3668 = vand.u32 %v3664, 65535
    %v3669 = vshrl.u32 %v3664, 16
    %v3670 = vmul.u32 %v3666, %v3668
    %v3671 = vmul.u32 %v3666, %v3669
    %v3672 = vmul.u32 %v3667, %v3668
    %v3673 = vmul.u32 %v3667, %v3669
    %v3674 = vshll.u32 %v3671, 16
    %v3675 = vshrl.u32 %v3671, 16
    %v3676 = vshll.u32 %v3672, 16
    %v3677 = vshrl.u32 %v3672, 16
    %vm3678 = vc.u32 %v3670, %v3674
    %v3679 = vsel %vm3678, 1, 0
    %v3680 = vadd.s32 %v3670, %v3674
    %v3681 = vadd.s32 %v3673, %v3679
    %vm3682 = vc.u32 %v3680, %v3676
    %v3683 = vsel %vm3682, 1, 0
    %v3684 = vadd.s32 %v3680, %v3676
    %v3685 = vadd.s32 %v3681, %v3683
    %v3686 = vadd.s32 %v3685, %v3675
    %v3687 = vadd.s32 %v3686, %v3677
    %v3688 = vand.u32 %v3665, 65535
    %v3689 = vshrl.u32 %v3665, 16
    %v3690 = vand.u32 %v3660, 65535
    %v3691 = vshrl.u32 %v3660, 16
    %v3692 = vmul.u32 %v3688, %v3690
    %v3693 = vmul.u32 %v3688, %v3691
    %v3694 = vmul.u32 %v3689, %v3690
    %v3695 = vmul.u32 %v3689, %v3691
    %v3696 = vshll.u32 %v3693, 16
    %v3697 = vshrl.u32 %v3693, 16
    %v3698 = vshll.u32 %v3694, 16
    %v3699 = vshrl.u32 %v3694, 16
    %vm3700 = vc.u32 %v3692, %v3696
    %v3701 = vsel %vm3700, 1, 0
    %v3702 = vadd.s32 %v3692, %v3696
    %v3703 = vadd.s32 %v3695, %v3701
    %vm3704 = vc.u32 %v3702, %v3698
    %v3705 = vsel %vm3704, 1, 0
    %v3706 = vadd.s32 %v3702, %v3698
    %v3707 = vadd.s32 %v3703, %v3705
    %v3708 = vadd.s32 %v3707, %v3697
    %v3709 = vadd.s32 %v3708, %v3699
    %v3710 = vmul.u32 %v3665, %v3656
    %v3711 = vadd.s32 %v3687, %v3706
    %vm3712 = vc.u32 %v3687, %v3706
    %v3713 = vadd.s32 %v3709, 1
    %v3714 = vsel %vm3712, %v3713, %v3709
    %v3715 = vadd.s32 %v3710, %v3714
    %v3716 = vadd.s32 %v3715, 536870912
    %v3717 = vshrl.u32 %v3716, 30
    %v3718 = vshll.u32 %v3717, 30
    %v3719 = vsub.s32 %v3715, %v3718
    %vm3720 = vcmp.lt.s32.totalorder %v3719, 0
    %v3721 = vsub.s32 0, %v3719
    %v3722 = vsel %vm3720, %v3721, %v3719
    %v3723 = vclz %v3722
    %v3724 = vsub.s32 %v3723, 2
    %vm3725 = vcmp.gt.s32.totalorder 0, %v3724
    %v3726 = vsel %vm3725, 0, %v3724
    %v3727 = vsub.s32 32, %v3726
    %v3728 = vshll.u32 %v3719, %v3726
    %v3729 = vshrl.u32 %v3711, %v3727
    %v3730 = vor.u32 %v3728, %v3729
    %v3731 = vsub.s32 4294967266, %v3726
    %v3732 = vadd.s32 %v3731, 127
    %v3733 = vshll.u32 %v3732, 23
    %v3734 = vor.u32 4788187, %v3733
    %v3735 = vand.u32 2147483647, %v3734
    %v3737 = vcvt.s32.f32 %v3730
    %v3738 = vmul.f32 %v3737, %v3735
    %v3739 = vxor.u32 %v3738, 2147483648
    %v3740 = vsel %vm3619, %v3739, %v3738
    %v3741 = vsub.s32 4, %v3717
    %v3742 = vsel %vm3619, %v3741, %v3717
    %v3743 = vsel %vm3618, %v2839, %v3740
    %v3744 = vsel %vm3618, 0, %v3742
    %v3745 = vmul.f32 %v3743, %v3743
    %v3746 = vmul.f32 %v3745, -0.001358992
    %v3747 = vadd.f32 %v3746, 0.041655596
    %v3748 = vmul.f32 %v3745, %v3747
    %v3749 = vadd.f32 %v3748, -0.4999988
    %v3750 = vmul.f32 %v3745, %v3749
    %v3751 = vadd.f32 1.0, %v3750
    %v3752 = vmul.f32 %v3743, %v3743
    %v3753 = vmul.f32 %v3752, -0.00019511016
    %v3754 = vadd.f32 %v3753, 0.008332121
    %v3755 = vmul.f32 %v3752, %v3754
    %v3756 = vadd.f32 %v3755, -0.16666654
    %v3757 = vmul.f32 %v3752, %v3756
    %v3758 = vadd.f32 %v3757, 1.0
    %v3759 = vmul.f32 %v3758, %v3743
    %vm3760 = vweird.f32 %v2839
    %v3761 = vadd.s32 %v3744, 3
    %v3762 = vand.u32 %v3761, 3
    %vm3763 = vcmp.lt.s32.totalorder %v3762, 2
    %vm3764 = vcmp.eq.s32.totalorder %v3762, 0
    %v3765 = vxor.u32 %v3759, 2147483648
    %v3766 = vsel %vm3764, %v3751, %v3765
    %vm3767 = vcmp.eq.s32.totalorder %v3762, 2
    %v3768 = vxor.u32 %v3751, 2147483648
    %v3769 = vsel %vm3767, %v3768, %v3759
    %v3770 = vsel %vm3763, %v3766, %v3769
    %v3771 = vsel %vm3760, nan, %v3770
    %v3772 = vand.u32 2147483647, %v2840
    %vm3773 = vcmp.le.f32.partialorder %v3772, 0.7853982
    %vm3774 = vcmp.lt.s32.totalorder %v2840, 0
    %v3775 = vand.u32 %v2840, 2139095040
    %v3776 = vshrl.u32 %v3775, 23
    %v3777 = vsub.s32 %v3776, 127
    %v3778 = vand.u32 2147483647, %v2840
    %v3779 = vand.u32 %v3778, 8388607
    %v3780 = vor.u32 %v3779, 8388608
    %v3781 = vsub.s32 0, %v3780
    %v3782 = vadd.s32 %v3777, 1
    %vm3783 = vcmp.gt.s32.totalorder %v3782, 0
    %v3784 = vsel %vm3783, %v3782, 0
    %v3785 = vshrl.u32 %v3784, 5
    %v3786 = vand.u32 %v3784, 31
    %v3787 = vsub.s32 32, %v3786
    %v3788 = vshrl.u32 683565275, %v3787
    %v3789 = vshll.u32 683565275, %v3786
    %v3790 = vshrl.u32 2475754826, %v3787
    %v3791 = vor.u32 %v3789, %v3790
    %v3792 = vshll.u32 2475754826, %v3786
    %v3793 = vshrl.u32 2131351028, %v3787
    %v3794 = vor.u32 %v3792, %v3793
    %v3795 = vshll.u32 2131351028, %v3786
    %v3796 = vshrl.u32 2102212464, %v3787
    %v3797 = vor.u32 %v3795, %v3796
    %v3798 = vshll.u32 2102212464, %v3786
    %v3799 = vshrl.u32 920167782, %v3787
    %v3800 = vor.u32 %v3798, %v3799
    %v3801 = vshll.u32 920167782, %v3786
    %v3802 = vshrl.u32 1326507024, %v3787
    %v3803 = vor.u32 %v3801, %v3802
    %vm3804 = vcmp.lt.s32.totalorder %v3785, 1
    %vm3805 = vcmp.lt.s32.totalorder %v3785, 2
    %vm3806 = vcmp.lt.s32.totalorder %v3785, 3
    %vm3807 = vcmp.lt.s32.totalorder %v3785, 4
    %v3808 = vsel %vm3804, %v3788, %v3791
    %v3809 = vsel %vm3807, %v3797, 2102212464
    %v3810 = vsel %vm3806, %v3794, %v3809
    %v3811 = vsel %vm3805, %v3808, %v3810
    %v3812 = vsel %vm3804, %v3791, %v3794
    %v3813 = vsel %vm3807, %v3800, 920167782
    %v3814 = vsel %vm3806, %v3797, %v3813
    %v3815 = vsel %vm3805, %v3812, %v3814
    %v3816 = vsel %vm3804, %v3794, %v3797
    %v3817 = vsel %vm3807, %v3803, 1326507024
    %v3818 = vsel %vm3806, %v3800, %v3817
    %v3819 = vsel %vm3805, %v3816, %v3818
    %v3820 = vshll.u32 %v3780, 8
    %v3821 = vand.u32 %v3820, 65535
    %v3822 = vshrl.u32 %v3820, 16
    %v3823 = vand.u32 %v3819, 65535
    %v3824 = vshrl.u32 %v3819, 16
    %v3825 = vmul.u32 %v3821, %v3823
    %v3826 = vmul.u32 %v3821, %v3824
    %v3827 = vmul.u32 %v3822, %v3823
    %v3828 = vmul.u32 %v3822, %v3824
    %v3829 = vshll.u32 %v3826, 16
    %v3830 = vshrl.u32 %v3826, 16
    %v3831 = vshll.u32 %v3827, 16
    %v3832 = vshrl.u32 %v3827, 16
    %vm3833 = vc.u32 %v3825, %v3829
    %v3834 = vsel %vm3833, 1, 0
    %v3835 = vadd.s32 %v3825, %v3829
    %v3836 = vadd.s32 %v3828, %v3834
    %vm3837 = vc.u32 %v3835, %v3831
    %v3838 = vsel %vm3837, 1, 0
    %v3839 = vadd.s32 %v3835, %v3831
    %v3840 = vadd.s32 %v3836, %v3838
    %v3841 = vadd.s32 %v3840, %v3830
    %v3842 = vadd.s32 %v3841, %v3832
    %v3843 = vand.u32 %v3820, 65535
    %v3844 = vshrl.u32 %v3820, 16
    %v3845 = vand.u32 %v3815, 65535
    %v3846 = vshrl.u32 %v3815, 16
    %v3847 = vmul.u32 %v3843, %v3845
    %v3848 = vmul.u32 %v3843, %v3846
    %v3849 = vmul.u32 %v3844, %v3845
    %v3850 = vmul.u32 %v3844, %v3846
    %v3851 = vshll.u32 %v3848, 16
    %v3852 = vshrl.u32 %v3848, 16
    %v3853 = vshll.u32 %v3849, 16
    %v3854 = vshrl.u32 %v3849, 16
    %vm3855 = vc.u32 %v3847, %v3851
    %v3856 = vsel %vm3855, 1, 0
    %v3857 = vadd.s32 %v3847, %v3851
    %v3858 = vadd.s32 %v3850, %v3856
    %vm3859 = vc.u32 %v3857, %v3853
    %v3860 = vsel %vm3859, 1, 0
    %v3861 = vadd.s32 %v3857, %v3853
    %v3862 = vadd.s32 %v3858, %v3860
    %v3863 = vadd.s32 %v3862, %v3852
    %v3864 = vadd.s32 %v3863, %v3854
    %v3865 = vmul.u32 %v3820, %v3811
    %v3866 = vadd.s32 %v3842, %v3861
    %vm3867 = vc.u32 %v3842, %v3861
    %v3868 = vadd.s32 %v3864, 1
    %v3869 = vsel %vm3867, %v3868, %v3864
    %v3870 = vadd.s32 %v3865, %v3869
    %v3871 = vadd.s32 %v3870, 536870912
    %v3872 = vshrl.u32 %v3871, 30
    %v3873 = vshll.u32 %v3872, 30
    %v3874 = vsub.s32 %v3870, %v3873
    %vm3875 = vcmp.lt.s32.totalorder %v3874, 0
    %v3876 = vsub.s32 0, %v3874
    %v3877 = vsel %vm3875, %v3876, %v3874
    %v3878 = vclz %v3877
    %v3879 = vsub.s32 %v3878, 2
    %vm3880 = vcmp.gt.s32.totalorder 0, %v3879
    %v3881 = vsel %vm3880, 0, %v3879
    %v3882 = vsub.s32 32, %v3881
    %v3883 = vshll.u32 %v3874, %v3881
    %v3884 = vshrl.u32 %v3866, %v3882
    %v3885 = vor.u32 %v3883, %v3884
    %v3886 = vsub.s32 4294967266, %v3881
    %v3887 = vadd.s32 %v3886, 127
    %v3888 = vshll.u32 %v3887, 23
    %v3889 = vor.u32 4788187, %v3888
    %v3890 = vand.u32 2147483647, %v3889
    %v3892 = vcvt.s32.f32 %v3885
    %v3893 = vmul.f32 %v3892, %v3890
    %v3894 = vxor.u32 %v3893, 2147483648
    %v3895 = vsel %vm3774, %v3894, %v3893
    %v3896 = vsub.s32 4, %v3872
    %v3897 = vsel %vm3774, %v3896, %v3872
    %v3898 = vsel %vm3773, %v2840, %v3895
    %v3899 = vsel %vm3773, 0, %v3897
    %v3900 = vmul.f32 %v3898, %v3898
    %v3901 = vmul.f32 %v3900, -0.001358992
    %v3902 = vadd.f32 %v3901, 0.041655596
    %v3903 = vmul.f32 %v3900, %v3902
    %v3904 = vadd.f32 %v3903, -0.4999988
    %v3905 = vmul.f32 %v3900, %v3904
    %v3906 = vadd.f32 1.0, %v3905
    %v3907 = vmul.f32 %v3898, %v3898
    %v3908 = vmul.f32 %v3907, -0.00019511016
    %v3909 = vadd.f32 %v3908, 0.008332121
    %v3910 = vmul.f32 %v3907, %v3909
    %v3911 = vadd.f32 %v3910, -0.16666654
    %v3912 = vmul.f32 %v3907, %v3911
    %v3913 = vadd.f32 %v3912, 1.0
    %v3914 = vmul.f32 %v3913, %v3898
    %vm3915 = vweird.f32 %v2840
    %v3916 = vadd.s32 %v3899, 3
    %v3917 = vand.u32 %v3916, 3
    %vm3918 = vcmp.lt.s32.totalorder %v3917, 2
    %vm3919 = vcmp.eq.s32.totalorder %v3917, 0
    %v3920 = vxor.u32 %v3914, 2147483648
    %v3921 = vsel %vm3919, %v3906, %v3920
    %vm3922 = vcmp.eq.s32.totalorder %v3917, 2
    %v3923 = vxor.u32 %v3906, 2147483648
    %v3924 = vsel %vm3922, %v3923, %v3914
    %v3925 = vsel %vm3918, %v3921, %v3924
    %v3926 = vsel %vm3915, nan, %v3925
    %v3927 = vand.u32 2147483647, %v2841
    %vm3928 = vcmp.le.f32.partialorder %v3927, 0.7853982
    %vm3929 = vcmp.lt.s32.totalorder %v2841, 0
    %v3930 = vand.u32 %v2841, 2139095040
    %v3931 = vshrl.u32 %v3930, 23
    %v3932 = vsub.s32 %v3931, 127
    %v3933 = vand.u32 2147483647, %v2841
    %v3934 = vand.u32 %v3933, 8388607
    %v3935 = vor.u32 %v3934, 8388608
    %v3936 = vsub.s32 0, %v3935
    %v3937 = vadd.s32 %v3932, 1
    %vm3938 = vcmp.gt.s32.totalorder %v3937, 0
    %v3939 = vsel %vm3938, %v3937, 0
    %v3940 = vshrl.u32 %v3939, 5
    %v3941 = vand.u32 %v3939, 31
    %v3942 = vsub.s32 32, %v3941
    %v3943 = vshrl.u32 683565275, %v3942
    %v3944 = vshll.u32 683565275, %v3941
    %v3945 = vshrl.u32 2475754826, %v3942
    %v3946 = vor.u32 %v3944, %v3945
    %v3947 = vshll.u32 2475754826, %v3941
    %v3948 = vshrl.u32 2131351028, %v3942
    %v3949 = vor.u32 %v3947, %v3948
    %v3950 = vshll.u32 2131351028, %v3941
    %v3951 = vshrl.u32 2102212464, %v3942
    %v3952 = vor.u32 %v3950, %v3951
    %v3953 = vshll.u32 2102212464, %v3941
    %v3954 = vshrl.u32 920167782, %v3942
    %v3955 = vor.u32 %v3953, %v3954
    %v3956 = vshll.u32 920167782, %v3941
    %v3957 = vshrl.u32 1326507024, %v3942
    %v3958 = vor.u32 %v3956, %v3957
    %vm3959 = vcmp.lt.s32.totalorder %v3940, 1
    %vm3960 = vcmp.lt.s32.totalorder %v3940, 2
    %vm3961 = vcmp.lt.s32.totalorder %v3940, 3
    %vm3962 = vcmp.lt.s32.totalorder %v3940, 4
    %v3963 = vsel %vm3959, %v3943, %v3946
    %v3964 = vsel %vm3962, %v3952, 2102212464
    %v3965 = vsel %vm3961, %v3949, %v3964
    %v3966 = vsel %vm3960, %v3963, %v3965
    %v3967 = vsel %vm3959, %v3946, %v3949
    %v3968 = vsel %vm3962, %v3955, 920167782
    %v3969 = vsel %vm3961, %v3952, %v3968
    %v3970 = vsel %vm3960, %v3967, %v3969
    %v3971 = vsel %vm3959, %v3949, %v3952
    %v3972 = vsel %vm3962, %v3958, 1326507024
    %v3973 = vsel %vm3961, %v3955, %v3972
    %v3974 = vsel %vm3960, %v3971, %v3973
    %v3975 = vshll.u32 %v3935, 8
    %v3976 = vand.u32 %v3975, 65535
    %v3977 = vshrl.u32 %v3975, 16
    %v3978 = vand.u32 %v3974, 65535
    %v3979 = vshrl.u32 %v3974, 16
    %v3980 = vmul.u32 %v3976, %v3978
    %v3981 = vmul.u32 %v3976, %v3979
    %v3982 = vmul.u32 %v3977, %v3978
    %v3983 = vmul.u32 %v3977, %v3979
    %v3984 = vshll.u32 %v3981, 16
    %v3985 = vshrl.u32 %v3981, 16
    %v3986 = vshll.u32 %v3982, 16
    %v3987 = vshrl.u32 %v3982, 16
    %vm3988 = vc.u32 %v3980, %v3984
    %v3989 = vsel %vm3988, 1, 0
    %v3990 = vadd.s32 %v3980, %v3984
    %v3991 = vadd.s32 %v3983, %v3989
    %vm3992 = vc.u32 %v3990, %v3986
    %v3993 = vsel %vm3992, 1, 0
    %v3994 = vadd.s32 %v3990, %v3986
    %v3995 = vadd.s32 %v3991, %v3993
    %v3996 = vadd.s32 %v3995, %v3985
    %v3997 = vadd.s32 %v3996, %v3987
    %v3998 = vand.u32 %v3975, 65535
    %v3999 = vshrl.u32 %v3975, 16
    %v4000 = vand.u32 %v3970, 65535
    %v4001 = vshrl.u32 %v3970, 16
    %v4002 = vmul.u32 %v3998, %v4000
    %v4003 = vmul.u32 %v3998, %v4001
    %v4004 = vmul.u32 %v3999, %v4000
    %v4005 = vmul.u32 %v3999, %v4001
    %v4006 = vshll.u32 %v4003, 16
    %v4007 = vshrl.u32 %v4003, 16
    %v4008 = vshll.u32 %v4004, 16
    %v4009 = vshrl.u32 %v4004, 16
    %vm4010 = vc.u32 %v4002, %v4006
    %v4011 = vsel %vm4010, 1, 0
    %v4012 = vadd.s32 %v4002, %v4006
    %v4013 = vadd.s32 %v4005, %v4011
    %vm4014 = vc.u32 %v4012, %v4008
    %v4015 = vsel %vm4014, 1, 0
    %v4016 = vadd.s32 %v4012, %v4008
    %v4017 = vadd.s32 %v4013, %v4015
    %v4018 = vadd.s32 %v4017, %v4007
    %v4019 = vadd.s32 %v4018, %v4009
    %v4020 = vmul.u32 %v3975, %v3966
    %v4021 = vadd.s32 %v3997, %v4016
    %vm4022 = vc.u32 %v3997, %v4016
    %v4023 = vadd.s32 %v4019, 1
    %v4024 = vsel %vm4022, %v4023, %v4019
    %v4025 = vadd.s32 %v4020, %v4024
    %v4026 = vadd.s32 %v4025, 536870912
    %v4027 = vshrl.u32 %v4026, 30
    %v4028 = vshll.u32 %v4027, 30
    %v4029 = vsub.s32 %v4025, %v4028
    %vm4030 = vcmp.lt.s32.totalorder %v4029, 0
    %v4031 = vsub.s32 0, %v4029
    %v4032 = vsel %vm4030, %v4031, %v4029
    %v4033 = vclz %v4032
    %v4034 = vsub.s32 %v4033, 2
    %vm4035 = vcmp.gt.s32.totalorder 0, %v4034
    %v4036 = vsel %vm4035, 0, %v4034
    %v4037 = vsub.s32 32, %v4036
    %v4038 = vshll.u32 %v4029, %v4036
    %v4039 = vshrl.u32 %v4021, %v4037
    %v4040 = vor.u32 %v4038, %v4039
    %v4041 = vsub.s32 4294967266, %v4036
    %v4042 = vadd.s32 %v4041, 127
    %v4043 = vshll.u32 %v4042, 23
    %v4044 = vor.u32 4788187, %v4043
    %v4045 = vand.u32 2147483647, %v4044
    %v4047 = vcvt.s32.f32 %v4040
    %v4048 = vmul.f32 %v4047, %v4045
    %v4049 = vxor.u32 %v4048, 2147483648
    %v4050 = vsel %vm3929, %v4049, %v4048
    %v4051 = vsub.s32 4, %v4027
    %v4052 = vsel %vm3929, %v4051, %v4027
    %v4053 = vsel %vm3928, %v2841, %v4050
    %v4054 = vsel %vm3928, 0, %v4052
    %v4055 = vmul.f32 %v4053, %v4053
    %v4056 = vmul.f32 %v4055, -0.001358992
    %v4057 = vadd.f32 %v4056, 0.041655596
    %v4058 = vmul.f32 %v4055, %v4057
    %v4059 = vadd.f32 %v4058, -0.4999988
    %v4060 = vmul.f32 %v4055, %v4059
    %v4061 = vadd.f32 1.0, %v4060
    %v4062 = vmul.f32 %v4053, %v4053
    %v4063 = vmul.f32 %v4062, -0.00019511016
    %v4064 = vadd.f32 %v4063, 0.008332121
    %v4065 = vmul.f32 %v4062, %v4064
    %v4066 = vadd.f32 %v4065, -0.16666654
    %v4067 = vmul.f32 %v4062, %v4066
    %v4068 = vadd.f32 %v4067, 1.0
    %v4069 = vmul.f32 %v4068, %v4053
    %vm4070 = vweird.f32 %v2841
    %v4071 = vadd.s32 %v4054, 3
    %v4072 = vand.u32 %v4071, 3
    %vm4073 = vcmp.lt.s32.totalorder %v4072, 2
    %vm4074 = vcmp.eq.s32.totalorder %v4072, 0
    %v4075 = vxor.u32 %v4069, 2147483648
    %v4076 = vsel %vm4074, %v4061, %v4075
    %vm4077 = vcmp.eq.s32.totalorder %v4072, 2
    %v4078 = vxor.u32 %v4061, 2147483648
    %v4079 = vsel %vm4077, %v4078, %v4069
    %v4080 = vsel %vm4073, %v4076, %v4079
    %v4081 = vsel %vm4070, nan, %v4080
    %v4082 = vld [vmem:[%s5] sm:$0xff]
    %v4083 = vld [vmem:[%s5 + $0x8] sm:$0xff]
    %v4084 = vld [vmem:[%s5 + $0x10] sm:$0xff]
    %v4085 = vld [vmem:[%s5 + $0x18] sm:$0xff]
    %4087 = vset.pattern.permute.xlu0 0
    %4088 = vperm.xlu0 %4087, %v4082
    %v4089 = vpop.permute.xlu0 %4088
    %4092 = vset.pattern.permute.xlu0 0
    %4093 = vperm.xlu0 %4092, %v4083
    %v4094 = vpop.permute.xlu0 %4093
    %4097 = vset.pattern.permute.xlu0 0
    %4098 = vperm.xlu0 %4097, %v4084
    %v4099 = vpop.permute.xlu0 %4098
    %4102 = vset.pattern.permute.xlu0 0
    %4103 = vperm.xlu0 %4102, %v4085
    %v4104 = vpop.permute.xlu0 %4103
    %v4106 = vmul.f32 %v4089, %v2996
    %v4107 = vmul.f32 %v4089, %v3151
    %v4108 = vmul.f32 %v4094, %v3306
    %v4109 = vmul.f32 %v4094, %v3461
    %v4110 = vmul.f32 %v4099, %v3616
    %v4111 = vmul.f32 %v4099, %v3771
    %v4112 = vmul.f32 %v4104, %v3926
    %v4113 = vmul.f32 %v4104, %v4081
    %v4114 = vadd.f32 %v4106, %v4108
    %v4115 = vadd.f32 %v4114, %v4110
    %v4116 = vadd.f32 %v4115, %v4112
    %v4117 = vrot.slane %v4116, 4
    %v4118 = vadd.f32 %v4116, %v4117
    %v4119 = vrot.slane %v4118, 2
    %v4120 = vadd.f32 %v4118, %v4119
    %v4121 = vrot.slane %v4120, 1
    %v4122 = vadd.f32 %v4120, %v4121
    %v4123 = vadd.f32 %v4107, %v4109
    %v4124 = vadd.f32 %v4123, %v4111
    %v4125 = vadd.f32 %v4124, %v4113
    %v4126 = vrot.slane %v4125, 4
    %v4127 = vadd.f32 %v4125, %v4126
    %v4128 = vrot.slane %v4127, 2
    %v4129 = vadd.f32 %v4127, %v4128
    %v4130 = vrot.slane %v4129, 1
    %v4131 = vadd.f32 %v4129, %v4130
    %v4132 = vld [vmem:[#allocation2] sm:$0x1]
    %4134 = vset.pattern.permute.xlu0 0
    %4135 = vperm.xlu0 %4134, %v4132
    %v4136 = vpop.permute.xlu0 %4135
    %v4138 = vperm.slane %v4136, 0
    %v4139 = vadd.f32 %v4122, %v4138
    %v4140 = vadd.f32 %v4131, %v4138
    %v4141 = vmul.f32 %v4139, 30.0
    %v4142 = vmul.f32 %v4140, 30.0
    %v4143 = vand.u32 2147483647, %v4141
    %vm4144 = vcmp.le.f32.partialorder %v4143, 0.7853982
    %vm4145 = vcmp.lt.s32.totalorder %v4141, 0
    %v4146 = vand.u32 %v4141, 2139095040
    %v4147 = vshrl.u32 %v4146, 23
    %v4148 = vsub.s32 %v4147, 127
    %v4149 = vand.u32 2147483647, %v4141
    %v4150 = vand.u32 %v4149, 8388607
    %v4151 = vor.u32 %v4150, 8388608
    %v4152 = vsub.s32 0, %v4151
    %v4153 = vadd.s32 %v4148, 1
    %vm4154 = vcmp.gt.s32.totalorder %v4153, 0
    %v4155 = vsel %vm4154, %v4153, 0
    %v4156 = vshrl.u32 %v4155, 5
    %v4157 = vand.u32 %v4155, 31
    %v4158 = vsub.s32 32, %v4157
    %v4159 = vshrl.u32 683565275, %v4158
    %v4160 = vshll.u32 683565275, %v4157
    %v4161 = vshrl.u32 2475754826, %v4158
    %v4162 = vor.u32 %v4160, %v4161
    %v4163 = vshll.u32 2475754826, %v4157
    %v4164 = vshrl.u32 2131351028, %v4158
    %v4165 = vor.u32 %v4163, %v4164
    %v4166 = vshll.u32 2131351028, %v4157
    %v4167 = vshrl.u32 2102212464, %v4158
    %v4168 = vor.u32 %v4166, %v4167
    %v4169 = vshll.u32 2102212464, %v4157
    %v4170 = vshrl.u32 920167782, %v4158
    %v4171 = vor.u32 %v4169, %v4170
    %v4172 = vshll.u32 920167782, %v4157
    %v4173 = vshrl.u32 1326507024, %v4158
    %v4174 = vor.u32 %v4172, %v4173
    %vm4175 = vcmp.lt.s32.totalorder %v4156, 1
    %vm4176 = vcmp.lt.s32.totalorder %v4156, 2
    %vm4177 = vcmp.lt.s32.totalorder %v4156, 3
    %vm4178 = vcmp.lt.s32.totalorder %v4156, 4
    %v4179 = vsel %vm4175, %v4159, %v4162
    %v4180 = vsel %vm4178, %v4168, 2102212464
    %v4181 = vsel %vm4177, %v4165, %v4180
    %v4182 = vsel %vm4176, %v4179, %v4181
    %v4183 = vsel %vm4175, %v4162, %v4165
    %v4184 = vsel %vm4178, %v4171, 920167782
    %v4185 = vsel %vm4177, %v4168, %v4184
    %v4186 = vsel %vm4176, %v4183, %v4185
    %v4187 = vsel %vm4175, %v4165, %v4168
    %v4188 = vsel %vm4178, %v4174, 1326507024
    %v4189 = vsel %vm4177, %v4171, %v4188
    %v4190 = vsel %vm4176, %v4187, %v4189
    %v4191 = vshll.u32 %v4151, 8
    %v4192 = vand.u32 %v4191, 65535
    %v4193 = vshrl.u32 %v4191, 16
    %v4194 = vand.u32 %v4190, 65535
    %v4195 = vshrl.u32 %v4190, 16
    %v4196 = vmul.u32 %v4192, %v4194
    %v4197 = vmul.u32 %v4192, %v4195
    %v4198 = vmul.u32 %v4193, %v4194
    %v4199 = vmul.u32 %v4193, %v4195
    %v4200 = vshll.u32 %v4197, 16
    %v4201 = vshrl.u32 %v4197, 16
    %v4202 = vshll.u32 %v4198, 16
    %v4203 = vshrl.u32 %v4198, 16
    %vm4204 = vc.u32 %v4196, %v4200
    %v4205 = vsel %vm4204, 1, 0
    %v4206 = vadd.s32 %v4196, %v4200
    %v4207 = vadd.s32 %v4199, %v4205
    %vm4208 = vc.u32 %v4206, %v4202
    %v4209 = vsel %vm4208, 1, 0
    %v4210 = vadd.s32 %v4206, %v4202
    %v4211 = vadd.s32 %v4207, %v4209
    %v4212 = vadd.s32 %v4211, %v4201
    %v4213 = vadd.s32 %v4212, %v4203
    %v4214 = vand.u32 %v4191, 65535
    %v4215 = vshrl.u32 %v4191, 16
    %v4216 = vand.u32 %v4186, 65535
    %v4217 = vshrl.u32 %v4186, 16
    %v4218 = vmul.u32 %v4214, %v4216
    %v4219 = vmul.u32 %v4214, %v4217
    %v4220 = vmul.u32 %v4215, %v4216
    %v4221 = vmul.u32 %v4215, %v4217
    %v4222 = vshll.u32 %v4219, 16
    %v4223 = vshrl.u32 %v4219, 16
    %v4224 = vshll.u32 %v4220, 16
    %v4225 = vshrl.u32 %v4220, 16
    %vm4226 = vc.u32 %v4218, %v4222
    %v4227 = vsel %vm4226, 1, 0
    %v4228 = vadd.s32 %v4218, %v4222
    %v4229 = vadd.s32 %v4221, %v4227
    %vm4230 = vc.u32 %v4228, %v4224
    %v4231 = vsel %vm4230, 1, 0
    %v4232 = vadd.s32 %v4228, %v4224
    %v4233 = vadd.s32 %v4229, %v4231
    %v4234 = vadd.s32 %v4233, %v4223
    %v4235 = vadd.s32 %v4234, %v4225
    %v4236 = vmul.u32 %v4191, %v4182
    %v4237 = vadd.s32 %v4213, %v4232
    %vm4238 = vc.u32 %v4213, %v4232
    %v4239 = vadd.s32 %v4235, 1
    %v4240 = vsel %vm4238, %v4239, %v4235
    %v4241 = vadd.s32 %v4236, %v4240
    %v4242 = vadd.s32 %v4241, 536870912
    %v4243 = vshrl.u32 %v4242, 30
    %v4244 = vshll.u32 %v4243, 30
    %v4245 = vsub.s32 %v4241, %v4244
    %vm4246 = vcmp.lt.s32.totalorder %v4245, 0
    %v4247 = vsub.s32 0, %v4245
    %v4248 = vsel %vm4246, %v4247, %v4245
    %v4249 = vclz %v4248
    %v4250 = vsub.s32 %v4249, 2
    %vm4251 = vcmp.gt.s32.totalorder 0, %v4250
    %v4252 = vsel %vm4251, 0, %v4250
    %v4253 = vsub.s32 32, %v4252
    %v4254 = vshll.u32 %v4245, %v4252
    %v4255 = vshrl.u32 %v4237, %v4253
    %v4256 = vor.u32 %v4254, %v4255
    %v4257 = vsub.s32 4294967266, %v4252
    %v4258 = vadd.s32 %v4257, 127
    %v4259 = vshll.u32 %v4258, 23
    %v4260 = vor.u32 4788187, %v4259
    %v4261 = vand.u32 2147483647, %v4260
    %v4263 = vcvt.s32.f32 %v4256
    %v4264 = vmul.f32 %v4263, %v4261
    %v4265 = vxor.u32 %v4264, 2147483648
    %v4266 = vsel %vm4145, %v4265, %v4264
    %v4267 = vsub.s32 4, %v4243
    %v4268 = vsel %vm4145, %v4267, %v4243
    %v4269 = vsel %vm4144, %v4141, %v4266
    %v4270 = vsel %vm4144, 0, %v4268
    %v4271 = vmul.f32 %v4269, %v4269
    %v4272 = vmul.f32 %v4271, -0.001358992
    %v4273 = vadd.f32 %v4272, 0.041655596
    %v4274 = vmul.f32 %v4271, %v4273
    %v4275 = vadd.f32 %v4274, -0.4999988
    %v4276 = vmul.f32 %v4271, %v4275
    %v4277 = vadd.f32 1.0, %v4276
    %v4278 = vmul.f32 %v4269, %v4269
    %v4279 = vmul.f32 %v4278, -0.00019511016
    %v4280 = vadd.f32 %v4279, 0.008332121
    %v4281 = vmul.f32 %v4278, %v4280
    %v4282 = vadd.f32 %v4281, -0.16666654
    %v4283 = vmul.f32 %v4278, %v4282
    %v4284 = vadd.f32 %v4283, 1.0
    %v4285 = vmul.f32 %v4284, %v4269
    %vm4286 = vweird.f32 %v4141
    %v4287 = vadd.s32 %v4270, 3
    %v4288 = vand.u32 %v4287, 3
    %vm4289 = vcmp.lt.s32.totalorder %v4288, 2
    %vm4290 = vcmp.eq.s32.totalorder %v4288, 0
    %v4291 = vxor.u32 %v4285, 2147483648
    %v4292 = vsel %vm4290, %v4277, %v4291
    %vm4293 = vcmp.eq.s32.totalorder %v4288, 2
    %v4294 = vxor.u32 %v4277, 2147483648
    %v4295 = vsel %vm4293, %v4294, %v4285
    %v4296 = vsel %vm4289, %v4292, %v4295
    %v4297 = vsel %vm4286, nan, %v4296
    %v4298 = vand.u32 2147483647, %v4142
    %vm4299 = vcmp.le.f32.partialorder %v4298, 0.7853982
    %vm4300 = vcmp.lt.s32.totalorder %v4142, 0
    %v4301 = vand.u32 %v4142, 2139095040
    %v4302 = vshrl.u32 %v4301, 23
    %v4303 = vsub.s32 %v4302, 127
    %v4304 = vand.u32 2147483647, %v4142
    %v4305 = vand.u32 %v4304, 8388607
    %v4306 = vor.u32 %v4305, 8388608
    %v4307 = vsub.s32 0, %v4306
    %v4308 = vadd.s32 %v4303, 1
    %vm4309 = vcmp.gt.s32.totalorder %v4308, 0
    %v4310 = vsel %vm4309, %v4308, 0
    %v4311 = vshrl.u32 %v4310, 5
    %v4312 = vand.u32 %v4310, 31
    %v4313 = vsub.s32 32, %v4312
    %v4314 = vshrl.u32 683565275, %v4313
    %v4315 = vshll.u32 683565275, %v4312
    %v4316 = vshrl.u32 2475754826, %v4313
    %v4317 = vor.u32 %v4315, %v4316
    %v4318 = vshll.u32 2475754826, %v4312
    %v4319 = vshrl.u32 2131351028, %v4313
    %v4320 = vor.u32 %v4318, %v4319
    %v4321 = vshll.u32 2131351028, %v4312
    %v4322 = vshrl.u32 2102212464, %v4313
    %v4323 = vor.u32 %v4321, %v4322
    %v4324 = vshll.u32 2102212464, %v4312
    %v4325 = vshrl.u32 920167782, %v4313
    %v4326 = vor.u32 %v4324, %v4325
    %v4327 = vshll.u32 920167782, %v4312
    %v4328 = vshrl.u32 1326507024, %v4313
    %v4329 = vor.u32 %v4327, %v4328
    %vm4330 = vcmp.lt.s32.totalorder %v4311, 1
    %vm4331 = vcmp.lt.s32.totalorder %v4311, 2
    %vm4332 = vcmp.lt.s32.totalorder %v4311, 3
    %vm4333 = vcmp.lt.s32.totalorder %v4311, 4
    %v4334 = vsel %vm4330, %v4314, %v4317
    %v4335 = vsel %vm4333, %v4323, 2102212464
    %v4336 = vsel %vm4332, %v4320, %v4335
    %v4337 = vsel %vm4331, %v4334, %v4336
    %v4338 = vsel %vm4330, %v4317, %v4320
    %v4339 = vsel %vm4333, %v4326, 920167782
    %v4340 = vsel %vm4332, %v4323, %v4339
    %v4341 = vsel %vm4331, %v4338, %v4340
    %v4342 = vsel %vm4330, %v4320, %v4323
    %v4343 = vsel %vm4333, %v4329, 1326507024
    %v4344 = vsel %vm4332, %v4326, %v4343
    %v4345 = vsel %vm4331, %v4342, %v4344
    %v4346 = vshll.u32 %v4306, 8
    %v4347 = vand.u32 %v4346, 65535
    %v4348 = vshrl.u32 %v4346, 16
    %v4349 = vand.u32 %v4345, 65535
    %v4350 = vshrl.u32 %v4345, 16
    %v4351 = vmul.u32 %v4347, %v4349
    %v4352 = vmul.u32 %v4347, %v4350
    %v4353 = vmul.u32 %v4348, %v4349
    %v4354 = vmul.u32 %v4348, %v4350
    %v4355 = vshll.u32 %v4352, 16
    %v4356 = vshrl.u32 %v4352, 16
    %v4357 = vshll.u32 %v4353, 16
    %v4358 = vshrl.u32 %v4353, 16
    %vm4359 = vc.u32 %v4351, %v4355
    %v4360 = vsel %vm4359, 1, 0
    %v4361 = vadd.s32 %v4351, %v4355
    %v4362 = vadd.s32 %v4354, %v4360
    %vm4363 = vc.u32 %v4361, %v4357
    %v4364 = vsel %vm4363, 1, 0
    %v4365 = vadd.s32 %v4361, %v4357
    %v4366 = vadd.s32 %v4362, %v4364
    %v4367 = vadd.s32 %v4366, %v4356
    %v4368 = vadd.s32 %v4367, %v4358
    %v4369 = vand.u32 %v4346, 65535
    %v4370 = vshrl.u32 %v4346, 16
    %v4371 = vand.u32 %v4341, 65535
    %v4372 = vshrl.u32 %v4341, 16
    %v4373 = vmul.u32 %v4369, %v4371
    %v4374 = vmul.u32 %v4369, %v4372
    %v4375 = vmul.u32 %v4370, %v4371
    %v4376 = vmul.u32 %v4370, %v4372
    %v4377 = vshll.u32 %v4374, 16
    %v4378 = vshrl.u32 %v4374, 16
    %v4379 = vshll.u32 %v4375, 16
    %v4380 = vshrl.u32 %v4375, 16
    %vm4381 = vc.u32 %v4373, %v4377
    %v4382 = vsel %vm4381, 1, 0
    %v4383 = vadd.s32 %v4373, %v4377
    %v4384 = vadd.s32 %v4376, %v4382
    %vm4385 = vc.u32 %v4383, %v4379
    %v4386 = vsel %vm4385, 1, 0
    %v4387 = vadd.s32 %v4383, %v4379
    %v4388 = vadd.s32 %v4384, %v4386
    %v4389 = vadd.s32 %v4388, %v4378
    %v4390 = vadd.s32 %v4389, %v4380
    %v4391 = vmul.u32 %v4346, %v4337
    %v4392 = vadd.s32 %v4368, %v4387
    %vm4393 = vc.u32 %v4368, %v4387
    %v4394 = vadd.s32 %v4390, 1
    %v4395 = vsel %vm4393, %v4394, %v4390
    %v4396 = vadd.s32 %v4391, %v4395
    %v4397 = vadd.s32 %v4396, 536870912
    %v4398 = vshrl.u32 %v4397, 30
    %v4399 = vshll.u32 %v4398, 30
    %v4400 = vsub.s32 %v4396, %v4399
    %vm4401 = vcmp.lt.s32.totalorder %v4400, 0
    %v4402 = vsub.s32 0, %v4400
    %v4403 = vsel %vm4401, %v4402, %v4400
    %v4404 = vclz %v4403
    %v4405 = vsub.s32 %v4404, 2
    %vm4406 = vcmp.gt.s32.totalorder 0, %v4405
    %v4407 = vsel %vm4406, 0, %v4405
    %v4408 = vsub.s32 32, %v4407
    %v4409 = vshll.u32 %v4400, %v4407
    %v4410 = vshrl.u32 %v4392, %v4408
    %v4411 = vor.u32 %v4409, %v4410
    %v4412 = vsub.s32 4294967266, %v4407
    %v4413 = vadd.s32 %v4412, 127
    %v4414 = vshll.u32 %v4413, 23
    %v4415 = vor.u32 4788187, %v4414
    %v4416 = vand.u32 2147483647, %v4415
    %v4418 = vcvt.s32.f32 %v4411
    %v4419 = vmul.f32 %v4418, %v4416
    %v4420 = vxor.u32 %v4419, 2147483648
    %v4421 = vsel %vm4300, %v4420, %v4419
    %v4422 = vsub.s32 4, %v4398
    %v4423 = vsel %vm4300, %v4422, %v4398
    %v4424 = vsel %vm4299, %v4142, %v4421
    %v4425 = vsel %vm4299, 0, %v4423
    %v4426 = vmul.f32 %v4424, %v4424
    %v4427 = vmul.f32 %v4426, -0.001358992
    %v4428 = vadd.f32 %v4427, 0.041655596
    %v4429 = vmul.f32 %v4426, %v4428
    %v4430 = vadd.f32 %v4429, -0.4999988
    %v4431 = vmul.f32 %v4426, %v4430
    %v4432 = vadd.f32 1.0, %v4431
    %v4433 = vmul.f32 %v4424, %v4424
    %v4434 = vmul.f32 %v4433, -0.00019511016
    %v4435 = vadd.f32 %v4434, 0.008332121
    %v4436 = vmul.f32 %v4433, %v4435
    %v4437 = vadd.f32 %v4436, -0.16666654
    %v4438 = vmul.f32 %v4433, %v4437
    %v4439 = vadd.f32 %v4438, 1.0
    %v4440 = vmul.f32 %v4439, %v4424
    %vm4441 = vweird.f32 %v4142
    %v4442 = vadd.s32 %v4425, 3
    %v4443 = vand.u32 %v4442, 3
    %vm4444 = vcmp.lt.s32.totalorder %v4443, 2
    %vm4445 = vcmp.eq.s32.totalorder %v4443, 0
    %v4446 = vxor.u32 %v4440, 2147483648
    %v4447 = vsel %vm4445, %v4432, %v4446
    %vm4448 = vcmp.eq.s32.totalorder %v4443, 2
    %v4449 = vxor.u32 %v4432, 2147483648
    %v4450 = vsel %vm4448, %v4449, %v4440
    %v4451 = vsel %vm4444, %v4447, %v4450
    %v4452 = vsel %vm4441, nan, %v4451
    %v4455 = vrot.slane %v4452, 7
    %vm4456 = vcmask 1040384
    %v4457 = vsel %vm4456, %v4297, %v4455
    %v4459 = vlaneseq
    %vm4460 = vcmp.ge.s32.totalorder %v4459, 0
    %vm4461 = vcmp.lt.s32.totalorder %v4459, 256
    %vm4462 = vmand %vm4460, %vm4461
    %4463 = vst.msk [vmem:[#allocation3] sm:$0x3] %vm4462, %v4457
    // Predicated region
    $region30: #{tpu_custom_call.1} parent=1 // pred_check
      _
    $region31: #{tpu_custom_call.1} parent=1 // pred_check_branch
      %4465 = sbr.rel (0) target = $region33
    $region32: #{tpu_custom_call.1} parent=1 // pred_region
      %4467 = vsyncadd [#allocation4], 0
      %s4469 = sshll.u32 [#allocation3], 4
      %s4470 = int_to_ptr.vmem [resolvable:$true] %s4469
      %s4471 = sshll.u32 %s7, 4
      %s4472 = int_to_ptr.hbm [resolvable:$true] %s4471
      %4474 = dma.vmem_to_hbm [thread:$0]  %s4470, 32, %s4472, [#allocation4]
    $region33: #{tpu_custom_call.1} parent=1 // pred_fallthru
      _
    // Predicated region
    $region34: #{tpu_custom_call.1} parent=1 // pred_check
      _
    $region35: #{tpu_custom_call.1} parent=1 // pred_check_branch
      %4476 = sbr.rel (0) target = $region37
    $region36: #{tpu_custom_call.1} parent=1 // pred_region
      %4478 = dma.done [#allocation4], 32
    $region37: #{tpu_custom_call.1} parent=1 // pred_fallthru
      _
    %4479 = vsyncpa [#allocation4], 1

// kernel: tpu_custom_call.1
$region0: #{tpu_custom_call.1}
  #allocation0 [shape = 'u32[]', space=smem, size = 0x4, offset = 0x4, fixed_abs, tag = 'smem constant byte address 0x4 - core index']
  #allocation1 [shape = 'u32[72,128]{1,0:T(1,128)}', space=vmem, size = 0x9000, scoped, tag = 'internal scratch']
  #allocation2 [shape = 'f32[1,1]{1,0:T(1,128)S(1)}', space=vmem, size = 0x200, scoped, tag = 'scoped memory for tpu_custom_call.1']
  %s0 = inlined_call_operand.vmem [shape: f32[2,256], index: 0, kind: input, shape index: {}]
  %s1 = inlined_call_operand.vmem [shape: f32[32,2], index: 1, kind: input, shape index: {}]
  %s2 = inlined_call_operand.vmem [shape: f32[32,1], index: 2, kind: input, shape index: {}]
  %s3 = inlined_call_operand.vmem [shape: f32[2,32,32], index: 3, kind: input, shape index: {}]
  %s4 = inlined_call_operand.vmem [shape: f32[2,32,1], index: 4, kind: input, shape index: {}]
  %s5 = inlined_call_operand.vmem [shape: f32[32,1], index: 5, kind: input, shape index: {}]
  %s6 = inlined_call_operand.<no memory space> [shape: f32[1,1], index: 6, kind: input, shape index: {}]
  %s7 = inlined_call_operand.hbm [shape: f32[1,256], index: 7, kind: output, shape index: {}]
  %s8 = sld [smem:[#allocation0]]
  $region38: #{tpu_custom_call.1} parent=0
    _
  %s10 = ssub.s32 1, %s8
  %s11 = scalar_select 0, %s10, %s8
  %v12 = vstv %s6
  %13 = vst [vmem:[#allocation2] sm:$0x1] %v12
  $region1: #{tpu_custom_call.1} parent=0
    #allocation3 [shape = 'u8[1024]{0}', space=vmem, size = 0x400, scoped, tag = 'output window, operand 0, single buffered']
    #allocation4 [shape = 's32[1]{0}', space=sflag, size = 0x4, scoped, tag = 'scoped memory for tpu_custom_call.1']
    %14 = vsyncpa [#allocation4], 0
    // Predicated region
    $region2: #{tpu_custom_call.1} parent=1 // pred_check
      _
    $region3: #{tpu_custom_call.1} parent=1 // pred_check_branch
      %16 = sbr.rel (0) target = $region5
    $region4: #{tpu_custom_call.1} parent=1 // pred_region
      _
    $region5: #{tpu_custom_call.1} parent=1 // pred_fallthru
      _
    // Predicated region
    $region6: #{tpu_custom_call.1} parent=1 // pred_check
      _
    $region7: #{tpu_custom_call.1} parent=1 // pred_check_branch
      %18 = sbr.rel (0) target = $region9
    $region8: #{tpu_custom_call.1} parent=1 // pred_region
      _
    $region9: #{tpu_custom_call.1} parent=1 // pred_fallthru
      _
    // Predicated region
    $region10: #{tpu_custom_call.1} parent=1 // pred_check
      _
    $region11: #{tpu_custom_call.1} parent=1 // pred_check_branch
      %20 = sbr.rel (0) target = $region13
    $region12: #{tpu_custom_call.1} parent=1 // pred_region
      _
    $region13: #{tpu_custom_call.1} parent=1 // pred_fallthru
      _
    // Predicated region
    $region14: #{tpu_custom_call.1} parent=1 // pred_check
      _
    $region15: #{tpu_custom_call.1} parent=1 // pred_check_branch
      %22 = sbr.rel (0) target = $region17
    $region16: #{tpu_custom_call.1} parent=1 // pred_region
      _
    $region17: #{tpu_custom_call.1} parent=1 // pred_fallthru
      _
    // Predicated region
    $region18: #{tpu_custom_call.1} parent=1 // pred_check
      _
    $region19: #{tpu_custom_call.1} parent=1 // pred_check_branch
      %24 = sbr.rel (0) target = $region21
    $region20: #{tpu_custom_call.1} parent=1 // pred_region
      _
    $region21: #{tpu_custom_call.1} parent=1 // pred_fallthru
      _
    // Predicated region
    $region22: #{tpu_custom_call.1} parent=1 // pred_check
      _
    $region23: #{tpu_custom_call.1} parent=1 // pred_check_branch
      %26 = sbr.rel (0) target = $region25
    $region24: #{tpu_custom_call.1} parent=1 // pred_region
      _
    $region25: #{tpu_custom_call.1} parent=1 // pred_fallthru
      _
    // Predicated region
    $region26: #{tpu_custom_call.1} parent=1 // pred_check
      _
    $region27: #{tpu_custom_call.1} parent=1 // pred_check_branch
      %28 = sbr.rel (0) target = $region29
    $region28: #{tpu_custom_call.1} parent=1 // pred_region
      _
    $region29: #{tpu_custom_call.1} parent=1 // pred_fallthru
      _
    %v29 = vld [vmem:[%s0] sm:$0xf]
    %v30 = vld [vmem:[%s1] sm:$0xff]
    %v31 = vld [vmem:[%s1 + $0x8] sm:$0xff]
    %v32 = vld [vmem:[%s1 + $0x10] sm:$0xff]
    %v33 = vld [vmem:[%s1 + $0x18] sm:$0xff]
    %35 = vset.pattern.permute.xlu0 0
    %36 = vperm.xlu0 %35, %v30
    %v37 = vpop.permute.xlu0 %36
    %40 = vset.pattern.permute.xlu0 0
    %41 = vperm.xlu0 %40, %v31
    %v42 = vpop.permute.xlu0 %41
    %45 = vset.pattern.permute.xlu0 0
    %46 = vperm.xlu0 %45, %v32
    %v47 = vpop.permute.xlu0 %46
    %50 = vset.pattern.permute.xlu0 0
    %51 = vperm.xlu0 %50, %v33
    %v52 = vpop.permute.xlu0 %51
    %v55 = vperm.slane %v29, 0
    %v56 = vperm.slane %v29, 2
    %v59 = vperm.slane %v55, 0
    %v60 = vperm.slane %v56, 0
    %v61 = vmul.f32 %v37, %v59
    %v62 = vmul.f32 %v37, %v60
    %v63 = vmul.f32 %v42, %v59
    %v64 = vmul.f32 %v42, %v60
    %v65 = vmul.f32 %v47, %v59
    %v66 = vmul.f32 %v47, %v60
    %v67 = vmul.f32 %v52, %v59
    %v68 = vmul.f32 %v52, %v60
    %69 = vset.pattern.permute.xlu0 1
    %70 = vperm.xlu0 %69, %v30
    %v71 = vpop.permute.xlu0 %70
    %73 = vset.pattern.permute.xlu0 1
    %74 = vperm.xlu0 %73, %v31
    %v75 = vpop.permute.xlu0 %74
    %77 = vset.pattern.permute.xlu0 1
    %78 = vperm.xlu0 %77, %v32
    %v79 = vpop.permute.xlu0 %78
    %81 = vset.pattern.permute.xlu0 1
    %82 = vperm.xlu0 %81, %v33
    %v83 = vpop.permute.xlu0 %82
    %v85 = vperm.slane %v29, 1
    %v86 = vperm.slane %v29, 3
    %v89 = vperm.slane %v85, 1
    %v90 = vperm.slane %v86, 1
    %v91 = vmul.f32 %v71, %v89
    %v92 = vmul.f32 %v71, %v90
    %v93 = vmul.f32 %v75, %v89
    %v94 = vmul.f32 %v75, %v90
    %v95 = vmul.f32 %v79, %v89
    %v96 = vmul.f32 %v79, %v90
    %v97 = vmul.f32 %v83, %v89
    %v98 = vmul.f32 %v83, %v90
    %v99 = vadd.f32 %v61, %v91
    %v100 = vadd.f32 %v62, %v92
    %v101 = vadd.f32 %v63, %v93
    %v102 = vadd.f32 %v64, %v94
    %v103 = vadd.f32 %v65, %v95
    %v104 = vadd.f32 %v66, %v96
    %v105 = vadd.f32 %v67, %v97
    %v106 = vadd.f32 %v68, %v98
    %v107 = vld [vmem:[%s2] sm:$0xff]
    %v108 = vld [vmem:[%s2 + $0x8] sm:$0xff]
    %v109 = vld [vmem:[%s2 + $0x10] sm:$0xff]
    %v110 = vld [vmem:[%s2 + $0x18] sm:$0xff]
    %112 = vset.pattern.permute.xlu0 0
    %113 = vperm.xlu0 %112, %v107
    %v114 = vpop.permute.xlu0 %113
    %117 = vset.pattern.permute.xlu0 0
    %118 = vperm.xlu0 %117, %v108
    %v119 = vpop.permute.xlu0 %118
    %122 = vset.pattern.permute.xlu0 0
    %123 = vperm.xlu0 %122, %v109
    %v124 = vpop.permute.xlu0 %123
    %127 = vset.pattern.permute.xlu0 0
    %128 = vperm.xlu0 %127, %v110
    %v129 = vpop.permute.xlu0 %128
    %v131 = vadd.f32 %v99, %v114
    %v132 = vadd.f32 %v100, %v114
    %v133 = vadd.f32 %v101, %v119
    %v134 = vadd.f32 %v102, %v119
    %v135 = vadd.f32 %v103, %v124
    %v136 = vadd.f32 %v104, %v124
    %v137 = vadd.f32 %v105, %v129
    %v138 = vadd.f32 %v106, %v129
    %v139 = vmul.f32 %v131, 30.0
    %v140 = vmul.f32 %v132, 30.0
    %v141 = vmul.f32 %v133, 30.0
    %v142 = vmul.f32 %v134, 30.0
    %v143 = vmul.f32 %v135, 30.0
    %v144 = vmul.f32 %v136, 30.0
    %v145 = vmul.f32 %v137, 30.0
    %v146 = vmul.f32 %v138, 30.0
    %v147 = vand.u32 2147483647, %v139
    %vm148 = vcmp.le.f32.partialorder %v147, 0.7853982
    %vm149 = vcmp.lt.s32.totalorder %v139, 0
    %v150 = vand.u32 %v139, 2139095040
    %v151 = vshrl.u32 %v150, 23
    %v152 = vsub.s32 %v151, 127
    %v153 = vand.u32 2147483647, %v139
    %v154 = vand.u32 %v153, 8388607
    %v155 = vor.u32 %v154, 8388608
    %v156 = vsub.s32 0, %v155
    %v157 = vadd.s32 %v152, 1
    %vm158 = vcmp.gt.s32.totalorder %v157, 0
    %v159 = vsel %vm158, %v157, 0
    %v160 = vshrl.u32 %v159, 5
    %v161 = vand.u32 %v159, 31
    %v162 = vsub.s32 32, %v161
    %v163 = vshrl.u32 683565275, %v162
    %v164 = vshll.u32 683565275, %v161
    %v165 = vshrl.u32 2475754826, %v162
    %v166 = vor.u32 %v164, %v165
    %v167 = vshll.u32 2475754826, %v161
    %v168 = vshrl.u32 2131351028, %v162
    %v169 = vor.u32 %v167, %v168
    %v170 = vshll.u32 2131351028, %v161
    %v171 = vshrl.u32 2102212464, %v162
    %v172 = vor.u32 %v170, %v171
    %v173 = vshll.u32 2102212464, %v161
    %v174 = vshrl.u32 920167782, %v162
    %v175 = vor.u32 %v173, %v174
    %v176 = vshll.u32 920167782, %v161
    %v177 = vshrl.u32 1326507024, %v162
    %v178 = vor.u32 %v176, %v177
    %vm179 = vcmp.lt.s32.totalorder %v160, 1
    %vm180 = vcmp.lt.s32.totalorder %v160, 2
    %vm181 = vcmp.lt.s32.totalorder %v160, 3
    %vm182 = vcmp.lt.s32.totalorder %v160, 4
    %v183 = vsel %vm179, %v163, %v166
    %v184 = vsel %vm182, %v172, 2102212464
    %v185 = vsel %vm181, %v169, %v184
    %v186 = vsel %vm180, %v183, %v185
    %v187 = vsel %vm179, %v166, %v169
    %v188 = vsel %vm182, %v175, 920167782
    %v189 = vsel %vm181, %v172, %v188
    %v190 = vsel %vm180, %v187, %v189
    %v191 = vsel %vm179, %v169, %v172
    %v192 = vsel %vm182, %v178, 1326507024
    %v193 = vsel %vm181, %v175, %v192
    %v194 = vsel %vm180, %v191, %v193
    %v195 = vshll.u32 %v155, 8
    %v196 = vand.u32 %v195, 65535
    %v197 = vshrl.u32 %v195, 16
    %v198 = vand.u32 %v194, 65535
    %v199 = vshrl.u32 %v194, 16
    %v200 = vmul.u32 %v196, %v198
    %v201 = vmul.u32 %v196, %v199
    %v202 = vmul.u32 %v197, %v198
    %v203 = vmul.u32 %v197, %v199
    %v204 = vshll.u32 %v201, 16
    %v205 = vshrl.u32 %v201, 16
    %v206 = vshll.u32 %v202, 16
    %v207 = vshrl.u32 %v202, 16
    %vm208 = vc.u32 %v200, %v204
    %v209 = vsel %vm208, 1, 0
    %v210 = vadd.s32 %v200, %v204
    %v211 = vadd.s32 %v203, %v209
    %vm212 = vc.u32 %v210, %v206
    %v213 = vsel %vm212, 1, 0
    %v214 = vadd.s32 %v210, %v206
    %v215 = vadd.s32 %v211, %v213
    %v216 = vadd.s32 %v215, %v205
    %v217 = vadd.s32 %v216, %v207
    %v218 = vand.u32 %v195, 65535
    %v219 = vshrl.u32 %v195, 16
    %v220 = vand.u32 %v190, 65535
    %v221 = vshrl.u32 %v190, 16
    %v222 = vmul.u32 %v218, %v220
    %v223 = vmul.u32 %v218, %v221
    %v224 = vmul.u32 %v219, %v220
    %v225 = vmul.u32 %v219, %v221
    %v226 = vshll.u32 %v223, 16
    %v227 = vshrl.u32 %v223, 16
    %v228 = vshll.u32 %v224, 16
    %v229 = vshrl.u32 %v224, 16
    %vm230 = vc.u32 %v222, %v226
    %v231 = vsel %vm230, 1, 0
    %v232 = vadd.s32 %v222, %v226
    %v233 = vadd.s32 %v225, %v231
    %vm234 = vc.u32 %v232, %v228
    %v235 = vsel %vm234, 1, 0
    %v236 = vadd.s32 %v232, %v228
    %v237 = vadd.s32 %v233, %v235
    %v238 = vadd.s32 %v237, %v227
    %v239 = vadd.s32 %v238, %v229
    %v240 = vmul.u32 %v195, %v186
    %v241 = vadd.s32 %v217, %v236
    %vm242 = vc.u32 %v217, %v236
    %v243 = vadd.s32 %v239, 1
    %v244 = vsel %vm242, %v243, %v239
    %v245 = vadd.s32 %v240, %v244
    %v246 = vadd.s32 %v245, 536870912
    %v247 = vshrl.u32 %v246, 30
    %v248 = vshll.u32 %v247, 30
    %v249 = vsub.s32 %v245, %v248
    %vm250 = vcmp.lt.s32.totalorder %v249, 0
    %v251 = vsub.s32 0, %v249
    %v252 = vsel %vm250, %v251, %v249
    %v253 = vclz %v252
    %v254 = vsub.s32 %v253, 2
    %vm255 = vcmp.gt.s32.totalorder 0, %v254
    %v256 = vsel %vm255, 0, %v254
    %v257 = vsub.s32 32, %v256
    %v258 = vshll.u32 %v249, %v256
    %v259 = vshrl.u32 %v241, %v257
    %v260 = vor.u32 %v258, %v259
    %v261 = vsub.s32 4294967266, %v256
    %v262 = vadd.s32 %v261, 127
    %v263 = vshll.u32 %v262, 23
    %v264 = vor.u32 4788187, %v263
    %v265 = vand.u32 2147483647, %v264
    %v267 = vcvt.s32.f32 %v260
    %v268 = vmul.f32 %v267, %v265
    %v269 = vxor.u32 %v268, 2147483648
    %v270 = vsel %vm149, %v269, %v268
    %v271 = vsub.s32 4, %v247
    %v272 = vsel %vm149, %v271, %v247
    %v273 = vsel %vm148, %v139, %v270
    %v274 = vsel %vm148, 0, %v272
    %v275 = vmul.f32 %v273, %v273
    %v276 = vmul.f32 %v275, -0.001358992
    %v277 = vadd.f32 %v276, 0.041655596
    %v278 = vmul.f32 %v275, %v277
    %v279 = vadd.f32 %v278, -0.4999988
    %v280 = vmul.f32 %v275, %v279
    %v281 = vadd.f32 1.0, %v280
    %v282 = vmul.f32 %v273, %v273
    %v283 = vmul.f32 %v282, -0.00019511016
    %v284 = vadd.f32 %v283, 0.008332121
    %v285 = vmul.f32 %v282, %v284
    %v286 = vadd.f32 %v285, -0.16666654
    %v287 = vmul.f32 %v282, %v286
    %v288 = vadd.f32 %v287, 1.0
    %v289 = vmul.f32 %v288, %v273
    %vm290 = vweird.f32 %v139
    %v291 = vadd.s32 %v274, 3
    %v292 = vand.u32 %v291, 3
    %vm293 = vcmp.lt.s32.totalorder %v292, 2
    %vm294 = vcmp.eq.s32.totalorder %v292, 0
    %v295 = vxor.u32 %v289, 2147483648
    %v296 = vsel %vm294, %v281, %v295
    %vm297 = vcmp.eq.s32.totalorder %v292, 2
    %v298 = vxor.u32 %v281, 2147483648
    %v299 = vsel %vm297, %v298, %v289
    %v300 = vsel %vm293, %v296, %v299
    %v301 = vsel %vm290, nan, %v300
    %v302 = vand.u32 2147483647, %v140
    %vm303 = vcmp.le.f32.partialorder %v302, 0.7853982
    %vm304 = vcmp.lt.s32.totalorder %v140, 0
    %v305 = vand.u32 %v140, 2139095040
    %v306 = vshrl.u32 %v305, 23
    %v307 = vsub.s32 %v306, 127
    %v308 = vand.u32 2147483647, %v140
    %v309 = vand.u32 %v308, 8388607
    %v310 = vor.u32 %v309, 8388608
    %v311 = vsub.s32 0, %v310
    %v312 = vadd.s32 %v307, 1
    %vm313 = vcmp.gt.s32.totalorder %v312, 0
    %v314 = vsel %vm313, %v312, 0
    %v315 = vshrl.u32 %v314, 5
    %v316 = vand.u32 %v314, 31
    %v317 = vsub.s32 32, %v316
    %v318 = vshrl.u32 683565275, %v317
    %v319 = vshll.u32 683565275, %v316
    %v320 = vshrl.u32 2475754826, %v317
    %v321 = vor.u32 %v319, %v320
    %v322 = vshll.u32 2475754826, %v316
    %v323 = vshrl.u32 2131351028, %v317
    %v324 = vor.u32 %v322, %v323
    %v325 = vshll.u32 2131351028, %v316
    %v326 = vshrl.u32 2102212464, %v317
    %v327 = vor.u32 %v325, %v326
    %v328 = vshll.u32 2102212464, %v316
    %v329 = vshrl.u32 920167782, %v317
    %v330 = vor.u32 %v328, %v329
    %v331 = vshll.u32 920167782, %v316
    %v332 = vshrl.u32 1326507024, %v317
    %v333 = vor.u32 %v331, %v332
    %vm334 = vcmp.lt.s32.totalorder %v315, 1
    %vm335 = vcmp.lt.s32.totalorder %v315, 2
    %vm336 = vcmp.lt.s32.totalorder %v315, 3
    %vm337 = vcmp.lt.s32.totalorder %v315, 4
    %v338 = vsel %vm334, %v318, %v321
    %v339 = vsel %vm337, %v327, 2102212464
    %v340 = vsel %vm336, %v324, %v339
    %v341 = vsel %vm335, %v338, %v340
    %v342 = vsel %vm334, %v321, %v324
    %v343 = vsel %vm337, %v330, 920167782
    %v344 = vsel %vm336, %v327, %v343
    %v345 = vsel %vm335, %v342, %v344
    %v346 = vsel %vm334, %v324, %v327
    %v347 = vsel %vm337, %v333, 1326507024
    %v348 = vsel %vm336, %v330, %v347
    %v349 = vsel %vm335, %v346, %v348
    %v350 = vshll.u32 %v310, 8
    %v351 = vand.u32 %v350, 65535
    %v352 = vshrl.u32 %v350, 16
    %v353 = vand.u32 %v349, 65535
    %v354 = vshrl.u32 %v349, 16
    %v355 = vmul.u32 %v351, %v353
    %v356 = vmul.u32 %v351, %v354
    %v357 = vmul.u32 %v352, %v353
    %v358 = vmul.u32 %v352, %v354
    %v359 = vshll.u32 %v356, 16
    %v360 = vshrl.u32 %v356, 16
    %v361 = vshll.u32 %v357, 16
    %v362 = vshrl.u32 %v357, 16
    %vm363 = vc.u32 %v355, %v359
    %v364 = vsel %vm363, 1, 0
    %v365 = vadd.s32 %v355, %v359
    %v366 = vadd.s32 %v358, %v364
    %vm367 = vc.u32 %v365, %v361
    %v368 = vsel %vm367, 1, 0
    %v369 = vadd.s32 %v365, %v361
    %v370 = vadd.s32 %v366, %v368
    %v371 = vadd.s32 %v370, %v360
    %v372 = vadd.s32 %v371, %v362
    %v373 = vand.u32 %v350, 65535
    %v374 = vshrl.u32 %v350, 16
    %v375 = vand.u32 %v345, 65535
    %v376 = vshrl.u32 %v345, 16
    %v377 = vmul.u32 %v373, %v375
    %v378 = vmul.u32 %v373, %v376
    %v379 = vmul.u32 %v374, %v375
    %v380 = vmul.u32 %v374, %v376
    %v381 = vshll.u32 %v378, 16
    %v382 = vshrl.u32 %v378, 16
    %v383 = vshll.u32 %v379, 16
    %v384 = vshrl.u32 %v379, 16
    %vm385 = vc.u32 %v377, %v381
    %v386 = vsel %vm385, 1, 0
    %v387 = vadd.s32 %v377, %v381
    %v388 = vadd.s32 %v380, %v386
    %vm389 = vc.u32 %v387, %v383
    %v390 = vsel %vm389, 1, 0
    %v391 = vadd.s32 %v387, %v383
    %v392 = vadd.s32 %v388, %v390
    %v393 = vadd.s32 %v392, %v382
    %v394 = vadd.s32 %v393, %v384
    %v395 = vmul.u32 %v350, %v341
    %v396 = vadd.s32 %v372, %v391
    %vm397 = vc.u32 %v372, %v391
    %v398 = vadd.s32 %v394, 1
    %v399 = vsel %vm397, %v398, %v394
    %v400 = vadd.s32 %v395, %v399
    %v401 = vadd.s32 %v400, 536870912
    %v402 = vshrl.u32 %v401, 30
    %v403 = vshll.u32 %v402, 30
    %v404 = vsub.s32 %v400, %v403
    %vm405 = vcmp.lt.s32.totalorder %v404, 0
    %v406 = vsub.s32 0, %v404
    %v407 = vsel %vm405, %v406, %v404
    %v408 = vclz %v407
    %v409 = vsub.s32 %v408, 2
    %vm410 = vcmp.gt.s32.totalorder 0, %v409
    %v411 = vsel %vm410, 0, %v409
    %v412 = vsub.s32 32, %v411
    %v413 = vshll.u32 %v404, %v411
    %v414 = vshrl.u32 %v396, %v412
    %v415 = vor.u32 %v413, %v414
    %v416 = vsub.s32 4294967266, %v411
    %v417 = vadd.s32 %v416, 127
    %v418 = vshll.u32 %v417, 23
    %v419 = vor.u32 4788187, %v418
    %v420 = vand.u32 2147483647, %v419
    %v422 = vcvt.s32.f32 %v415
    %v423 = vmul.f32 %v422, %v420
    %v424 = vxor.u32 %v423, 2147483648
    %v425 = vsel %vm304, %v424, %v423
    %v426 = vsub.s32 4, %v402
    %v427 = vsel %vm304, %v426, %v402
    %v428 = vsel %vm303, %v140, %v425
    %v429 = vsel %vm303, 0, %v427
    %v430 = vmul.f32 %v428, %v428
    %v431 = vmul.f32 %v430, -0.001358992
    %v432 = vadd.f32 %v431, 0.041655596
    %v433 = vmul.f32 %v430, %v432
    %v434 = vadd.f32 %v433, -0.4999988
    %v435 = vmul.f32 %v430, %v434
    %v436 = vadd.f32 1.0, %v435
    %v437 = vmul.f32 %v428, %v428
    %v438 = vmul.f32 %v437, -0.00019511016
    %v439 = vadd.f32 %v438, 0.008332121
    %v440 = vmul.f32 %v437, %v439
    %v441 = vadd.f32 %v440, -0.16666654
    %v442 = vmul.f32 %v437, %v441
    %v443 = vadd.f32 %v442, 1.0
    %v444 = vmul.f32 %v443, %v428
    %vm445 = vweird.f32 %v140
    %v446 = vadd.s32 %v429, 3
    %v447 = vand.u32 %v446, 3
    %vm448 = vcmp.lt.s32.totalorder %v447, 2
    %vm449 = vcmp.eq.s32.totalorder %v447, 0
    %v450 = vxor.u32 %v444, 2147483648
    %v451 = vsel %vm449, %v436, %v450
    %vm452 = vcmp.eq.s32.totalorder %v447, 2
    %v453 = vxor.u32 %v436, 2147483648
    %v454 = vsel %vm452, %v453, %v444
    %v455 = vsel %vm448, %v451, %v454
    %v456 = vsel %vm445, nan, %v455
    %v457 = vand.u32 2147483647, %v141
    %vm458 = vcmp.le.f32.partialorder %v457, 0.7853982
    %vm459 = vcmp.lt.s32.totalorder %v141, 0
    %v460 = vand.u32 %v141, 2139095040
    %v461 = vshrl.u32 %v460, 23
    %v462 = vsub.s32 %v461, 127
    %v463 = vand.u32 2147483647, %v141
    %v464 = vand.u32 %v463, 8388607
    %v465 = vor.u32 %v464, 8388608
    %v466 = vsub.s32 0, %v465
    %v467 = vadd.s32 %v462, 1
    %vm468 = vcmp.gt.s32.totalorder %v467, 0
    %v469 = vsel %vm468, %v467, 0
    %v470 = vshrl.u32 %v469, 5
    %v471 = vand.u32 %v469, 31
    %v472 = vsub.s32 32, %v471
    %v473 = vshrl.u32 683565275, %v472
    %v474 = vshll.u32 683565275, %v471
    %v475 = vshrl.u32 2475754826, %v472
    %v476 = vor.u32 %v474, %v475
    %v477 = vshll.u32 2475754826, %v471
    %v478 = vshrl.u32 2131351028, %v472
    %v479 = vor.u32 %v477, %v478
    %v480 = vshll.u32 2131351028, %v471
    %v481 = vshrl.u32 2102212464, %v472
    %v482 = vor.u32 %v480, %v481
    %v483 = vshll.u32 2102212464, %v471
    %v484 = vshrl.u32 920167782, %v472
    %v485 = vor.u32 %v483, %v484
    %v486 = vshll.u32 920167782, %v471
    %v487 = vshrl.u32 1326507024, %v472
    %v488 = vor.u32 %v486, %v487
    %vm489 = vcmp.lt.s32.totalorder %v470, 1
    %vm490 = vcmp.lt.s32.totalorder %v470, 2
    %vm491 = vcmp.lt.s32.totalorder %v470, 3
    %vm492 = vcmp.lt.s32.totalorder %v470, 4
    %v493 = vsel %vm489, %v473, %v476
    %v494 = vsel %vm492, %v482, 2102212464
    %v495 = vsel %vm491, %v479, %v494
    %v496 = vsel %vm490, %v493, %v495
    %v497 = vsel %vm489, %v476, %v479
    %v498 = vsel %vm492, %v485, 920167782
    %v499 = vsel %vm491, %v482, %v498
    %v500 = vsel %vm490, %v497, %v499
    %v501 = vsel %vm489, %v479, %v482
    %v502 = vsel %vm492, %v488, 1326507024
    %v503 = vsel %vm491, %v485, %v502
    %v504 = vsel %vm490, %v501, %v503
    %v505 = vshll.u32 %v465, 8
    %v506 = vand.u32 %v505, 65535
    %v507 = vshrl.u32 %v505, 16
    %v508 = vand.u32 %v504, 65535
    %v509 = vshrl.u32 %v504, 16
    %v510 = vmul.u32 %v506, %v508
    %v511 = vmul.u32 %v506, %v509
    %v512 = vmul.u32 %v507, %v508
    %v513 = vmul.u32 %v507, %v509
    %v514 = vshll.u32 %v511, 16
    %v515 = vshrl.u32 %v511, 16
    %v516 = vshll.u32 %v512, 16
    %v517 = vshrl.u32 %v512, 16
    %vm518 = vc.u32 %v510, %v514
    %v519 = vsel %vm518, 1, 0
    %v520 = vadd.s32 %v510, %v514
    %v521 = vadd.s32 %v513, %v519
    %vm522 = vc.u32 %v520, %v516
    %v523 = vsel %vm522, 1, 0
    %v524 = vadd.s32 %v520, %v516
    %v525 = vadd.s32 %v521, %v523
    %v526 = vadd.s32 %v525, %v515
    %v527 = vadd.s32 %v526, %v517
    %v528 = vand.u32 %v505, 65535
    %v529 = vshrl.u32 %v505, 16
    %v530 = vand.u32 %v500, 65535
    %v531 = vshrl.u32 %v500, 16
    %v532 = vmul.u32 %v528, %v530
    %v533 = vmul.u32 %v528, %v531
    %v534 = vmul.u32 %v529, %v530
    %v535 = vmul.u32 %v529, %v531
    %v536 = vshll.u32 %v533, 16
    %v537 = vshrl.u32 %v533, 16
    %v538 = vshll.u32 %v534, 16
    %v539 = vshrl.u32 %v534, 16
    %vm540 = vc.u32 %v532, %v536
    %v541 = vsel %vm540, 1, 0
    %v542 = vadd.s32 %v532, %v536
    %v543 = vadd.s32 %v535, %v541
    %vm544 = vc.u32 %v542, %v538
    %v545 = vsel %vm544, 1, 0
    %v546 = vadd.s32 %v542, %v538
    %v547 = vadd.s32 %v543, %v545
    %v548 = vadd.s32 %v547, %v537
    %v549 = vadd.s32 %v548, %v539
    %v550 = vmul.u32 %v505, %v496
    %v551 = vadd.s32 %v527, %v546
    %vm552 = vc.u32 %v527, %v546
    %v553 = vadd.s32 %v549, 1
    %v554 = vsel %vm552, %v553, %v549
    %v555 = vadd.s32 %v550, %v554
    %v556 = vadd.s32 %v555, 536870912
    %v557 = vshrl.u32 %v556, 30
    %v558 = vshll.u32 %v557, 30
    %v559 = vsub.s32 %v555, %v558
    %vm560 = vcmp.lt.s32.totalorder %v559, 0
    %v561 = vsub.s32 0, %v559
    %v562 = vsel %vm560, %v561, %v559
    %v563 = vclz %v562
    %v564 = vsub.s32 %v563, 2
    %vm565 = vcmp.gt.s32.totalorder 0, %v564
    %v566 = vsel %vm565, 0, %v564
    %v567 = vsub.s32 32, %v566
    %v568 = vshll.u32 %v559, %v566
    %v569 = vshrl.u32 %v551, %v567
    %v570 = vor.u32 %v568, %v569
    %v571 = vsub.s32 4294967266, %v566
    %v572 = vadd.s32 %v571, 127
    %v573 = vshll.u32 %v572, 23
    %v574 = vor.u32 4788187, %v573
    %v575 = vand.u32 2147483647, %v574
    %v577 = vcvt.s32.f32 %v570
    %v578 = vmul.f32 %v577, %v575
    %v579 = vxor.u32 %v578, 2147483648
    %v580 = vsel %vm459, %v579, %v578
    %v581 = vsub.s32 4, %v557
    %v582 = vsel %vm459, %v581, %v557
    %v583 = vsel %vm458, %v141, %v580
    %v584 = vsel %vm458, 0, %v582
    %v585 = vmul.f32 %v583, %v583
    %v586 = vmul.f32 %v585, -0.001358992
    %v587 = vadd.f32 %v586, 0.041655596
    %v588 = vmul.f32 %v585, %v587
    %v589 = vadd.f32 %v588, -0.4999988
    %v590 = vmul.f32 %v585, %v589
    %v591 = vadd.f32 1.0, %v590
    %v592 = vmul.f32 %v583, %v583
    %v593 = vmul.f32 %v592, -0.00019511016
    %v594 = vadd.f32 %v593, 0.008332121
    %v595 = vmul.f32 %v592, %v594
    %v596 = vadd.f32 %v595, -0.16666654
    %v597 = vmul.f32 %v592, %v596
    %v598 = vadd.f32 %v597, 1.0
    %v599 = vmul.f32 %v598, %v583
    %vm600 = vweird.f32 %v141
    %v601 = vadd.s32 %v584, 3
    %v602 = vand.u32 %v601, 3
    %vm603 = vcmp.lt.s32.totalorder %v602, 2
    %vm604 = vcmp.eq.s32.totalorder %v602, 0
    %v605 = vxor.u32 %v599, 2147483648
    %v606 = vsel %vm604, %v591, %v605
    %vm607 = vcmp.eq.s32.totalorder %v602, 2
    %v608 = vxor.u32 %v591, 2147483648
    %v609 = vsel %vm607, %v608, %v599
    %v610 = vsel %vm603, %v606, %v609
    %v611 = vsel %vm600, nan, %v610
    %v612 = vand.u32 2147483647, %v142
    %vm613 = vcmp.le.f32.partialorder %v612, 0.7853982
    %vm614 = vcmp.lt.s32.totalorder %v142, 0
    %v615 = vand.u32 %v142, 2139095040
    %v616 = vshrl.u32 %v615, 23
    %v617 = vsub.s32 %v616, 127
    %v618 = vand.u32 2147483647, %v142
    %v619 = vand.u32 %v618, 8388607
    %v620 = vor.u32 %v619, 8388608
    %v621 = vsub.s32 0, %v620
    %v622 = vadd.s32 %v617, 1
    %vm623 = vcmp.gt.s32.totalorder %v622, 0
    %v624 = vsel %vm623, %v622, 0
    %v625 = vshrl.u32 %v624, 5
    %v626 = vand.u32 %v624, 31
    %v627 = vsub.s32 32, %v626
    %v628 = vshrl.u32 683565275, %v627
    %v629 = vshll.u32 683565275, %v626
    %v630 = vshrl.u32 2475754826, %v627
    %v631 = vor.u32 %v629, %v630
    %v632 = vshll.u32 2475754826, %v626
    %v633 = vshrl.u32 2131351028, %v627
    %v634 = vor.u32 %v632, %v633
    %v635 = vshll.u32 2131351028, %v626
    %v636 = vshrl.u32 2102212464, %v627
    %v637 = vor.u32 %v635, %v636
    %v638 = vshll.u32 2102212464, %v626
    %v639 = vshrl.u32 920167782, %v627
    %v640 = vor.u32 %v638, %v639
    %v641 = vshll.u32 920167782, %v626
    %v642 = vshrl.u32 1326507024, %v627
    %v643 = vor.u32 %v641, %v642
    %vm644 = vcmp.lt.s32.totalorder %v625, 1
    %vm645 = vcmp.lt.s32.totalorder %v625, 2
    %vm646 = vcmp.lt.s32.totalorder %v625, 3
    %vm647 = vcmp.lt.s32.totalorder %v625, 4
    %v648 = vsel %vm644, %v628, %v631
    %v649 = vsel %vm647, %v637, 2102212464
    %v650 = vsel %vm646, %v634, %v649
    %v651 = vsel %vm645, %v648, %v650
    %v652 = vsel %vm644, %v631, %v634
    %v653 = vsel %vm647, %v640, 920167782
    %v654 = vsel %vm646, %v637, %v653
    %v655 = vsel %vm645, %v652, %v654
    %v656 = vsel %vm644, %v634, %v637
    %v657 = vsel %vm647, %v643, 1326507024
    %v658 = vsel %vm646, %v640, %v657
    %v659 = vsel %vm645, %v656, %v658
    %v660 = vshll.u32 %v620, 8
    %v661 = vand.u32 %v660, 65535
    %v662 = vshrl.u32 %v660, 16
    %v663 = vand.u32 %v659, 65535
    %v664 = vshrl.u32 %v659, 16
    %v665 = vmul.u32 %v661, %v663
    %v666 = vmul.u32 %v661, %v664
    %v667 = vmul.u32 %v662, %v663
    %v668 = vmul.u32 %v662, %v664
    %v669 = vshll.u32 %v666, 16
    %v670 = vshrl.u32 %v666, 16
    %v671 = vshll.u32 %v667, 16
    %v672 = vshrl.u32 %v667, 16
    %vm673 = vc.u32 %v665, %v669
    %v674 = vsel %vm673, 1, 0
    %v675 = vadd.s32 %v665, %v669
    %v676 = vadd.s32 %v668, %v674
    %vm677 = vc.u32 %v675, %v671
    %v678 = vsel %vm677, 1, 0
    %v679 = vadd.s32 %v675, %v671
    %v680 = vadd.s32 %v676, %v678
    %v681 = vadd.s32 %v680, %v670
    %v682 = vadd.s32 %v681, %v672
    %v683 = vand.u32 %v660, 65535
    %v684 = vshrl.u32 %v660, 16
    %v685 = vand.u32 %v655, 65535
    %v686 = vshrl.u32 %v655, 16
    %v687 = vmul.u32 %v683, %v685
    %v688 = vmul.u32 %v683, %v686
    %v689 = vmul.u32 %v684, %v685
    %v690 = vmul.u32 %v684, %v686
    %v691 = vshll.u32 %v688, 16
    %v692 = vshrl.u32 %v688, 16
    %v693 = vshll.u32 %v689, 16
    %v694 = vshrl.u32 %v689, 16
    %vm695 = vc.u32 %v687, %v691
    %v696 = vsel %vm695, 1, 0
    %v697 = vadd.s32 %v687, %v691
    %v698 = vadd.s32 %v690, %v696
    %vm699 = vc.u32 %v697, %v693
    %v700 = vsel %vm699, 1, 0
    %v701 = vadd.s32 %v697, %v693
    %v702 = vadd.s32 %v698, %v700
    %v703 = vadd.s32 %v702, %v692
    %v704 = vadd.s32 %v703, %v694
    %v705 = vmul.u32 %v660, %v651
    %v706 = vadd.s32 %v682, %v701
    %vm707 = vc.u32 %v682, %v701
    %v708 = vadd.s32 %v704, 1
    %v709 = vsel %vm707, %v708, %v704
    %v710 = vadd.s32 %v705, %v709
    %v711 = vadd.s32 %v710, 536870912
    %v712 = vshrl.u32 %v711, 30
    %v713 = vshll.u32 %v712, 30
    %v714 = vsub.s32 %v710, %v713
    %vm715 = vcmp.lt.s32.totalorder %v714, 0
    %v716 = vsub.s32 0, %v714
    %v717 = vsel %vm715, %v716, %v714
    %v718 = vclz %v717
    %v719 = vsub.s32 %v718, 2
    %vm720 = vcmp.gt.s32.totalorder 0, %v719
    %v721 = vsel %vm720, 0, %v719
    %v722 = vsub.s32 32, %v721
    %v723 = vshll.u32 %v714, %v721
    %v724 = vshrl.u32 %v706, %v722
    %v725 = vor.u32 %v723, %v724
    %v726 = vsub.s32 4294967266, %v721
    %v727 = vadd.s32 %v726, 127
    %v728 = vshll.u32 %v727, 23
    %v729 = vor.u32 4788187, %v728
    %v730 = vand.u32 2147483647, %v729
    %v732 = vcvt.s32.f32 %v725
    %v733 = vmul.f32 %v732, %v730
    %v734 = vxor.u32 %v733, 2147483648
    %v735 = vsel %vm614, %v734, %v733
    %v736 = vsub.s32 4, %v712
    %v737 = vsel %vm614, %v736, %v712
    %v738 = vsel %vm613, %v142, %v735
    %v739 = vsel %vm613, 0, %v737
    %v740 = vmul.f32 %v738, %v738
    %v741 = vmul.f32 %v740, -0.001358992
    %v742 = vadd.f32 %v741, 0.041655596
    %v743 = vmul.f32 %v740, %v742
    %v744 = vadd.f32 %v743, -0.4999988
    %v745 = vmul.f32 %v740, %v744
    %v746 = vadd.f32 1.0, %v745
    %v747 = vmul.f32 %v738, %v738
    %v748 = vmul.f32 %v747, -0.00019511016
    %v749 = vadd.f32 %v748, 0.008332121
    %v750 = vmul.f32 %v747, %v749
    %v751 = vadd.f32 %v750, -0.16666654
    %v752 = vmul.f32 %v747, %v751
    %v753 = vadd.f32 %v752, 1.0
    %v754 = vmul.f32 %v753, %v738
    %vm755 = vweird.f32 %v142
    %v756 = vadd.s32 %v739, 3
    %v757 = vand.u32 %v756, 3
    %vm758 = vcmp.lt.s32.totalorder %v757, 2
    %vm759 = vcmp.eq.s32.totalorder %v757, 0
    %v760 = vxor.u32 %v754, 2147483648
    %v761 = vsel %vm759, %v746, %v760
    %vm762 = vcmp.eq.s32.totalorder %v757, 2
    %v763 = vxor.u32 %v746, 2147483648
    %v764 = vsel %vm762, %v763, %v754
    %v765 = vsel %vm758, %v761, %v764
    %v766 = vsel %vm755, nan, %v765
    %v767 = vand.u32 2147483647, %v143
    %vm768 = vcmp.le.f32.partialorder %v767, 0.7853982
    %vm769 = vcmp.lt.s32.totalorder %v143, 0
    %v770 = vand.u32 %v143, 2139095040
    %v771 = vshrl.u32 %v770, 23
    %v772 = vsub.s32 %v771, 127
    %v773 = vand.u32 2147483647, %v143
    %v774 = vand.u32 %v773, 8388607
    %v775 = vor.u32 %v774, 8388608
    %v776 = vsub.s32 0, %v775
    %v777 = vadd.s32 %v772, 1
    %vm778 = vcmp.gt.s32.totalorder %v777, 0
    %v779 = vsel %vm778, %v777, 0
    %v780 = vshrl.u32 %v779, 5
    %v781 = vand.u32 %v779, 31
    %v782 = vsub.s32 32, %v781
    %v783 = vshrl.u32 683565275, %v782
    %v784 = vshll.u32 683565275, %v781
    %v785 = vshrl.u32 2475754826, %v782
    %v786 = vor.u32 %v784, %v785
    %v787 = vshll.u32 2475754826, %v781
    %v788 = vshrl.u32 2131351028, %v782
    %v789 = vor.u32 %v787, %v788
    %v790 = vshll.u32 2131351028, %v781
    %v791 = vshrl.u32 2102212464, %v782
    %v792 = vor.u32 %v790, %v791
    %v793 = vshll.u32 2102212464, %v781
    %v794 = vshrl.u32 920167782, %v782
    %v795 = vor.u32 %v793, %v794
    %v796 = vshll.u32 920167782, %v781
    %v797 = vshrl.u32 1326507024, %v782
    %v798 = vor.u32 %v796, %v797
    %vm799 = vcmp.lt.s32.totalorder %v780, 1
    %vm800 = vcmp.lt.s32.totalorder %v780, 2
    %vm801 = vcmp.lt.s32.totalorder %v780, 3
    %vm802 = vcmp.lt.s32.totalorder %v780, 4
    %v803 = vsel %vm799, %v783, %v786
    %v804 = vsel %vm802, %v792, 2102212464
    %v805 = vsel %vm801, %v789, %v804
    %v806 = vsel %vm800, %v803, %v805
    %v807 = vsel %vm799, %v786, %v789
    %v808 = vsel %vm802, %v795, 920167782
    %v809 = vsel %vm801, %v792, %v808
    %v810 = vsel %vm800, %v807, %v809
    %v811 = vsel %vm799, %v789, %v792
    %v812 = vsel %vm802, %v798, 1326507024
    %v813 = vsel %vm801, %v795, %v812
    %v814 = vsel %vm800, %v811, %v813
    %v815 = vshll.u32 %v775, 8
    %v816 = vand.u32 %v815, 65535
    %v817 = vshrl.u32 %v815, 16
    %v818 = vand.u32 %v814, 65535
    %v819 = vshrl.u32 %v814, 16
    %v820 = vmul.u32 %v816, %v818
    %v821 = vmul.u32 %v816, %v819
    %v822 = vmul.u32 %v817, %v818
    %v823 = vmul.u32 %v817, %v819
    %v824 = vshll.u32 %v821, 16
    %v825 = vshrl.u32 %v821, 16
    %v826 = vshll.u32 %v822, 16
    %v827 = vshrl.u32 %v822, 16
    %vm828 = vc.u32 %v820, %v824
    %v829 = vsel %vm828, 1, 0
    %v830 = vadd.s32 %v820, %v824
    %v831 = vadd.s32 %v823, %v829
    %vm832 = vc.u32 %v830, %v826
    %v833 = vsel %vm832, 1, 0
    %v834 = vadd.s32 %v830, %v826
    %v835 = vadd.s32 %v831, %v833
    %v836 = vadd.s32 %v835, %v825
    %v837 = vadd.s32 %v836, %v827
    %v838 = vand.u32 %v815, 65535
    %v839 = vshrl.u32 %v815, 16
    %v840 = vand.u32 %v810, 65535
    %v841 = vshrl.u32 %v810, 16
    %v842 = vmul.u32 %v838, %v840
    %v843 = vmul.u32 %v838, %v841
    %v844 = vmul.u32 %v839, %v840
    %v845 = vmul.u32 %v839, %v841
    %v846 = vshll.u32 %v843, 16
    %v847 = vshrl.u32 %v843, 16
    %v848 = vshll.u32 %v844, 16
    %v849 = vshrl.u32 %v844, 16
    %vm850 = vc.u32 %v842, %v846
    %v851 = vsel %vm850, 1, 0
    %v852 = vadd.s32 %v842, %v846
    %v853 = vadd.s32 %v845, %v851
    %vm854 = vc.u32 %v852, %v848
    %v855 = vsel %vm854, 1, 0
    %v856 = vadd.s32 %v852, %v848
    %v857 = vadd.s32 %v853, %v855
    %v858 = vadd.s32 %v857, %v847
    %v859 = vadd.s32 %v858, %v849
    %v860 = vmul.u32 %v815, %v806
    %v861 = vadd.s32 %v837, %v856
    %vm862 = vc.u32 %v837, %v856
    %v863 = vadd.s32 %v859, 1
    %v864 = vsel %vm862, %v863, %v859
    %v865 = vadd.s32 %v860, %v864
    %v866 = vadd.s32 %v865, 536870912
    %v867 = vshrl.u32 %v866, 30
    %v868 = vshll.u32 %v867, 30
    %v869 = vsub.s32 %v865, %v868
    %vm870 = vcmp.lt.s32.totalorder %v869, 0
    %v871 = vsub.s32 0, %v869
    %v872 = vsel %vm870, %v871, %v869
    %v873 = vclz %v872
    %v874 = vsub.s32 %v873, 2
    %vm875 = vcmp.gt.s32.totalorder 0, %v874
    %v876 = vsel %vm875, 0, %v874
    %v877 = vsub.s32 32, %v876
    %v878 = vshll.u32 %v869, %v876
    %v879 = vshrl.u32 %v861, %v877
    %v880 = vor.u32 %v878, %v879
    %v881 = vsub.s32 4294967266, %v876
    %v882 = vadd.s32 %v881, 127
    %v883 = vshll.u32 %v882, 23
    %v884 = vor.u32 4788187, %v883
    %v885 = vand.u32 2147483647, %v884
    %v887 = vcvt.s32.f32 %v880
    %v888 = vmul.f32 %v887, %v885
    %v889 = vxor.u32 %v888, 2147483648
    %v890 = vsel %vm769, %v889, %v888
    %v891 = vsub.s32 4, %v867
    %v892 = vsel %vm769, %v891, %v867
    %v893 = vsel %vm768, %v143, %v890
    %v894 = vsel %vm768, 0, %v892
    %v895 = vmul.f32 %v893, %v893
    %v896 = vmul.f32 %v895, -0.001358992
    %v897 = vadd.f32 %v896, 0.041655596
    %v898 = vmul.f32 %v895, %v897
    %v899 = vadd.f32 %v898, -0.4999988
    %v900 = vmul.f32 %v895, %v899
    %v901 = vadd.f32 1.0, %v900
    %v902 = vmul.f32 %v893, %v893
    %v903 = vmul.f32 %v902, -0.00019511016
    %v904 = vadd.f32 %v903, 0.008332121
    %v905 = vmul.f32 %v902, %v904
    %v906 = vadd.f32 %v905, -0.16666654
    %v907 = vmul.f32 %v902, %v906
    %v908 = vadd.f32 %v907, 1.0
    %v909 = vmul.f32 %v908, %v893
    %vm910 = vweird.f32 %v143
    %v911 = vadd.s32 %v894, 3
    %v912 = vand.u32 %v911, 3
    %vm913 = vcmp.lt.s32.totalorder %v912, 2
    %vm914 = vcmp.eq.s32.totalorder %v912, 0
    %v915 = vxor.u32 %v909, 2147483648
    %v916 = vsel %vm914, %v901, %v915
    %vm917 = vcmp.eq.s32.totalorder %v912, 2
    %v918 = vxor.u32 %v901, 2147483648
    %v919 = vsel %vm917, %v918, %v909
    %v920 = vsel %vm913, %v916, %v919
    %v921 = vsel %vm910, nan, %v920
    %v922 = vand.u32 2147483647, %v144
    %vm923 = vcmp.le.f32.partialorder %v922, 0.7853982
    %vm924 = vcmp.lt.s32.totalorder %v144, 0
    %v925 = vand.u32 %v144, 2139095040
    %v926 = vshrl.u32 %v925, 23
    %v927 = vsub.s32 %v926, 127
    %v928 = vand.u32 2147483647, %v144
    %v929 = vand.u32 %v928, 8388607
    %v930 = vor.u32 %v929, 8388608
    %v931 = vsub.s32 0, %v930
    %v932 = vadd.s32 %v927, 1
    %vm933 = vcmp.gt.s32.totalorder %v932, 0
    %v934 = vsel %vm933, %v932, 0
    %v935 = vshrl.u32 %v934, 5
    %v936 = vand.u32 %v934, 31
    %v937 = vsub.s32 32, %v936
    %v938 = vshrl.u32 683565275, %v937
    %v939 = vshll.u32 683565275, %v936
    %v940 = vshrl.u32 2475754826, %v937
    %v941 = vor.u32 %v939, %v940
    %v942 = vshll.u32 2475754826, %v936
    %v943 = vshrl.u32 2131351028, %v937
    %v944 = vor.u32 %v942, %v943
    %v945 = vshll.u32 2131351028, %v936
    %v946 = vshrl.u32 2102212464, %v937
    %v947 = vor.u32 %v945, %v946
    %v948 = vshll.u32 2102212464, %v936
    %v949 = vshrl.u32 920167782, %v937
    %v950 = vor.u32 %v948, %v949
    %v951 = vshll.u32 920167782, %v936
    %v952 = vshrl.u32 1326507024, %v937
    %v953 = vor.u32 %v951, %v952
    %vm954 = vcmp.lt.s32.totalorder %v935, 1
    %vm955 = vcmp.lt.s32.totalorder %v935, 2
    %vm956 = vcmp.lt.s32.totalorder %v935, 3
    %vm957 = vcmp.lt.s32.totalorder %v935, 4
    %v958 = vsel %vm954, %v938, %v941
    %v959 = vsel %vm957, %v947, 2102212464
    %v960 = vsel %vm956, %v944, %v959
    %v961 = vsel %vm955, %v958, %v960
    %v962 = vsel %vm954, %v941, %v944
    %v963 = vsel %vm957, %v950, 920167782
    %v964 = vsel %vm956, %v947, %v963
    %v965 = vsel %vm955, %v962, %v964
    %v966 = vsel %vm954, %v944, %v947
    %v967 = vsel %vm957, %v953, 1326507024
    %v968 = vsel %vm956, %v950, %v967
    %v969 = vsel %vm955, %v966, %v968
    %v970 = vshll.u32 %v930, 8
    %v971 = vand.u32 %v970, 65535
    %v972 = vshrl.u32 %v970, 16
    %v973 = vand.u32 %v969, 65535
    %v974 = vshrl.u32 %v969, 16
    %v975 = vmul.u32 %v971, %v973
    %v976 = vmul.u32 %v971, %v974
    %v977 = vmul.u32 %v972, %v973
    %v978 = vmul.u32 %v972, %v974
    %v979 = vshll.u32 %v976, 16
    %v980 = vshrl.u32 %v976, 16
    %v981 = vshll.u32 %v977, 16
    %v982 = vshrl.u32 %v977, 16
    %vm983 = vc.u32 %v975, %v979
    %v984 = vsel %vm983, 1, 0
    %v985 = vadd.s32 %v975, %v979
    %v986 = vadd.s32 %v978, %v984
    %vm987 = vc.u32 %v985, %v981
    %v988 = vsel %vm987, 1, 0
    %v989 = vadd.s32 %v985, %v981
    %v990 = vadd.s32 %v986, %v988
    %v991 = vadd.s32 %v990, %v980
    %v992 = vadd.s32 %v991, %v982
    %v993 = vand.u32 %v970, 65535
    %v994 = vshrl.u32 %v970, 16
    %v995 = vand.u32 %v965, 65535
    %v996 = vshrl.u32 %v965, 16
    %v997 = vmul.u32 %v993, %v995
    %v998 = vmul.u32 %v993, %v996
    %v999 = vmul.u32 %v994, %v995
    %v1000 = vmul.u32 %v994, %v996
    %v1001 = vshll.u32 %v998, 16
    %v1002 = vshrl.u32 %v998, 16
    %v1003 = vshll.u32 %v999, 16
    %v1004 = vshrl.u32 %v999, 16
    %vm1005 = vc.u32 %v997, %v1001
    %v1006 = vsel %vm1005, 1, 0
    %v1007 = vadd.s32 %v997, %v1001
    %v1008 = vadd.s32 %v1000, %v1006
    %vm1009 = vc.u32 %v1007, %v1003
    %v1010 = vsel %vm1009, 1, 0
    %v1011 = vadd.s32 %v1007, %v1003
    %v1012 = vadd.s32 %v1008, %v1010
    %v1013 = vadd.s32 %v1012, %v1002
    %v1014 = vadd.s32 %v1013, %v1004
    %v1015 = vmul.u32 %v970, %v961
    %v1016 = vadd.s32 %v992, %v1011
    %vm1017 = vc.u32 %v992, %v1011
    %v1018 = vadd.s32 %v1014, 1
    %v1019 = vsel %vm1017, %v1018, %v1014
    %v1020 = vadd.s32 %v1015, %v1019
    %v1021 = vadd.s32 %v1020, 536870912
    %v1022 = vshrl.u32 %v1021, 30
    %v1023 = vshll.u32 %v1022, 30
    %v1024 = vsub.s32 %v1020, %v1023
    %vm1025 = vcmp.lt.s32.totalorder %v1024, 0
    %v1026 = vsub.s32 0, %v1024
    %v1027 = vsel %vm1025, %v1026, %v1024
    %v1028 = vclz %v1027
    %v1029 = vsub.s32 %v1028, 2
    %vm1030 = vcmp.gt.s32.totalorder 0, %v1029
    %v1031 = vsel %vm1030, 0, %v1029
    %v1032 = vsub.s32 32, %v1031
    %v1033 = vshll.u32 %v1024, %v1031
    %v1034 = vshrl.u32 %v1016, %v1032
    %v1035 = vor.u32 %v1033, %v1034
    %v1036 = vsub.s32 4294967266, %v1031
    %v1037 = vadd.s32 %v1036, 127
    %v1038 = vshll.u32 %v1037, 23
    %v1039 = vor.u32 4788187, %v1038
    %v1040 = vand.u32 2147483647, %v1039
    %v1042 = vcvt.s32.f32 %v1035
    %v1043 = vmul.f32 %v1042, %v1040
    %v1044 = vxor.u32 %v1043, 2147483648
    %v1045 = vsel %vm924, %v1044, %v1043
    %v1046 = vsub.s32 4, %v1022
    %v1047 = vsel %vm924, %v1046, %v1022
    %v1048 = vsel %vm923, %v144, %v1045
    %v1049 = vsel %vm923, 0, %v1047
    %v1050 = vmul.f32 %v1048, %v1048
    %v1051 = vmul.f32 %v1050, -0.001358992
    %v1052 = vadd.f32 %v1051, 0.041655596
    %v1053 = vmul.f32 %v1050, %v1052
    %v1054 = vadd.f32 %v1053, -0.4999988
    %v1055 = vmul.f32 %v1050, %v1054
    %v1056 = vadd.f32 1.0, %v1055
    %v1057 = vmul.f32 %v1048, %v1048
    %v1058 = vmul.f32 %v1057, -0.00019511016
    %v1059 = vadd.f32 %v1058, 0.008332121
    %v1060 = vmul.f32 %v1057, %v1059
    %v1061 = vadd.f32 %v1060, -0.16666654
    %v1062 = vmul.f32 %v1057, %v1061
    %v1063 = vadd.f32 %v1062, 1.0
    %v1064 = vmul.f32 %v1063, %v1048
    %vm1065 = vweird.f32 %v144
    %v1066 = vadd.s32 %v1049, 3
    %v1067 = vand.u32 %v1066, 3
    %vm1068 = vcmp.lt.s32.totalorder %v1067, 2
    %vm1069 = vcmp.eq.s32.totalorder %v1067, 0
    %v1070 = vxor.u32 %v1064, 2147483648
    %v1071 = vsel %vm1069, %v1056, %v1070
    %vm1072 = vcmp.eq.s32.totalorder %v1067, 2
    %v1073 = vxor.u32 %v1056, 2147483648
    %v1074 = vsel %vm1072, %v1073, %v1064
    %v1075 = vsel %vm1068, %v1071, %v1074
    %v1076 = vsel %vm1065, nan, %v1075
    %v1077 = vand.u32 2147483647, %v145
    %vm1078 = vcmp.le.f32.partialorder %v1077, 0.7853982
    %vm1079 = vcmp.lt.s32.totalorder %v145, 0
    %v1080 = vand.u32 %v145, 2139095040
    %v1081 = vshrl.u32 %v1080, 23
    %v1082 = vsub.s32 %v1081, 127
    %v1083 = vand.u32 2147483647, %v145
    %v1084 = vand.u32 %v1083, 8388607
    %v1085 = vor.u32 %v1084, 8388608
    %v1086 = vsub.s32 0, %v1085
    %v1087 = vadd.s32 %v1082, 1
    %vm1088 = vcmp.gt.s32.totalorder %v1087, 0
    %v1089 = vsel %vm1088, %v1087, 0
    %v1090 = vshrl.u32 %v1089, 5
    %v1091 = vand.u32 %v1089, 31
    %v1092 = vsub.s32 32, %v1091
    %v1093 = vshrl.u32 683565275, %v1092
    %v1094 = vshll.u32 683565275, %v1091
    %v1095 = vshrl.u32 2475754826, %v1092
    %v1096 = vor.u32 %v1094, %v1095
    %v1097 = vshll.u32 2475754826, %v1091
    %v1098 = vshrl.u32 2131351028, %v1092
    %v1099 = vor.u32 %v1097, %v1098
    %v1100 = vshll.u32 2131351028, %v1091
    %v1101 = vshrl.u32 2102212464, %v1092
    %v1102 = vor.u32 %v1100, %v1101
    %v1103 = vshll.u32 2102212464, %v1091
    %v1104 = vshrl.u32 920167782, %v1092
    %v1105 = vor.u32 %v1103, %v1104
    %v1106 = vshll.u32 920167782, %v1091
    %v1107 = vshrl.u32 1326507024, %v1092
    %v1108 = vor.u32 %v1106, %v1107
    %vm1109 = vcmp.lt.s32.totalorder %v1090, 1
    %vm1110 = vcmp.lt.s32.totalorder %v1090, 2
    %vm1111 = vcmp.lt.s32.totalorder %v1090, 3
    %vm1112 = vcmp.lt.s32.totalorder %v1090, 4
    %v1113 = vsel %vm1109, %v1093, %v1096
    %v1114 = vsel %vm1112, %v1102, 2102212464
    %v1115 = vsel %vm1111, %v1099, %v1114
    %v1116 = vsel %vm1110, %v1113, %v1115
    %v1117 = vsel %vm1109, %v1096, %v1099
    %v1118 = vsel %vm1112, %v1105, 920167782
    %v1119 = vsel %vm1111, %v1102, %v1118
    %v1120 = vsel %vm1110, %v1117, %v1119
    %v1121 = vsel %vm1109, %v1099, %v1102
    %v1122 = vsel %vm1112, %v1108, 1326507024
    %v1123 = vsel %vm1111, %v1105, %v1122
    %v1124 = vsel %vm1110, %v1121, %v1123
    %v1125 = vshll.u32 %v1085, 8
    %v1126 = vand.u32 %v1125, 65535
    %v1127 = vshrl.u32 %v1125, 16
    %v1128 = vand.u32 %v1124, 65535
    %v1129 = vshrl.u32 %v1124, 16
    %v1130 = vmul.u32 %v1126, %v1128
    %v1131 = vmul.u32 %v1126, %v1129
    %v1132 = vmul.u32 %v1127, %v1128
    %v1133 = vmul.u32 %v1127, %v1129
    %v1134 = vshll.u32 %v1131, 16
    %v1135 = vshrl.u32 %v1131, 16
    %v1136 = vshll.u32 %v1132, 16
    %v1137 = vshrl.u32 %v1132, 16
    %vm1138 = vc.u32 %v1130, %v1134
    %v1139 = vsel %vm1138, 1, 0
    %v1140 = vadd.s32 %v1130, %v1134
    %v1141 = vadd.s32 %v1133, %v1139
    %vm1142 = vc.u32 %v1140, %v1136
    %v1143 = vsel %vm1142, 1, 0
    %v1144 = vadd.s32 %v1140, %v1136
    %v1145 = vadd.s32 %v1141, %v1143
    %v1146 = vadd.s32 %v1145, %v1135
    %v1147 = vadd.s32 %v1146, %v1137
    %v1148 = vand.u32 %v1125, 65535
    %v1149 = vshrl.u32 %v1125, 16
    %v1150 = vand.u32 %v1120, 65535
    %v1151 = vshrl.u32 %v1120, 16
    %v1152 = vmul.u32 %v1148, %v1150
    %v1153 = vmul.u32 %v1148, %v1151
    %v1154 = vmul.u32 %v1149, %v1150
    %v1155 = vmul.u32 %v1149, %v1151
    %v1156 = vshll.u32 %v1153, 16
    %v1157 = vshrl.u32 %v1153, 16
    %v1158 = vshll.u32 %v1154, 16
    %v1159 = vshrl.u32 %v1154, 16
    %vm1160 = vc.u32 %v1152, %v1156
    %v1161 = vsel %vm1160, 1, 0
    %v1162 = vadd.s32 %v1152, %v1156
    %v1163 = vadd.s32 %v1155, %v1161
    %vm1164 = vc.u32 %v1162, %v1158
    %v1165 = vsel %vm1164, 1, 0
    %v1166 = vadd.s32 %v1162, %v1158
    %v1167 = vadd.s32 %v1163, %v1165
    %v1168 = vadd.s32 %v1167, %v1157
    %v1169 = vadd.s32 %v1168, %v1159
    %v1170 = vmul.u32 %v1125, %v1116
    %v1171 = vadd.s32 %v1147, %v1166
    %vm1172 = vc.u32 %v1147, %v1166
    %v1173 = vadd.s32 %v1169, 1
    %v1174 = vsel %vm1172, %v1173, %v1169
    %v1175 = vadd.s32 %v1170, %v1174
    %v1176 = vadd.s32 %v1175, 536870912
    %v1177 = vshrl.u32 %v1176, 30
    %v1178 = vshll.u32 %v1177, 30
    %v1179 = vsub.s32 %v1175, %v1178
    %vm1180 = vcmp.lt.s32.totalorder %v1179, 0
    %v1181 = vsub.s32 0, %v1179
    %v1182 = vsel %vm1180, %v1181, %v1179
    %v1183 = vclz %v1182
    %v1184 = vsub.s32 %v1183, 2
    %vm1185 = vcmp.gt.s32.totalorder 0, %v1184
    %v1186 = vsel %vm1185, 0, %v1184
    %v1187 = vsub.s32 32, %v1186
    %v1188 = vshll.u32 %v1179, %v1186
    %v1189 = vshrl.u32 %v1171, %v1187
    %v1190 = vor.u32 %v1188, %v1189
    %v1191 = vsub.s32 4294967266, %v1186
    %v1192 = vadd.s32 %v1191, 127
    %v1193 = vshll.u32 %v1192, 23
    %v1194 = vor.u32 4788187, %v1193
    %v1195 = vand.u32 2147483647, %v1194
    %v1197 = vcvt.s32.f32 %v1190
    %v1198 = vmul.f32 %v1197, %v1195
    %v1199 = vxor.u32 %v1198, 2147483648
    %v1200 = vsel %vm1079, %v1199, %v1198
    %v1201 = vsub.s32 4, %v1177
    %v1202 = vsel %vm1079, %v1201, %v1177
    %v1203 = vsel %vm1078, %v145, %v1200
    %v1204 = vsel %vm1078, 0, %v1202
    %v1205 = vmul.f32 %v1203, %v1203
    %v1206 = vmul.f32 %v1205, -0.001358992
    %v1207 = vadd.f32 %v1206, 0.041655596
    %v1208 = vmul.f32 %v1205, %v1207
    %v1209 = vadd.f32 %v1208, -0.4999988
    %v1210 = vmul.f32 %v1205, %v1209
    %v1211 = vadd.f32 1.0, %v1210
    %v1212 = vmul.f32 %v1203, %v1203
    %v1213 = vmul.f32 %v1212, -0.00019511016
    %v1214 = vadd.f32 %v1213, 0.008332121
    %v1215 = vmul.f32 %v1212, %v1214
    %v1216 = vadd.f32 %v1215, -0.16666654
    %v1217 = vmul.f32 %v1212, %v1216
    %v1218 = vadd.f32 %v1217, 1.0
    %v1219 = vmul.f32 %v1218, %v1203
    %vm1220 = vweird.f32 %v145
    %v1221 = vadd.s32 %v1204, 3
    %v1222 = vand.u32 %v1221, 3
    %vm1223 = vcmp.lt.s32.totalorder %v1222, 2
    %vm1224 = vcmp.eq.s32.totalorder %v1222, 0
    %v1225 = vxor.u32 %v1219, 2147483648
    %v1226 = vsel %vm1224, %v1211, %v1225
    %vm1227 = vcmp.eq.s32.totalorder %v1222, 2
    %v1228 = vxor.u32 %v1211, 2147483648
    %v1229 = vsel %vm1227, %v1228, %v1219
    %v1230 = vsel %vm1223, %v1226, %v1229
    %v1231 = vsel %vm1220, nan, %v1230
    %v1232 = vand.u32 2147483647, %v146
    %vm1233 = vcmp.le.f32.partialorder %v1232, 0.7853982
    %vm1234 = vcmp.lt.s32.totalorder %v146, 0
    %v1235 = vand.u32 %v146, 2139095040
    %v1236 = vshrl.u32 %v1235, 23
    %v1237 = vsub.s32 %v1236, 127
    %v1238 = vand.u32 2147483647, %v146
    %v1239 = vand.u32 %v1238, 8388607
    %v1240 = vor.u32 %v1239, 8388608
    %v1241 = vsub.s32 0, %v1240
    %v1242 = vadd.s32 %v1237, 1
    %vm1243 = vcmp.gt.s32.totalorder %v1242, 0
    %v1244 = vsel %vm1243, %v1242, 0
    %v1245 = vshrl.u32 %v1244, 5
    %v1246 = vand.u32 %v1244, 31
    %v1247 = vsub.s32 32, %v1246
    %v1248 = vshrl.u32 683565275, %v1247
    %v1249 = vshll.u32 683565275, %v1246
    %v1250 = vshrl.u32 2475754826, %v1247
    %v1251 = vor.u32 %v1249, %v1250
    %v1252 = vshll.u32 2475754826, %v1246
    %v1253 = vshrl.u32 2131351028, %v1247
    %v1254 = vor.u32 %v1252, %v1253
    %v1255 = vshll.u32 2131351028, %v1246
    %v1256 = vshrl.u32 2102212464, %v1247
    %v1257 = vor.u32 %v1255, %v1256
    %v1258 = vshll.u32 2102212464, %v1246
    %v1259 = vshrl.u32 920167782, %v1247
    %v1260 = vor.u32 %v1258, %v1259
    %v1261 = vshll.u32 920167782, %v1246
    %v1262 = vshrl.u32 1326507024, %v1247
    %v1263 = vor.u32 %v1261, %v1262
    %vm1264 = vcmp.lt.s32.totalorder %v1245, 1
    %vm1265 = vcmp.lt.s32.totalorder %v1245, 2
    %vm1266 = vcmp.lt.s32.totalorder %v1245, 3
    %vm1267 = vcmp.lt.s32.totalorder %v1245, 4
    %v1268 = vsel %vm1264, %v1248, %v1251
    %v1269 = vsel %vm1267, %v1257, 2102212464
    %v1270 = vsel %vm1266, %v1254, %v1269
    %v1271 = vsel %vm1265, %v1268, %v1270
    %v1272 = vsel %vm1264, %v1251, %v1254
    %v1273 = vsel %vm1267, %v1260, 920167782
    %v1274 = vsel %vm1266, %v1257, %v1273
    %v1275 = vsel %vm1265, %v1272, %v1274
    %v1276 = vsel %vm1264, %v1254, %v1257
    %v1277 = vsel %vm1267, %v1263, 1326507024
    %v1278 = vsel %vm1266, %v1260, %v1277
    %v1279 = vsel %vm1265, %v1276, %v1278
    %v1280 = vshll.u32 %v1240, 8
    %v1281 = vand.u32 %v1280, 65535
    %v1282 = vshrl.u32 %v1280, 16
    %v1283 = vand.u32 %v1279, 65535
    %v1284 = vshrl.u32 %v1279, 16
    %v1285 = vmul.u32 %v1281, %v1283
    %v1286 = vmul.u32 %v1281, %v1284
    %v1287 = vmul.u32 %v1282, %v1283
    %v1288 = vmul.u32 %v1282, %v1284
    %v1289 = vshll.u32 %v1286, 16
    %v1290 = vshrl.u32 %v1286, 16
    %v1291 = vshll.u32 %v1287, 16
    %v1292 = vshrl.u32 %v1287, 16
    %vm1293 = vc.u32 %v1285, %v1289
    %v1294 = vsel %vm1293, 1, 0
    %v1295 = vadd.s32 %v1285, %v1289
    %v1296 = vadd.s32 %v1288, %v1294
    %vm1297 = vc.u32 %v1295, %v1291
    %v1298 = vsel %vm1297, 1, 0
    %v1299 = vadd.s32 %v1295, %v1291
    %v1300 = vadd.s32 %v1296, %v1298
    %v1301 = vadd.s32 %v1300, %v1290
    %v1302 = vadd.s32 %v1301, %v1292
    %v1303 = vand.u32 %v1280, 65535
    %v1304 = vshrl.u32 %v1280, 16
    %v1305 = vand.u32 %v1275, 65535
    %v1306 = vshrl.u32 %v1275, 16
    %v1307 = vmul.u32 %v1303, %v1305
    %v1308 = vmul.u32 %v1303, %v1306
    %v1309 = vmul.u32 %v1304, %v1305
    %v1310 = vmul.u32 %v1304, %v1306
    %v1311 = vshll.u32 %v1308, 16
    %v1312 = vshrl.u32 %v1308, 16
    %v1313 = vshll.u32 %v1309, 16
    %v1314 = vshrl.u32 %v1309, 16
    %vm1315 = vc.u32 %v1307, %v1311
    %v1316 = vsel %vm1315, 1, 0
    %v1317 = vadd.s32 %v1307, %v1311
    %v1318 = vadd.s32 %v1310, %v1316
    %vm1319 = vc.u32 %v1317, %v1313
    %v1320 = vsel %vm1319, 1, 0
    %v1321 = vadd.s32 %v1317, %v1313
    %v1322 = vadd.s32 %v1318, %v1320
    %v1323 = vadd.s32 %v1322, %v1312
    %v1324 = vadd.s32 %v1323, %v1314
    %v1325 = vmul.u32 %v1280, %v1271
    %v1326 = vadd.s32 %v1302, %v1321
    %vm1327 = vc.u32 %v1302, %v1321
    %v1328 = vadd.s32 %v1324, 1
    %v1329 = vsel %vm1327, %v1328, %v1324
    %v1330 = vadd.s32 %v1325, %v1329
    %v1331 = vadd.s32 %v1330, 536870912
    %v1332 = vshrl.u32 %v1331, 30
    %v1333 = vshll.u32 %v1332, 30
    %v1334 = vsub.s32 %v1330, %v1333
    %vm1335 = vcmp.lt.s32.totalorder %v1334, 0
    %v1336 = vsub.s32 0, %v1334
    %v1337 = vsel %vm1335, %v1336, %v1334
    %v1338 = vclz %v1337
    %v1339 = vsub.s32 %v1338, 2
    %vm1340 = vcmp.gt.s32.totalorder 0, %v1339
    %v1341 = vsel %vm1340, 0, %v1339
    %v1342 = vsub.s32 32, %v1341
    %v1343 = vshll.u32 %v1334, %v1341
    %v1344 = vshrl.u32 %v1326, %v1342
    %v1345 = vor.u32 %v1343, %v1344
    %v1346 = vsub.s32 4294967266, %v1341
    %v1347 = vadd.s32 %v1346, 127
    %v1348 = vshll.u32 %v1347, 23
    %v1349 = vor.u32 4788187, %v1348
    %v1350 = vand.u32 2147483647, %v1349
    %v1352 = vcvt.s32.f32 %v1345
    %v1353 = vmul.f32 %v1352, %v1350
    %v1354 = vxor.u32 %v1353, 2147483648
    %v1355 = vsel %vm1234, %v1354, %v1353
    %v1356 = vsub.s32 4, %v1332
    %v1357 = vsel %vm1234, %v1356, %v1332
    %v1358 = vsel %vm1233, %v146, %v1355
    %v1359 = vsel %vm1233, 0, %v1357
    %v1360 = vmul.f32 %v1358, %v1358
    %v1361 = vmul.f32 %v1360, -0.001358992
    %v1362 = vadd.f32 %v1361, 0.041655596
    %v1363 = vmul.f32 %v1360, %v1362
    %v1364 = vadd.f32 %v1363, -0.4999988
    %v1365 = vmul.f32 %v1360, %v1364
    %v1366 = vadd.f32 1.0, %v1365
    %v1367 = vmul.f32 %v1358, %v1358
    %v1368 = vmul.f32 %v1367, -0.00019511016
    %v1369 = vadd.f32 %v1368, 0.008332121
    %v1370 = vmul.f32 %v1367, %v1369
    %v1371 = vadd.f32 %v1370, -0.16666654
    %v1372 = vmul.f32 %v1367, %v1371
    %v1373 = vadd.f32 %v1372, 1.0
    %v1374 = vmul.f32 %v1373, %v1358
    %vm1375 = vweird.f32 %v146
    %v1376 = vadd.s32 %v1359, 3
    %v1377 = vand.u32 %v1376, 3
    %vm1378 = vcmp.lt.s32.totalorder %v1377, 2
    %vm1379 = vcmp.eq.s32.totalorder %v1377, 0
    %v1380 = vxor.u32 %v1374, 2147483648
    %v1381 = vsel %vm1379, %v1366, %v1380
    %vm1382 = vcmp.eq.s32.totalorder %v1377, 2
    %v1383 = vxor.u32 %v1366, 2147483648
    %v1384 = vsel %vm1382, %v1383, %v1374
    %v1385 = vsel %vm1378, %v1381, %v1384
    %v1386 = vsel %vm1375, nan, %v1385
    %v1387 = vld [vmem:[%s3] sm:$0xff]
    %v1388 = vld [vmem:[%s3 + $0x8] sm:$0xff]
    %v1389 = vld [vmem:[%s3 + $0x10] sm:$0xff]
    %v1390 = vld [vmem:[%s3 + $0x18] sm:$0xff]
    %v1391 = vld [vmem:[%s4] sm:$0xff]
    %v1392 = vld [vmem:[%s4 + $0x8] sm:$0xff]
    %v1393 = vld [vmem:[%s4 + $0x10] sm:$0xff]
    %v1394 = vld [vmem:[%s4 + $0x18] sm:$0xff]
    %1396 = vset.pattern.permute.xlu0 0
    %1397 = vperm.xlu0 %1396, %v1391
    %v1398 = vpop.permute.xlu0 %1397
    %1401 = vset.pattern.permute.xlu0 0
    %1402 = vperm.xlu0 %1401, %v1392
    %v1403 = vpop.permute.xlu0 %1402
    %1406 = vset.pattern.permute.xlu0 0
    %1407 = vperm.xlu0 %1406, %v1393
    %v1408 = vpop.permute.xlu0 %1407
    %1411 = vset.pattern.permute.xlu0 0
    %1412 = vperm.xlu0 %1411, %v1394
    %v1413 = vpop.permute.xlu0 %1412
    %vm1415 = vcmask 261120
    %v1417 = vsel %vm1415, %v1387, 0
    %v1420 = vsel %vm1415, %v1388, 0
    %v1423 = vsel %vm1415, %v1389, 0
    %v1426 = vsel %vm1415, %v1390, 0
    %1428 = vmatpush.msra.mxu0 0.0
    %1429 = vmatpush.msra.mxu0 0.0
    %1430 = vmatpush.msra.mxu0 0.0
    %1431 = vmatpush.msra.mxu0 0.0
    %1432 = vmatpush.msra.mxu0 0.0
    %1433 = vmatpush.msra.mxu0 0.0
    %1434 = vmatpush.msra.mxu0 0.0
    %1435 = vmatpush.msra.mxu0 0.0
    %1436 = vmatpush.msra.mxu0 0.0
    %1437 = vmatpush.msra.mxu0 0.0
    %1438 = vmatpush.msra.mxu0 0.0
    %1439 = vmatpush.msra.mxu0 0.0
    %1440 = vmatpush.msra.mxu0 %v1231
    %1441 = vmatpush.msra.mxu0 %v921
    %1442 = vmatpush.msra.mxu0 %v611
    %1443 = vmatpush.msra.mxu0 %v301
    %1444 = vmatmul.f32.gmra.mxu0 %v1417
    %v1445 = vpop.f32.mrf.mxu0
    %v1446 = vadd.f32 %v1398, %v1445
    %1447 = vmatmul.f32.gmra.mxu0 %v1420
    %v1448 = vpop.f32.mrf.mxu0
    %v1449 = vadd.f32 %v1403, %v1448
    %1450 = vmatmul.f32.gmra.mxu0 %v1423
    %v1451 = vpop.f32.mrf.mxu0
    %v1452 = vadd.f32 %v1408, %v1451
    %1453 = vmatmul.f32.gmra.mxu0 %v1426
    %v1454 = vpop.f32.mrf.mxu0
    %v1455 = vadd.f32 %v1413, %v1454
    %1456 = vdwg.mxu0
    %1457 = vmatpush.msra.mxu0 0.0
    %1458 = vmatpush.msra.mxu0 0.0
    %1459 = vmatpush.msra.mxu0 0.0
    %1460 = vmatpush.msra.mxu0 0.0
    %1461 = vmatpush.msra.mxu0 0.0
    %1462 = vmatpush.msra.mxu0 0.0
    %1463 = vmatpush.msra.mxu0 0.0
    %1464 = vmatpush.msra.mxu0 0.0
    %1465 = vmatpush.msra.mxu0 0.0
    %1466 = vmatpush.msra.mxu0 0.0
    %1467 = vmatpush.msra.mxu0 0.0
    %1468 = vmatpush.msra.mxu0 0.0
    %1469 = vmatpush.msra.mxu0 %v1386
    %1470 = vmatpush.msra.mxu0 %v1076
    %1471 = vmatpush.msra.mxu0 %v766
    %1472 = vmatpush.msra.mxu0 %v456
    %1473 = vmatmul.f32.gmra.mxu0 %v1417
    %v1474 = vpop.f32.mrf.mxu0
    %v1475 = vadd.f32 %v1398, %v1474
    %1476 = vmatmul.f32.gmra.mxu0 %v1420
    %v1477 = vpop.f32.mrf.mxu0
    %v1478 = vadd.f32 %v1403, %v1477
    %1479 = vmatmul.f32.gmra.mxu0 %v1423
    %v1480 = vpop.f32.mrf.mxu0
    %v1481 = vadd.f32 %v1408, %v1480
    %1482 = vmatmul.f32.gmra.mxu0 %v1426
    %v1483 = vpop.f32.mrf.mxu0
    %v1484 = vadd.f32 %v1413, %v1483
    %1485 = vdwg.mxu0
    %v1486 = vmul.f32 %v1446, 30.0
    %v1487 = vmul.f32 %v1475, 30.0
    %v1488 = vmul.f32 %v1449, 30.0
    %v1489 = vmul.f32 %v1478, 30.0
    %v1490 = vmul.f32 %v1452, 30.0
    %v1491 = vmul.f32 %v1481, 30.0
    %v1492 = vmul.f32 %v1455, 30.0
    %v1493 = vmul.f32 %v1484, 30.0
    %v1494 = vand.u32 2147483647, %v1486
    %vm1495 = vcmp.le.f32.partialorder %v1494, 0.7853982
    %vm1496 = vcmp.lt.s32.totalorder %v1486, 0
    %v1497 = vand.u32 %v1486, 2139095040
    %v1498 = vshrl.u32 %v1497, 23
    %v1499 = vsub.s32 %v1498, 127
    %v1500 = vand.u32 2147483647, %v1486
    %v1501 = vand.u32 %v1500, 8388607
    %v1502 = vor.u32 %v1501, 8388608
    %v1503 = vsub.s32 0, %v1502
    %v1504 = vadd.s32 %v1499, 1
    %vm1505 = vcmp.gt.s32.totalorder %v1504, 0
    %v1506 = vsel %vm1505, %v1504, 0
    %v1507 = vshrl.u32 %v1506, 5
    %v1508 = vand.u32 %v1506, 31
    %v1509 = vsub.s32 32, %v1508
    %v1510 = vshrl.u32 683565275, %v1509
    %v1511 = vshll.u32 683565275, %v1508
    %v1512 = vshrl.u32 2475754826, %v1509
    %v1513 = vor.u32 %v1511, %v1512
    %v1514 = vshll.u32 2475754826, %v1508
    %v1515 = vshrl.u32 2131351028, %v1509
    %v1516 = vor.u32 %v1514, %v1515
    %v1517 = vshll.u32 2131351028, %v1508
    %v1518 = vshrl.u32 2102212464, %v1509
    %v1519 = vor.u32 %v1517, %v1518
    %v1520 = vshll.u32 2102212464, %v1508
    %v1521 = vshrl.u32 920167782, %v1509
    %v1522 = vor.u32 %v1520, %v1521
    %v1523 = vshll.u32 920167782, %v1508
    %v1524 = vshrl.u32 1326507024, %v1509
    %v1525 = vor.u32 %v1523, %v1524
    %vm1526 = vcmp.lt.s32.totalorder %v1507, 1
    %vm1527 = vcmp.lt.s32.totalorder %v1507, 2
    %vm1528 = vcmp.lt.s32.totalorder %v1507, 3
    %vm1529 = vcmp.lt.s32.totalorder %v1507, 4
    %v1530 = vsel %vm1526, %v1510, %v1513
    %v1531 = vsel %vm1529, %v1519, 2102212464
    %v1532 = vsel %vm1528, %v1516, %v1531
    %v1533 = vsel %vm1527, %v1530, %v1532
    %v1534 = vsel %vm1526, %v1513, %v1516
    %v1535 = vsel %vm1529, %v1522, 920167782
    %v1536 = vsel %vm1528, %v1519, %v1535
    %v1537 = vsel %vm1527, %v1534, %v1536
    %v1538 = vsel %vm1526, %v1516, %v1519
    %v1539 = vsel %vm1529, %v1525, 1326507024
    %v1540 = vsel %vm1528, %v1522, %v1539
    %v1541 = vsel %vm1527, %v1538, %v1540
    %v1542 = vshll.u32 %v1502, 8
    %v1543 = vand.u32 %v1542, 65535
    %v1544 = vshrl.u32 %v1542, 16
    %v1545 = vand.u32 %v1541, 65535
    %v1546 = vshrl.u32 %v1541, 16
    %v1547 = vmul.u32 %v1543, %v1545
    %v1548 = vmul.u32 %v1543, %v1546
    %v1549 = vmul.u32 %v1544, %v1545
    %v1550 = vmul.u32 %v1544, %v1546
    %v1551 = vshll.u32 %v1548, 16
    %v1552 = vshrl.u32 %v1548, 16
    %v1553 = vshll.u32 %v1549, 16
    %v1554 = vshrl.u32 %v1549, 16
    %vm1555 = vc.u32 %v1547, %v1551
    %v1556 = vsel %vm1555, 1, 0
    %v1557 = vadd.s32 %v1547, %v1551
    %v1558 = vadd.s32 %v1550, %v1556
    %vm1559 = vc.u32 %v1557, %v1553
    %v1560 = vsel %vm1559, 1, 0
    %v1561 = vadd.s32 %v1557, %v1553
    %v1562 = vadd.s32 %v1558, %v1560
    %v1563 = vadd.s32 %v1562, %v1552
    %v1564 = vadd.s32 %v1563, %v1554
    %v1565 = vand.u32 %v1542, 65535
    %v1566 = vshrl.u32 %v1542, 16
    %v1567 = vand.u32 %v1537, 65535
    %v1568 = vshrl.u32 %v1537, 16
    %v1569 = vmul.u32 %v1565, %v1567
    %v1570 = vmul.u32 %v1565, %v1568
    %v1571 = vmul.u32 %v1566, %v1567
    %v1572 = vmul.u32 %v1566, %v1568
    %v1573 = vshll.u32 %v1570, 16
    %v1574 = vshrl.u32 %v1570, 16
    %v1575 = vshll.u32 %v1571, 16
    %v1576 = vshrl.u32 %v1571, 16
    %vm1577 = vc.u32 %v1569, %v1573
    %v1578 = vsel %vm1577, 1, 0
    %v1579 = vadd.s32 %v1569, %v1573
    %v1580 = vadd.s32 %v1572, %v1578
    %vm1581 = vc.u32 %v1579, %v1575
    %v1582 = vsel %vm1581, 1, 0
    %v1583 = vadd.s32 %v1579, %v1575
    %v1584 = vadd.s32 %v1580, %v1582
    %v1585 = vadd.s32 %v1584, %v1574
    %v1586 = vadd.s32 %v1585, %v1576
    %v1587 = vmul.u32 %v1542, %v1533
    %v1588 = vadd.s32 %v1564, %v1583
    %vm1589 = vc.u32 %v1564, %v1583
    %v1590 = vadd.s32 %v1586, 1
    %v1591 = vsel %vm1589, %v1590, %v1586
    %v1592 = vadd.s32 %v1587, %v1591
    %v1593 = vadd.s32 %v1592, 536870912
    %v1594 = vshrl.u32 %v1593, 30
    %v1595 = vshll.u32 %v1594, 30
    %v1596 = vsub.s32 %v1592, %v1595
    %vm1597 = vcmp.lt.s32.totalorder %v1596, 0
    %v1598 = vsub.s32 0, %v1596
    %v1599 = vsel %vm1597, %v1598, %v1596
    %v1600 = vclz %v1599
    %v1601 = vsub.s32 %v1600, 2
    %vm1602 = vcmp.gt.s32.totalorder 0, %v1601
    %v1603 = vsel %vm1602, 0, %v1601
    %v1604 = vsub.s32 32, %v1603
    %v1605 = vshll.u32 %v1596, %v1603
    %v1606 = vshrl.u32 %v1588, %v1604
    %v1607 = vor.u32 %v1605, %v1606
    %v1608 = vsub.s32 4294967266, %v1603
    %v1609 = vadd.s32 %v1608, 127
    %v1610 = vshll.u32 %v1609, 23
    %v1611 = vor.u32 4788187, %v1610
    %v1612 = vand.u32 2147483647, %v1611
    %v1614 = vcvt.s32.f32 %v1607
    %v1615 = vmul.f32 %v1614, %v1612
    %v1616 = vxor.u32 %v1615, 2147483648
    %v1617 = vsel %vm1496, %v1616, %v1615
    %v1618 = vsub.s32 4, %v1594
    %v1619 = vsel %vm1496, %v1618, %v1594
    %v1620 = vsel %vm1495, %v1486, %v1617
    %v1621 = vsel %vm1495, 0, %v1619
    %v1622 = vmul.f32 %v1620, %v1620
    %v1623 = vmul.f32 %v1622, -0.001358992
    %v1624 = vadd.f32 %v1623, 0.041655596
    %v1625 = vmul.f32 %v1622, %v1624
    %v1626 = vadd.f32 %v1625, -0.4999988
    %v1627 = vmul.f32 %v1622, %v1626
    %v1628 = vadd.f32 1.0, %v1627
    %v1629 = vmul.f32 %v1620, %v1620
    %v1630 = vmul.f32 %v1629, -0.00019511016
    %v1631 = vadd.f32 %v1630, 0.008332121
    %v1632 = vmul.f32 %v1629, %v1631
    %v1633 = vadd.f32 %v1632, -0.16666654
    %v1634 = vmul.f32 %v1629, %v1633
    %v1635 = vadd.f32 %v1634, 1.0
    %v1636 = vmul.f32 %v1635, %v1620
    %vm1637 = vweird.f32 %v1486
    %v1638 = vadd.s32 %v1621, 3
    %v1639 = vand.u32 %v1638, 3
    %vm1640 = vcmp.lt.s32.totalorder %v1639, 2
    %vm1641 = vcmp.eq.s32.totalorder %v1639, 0
    %v1642 = vxor.u32 %v1636, 2147483648
    %v1643 = vsel %vm1641, %v1628, %v1642
    %vm1644 = vcmp.eq.s32.totalorder %v1639, 2
    %v1645 = vxor.u32 %v1628, 2147483648
    %v1646 = vsel %vm1644, %v1645, %v1636
    %v1647 = vsel %vm1640, %v1643, %v1646
    %v1648 = vsel %vm1637, nan, %v1647
    %v1649 = vand.u32 2147483647, %v1487
    %vm1650 = vcmp.le.f32.partialorder %v1649, 0.7853982
    %vm1651 = vcmp.lt.s32.totalorder %v1487, 0
    %v1652 = vand.u32 %v1487, 2139095040
    %v1653 = vshrl.u32 %v1652, 23
    %v1654 = vsub.s32 %v1653, 127
    %v1655 = vand.u32 2147483647, %v1487
    %v1656 = vand.u32 %v1655, 8388607
    %v1657 = vor.u32 %v1656, 8388608
    %v1658 = vsub.s32 0, %v1657
    %v1659 = vadd.s32 %v1654, 1
    %vm1660 = vcmp.gt.s32.totalorder %v1659, 0
    %v1661 = vsel %vm1660, %v1659, 0
    %v1662 = vshrl.u32 %v1661, 5
    %v1663 = vand.u32 %v1661, 31
    %v1664 = vsub.s32 32, %v1663
    %v1665 = vshrl.u32 683565275, %v1664
    %v1666 = vshll.u32 683565275, %v1663
    %v1667 = vshrl.u32 2475754826, %v1664
    %v1668 = vor.u32 %v1666, %v1667
    %v1669 = vshll.u32 2475754826, %v1663
    %v1670 = vshrl.u32 2131351028, %v1664
    %v1671 = vor.u32 %v1669, %v1670
    %v1672 = vshll.u32 2131351028, %v1663
    %v1673 = vshrl.u32 2102212464, %v1664
    %v1674 = vor.u32 %v1672, %v1673
    %v1675 = vshll.u32 2102212464, %v1663
    %v1676 = vshrl.u32 920167782, %v1664
    %v1677 = vor.u32 %v1675, %v1676
    %v1678 = vshll.u32 920167782, %v1663
    %v1679 = vshrl.u32 1326507024, %v1664
    %v1680 = vor.u32 %v1678, %v1679
    %vm1681 = vcmp.lt.s32.totalorder %v1662, 1
    %vm1682 = vcmp.lt.s32.totalorder %v1662, 2
    %vm1683 = vcmp.lt.s32.totalorder %v1662, 3
    %vm1684 = vcmp.lt.s32.totalorder %v1662, 4
    %v1685 = vsel %vm1681, %v1665, %v1668
    %v1686 = vsel %vm1684, %v1674, 2102212464
    %v1687 = vsel %vm1683, %v1671, %v1686
    %v1688 = vsel %vm1682, %v1685, %v1687
    %v1689 = vsel %vm1681, %v1668, %v1671
    %v1690 = vsel %vm1684, %v1677, 920167782
    %v1691 = vsel %vm1683, %v1674, %v1690
    %v1692 = vsel %vm1682, %v1689, %v1691
    %v1693 = vsel %vm1681, %v1671, %v1674
    %v1694 = vsel %vm1684, %v1680, 1326507024
    %v1695 = vsel %vm1683, %v1677, %v1694
    %v1696 = vsel %vm1682, %v1693, %v1695
    %v1697 = vshll.u32 %v1657, 8
    %v1698 = vand.u32 %v1697, 65535
    %v1699 = vshrl.u32 %v1697, 16
    %v1700 = vand.u32 %v1696, 65535
    %v1701 = vshrl.u32 %v1696, 16
    %v1702 = vmul.u32 %v1698, %v1700
    %v1703 = vmul.u32 %v1698, %v1701
    %v1704 = vmul.u32 %v1699, %v1700
    %v1705 = vmul.u32 %v1699, %v1701
    %v1706 = vshll.u32 %v1703, 16
    %v1707 = vshrl.u32 %v1703, 16
    %v1708 = vshll.u32 %v1704, 16
    %v1709 = vshrl.u32 %v1704, 16
    %vm1710 = vc.u32 %v1702, %v1706
    %v1711 = vsel %vm1710, 1, 0
    %v1712 = vadd.s32 %v1702, %v1706
    %v1713 = vadd.s32 %v1705, %v1711
    %vm1714 = vc.u32 %v1712, %v1708
    %v1715 = vsel %vm1714, 1, 0
    %v1716 = vadd.s32 %v1712, %v1708
    %v1717 = vadd.s32 %v1713, %v1715
    %v1718 = vadd.s32 %v1717, %v1707
    %v1719 = vadd.s32 %v1718, %v1709
    %v1720 = vand.u32 %v1697, 65535
    %v1721 = vshrl.u32 %v1697, 16
    %v1722 = vand.u32 %v1692, 65535
    %v1723 = vshrl.u32 %v1692, 16
    %v1724 = vmul.u32 %v1720, %v1722
    %v1725 = vmul.u32 %v1720, %v1723
    %v1726 = vmul.u32 %v1721, %v1722
    %v1727 = vmul.u32 %v1721, %v1723
    %v1728 = vshll.u32 %v1725, 16
    %v1729 = vshrl.u32 %v1725, 16
    %v1730 = vshll.u32 %v1726, 16
    %v1731 = vshrl.u32 %v1726, 16
    %vm1732 = vc.u32 %v1724, %v1728
    %v1733 = vsel %vm1732, 1, 0
    %v1734 = vadd.s32 %v1724, %v1728
    %v1735 = vadd.s32 %v1727, %v1733
    %vm1736 = vc.u32 %v1734, %v1730
    %v1737 = vsel %vm1736, 1, 0
    %v1738 = vadd.s32 %v1734, %v1730
    %v1739 = vadd.s32 %v1735, %v1737
    %v1740 = vadd.s32 %v1739, %v1729
    %v1741 = vadd.s32 %v1740, %v1731
    %v1742 = vmul.u32 %v1697, %v1688
    %v1743 = vadd.s32 %v1719, %v1738
    %vm1744 = vc.u32 %v1719, %v1738
    %v1745 = vadd.s32 %v1741, 1
    %v1746 = vsel %vm1744, %v1745, %v1741
    %v1747 = vadd.s32 %v1742, %v1746
    %v1748 = vadd.s32 %v1747, 536870912
    %v1749 = vshrl.u32 %v1748, 30
    %v1750 = vshll.u32 %v1749, 30
    %v1751 = vsub.s32 %v1747, %v1750
    %vm1752 = vcmp.lt.s32.totalorder %v1751, 0
    %v1753 = vsub.s32 0, %v1751
    %v1754 = vsel %vm1752, %v1753, %v1751
    %v1755 = vclz %v1754
    %v1756 = vsub.s32 %v1755, 2
    %vm1757 = vcmp.gt.s32.totalorder 0, %v1756
    %v1758 = vsel %vm1757, 0, %v1756
    %v1759 = vsub.s32 32, %v1758
    %v1760 = vshll.u32 %v1751, %v1758
    %v1761 = vshrl.u32 %v1743, %v1759
    %v1762 = vor.u32 %v1760, %v1761
    %v1763 = vsub.s32 4294967266, %v1758
    %v1764 = vadd.s32 %v1763, 127
    %v1765 = vshll.u32 %v1764, 23
    %v1766 = vor.u32 4788187, %v1765
    %v1767 = vand.u32 2147483647, %v1766
    %v1769 = vcvt.s32.f32 %v1762
    %v1770 = vmul.f32 %v1769, %v1767
    %v1771 = vxor.u32 %v1770, 2147483648
    %v1772 = vsel %vm1651, %v1771, %v1770
    %v1773 = vsub.s32 4, %v1749
    %v1774 = vsel %vm1651, %v1773, %v1749
    %v1775 = vsel %vm1650, %v1487, %v1772
    %v1776 = vsel %vm1650, 0, %v1774
    %v1777 = vmul.f32 %v1775, %v1775
    %v1778 = vmul.f32 %v1777, -0.001358992
    %v1779 = vadd.f32 %v1778, 0.041655596
    %v1780 = vmul.f32 %v1777, %v1779
    %v1781 = vadd.f32 %v1780, -0.4999988
    %v1782 = vmul.f32 %v1777, %v1781
    %v1783 = vadd.f32 1.0, %v1782
    %v1784 = vmul.f32 %v1775, %v1775
    %v1785 = vmul.f32 %v1784, -0.00019511016
    %v1786 = vadd.f32 %v1785, 0.008332121
    %v1787 = vmul.f32 %v1784, %v1786
    %v1788 = vadd.f32 %v1787, -0.16666654
    %v1789 = vmul.f32 %v1784, %v1788
    %v1790 = vadd.f32 %v1789, 1.0
    %v1791 = vmul.f32 %v1790, %v1775
    %vm1792 = vweird.f32 %v1487
    %v1793 = vadd.s32 %v1776, 3
    %v1794 = vand.u32 %v1793, 3
    %vm1795 = vcmp.lt.s32.totalorder %v1794, 2
    %vm1796 = vcmp.eq.s32.totalorder %v1794, 0
    %v1797 = vxor.u32 %v1791, 2147483648
    %v1798 = vsel %vm1796, %v1783, %v1797
    %vm1799 = vcmp.eq.s32.totalorder %v1794, 2
    %v1800 = vxor.u32 %v1783, 2147483648
    %v1801 = vsel %vm1799, %v1800, %v1791
    %v1802 = vsel %vm1795, %v1798, %v1801
    %v1803 = vsel %vm1792, nan, %v1802
    %v1804 = vand.u32 2147483647, %v1488
    %vm1805 = vcmp.le.f32.partialorder %v1804, 0.7853982
    %vm1806 = vcmp.lt.s32.totalorder %v1488, 0
    %v1807 = vand.u32 %v1488, 2139095040
    %v1808 = vshrl.u32 %v1807, 23
    %v1809 = vsub.s32 %v1808, 127
    %v1810 = vand.u32 2147483647, %v1488
    %v1811 = vand.u32 %v1810, 8388607
    %v1812 = vor.u32 %v1811, 8388608
    %v1813 = vsub.s32 0, %v1812
    %v1814 = vadd.s32 %v1809, 1
    %vm1815 = vcmp.gt.s32.totalorder %v1814, 0
    %v1816 = vsel %vm1815, %v1814, 0
    %v1817 = vshrl.u32 %v1816, 5
    %v1818 = vand.u32 %v1816, 31
    %v1819 = vsub.s32 32, %v1818
    %v1820 = vshrl.u32 683565275, %v1819
    %v1821 = vshll.u32 683565275, %v1818
    %v1822 = vshrl.u32 2475754826, %v1819
    %v1823 = vor.u32 %v1821, %v1822
    %v1824 = vshll.u32 2475754826, %v1818
    %v1825 = vshrl.u32 2131351028, %v1819
    %v1826 = vor.u32 %v1824, %v1825
    %v1827 = vshll.u32 2131351028, %v1818
    %v1828 = vshrl.u32 2102212464, %v1819
    %v1829 = vor.u32 %v1827, %v1828
    %v1830 = vshll.u32 2102212464, %v1818
    %v1831 = vshrl.u32 920167782, %v1819
    %v1832 = vor.u32 %v1830, %v1831
    %v1833 = vshll.u32 920167782, %v1818
    %v1834 = vshrl.u32 1326507024, %v1819
    %v1835 = vor.u32 %v1833, %v1834
    %vm1836 = vcmp.lt.s32.totalorder %v1817, 1
    %vm1837 = vcmp.lt.s32.totalorder %v1817, 2
    %vm1838 = vcmp.lt.s32.totalorder %v1817, 3
    %vm1839 = vcmp.lt.s32.totalorder %v1817, 4
    %v1840 = vsel %vm1836, %v1820, %v1823
    %v1841 = vsel %vm1839, %v1829, 2102212464
    %v1842 = vsel %vm1838, %v1826, %v1841
    %v1843 = vsel %vm1837, %v1840, %v1842
    %v1844 = vsel %vm1836, %v1823, %v1826
    %v1845 = vsel %vm1839, %v1832, 920167782
    %v1846 = vsel %vm1838, %v1829, %v1845
    %v1847 = vsel %vm1837, %v1844, %v1846
    %v1848 = vsel %vm1836, %v1826, %v1829
    %v1849 = vsel %vm1839, %v1835, 1326507024
    %v1850 = vsel %vm1838, %v1832, %v1849
    %v1851 = vsel %vm1837, %v1848, %v1850
    %v1852 = vshll.u32 %v1812, 8
    %v1853 = vand.u32 %v1852, 65535
    %v1854 = vshrl.u32 %v1852, 16
    %v1855 = vand.u32 %v1851, 65535
    %v1856 = vshrl.u32 %v1851, 16
    %v1857 = vmul.u32 %v1853, %v1855
    %v1858 = vmul.u32 %v1853, %v1856
    %v1859 = vmul.u32 %v1854, %v1855
    %v1860 = vmul.u32 %v1854, %v1856
    %v1861 = vshll.u32 %v1858, 16
    %v1862 = vshrl.u32 %v1858, 16
    %v1863 = vshll.u32 %v1859, 16
    %v1864 = vshrl.u32 %v1859, 16
    %vm1865 = vc.u32 %v1857, %v1861
    %v1866 = vsel %vm1865, 1, 0
    %v1867 = vadd.s32 %v1857, %v1861
    %v1868 = vadd.s32 %v1860, %v1866
    %vm1869 = vc.u32 %v1867, %v1863
    %v1870 = vsel %vm1869, 1, 0
    %v1871 = vadd.s32 %v1867, %v1863
    %v1872 = vadd.s32 %v1868, %v1870
    %v1873 = vadd.s32 %v1872, %v1862
    %v1874 = vadd.s32 %v1873, %v1864
    %v1875 = vand.u32 %v1852, 65535
    %v1876 = vshrl.u32 %v1852, 16
    %v1877 = vand.u32 %v1847, 65535
    %v1878 = vshrl.u32 %v1847, 16
    %v1879 = vmul.u32 %v1875, %v1877
    %v1880 = vmul.u32 %v1875, %v1878
    %v1881 = vmul.u32 %v1876, %v1877
    %v1882 = vmul.u32 %v1876, %v1878
    %v1883 = vshll.u32 %v1880, 16
    %v1884 = vshrl.u32 %v1880, 16
    %v1885 = vshll.u32 %v1881, 16
    %v1886 = vshrl.u32 %v1881, 16
    %vm1887 = vc.u32 %v1879, %v1883
    %v1888 = vsel %vm1887, 1, 0
    %v1889 = vadd.s32 %v1879, %v1883
    %v1890 = vadd.s32 %v1882, %v1888
    %vm1891 = vc.u32 %v1889, %v1885
    %v1892 = vsel %vm1891, 1, 0
    %v1893 = vadd.s32 %v1889, %v1885
    %v1894 = vadd.s32 %v1890, %v1892
    %v1895 = vadd.s32 %v1894, %v1884
    %v1896 = vadd.s32 %v1895, %v1886
    %v1897 = vmul.u32 %v1852, %v1843
    %v1898 = vadd.s32 %v1874, %v1893
    %vm1899 = vc.u32 %v1874, %v1893
    %v1900 = vadd.s32 %v1896, 1
    %v1901 = vsel %vm1899, %v1900, %v1896
    %v1902 = vadd.s32 %v1897, %v1901
    %v1903 = vadd.s32 %v1902, 536870912
    %v1904 = vshrl.u32 %v1903, 30
    %v1905 = vshll.u32 %v1904, 30
    %v1906 = vsub.s32 %v1902, %v1905
    %vm1907 = vcmp.lt.s32.totalorder %v1906, 0
    %v1908 = vsub.s32 0, %v1906
    %v1909 = vsel %vm1907, %v1908, %v1906
    %v1910 = vclz %v1909
    %v1911 = vsub.s32 %v1910, 2
    %vm1912 = vcmp.gt.s32.totalorder 0, %v1911
    %v1913 = vsel %vm1912, 0, %v1911
    %v1914 = vsub.s32 32, %v1913
    %v1915 = vshll.u32 %v1906, %v1913
    %v1916 = vshrl.u32 %v1898, %v1914
    %v1917 = vor.u32 %v1915, %v1916
    %v1918 = vsub.s32 4294967266, %v1913
    %v1919 = vadd.s32 %v1918, 127
    %v1920 = vshll.u32 %v1919, 23
    %v1921 = vor.u32 4788187, %v1920
    %v1922 = vand.u32 2147483647, %v1921
    %v1924 = vcvt.s32.f32 %v1917
    %v1925 = vmul.f32 %v1924, %v1922
    %v1926 = vxor.u32 %v1925, 2147483648
    %v1927 = vsel %vm1806, %v1926, %v1925
    %v1928 = vsub.s32 4, %v1904
    %v1929 = vsel %vm1806, %v1928, %v1904
    %v1930 = vsel %vm1805, %v1488, %v1927
    %v1931 = vsel %vm1805, 0, %v1929
    %v1932 = vmul.f32 %v1930, %v1930
    %v1933 = vmul.f32 %v1932, -0.001358992
    %v1934 = vadd.f32 %v1933, 0.041655596
    %v1935 = vmul.f32 %v1932, %v1934
    %v1936 = vadd.f32 %v1935, -0.4999988
    %v1937 = vmul.f32 %v1932, %v1936
    %v1938 = vadd.f32 1.0, %v1937
    %v1939 = vmul.f32 %v1930, %v1930
    %v1940 = vmul.f32 %v1939, -0.00019511016
    %v1941 = vadd.f32 %v1940, 0.008332121
    %v1942 = vmul.f32 %v1939, %v1941
    %v1943 = vadd.f32 %v1942, -0.16666654
    %v1944 = vmul.f32 %v1939, %v1943
    %v1945 = vadd.f32 %v1944, 1.0
    %v1946 = vmul.f32 %v1945, %v1930
    %vm1947 = vweird.f32 %v1488
    %v1948 = vadd.s32 %v1931, 3
    %v1949 = vand.u32 %v1948, 3
    %vm1950 = vcmp.lt.s32.totalorder %v1949, 2
    %vm1951 = vcmp.eq.s32.totalorder %v1949, 0
    %v1952 = vxor.u32 %v1946, 2147483648
    %v1953 = vsel %vm1951, %v1938, %v1952
    %vm1954 = vcmp.eq.s32.totalorder %v1949, 2
    %v1955 = vxor.u32 %v1938, 2147483648
    %v1956 = vsel %vm1954, %v1955, %v1946
    %v1957 = vsel %vm1950, %v1953, %v1956
    %v1958 = vsel %vm1947, nan, %v1957
    %v1959 = vand.u32 2147483647, %v1489
    %vm1960 = vcmp.le.f32.partialorder %v1959, 0.7853982
    %vm1961 = vcmp.lt.s32.totalorder %v1489, 0
    %v1962 = vand.u32 %v1489, 2139095040
    %v1963 = vshrl.u32 %v1962, 23
    %v1964 = vsub.s32 %v1963, 127
    %v1965 = vand.u32 2147483647, %v1489
    %v1966 = vand.u32 %v1965, 8388607
    %v1967 = vor.u32 %v1966, 8388608
    %v1968 = vsub.s32 0, %v1967
    %v1969 = vadd.s32 %v1964, 1
    %vm1970 = vcmp.gt.s32.totalorder %v1969, 0
    %v1971 = vsel %vm1970, %v1969, 0
    %v1972 = vshrl.u32 %v1971, 5
    %v1973 = vand.u32 %v1971, 31
    %v1974 = vsub.s32 32, %v1973
    %v1975 = vshrl.u32 683565275, %v1974
    %v1976 = vshll.u32 683565275, %v1973
    %v1977 = vshrl.u32 2475754826, %v1974
    %v1978 = vor.u32 %v1976, %v1977
    %v1979 = vshll.u32 2475754826, %v1973
    %v1980 = vshrl.u32 2131351028, %v1974
    %v1981 = vor.u32 %v1979, %v1980
    %v1982 = vshll.u32 2131351028, %v1973
    %v1983 = vshrl.u32 2102212464, %v1974
    %v1984 = vor.u32 %v1982, %v1983
    %v1985 = vshll.u32 2102212464, %v1973
    %v1986 = vshrl.u32 920167782, %v1974
    %v1987 = vor.u32 %v1985, %v1986
    %v1988 = vshll.u32 920167782, %v1973
    %v1989 = vshrl.u32 1326507024, %v1974
    %v1990 = vor.u32 %v1988, %v1989
    %vm1991 = vcmp.lt.s32.totalorder %v1972, 1
    %vm1992 = vcmp.lt.s32.totalorder %v1972, 2
    %vm1993 = vcmp.lt.s32.totalorder %v1972, 3
    %vm1994 = vcmp.lt.s32.totalorder %v1972, 4
    %v1995 = vsel %vm1991, %v1975, %v1978
    %v1996 = vsel %vm1994, %v1984, 2102212464
    %v1997 = vsel %vm1993, %v1981, %v1996
    %v1998 = vsel %vm1992, %v1995, %v1997
    %v1999 = vsel %vm1991, %v1978, %v1981
    %v2000 = vsel %vm1994, %v1987, 920167782
    %v2001 = vsel %vm1993, %v1984, %v2000
    %v2002 = vsel %vm1992, %v1999, %v2001
    %v2003 = vsel %vm1991, %v1981, %v1984
    %v2004 = vsel %vm1994, %v1990, 1326507024
    %v2005 = vsel %vm1993, %v1987, %v2004
    %v2006 = vsel %vm1992, %v2003, %v2005
    %v2007 = vshll.u32 %v1967, 8
    %v2008 = vand.u32 %v2007, 65535
    %v2009 = vshrl.u32 %v2007, 16
    %v2010 = vand.u32 %v2006, 65535
    %v2011 = vshrl.u32 %v2006, 16
    %v2012 = vmul.u32 %v2008, %v2010
    %v2013 = vmul.u32 %v2008, %v2011
    %v2014 = vmul.u32 %v2009, %v2010
    %v2015 = vmul.u32 %v2009, %v2011
    %v2016 = vshll.u32 %v2013, 16
    %v2017 = vshrl.u32 %v2013, 16
    %v2018 = vshll.u32 %v2014, 16
    %v2019 = vshrl.u32 %v2014, 16
    %vm2020 = vc.u32 %v2012, %v2016
    %v2021 = vsel %vm2020, 1, 0
    %v2022 = vadd.s32 %v2012, %v2016
    %v2023 = vadd.s32 %v2015, %v2021
    %vm2024 = vc.u32 %v2022, %v2018
    %v2025 = vsel %vm2024, 1, 0
    %v2026 = vadd.s32 %v2022, %v2018
    %v2027 = vadd.s32 %v2023, %v2025
    %v2028 = vadd.s32 %v2027, %v2017
    %v2029 = vadd.s32 %v2028, %v2019
    %v2030 = vand.u32 %v2007, 65535
    %v2031 = vshrl.u32 %v2007, 16
    %v2032 = vand.u32 %v2002, 65535
    %v2033 = vshrl.u32 %v2002, 16
    %v2034 = vmul.u32 %v2030, %v2032
    %v2035 = vmul.u32 %v2030, %v2033
    %v2036 = vmul.u32 %v2031, %v2032
    %v2037 = vmul.u32 %v2031, %v2033
    %v2038 = vshll.u32 %v2035, 16
    %v2039 = vshrl.u32 %v2035, 16
    %v2040 = vshll.u32 %v2036, 16
    %v2041 = vshrl.u32 %v2036, 16
    %vm2042 = vc.u32 %v2034, %v2038
    %v2043 = vsel %vm2042, 1, 0
    %v2044 = vadd.s32 %v2034, %v2038
    %v2045 = vadd.s32 %v2037, %v2043
    %vm2046 = vc.u32 %v2044, %v2040
    %v2047 = vsel %vm2046, 1, 0
    %v2048 = vadd.s32 %v2044, %v2040
    %v2049 = vadd.s32 %v2045, %v2047
    %v2050 = vadd.s32 %v2049, %v2039
    %v2051 = vadd.s32 %v2050, %v2041
    %v2052 = vmul.u32 %v2007, %v1998
    %v2053 = vadd.s32 %v2029, %v2048
    %vm2054 = vc.u32 %v2029, %v2048
    %v2055 = vadd.s32 %v2051, 1
    %v2056 = vsel %vm2054, %v2055, %v2051
    %v2057 = vadd.s32 %v2052, %v2056
    %v2058 = vadd.s32 %v2057, 536870912
    %v2059 = vshrl.u32 %v2058, 30
    %v2060 = vshll.u32 %v2059, 30
    %v2061 = vsub.s32 %v2057, %v2060
    %vm2062 = vcmp.lt.s32.totalorder %v2061, 0
    %v2063 = vsub.s32 0, %v2061
    %v2064 = vsel %vm2062, %v2063, %v2061
    %v2065 = vclz %v2064
    %v2066 = vsub.s32 %v2065, 2
    %vm2067 = vcmp.gt.s32.totalorder 0, %v2066
    %v2068 = vsel %vm2067, 0, %v2066
    %v2069 = vsub.s32 32, %v2068
    %v2070 = vshll.u32 %v2061, %v2068
    %v2071 = vshrl.u32 %v2053, %v2069
    %v2072 = vor.u32 %v2070, %v2071
    %v2073 = vsub.s32 4294967266, %v2068
    %v2074 = vadd.s32 %v2073, 127
    %v2075 = vshll.u32 %v2074, 23
    %v2076 = vor.u32 4788187, %v2075
    %v2077 = vand.u32 2147483647, %v2076
    %v2079 = vcvt.s32.f32 %v2072
    %v2080 = vmul.f32 %v2079, %v2077
    %v2081 = vxor.u32 %v2080, 2147483648
    %v2082 = vsel %vm1961, %v2081, %v2080
    %v2083 = vsub.s32 4, %v2059
    %v2084 = vsel %vm1961, %v2083, %v2059
    %v2085 = vsel %vm1960, %v1489, %v2082
    %v2086 = vsel %vm1960, 0, %v2084
    %v2087 = vmul.f32 %v2085, %v2085
    %v2088 = vmul.f32 %v2087, -0.001358992
    %v2089 = vadd.f32 %v2088, 0.041655596
    %v2090 = vmul.f32 %v2087, %v2089
    %v2091 = vadd.f32 %v2090, -0.4999988
    %v2092 = vmul.f32 %v2087, %v2091
    %v2093 = vadd.f32 1.0, %v2092
    %v2094 = vmul.f32 %v2085, %v2085
    %v2095 = vmul.f32 %v2094, -0.00019511016
    %v2096 = vadd.f32 %v2095, 0.008332121
    %v2097 = vmul.f32 %v2094, %v2096
    %v2098 = vadd.f32 %v2097, -0.16666654
    %v2099 = vmul.f32 %v2094, %v2098
    %v2100 = vadd.f32 %v2099, 1.0
    %v2101 = vmul.f32 %v2100, %v2085
    %vm2102 = vweird.f32 %v1489
    %v2103 = vadd.s32 %v2086, 3
    %v2104 = vand.u32 %v2103, 3
    %vm2105 = vcmp.lt.s32.totalorder %v2104, 2
    %vm2106 = vcmp.eq.s32.totalorder %v2104, 0
    %v2107 = vxor.u32 %v2101, 2147483648
    %v2108 = vsel %vm2106, %v2093, %v2107
    %vm2109 = vcmp.eq.s32.totalorder %v2104, 2
    %v2110 = vxor.u32 %v2093, 2147483648
    %v2111 = vsel %vm2109, %v2110, %v2101
    %v2112 = vsel %vm2105, %v2108, %v2111
    %v2113 = vsel %vm2102, nan, %v2112
    %v2114 = vand.u32 2147483647, %v1490
    %vm2115 = vcmp.le.f32.partialorder %v2114, 0.7853982
    %vm2116 = vcmp.lt.s32.totalorder %v1490, 0
    %v2117 = vand.u32 %v1490, 2139095040
    %v2118 = vshrl.u32 %v2117, 23
    %v2119 = vsub.s32 %v2118, 127
    %v2120 = vand.u32 2147483647, %v1490
    %v2121 = vand.u32 %v2120, 8388607
    %v2122 = vor.u32 %v2121, 8388608
    %v2123 = vsub.s32 0, %v2122
    %v2124 = vadd.s32 %v2119, 1
    %vm2125 = vcmp.gt.s32.totalorder %v2124, 0
    %v2126 = vsel %vm2125, %v2124, 0
    %v2127 = vshrl.u32 %v2126, 5
    %v2128 = vand.u32 %v2126, 31
    %v2129 = vsub.s32 32, %v2128
    %v2130 = vshrl.u32 683565275, %v2129
    %v2131 = vshll.u32 683565275, %v2128
    %v2132 = vshrl.u32 2475754826, %v2129
    %v2133 = vor.u32 %v2131, %v2132
    %v2134 = vshll.u32 2475754826, %v2128
    %v2135 = vshrl.u32 2131351028, %v2129
    %v2136 = vor.u32 %v2134, %v2135
    %v2137 = vshll.u32 2131351028, %v2128
    %v2138 = vshrl.u32 2102212464, %v2129
    %v2139 = vor.u32 %v2137, %v2138
    %v2140 = vshll.u32 2102212464, %v2128
    %v2141 = vshrl.u32 920167782, %v2129
    %v2142 = vor.u32 %v2140, %v2141
    %v2143 = vshll.u32 920167782, %v2128
    %v2144 = vshrl.u32 1326507024, %v2129
    %v2145 = vor.u32 %v2143, %v2144
    %vm2146 = vcmp.lt.s32.totalorder %v2127, 1
    %vm2147 = vcmp.lt.s32.totalorder %v2127, 2
    %vm2148 = vcmp.lt.s32.totalorder %v2127, 3
    %vm2149 = vcmp.lt.s32.totalorder %v2127, 4
    %v2150 = vsel %vm2146, %v2130, %v2133
    %v2151 = vsel %vm2149, %v2139, 2102212464
    %v2152 = vsel %vm2148, %v2136, %v2151
    %v2153 = vsel %vm2147, %v2150, %v2152
    %v2154 = vsel %vm2146, %v2133, %v2136
    %v2155 = vsel %vm2149, %v2142, 920167782
    %v2156 = vsel %vm2148, %v2139, %v2155
    %v2157 = vsel %vm2147, %v2154, %v2156
    %v2158 = vsel %vm2146, %v2136, %v2139
    %v2159 = vsel %vm2149, %v2145, 1326507024
    %v2160 = vsel %vm2148, %v2142, %v2159
    %v2161 = vsel %vm2147, %v2158, %v2160
    %v2162 = vshll.u32 %v2122, 8
    %v2163 = vand.u32 %v2162, 65535
    %v2164 = vshrl.u32 %v2162, 16
    %v2165 = vand.u32 %v2161, 65535
    %v2166 = vshrl.u32 %v2161, 16
    %v2167 = vmul.u32 %v2163, %v2165
    %v2168 = vmul.u32 %v2163, %v2166
    %v2169 = vmul.u32 %v2164, %v2165
    %v2170 = vmul.u32 %v2164, %v2166
    %v2171 = vshll.u32 %v2168, 16
    %v2172 = vshrl.u32 %v2168, 16
    %v2173 = vshll.u32 %v2169, 16
    %v2174 = vshrl.u32 %v2169, 16
    %vm2175 = vc.u32 %v2167, %v2171
    %v2176 = vsel %vm2175, 1, 0
    %v2177 = vadd.s32 %v2167, %v2171
    %v2178 = vadd.s32 %v2170, %v2176
    %vm2179 = vc.u32 %v2177, %v2173
    %v2180 = vsel %vm2179, 1, 0
    %v2181 = vadd.s32 %v2177, %v2173
    %v2182 = vadd.s32 %v2178, %v2180
    %v2183 = vadd.s32 %v2182, %v2172
    %v2184 = vadd.s32 %v2183, %v2174
    %v2185 = vand.u32 %v2162, 65535
    %v2186 = vshrl.u32 %v2162, 16
    %v2187 = vand.u32 %v2157, 65535
    %v2188 = vshrl.u32 %v2157, 16
    %v2189 = vmul.u32 %v2185, %v2187
    %v2190 = vmul.u32 %v2185, %v2188
    %v2191 = vmul.u32 %v2186, %v2187
    %v2192 = vmul.u32 %v2186, %v2188
    %v2193 = vshll.u32 %v2190, 16
    %v2194 = vshrl.u32 %v2190, 16
    %v2195 = vshll.u32 %v2191, 16
    %v2196 = vshrl.u32 %v2191, 16
    %vm2197 = vc.u32 %v2189, %v2193
    %v2198 = vsel %vm2197, 1, 0
    %v2199 = vadd.s32 %v2189, %v2193
    %v2200 = vadd.s32 %v2192, %v2198
    %vm2201 = vc.u32 %v2199, %v2195
    %v2202 = vsel %vm2201, 1, 0
    %v2203 = vadd.s32 %v2199, %v2195
    %v2204 = vadd.s32 %v2200, %v2202
    %v2205 = vadd.s32 %v2204, %v2194
    %v2206 = vadd.s32 %v2205, %v2196
    %v2207 = vmul.u32 %v2162, %v2153
    %v2208 = vadd.s32 %v2184, %v2203
    %vm2209 = vc.u32 %v2184, %v2203
    %v2210 = vadd.s32 %v2206, 1
    %v2211 = vsel %vm2209, %v2210, %v2206
    %v2212 = vadd.s32 %v2207, %v2211
    %v2213 = vadd.s32 %v2212, 536870912
    %v2214 = vshrl.u32 %v2213, 30
    %v2215 = vshll.u32 %v2214, 30
    %v2216 = vsub.s32 %v2212, %v2215
    %vm2217 = vcmp.lt.s32.totalorder %v2216, 0
    %v2218 = vsub.s32 0, %v2216
    %v2219 = vsel %vm2217, %v2218, %v2216
    %v2220 = vclz %v2219
    %v2221 = vsub.s32 %v2220, 2
    %vm2222 = vcmp.gt.s32.totalorder 0, %v2221
    %v2223 = vsel %vm2222, 0, %v2221
    %v2224 = vsub.s32 32, %v2223
    %v2225 = vshll.u32 %v2216, %v2223
    %v2226 = vshrl.u32 %v2208, %v2224
    %v2227 = vor.u32 %v2225, %v2226
    %v2228 = vsub.s32 4294967266, %v2223
    %v2229 = vadd.s32 %v2228, 127
    %v2230 = vshll.u32 %v2229, 23
    %v2231 = vor.u32 4788187, %v2230
    %v2232 = vand.u32 2147483647, %v2231
    %v2234 = vcvt.s32.f32 %v2227
    %v2235 = vmul.f32 %v2234, %v2232
    %v2236 = vxor.u32 %v2235, 2147483648
    %v2237 = vsel %vm2116, %v2236, %v2235
    %v2238 = vsub.s32 4, %v2214
    %v2239 = vsel %vm2116, %v2238, %v2214
    %v2240 = vsel %vm2115, %v1490, %v2237
    %v2241 = vsel %vm2115, 0, %v2239
    %v2242 = vmul.f32 %v2240, %v2240
    %v2243 = vmul.f32 %v2242, -0.001358992
    %v2244 = vadd.f32 %v2243, 0.041655596
    %v2245 = vmul.f32 %v2242, %v2244
    %v2246 = vadd.f32 %v2245, -0.4999988
    %v2247 = vmul.f32 %v2242, %v2246
    %v2248 = vadd.f32 1.0, %v2247
    %v2249 = vmul.f32 %v2240, %v2240
    %v2250 = vmul.f32 %v2249, -0.00019511016
    %v2251 = vadd.f32 %v2250, 0.008332121
    %v2252 = vmul.f32 %v2249, %v2251
    %v2253 = vadd.f32 %v2252, -0.16666654
    %v2254 = vmul.f32 %v2249, %v2253
    %v2255 = vadd.f32 %v2254, 1.0
    %v2256 = vmul.f32 %v2255, %v2240
    %vm2257 = vweird.f32 %v1490
    %v2258 = vadd.s32 %v2241, 3
    %v2259 = vand.u32 %v2258, 3
    %vm2260 = vcmp.lt.s32.totalorder %v2259, 2
    %vm2261 = vcmp.eq.s32.totalorder %v2259, 0
    %v2262 = vxor.u32 %v2256, 2147483648
    %v2263 = vsel %vm2261, %v2248, %v2262
    %vm2264 = vcmp.eq.s32.totalorder %v2259, 2
    %v2265 = vxor.u32 %v2248, 2147483648
    %v2266 = vsel %vm2264, %v2265, %v2256
    %v2267 = vsel %vm2260, %v2263, %v2266
    %v2268 = vsel %vm2257, nan, %v2267
    %v2269 = vand.u32 2147483647, %v1491
    %vm2270 = vcmp.le.f32.partialorder %v2269, 0.7853982
    %vm2271 = vcmp.lt.s32.totalorder %v1491, 0
    %v2272 = vand.u32 %v1491, 2139095040
    %v2273 = vshrl.u32 %v2272, 23
    %v2274 = vsub.s32 %v2273, 127
    %v2275 = vand.u32 2147483647, %v1491
    %v2276 = vand.u32 %v2275, 8388607
    %v2277 = vor.u32 %v2276, 8388608
    %v2278 = vsub.s32 0, %v2277
    %v2279 = vadd.s32 %v2274, 1
    %vm2280 = vcmp.gt.s32.totalorder %v2279, 0
    %v2281 = vsel %vm2280, %v2279, 0
    %v2282 = vshrl.u32 %v2281, 5
    %v2283 = vand.u32 %v2281, 31
    %v2284 = vsub.s32 32, %v2283
    %v2285 = vshrl.u32 683565275, %v2284
    %v2286 = vshll.u32 683565275, %v2283
    %v2287 = vshrl.u32 2475754826, %v2284
    %v2288 = vor.u32 %v2286, %v2287
    %v2289 = vshll.u32 2475754826, %v2283
    %v2290 = vshrl.u32 2131351028, %v2284
    %v2291 = vor.u32 %v2289, %v2290
    %v2292 = vshll.u32 2131351028, %v2283
    %v2293 = vshrl.u32 2102212464, %v2284
    %v2294 = vor.u32 %v2292, %v2293
    %v2295 = vshll.u32 2102212464, %v2283
    %v2296 = vshrl.u32 920167782, %v2284
    %v2297 = vor.u32 %v2295, %v2296
    %v2298 = vshll.u32 920167782, %v2283
    %v2299 = vshrl.u32 1326507024, %v2284
    %v2300 = vor.u32 %v2298, %v2299
    %vm2301 = vcmp.lt.s32.totalorder %v2282, 1
    %vm2302 = vcmp.lt.s32.totalorder %v2282, 2
    %vm2303 = vcmp.lt.s32.totalorder %v2282, 3
    %vm2304 = vcmp.lt.s32.totalorder %v2282, 4
    %v2305 = vsel %vm2301, %v2285, %v2288
    %v2306 = vsel %vm2304, %v2294, 2102212464
    %v2307 = vsel %vm2303, %v2291, %v2306
    %v2308 = vsel %vm2302, %v2305, %v2307
    %v2309 = vsel %vm2301, %v2288, %v2291
    %v2310 = vsel %vm2304, %v2297, 920167782
    %v2311 = vsel %vm2303, %v2294, %v2310
    %v2312 = vsel %vm2302, %v2309, %v2311
    %v2313 = vsel %vm2301, %v2291, %v2294
    %v2314 = vsel %vm2304, %v2300, 1326507024
    %v2315 = vsel %vm2303, %v2297, %v2314
    %v2316 = vsel %vm2302, %v2313, %v2315
    %v2317 = vshll.u32 %v2277, 8
    %v2318 = vand.u32 %v2317, 65535
    %v2319 = vshrl.u32 %v2317, 16
    %v2320 = vand.u32 %v2316, 65535
    %v2321 = vshrl.u32 %v2316, 16
    %v2322 = vmul.u32 %v2318, %v2320
    %v2323 = vmul.u32 %v2318, %v2321
    %v2324 = vmul.u32 %v2319, %v2320
    %v2325 = vmul.u32 %v2319, %v2321
    %v2326 = vshll.u32 %v2323, 16
    %v2327 = vshrl.u32 %v2323, 16
    %v2328 = vshll.u32 %v2324, 16
    %v2329 = vshrl.u32 %v2324, 16
    %vm2330 = vc.u32 %v2322, %v2326
    %v2331 = vsel %vm2330, 1, 0
    %v2332 = vadd.s32 %v2322, %v2326
    %v2333 = vadd.s32 %v2325, %v2331
    %vm2334 = vc.u32 %v2332, %v2328
    %v2335 = vsel %vm2334, 1, 0
    %v2336 = vadd.s32 %v2332, %v2328
    %v2337 = vadd.s32 %v2333, %v2335
    %v2338 = vadd.s32 %v2337, %v2327
    %v2339 = vadd.s32 %v2338, %v2329
    %v2340 = vand.u32 %v2317, 65535
    %v2341 = vshrl.u32 %v2317, 16
    %v2342 = vand.u32 %v2312, 65535
    %v2343 = vshrl.u32 %v2312, 16
    %v2344 = vmul.u32 %v2340, %v2342
    %v2345 = vmul.u32 %v2340, %v2343
    %v2346 = vmul.u32 %v2341, %v2342
    %v2347 = vmul.u32 %v2341, %v2343
    %v2348 = vshll.u32 %v2345, 16
    %v2349 = vshrl.u32 %v2345, 16
    %v2350 = vshll.u32 %v2346, 16
    %v2351 = vshrl.u32 %v2346, 16
    %vm2352 = vc.u32 %v2344, %v2348
    %v2353 = vsel %vm2352, 1, 0
    %v2354 = vadd.s32 %v2344, %v2348
    %v2355 = vadd.s32 %v2347, %v2353
    %vm2356 = vc.u32 %v2354, %v2350
    %v2357 = vsel %vm2356, 1, 0
    %v2358 = vadd.s32 %v2354, %v2350
    %v2359 = vadd.s32 %v2355, %v2357
    %v2360 = vadd.s32 %v2359, %v2349
    %v2361 = vadd.s32 %v2360, %v2351
    %v2362 = vmul.u32 %v2317, %v2308
    %v2363 = vadd.s32 %v2339, %v2358
    %vm2364 = vc.u32 %v2339, %v2358
    %v2365 = vadd.s32 %v2361, 1
    %v2366 = vsel %vm2364, %v2365, %v2361
    %v2367 = vadd.s32 %v2362, %v2366
    %v2368 = vadd.s32 %v2367, 536870912
    %v2369 = vshrl.u32 %v2368, 30
    %v2370 = vshll.u32 %v2369, 30
    %v2371 = vsub.s32 %v2367, %v2370
    %vm2372 = vcmp.lt.s32.totalorder %v2371, 0
    %v2373 = vsub.s32 0, %v2371
    %v2374 = vsel %vm2372, %v2373, %v2371
    %v2375 = vclz %v2374
    %v2376 = vsub.s32 %v2375, 2
    %vm2377 = vcmp.gt.s32.totalorder 0, %v2376
    %v2378 = vsel %vm2377, 0, %v2376
    %v2379 = vsub.s32 32, %v2378
    %v2380 = vshll.u32 %v2371, %v2378
    %v2381 = vshrl.u32 %v2363, %v2379
    %v2382 = vor.u32 %v2380, %v2381
    %v2383 = vsub.s32 4294967266, %v2378
    %v2384 = vadd.s32 %v2383, 127
    %v2385 = vshll.u32 %v2384, 23
    %v2386 = vor.u32 4788187, %v2385
    %v2387 = vand.u32 2147483647, %v2386
    %v2389 = vcvt.s32.f32 %v2382
    %v2390 = vmul.f32 %v2389, %v2387
    %v2391 = vxor.u32 %v2390, 2147483648
    %v2392 = vsel %vm2271, %v2391, %v2390
    %v2393 = vsub.s32 4, %v2369
    %v2394 = vsel %vm2271, %v2393, %v2369
    %v2395 = vsel %vm2270, %v1491, %v2392
    %v2396 = vsel %vm2270, 0, %v2394
    %v2397 = vmul.f32 %v2395, %v2395
    %v2398 = vmul.f32 %v2397, -0.001358992
    %v2399 = vadd.f32 %v2398, 0.041655596
    %v2400 = vmul.f32 %v2397, %v2399
    %v2401 = vadd.f32 %v2400, -0.4999988
    %v2402 = vmul.f32 %v2397, %v2401
    %v2403 = vadd.f32 1.0, %v2402
    %v2404 = vmul.f32 %v2395, %v2395
    %v2405 = vmul.f32 %v2404, -0.00019511016
    %v2406 = vadd.f32 %v2405, 0.008332121
    %v2407 = vmul.f32 %v2404, %v2406
    %v2408 = vadd.f32 %v2407, -0.16666654
    %v2409 = vmul.f32 %v2404, %v2408
    %v2410 = vadd.f32 %v2409, 1.0
    %v2411 = vmul.f32 %v2410, %v2395
    %vm2412 = vweird.f32 %v1491
    %v2413 = vadd.s32 %v2396, 3
    %v2414 = vand.u32 %v2413, 3
    %vm2415 = vcmp.lt.s32.totalorder %v2414, 2
    %vm2416 = vcmp.eq.s32.totalorder %v2414, 0
    %v2417 = vxor.u32 %v2411, 2147483648
    %v2418 = vsel %vm2416, %v2403, %v2417
    %vm2419 = vcmp.eq.s32.totalorder %v2414, 2
    %v2420 = vxor.u32 %v2403, 2147483648
    %v2421 = vsel %vm2419, %v2420, %v2411
    %v2422 = vsel %vm2415, %v2418, %v2421
    %v2423 = vsel %vm2412, nan, %v2422
    %v2424 = vand.u32 2147483647, %v1492
    %vm2425 = vcmp.le.f32.partialorder %v2424, 0.7853982
    %vm2426 = vcmp.lt.s32.totalorder %v1492, 0
    %v2427 = vand.u32 %v1492, 2139095040
    %v2428 = vshrl.u32 %v2427, 23
    %v2429 = vsub.s32 %v2428, 127
    %v2430 = vand.u32 2147483647, %v1492
    %v2431 = vand.u32 %v2430, 8388607
    %v2432 = vor.u32 %v2431, 8388608
    %v2433 = vsub.s32 0, %v2432
    %v2434 = vadd.s32 %v2429, 1
    %vm2435 = vcmp.gt.s32.totalorder %v2434, 0
    %v2436 = vsel %vm2435, %v2434, 0
    %v2437 = vshrl.u32 %v2436, 5
    %v2438 = vand.u32 %v2436, 31
    %v2439 = vsub.s32 32, %v2438
    %v2440 = vshrl.u32 683565275, %v2439
    %v2441 = vshll.u32 683565275, %v2438
    %v2442 = vshrl.u32 2475754826, %v2439
    %v2443 = vor.u32 %v2441, %v2442
    %v2444 = vshll.u32 2475754826, %v2438
    %v2445 = vshrl.u32 2131351028, %v2439
    %v2446 = vor.u32 %v2444, %v2445
    %v2447 = vshll.u32 2131351028, %v2438
    %v2448 = vshrl.u32 2102212464, %v2439
    %v2449 = vor.u32 %v2447, %v2448
    %v2450 = vshll.u32 2102212464, %v2438
    %v2451 = vshrl.u32 920167782, %v2439
    %v2452 = vor.u32 %v2450, %v2451
    %v2453 = vshll.u32 920167782, %v2438
    %v2454 = vshrl.u32 1326507024, %v2439
    %v2455 = vor.u32 %v2453, %v2454
    %vm2456 = vcmp.lt.s32.totalorder %v2437, 1
    %vm2457 = vcmp.lt.s32.totalorder %v2437, 2
    %vm2458 = vcmp.lt.s32.totalorder %v2437, 3
    %vm2459 = vcmp.lt.s32.totalorder %v2437, 4
    %v2460 = vsel %vm2456, %v2440, %v2443
    %v2461 = vsel %vm2459, %v2449, 2102212464
    %v2462 = vsel %vm2458, %v2446, %v2461
    %v2463 = vsel %vm2457, %v2460, %v2462
    %v2464 = vsel %vm2456, %v2443, %v2446
    %v2465 = vsel %vm2459, %v2452, 920167782
    %v2466 = vsel %vm2458, %v2449, %v2465
    %v2467 = vsel %vm2457, %v2464, %v2466
    %v2468 = vsel %vm2456, %v2446, %v2449
    %v2469 = vsel %vm2459, %v2455, 1326507024
    %v2470 = vsel %vm2458, %v2452, %v2469
    %v2471 = vsel %vm2457, %v2468, %v2470
    %v2472 = vshll.u32 %v2432, 8
    %v2473 = vand.u32 %v2472, 65535
    %v2474 = vshrl.u32 %v2472, 16
    %v2475 = vand.u32 %v2471, 65535
    %v2476 = vshrl.u32 %v2471, 16
    %v2477 = vmul.u32 %v2473, %v2475
    %v2478 = vmul.u32 %v2473, %v2476
    %v2479 = vmul.u32 %v2474, %v2475
    %v2480 = vmul.u32 %v2474, %v2476
    %v2481 = vshll.u32 %v2478, 16
    %v2482 = vshrl.u32 %v2478, 16
    %v2483 = vshll.u32 %v2479, 16
    %v2484 = vshrl.u32 %v2479, 16
    %vm2485 = vc.u32 %v2477, %v2481
    %v2486 = vsel %vm2485, 1, 0
    %v2487 = vadd.s32 %v2477, %v2481
    %v2488 = vadd.s32 %v2480, %v2486
    %vm2489 = vc.u32 %v2487, %v2483
    %v2490 = vsel %vm2489, 1, 0
    %v2491 = vadd.s32 %v2487, %v2483
    %v2492 = vadd.s32 %v2488, %v2490
    %v2493 = vadd.s32 %v2492, %v2482
    %v2494 = vadd.s32 %v2493, %v2484
    %v2495 = vand.u32 %v2472, 65535
    %v2496 = vshrl.u32 %v2472, 16
    %v2497 = vand.u32 %v2467, 65535
    %v2498 = vshrl.u32 %v2467, 16
    %v2499 = vmul.u32 %v2495, %v2497
    %v2500 = vmul.u32 %v2495, %v2498
    %v2501 = vmul.u32 %v2496, %v2497
    %v2502 = vmul.u32 %v2496, %v2498
    %v2503 = vshll.u32 %v2500, 16
    %v2504 = vshrl.u32 %v2500, 16
    %v2505 = vshll.u32 %v2501, 16
    %v2506 = vshrl.u32 %v2501, 16
    %vm2507 = vc.u32 %v2499, %v2503
    %v2508 = vsel %vm2507, 1, 0
    %v2509 = vadd.s32 %v2499, %v2503
    %v2510 = vadd.s32 %v2502, %v2508
    %vm2511 = vc.u32 %v2509, %v2505
    %v2512 = vsel %vm2511, 1, 0
    %v2513 = vadd.s32 %v2509, %v2505
    %v2514 = vadd.s32 %v2510, %v2512
    %v2515 = vadd.s32 %v2514, %v2504
    %v2516 = vadd.s32 %v2515, %v2506
    %v2517 = vmul.u32 %v2472, %v2463
    %v2518 = vadd.s32 %v2494, %v2513
    %vm2519 = vc.u32 %v2494, %v2513
    %v2520 = vadd.s32 %v2516, 1
    %v2521 = vsel %vm2519, %v2520, %v2516
    %v2522 = vadd.s32 %v2517, %v2521
    %v2523 = vadd.s32 %v2522, 536870912
    %v2524 = vshrl.u32 %v2523, 30
    %v2525 = vshll.u32 %v2524, 30
    %v2526 = vsub.s32 %v2522, %v2525
    %vm2527 = vcmp.lt.s32.totalorder %v2526, 0
    %v2528 = vsub.s32 0, %v2526
    %v2529 = vsel %vm2527, %v2528, %v2526
    %v2530 = vclz %v2529
    %v2531 = vsub.s32 %v2530, 2
    %vm2532 = vcmp.gt.s32.totalorder 0, %v2531
    %v2533 = vsel %vm2532, 0, %v2531
    %v2534 = vsub.s32 32, %v2533
    %v2535 = vshll.u32 %v2526, %v2533
    %v2536 = vshrl.u32 %v2518, %v2534
    %v2537 = vor.u32 %v2535, %v2536
    %v2538 = vsub.s32 4294967266, %v2533
    %v2539 = vadd.s32 %v2538, 127
    %v2540 = vshll.u32 %v2539, 23
    %v2541 = vor.u32 4788187, %v2540
    %v2542 = vand.u32 2147483647, %v2541
    %v2544 = vcvt.s32.f32 %v2537
    %v2545 = vmul.f32 %v2544, %v2542
    %v2546 = vxor.u32 %v2545, 2147483648
    %v2547 = vsel %vm2426, %v2546, %v2545
    %v2548 = vsub.s32 4, %v2524
    %v2549 = vsel %vm2426, %v2548, %v2524
    %v2550 = vsel %vm2425, %v1492, %v2547
    %v2551 = vsel %vm2425, 0, %v2549
    %v2552 = vmul.f32 %v2550, %v2550
    %v2553 = vmul.f32 %v2552, -0.001358992
    %v2554 = vadd.f32 %v2553, 0.041655596
    %v2555 = vmul.f32 %v2552, %v2554
    %v2556 = vadd.f32 %v2555, -0.4999988
    %v2557 = vmul.f32 %v2552, %v2556
    %v2558 = vadd.f32 1.0, %v2557
    %v2559 = vmul.f32 %v2550, %v2550
    %v2560 = vmul.f32 %v2559, -0.00019511016
    %v2561 = vadd.f32 %v2560, 0.008332121
    %v2562 = vmul.f32 %v2559, %v2561
    %v2563 = vadd.f32 %v2562, -0.16666654
    %v2564 = vmul.f32 %v2559, %v2563
    %v2565 = vadd.f32 %v2564, 1.0
    %v2566 = vmul.f32 %v2565, %v2550
    %vm2567 = vweird.f32 %v1492
    %v2568 = vadd.s32 %v2551, 3
    %v2569 = vand.u32 %v2568, 3
    %vm2570 = vcmp.lt.s32.totalorder %v2569, 2
    %vm2571 = vcmp.eq.s32.totalorder %v2569, 0
    %v2572 = vxor.u32 %v2566, 2147483648
    %v2573 = vsel %vm2571, %v2558, %v2572
    %vm2574 = vcmp.eq.s32.totalorder %v2569, 2
    %v2575 = vxor.u32 %v2558, 2147483648
    %v2576 = vsel %vm2574, %v2575, %v2566
    %v2577 = vsel %vm2570, %v2573, %v2576
    %v2578 = vsel %vm2567, nan, %v2577
    %v2579 = vand.u32 2147483647, %v1493
    %vm2580 = vcmp.le.f32.partialorder %v2579, 0.7853982
    %vm2581 = vcmp.lt.s32.totalorder %v1493, 0
    %v2582 = vand.u32 %v1493, 2139095040
    %v2583 = vshrl.u32 %v2582, 23
    %v2584 = vsub.s32 %v2583, 127
    %v2585 = vand.u32 2147483647, %v1493
    %v2586 = vand.u32 %v2585, 8388607
    %v2587 = vor.u32 %v2586, 8388608
    %v2588 = vsub.s32 0, %v2587
    %v2589 = vadd.s32 %v2584, 1
    %vm2590 = vcmp.gt.s32.totalorder %v2589, 0
    %v2591 = vsel %vm2590, %v2589, 0
    %v2592 = vshrl.u32 %v2591, 5
    %v2593 = vand.u32 %v2591, 31
    %v2594 = vsub.s32 32, %v2593
    %v2595 = vshrl.u32 683565275, %v2594
    %v2596 = vshll.u32 683565275, %v2593
    %v2597 = vshrl.u32 2475754826, %v2594
    %v2598 = vor.u32 %v2596, %v2597
    %v2599 = vshll.u32 2475754826, %v2593
    %v2600 = vshrl.u32 2131351028, %v2594
    %v2601 = vor.u32 %v2599, %v2600
    %v2602 = vshll.u32 2131351028, %v2593
    %v2603 = vshrl.u32 2102212464, %v2594
    %v2604 = vor.u32 %v2602, %v2603
    %v2605 = vshll.u32 2102212464, %v2593
    %v2606 = vshrl.u32 920167782, %v2594
    %v2607 = vor.u32 %v2605, %v2606
    %v2608 = vshll.u32 920167782, %v2593
    %v2609 = vshrl.u32 1326507024, %v2594
    %v2610 = vor.u32 %v2608, %v2609
    %vm2611 = vcmp.lt.s32.totalorder %v2592, 1
    %vm2612 = vcmp.lt.s32.totalorder %v2592, 2
    %vm2613 = vcmp.lt.s32.totalorder %v2592, 3
    %vm2614 = vcmp.lt.s32.totalorder %v2592, 4
    %v2615 = vsel %vm2611, %v2595, %v2598
    %v2616 = vsel %vm2614, %v2604, 2102212464
    %v2617 = vsel %vm2613, %v2601, %v2616
    %v2618 = vsel %vm2612, %v2615, %v2617
    %v2619 = vsel %vm2611, %v2598, %v2601
    %v2620 = vsel %vm2614, %v2607, 920167782
    %v2621 = vsel %vm2613, %v2604, %v2620
    %v2622 = vsel %vm2612, %v2619, %v2621
    %v2623 = vsel %vm2611, %v2601, %v2604
    %v2624 = vsel %vm2614, %v2610, 1326507024
    %v2625 = vsel %vm2613, %v2607, %v2624
    %v2626 = vsel %vm2612, %v2623, %v2625
    %v2627 = vshll.u32 %v2587, 8
    %v2628 = vand.u32 %v2627, 65535
    %v2629 = vshrl.u32 %v2627, 16
    %v2630 = vand.u32 %v2626, 65535
    %v2631 = vshrl.u32 %v2626, 16
    %v2632 = vmul.u32 %v2628, %v2630
    %v2633 = vmul.u32 %v2628, %v2631
    %v2634 = vmul.u32 %v2629, %v2630
    %v2635 = vmul.u32 %v2629, %v2631
    %v2636 = vshll.u32 %v2633, 16
    %v2637 = vshrl.u32 %v2633, 16
    %v2638 = vshll.u32 %v2634, 16
    %v2639 = vshrl.u32 %v2634, 16
    %vm2640 = vc.u32 %v2632, %v2636
    %v2641 = vsel %vm2640, 1, 0
    %v2642 = vadd.s32 %v2632, %v2636
    %v2643 = vadd.s32 %v2635, %v2641
    %vm2644 = vc.u32 %v2642, %v2638
    %v2645 = vsel %vm2644, 1, 0
    %v2646 = vadd.s32 %v2642, %v2638
    %v2647 = vadd.s32 %v2643, %v2645
    %v2648 = vadd.s32 %v2647, %v2637
    %v2649 = vadd.s32 %v2648, %v2639
    %v2650 = vand.u32 %v2627, 65535
    %v2651 = vshrl.u32 %v2627, 16
    %v2652 = vand.u32 %v2622, 65535
    %v2653 = vshrl.u32 %v2622, 16
    %v2654 = vmul.u32 %v2650, %v2652
    %v2655 = vmul.u32 %v2650, %v2653
    %v2656 = vmul.u32 %v2651, %v2652
    %v2657 = vmul.u32 %v2651, %v2653
    %v2658 = vshll.u32 %v2655, 16
    %v2659 = vshrl.u32 %v2655, 16
    %v2660 = vshll.u32 %v2656, 16
    %v2661 = vshrl.u32 %v2656, 16
    %vm2662 = vc.u32 %v2654, %v2658
    %v2663 = vsel %vm2662, 1, 0
    %v2664 = vadd.s32 %v2654, %v2658
    %v2665 = vadd.s32 %v2657, %v2663
    %vm2666 = vc.u32 %v2664, %v2660
    %v2667 = vsel %vm2666, 1, 0
    %v2668 = vadd.s32 %v2664, %v2660
    %v2669 = vadd.s32 %v2665, %v2667
    %v2670 = vadd.s32 %v2669, %v2659
    %v2671 = vadd.s32 %v2670, %v2661
    %v2672 = vmul.u32 %v2627, %v2618
    %v2673 = vadd.s32 %v2649, %v2668
    %vm2674 = vc.u32 %v2649, %v2668
    %v2675 = vadd.s32 %v2671, 1
    %v2676 = vsel %vm2674, %v2675, %v2671
    %v2677 = vadd.s32 %v2672, %v2676
    %v2678 = vadd.s32 %v2677, 536870912
    %v2679 = vshrl.u32 %v2678, 30
    %v2680 = vshll.u32 %v2679, 30
    %v2681 = vsub.s32 %v2677, %v2680
    %vm2682 = vcmp.lt.s32.totalorder %v2681, 0
    %v2683 = vsub.s32 0, %v2681
    %v2684 = vsel %vm2682, %v2683, %v2681
    %v2685 = vclz %v2684
    %v2686 = vsub.s32 %v2685, 2
    %vm2687 = vcmp.gt.s32.totalorder 0, %v2686
    %v2688 = vsel %vm2687, 0, %v2686
    %v2689 = vsub.s32 32, %v2688
    %v2690 = vshll.u32 %v2681, %v2688
    %v2691 = vshrl.u32 %v2673, %v2689
    %v2692 = vor.u32 %v2690, %v2691
    %v2693 = vsub.s32 4294967266, %v2688
    %v2694 = vadd.s32 %v2693, 127
    %v2695 = vshll.u32 %v2694, 23
    %v2696 = vor.u32 4788187, %v2695
    %v2697 = vand.u32 2147483647, %v2696
    %v2699 = vcvt.s32.f32 %v2692
    %v2700 = vmul.f32 %v2699, %v2697
    %v2701 = vxor.u32 %v2700, 2147483648
    %v2702 = vsel %vm2581, %v2701, %v2700
    %v2703 = vsub.s32 4, %v2679
    %v2704 = vsel %vm2581, %v2703, %v2679
    %v2705 = vsel %vm2580, %v1493, %v2702
    %v2706 = vsel %vm2580, 0, %v2704
    %v2707 = vmul.f32 %v2705, %v2705
    %v2708 = vmul.f32 %v2707, -0.001358992
    %v2709 = vadd.f32 %v2708, 0.041655596
    %v2710 = vmul.f32 %v2707, %v2709
    %v2711 = vadd.f32 %v2710, -0.4999988
    %v2712 = vmul.f32 %v2707, %v2711
    %v2713 = vadd.f32 1.0, %v2712
    %v2714 = vmul.f32 %v2705, %v2705
    %v2715 = vmul.f32 %v2714, -0.00019511016
    %v2716 = vadd.f32 %v2715, 0.008332121
    %v2717 = vmul.f32 %v2714, %v2716
    %v2718 = vadd.f32 %v2717, -0.16666654
    %v2719 = vmul.f32 %v2714, %v2718
    %v2720 = vadd.f32 %v2719, 1.0
    %v2721 = vmul.f32 %v2720, %v2705
    %vm2722 = vweird.f32 %v1493
    %v2723 = vadd.s32 %v2706, 3
    %v2724 = vand.u32 %v2723, 3
    %vm2725 = vcmp.lt.s32.totalorder %v2724, 2
    %vm2726 = vcmp.eq.s32.totalorder %v2724, 0
    %v2727 = vxor.u32 %v2721, 2147483648
    %v2728 = vsel %vm2726, %v2713, %v2727
    %vm2729 = vcmp.eq.s32.totalorder %v2724, 2
    %v2730 = vxor.u32 %v2713, 2147483648
    %v2731 = vsel %vm2729, %v2730, %v2721
    %v2732 = vsel %vm2725, %v2728, %v2731
    %v2733 = vsel %vm2722, nan, %v2732
    %s2734 = scalar_lea.vmem %s3, 32
    %v2735 = vld [vmem:[%s2734] sm:$0xff]
    %v2736 = vld [vmem:[%s2734 + $0x8] sm:$0xff]
    %v2737 = vld [vmem:[%s2734 + $0x10] sm:$0xff]
    %v2738 = vld [vmem:[%s2734 + $0x18] sm:$0xff]
    %s2739 = scalar_lea.vmem %s4, 32
    %v2740 = vld [vmem:[%s2739] sm:$0xff]
    %v2741 = vld [vmem:[%s2739 + $0x8] sm:$0xff]
    %v2742 = vld [vmem:[%s2739 + $0x10] sm:$0xff]
    %v2743 = vld [vmem:[%s2739 + $0x18] sm:$0xff]
    %2745 = vset.pattern.permute.xlu0 0
    %2746 = vperm.xlu0 %2745, %v2740
    %v2747 = vpop.permute.xlu0 %2746
    %2750 = vset.pattern.permute.xlu0 0
    %2751 = vperm.xlu0 %2750, %v2741
    %v2752 = vpop.permute.xlu0 %2751
    %2755 = vset.pattern.permute.xlu0 0
    %2756 = vperm.xlu0 %2755, %v2742
    %v2757 = vpop.permute.xlu0 %2756
    %2760 = vset.pattern.permute.xlu0 0
    %2761 = vperm.xlu0 %2760, %v2743
    %v2762 = vpop.permute.xlu0 %2761
    %v2765 = vsel %vm1415, %v2735, 0
    %v2768 = vsel %vm1415, %v2736, 0
    %v2771 = vsel %vm1415, %v2737, 0
    %v2774 = vsel %vm1415, %v2738, 0
    %2776 = vmatpush.msra.mxu0 0.0
    %2777 = vmatpush.msra.mxu0 0.0
    %2778 = vmatpush.msra.mxu0 0.0
    %2779 = vmatpush.msra.mxu0 0.0
    %2780 = vmatpush.msra.mxu0 0.0
    %2781 = vmatpush.msra.mxu0 0.0
    %2782 = vmatpush.msra.mxu0 0.0
    %2783 = vmatpush.msra.mxu0 0.0
    %2784 = vmatpush.msra.mxu0 0.0
    %2785 = vmatpush.msra.mxu0 0.0
    %2786 = vmatpush.msra.mxu0 0.0
    %2787 = vmatpush.msra.mxu0 0.0
    %2788 = vmatpush.msra.mxu0 %v2578
    %2789 = vmatpush.msra.mxu0 %v2268
    %2790 = vmatpush.msra.mxu0 %v1958
    %2791 = vmatpush.msra.mxu0 %v1648
    %2792 = vmatmul.f32.gmra.mxu0 %v2765
    %v2793 = vpop.f32.mrf.mxu0
    %v2794 = vadd.f32 %v2747, %v2793
    %2795 = vmatmul.f32.gmra.mxu0 %v2768
    %v2796 = vpop.f32.mrf.mxu0
    %v2797 = vadd.f32 %v2752, %v2796
    %2798 = vmatmul.f32.gmra.mxu0 %v2771
    %v2799 = vpop.f32.mrf.mxu0
    %v2800 = vadd.f32 %v2757, %v2799
    %2801 = vmatmul.f32.gmra.mxu0 %v2774
    %v2802 = vpop.f32.mrf.mxu0
    %v2803 = vadd.f32 %v2762, %v2802
    %2804 = vdwg.mxu0
    %2805 = vmatpush.msra.mxu0 0.0
    %2806 = vmatpush.msra.mxu0 0.0
    %2807 = vmatpush.msra.mxu0 0.0
    %2808 = vmatpush.msra.mxu0 0.0
    %2809 = vmatpush.msra.mxu0 0.0
    %2810 = vmatpush.msra.mxu0 0.0
    %2811 = vmatpush.msra.mxu0 0.0
    %2812 = vmatpush.msra.mxu0 0.0
    %2813 = vmatpush.msra.mxu0 0.0
    %2814 = vmatpush.msra.mxu0 0.0
    %2815 = vmatpush.msra.mxu0 0.0
    %2816 = vmatpush.msra.mxu0 0.0
    %2817 = vmatpush.msra.mxu0 %v2733
    %2818 = vmatpush.msra.mxu0 %v2423
    %2819 = vmatpush.msra.mxu0 %v2113
    %2820 = vmatpush.msra.mxu0 %v1803
    %2821 = vmatmul.f32.gmra.mxu0 %v2765
    %v2822 = vpop.f32.mrf.mxu0
    %v2823 = vadd.f32 %v2747, %v2822
    %2824 = vmatmul.f32.gmra.mxu0 %v2768
    %v2825 = vpop.f32.mrf.mxu0
    %v2826 = vadd.f32 %v2752, %v2825
    %2827 = vmatmul.f32.gmra.mxu0 %v2771
    %v2828 = vpop.f32.mrf.mxu0
    %v2829 = vadd.f32 %v2757, %v2828
    %2830 = vmatmul.f32.gmra.mxu0 %v2774
    %v2831 = vpop.f32.mrf.mxu0
    %v2832 = vadd.f32 %v2762, %v2831
    %2833 = vdwg.mxu0
    %v2834 = vmul.f32 %v2794, 30.0
    %v2835 = vmul.f32 %v2823, 30.0
    %v2836 = vmul.f32 %v2797, 30.0
    %v2837 = vmul.f32 %v2826, 30.0
    %v2838 = vmul.f32 %v2800, 30.0
    %v2839 = vmul.f32 %v2829, 30.0
    %v2840 = vmul.f32 %v2803, 30.0
    %v2841 = vmul.f32 %v2832, 30.0
    %v2842 = vand.u32 2147483647, %v2834
    %vm2843 = vcmp.le.f32.partialorder %v2842, 0.7853982
    %vm2844 = vcmp.lt.s32.totalorder %v2834, 0
    %v2845 = vand.u32 %v2834, 2139095040
    %v2846 = vshrl.u32 %v2845, 23
    %v2847 = vsub.s32 %v2846, 127
    %v2848 = vand.u32 2147483647, %v2834
    %v2849 = vand.u32 %v2848, 8388607
    %v2850 = vor.u32 %v2849, 8388608
    %v2851 = vsub.s32 0, %v2850
    %v2852 = vadd.s32 %v2847, 1
    %vm2853 = vcmp.gt.s32.totalorder %v2852, 0
    %v2854 = vsel %vm2853, %v2852, 0
    %v2855 = vshrl.u32 %v2854, 5
    %v2856 = vand.u32 %v2854, 31
    %v2857 = vsub.s32 32, %v2856
    %v2858 = vshrl.u32 683565275, %v2857
    %v2859 = vshll.u32 683565275, %v2856
    %v2860 = vshrl.u32 2475754826, %v2857
    %v2861 = vor.u32 %v2859, %v2860
    %v2862 = vshll.u32 2475754826, %v2856
    %v2863 = vshrl.u32 2131351028, %v2857
    %v2864 = vor.u32 %v2862, %v2863
    %v2865 = vshll.u32 2131351028, %v2856
    %v2866 = vshrl.u32 2102212464, %v2857
    %v2867 = vor.u32 %v2865, %v2866
    %v2868 = vshll.u32 2102212464, %v2856
    %v2869 = vshrl.u32 920167782, %v2857
    %v2870 = vor.u32 %v2868, %v2869
    %v2871 = vshll.u32 920167782, %v2856
    %v2872 = vshrl.u32 1326507024, %v2857
    %v2873 = vor.u32 %v2871, %v2872
    %vm2874 = vcmp.lt.s32.totalorder %v2855, 1
    %vm2875 = vcmp.lt.s32.totalorder %v2855, 2
    %vm2876 = vcmp.lt.s32.totalorder %v2855, 3
    %vm2877 = vcmp.lt.s32.totalorder %v2855, 4
    %v2878 = vsel %vm2874, %v2858, %v2861
    %v2879 = vsel %vm2877, %v2867, 2102212464
    %v2880 = vsel %vm2876, %v2864, %v2879
    %v2881 = vsel %vm2875, %v2878, %v2880
    %v2882 = vsel %vm2874, %v2861, %v2864
    %v2883 = vsel %vm2877, %v2870, 920167782
    %v2884 = vsel %vm2876, %v2867, %v2883
    %v2885 = vsel %vm2875, %v2882, %v2884
    %v2886 = vsel %vm2874, %v2864, %v2867
    %v2887 = vsel %vm2877, %v2873, 1326507024
    %v2888 = vsel %vm2876, %v2870, %v2887
    %v2889 = vsel %vm2875, %v2886, %v2888
    %v2890 = vshll.u32 %v2850, 8
    %v2891 = vand.u32 %v2890, 65535
    %v2892 = vshrl.u32 %v2890, 16
    %v2893 = vand.u32 %v2889, 65535
    %v2894 = vshrl.u32 %v2889, 16
    %v2895 = vmul.u32 %v2891, %v2893
    %v2896 = vmul.u32 %v2891, %v2894
    %v2897 = vmul.u32 %v2892, %v2893
    %v2898 = vmul.u32 %v2892, %v2894
    %v2899 = vshll.u32 %v2896, 16
    %v2900 = vshrl.u32 %v2896, 16
    %v2901 = vshll.u32 %v2897, 16
    %v2902 = vshrl.u32 %v2897, 16
    %vm2903 = vc.u32 %v2895, %v2899
    %v2904 = vsel %vm2903, 1, 0
    %v2905 = vadd.s32 %v2895, %v2899
    %v2906 = vadd.s32 %v2898, %v2904
    %vm2907 = vc.u32 %v2905, %v2901
    %v2908 = vsel %vm2907, 1, 0
    %v2909 = vadd.s32 %v2905, %v2901
    %v2910 = vadd.s32 %v2906, %v2908
    %v2911 = vadd.s32 %v2910, %v2900
    %v2912 = vadd.s32 %v2911, %v2902
    %v2913 = vand.u32 %v2890, 65535
    %v2914 = vshrl.u32 %v2890, 16
    %v2915 = vand.u32 %v2885, 65535
    %v2916 = vshrl.u32 %v2885, 16
    %v2917 = vmul.u32 %v2913, %v2915
    %v2918 = vmul.u32 %v2913, %v2916
    %v2919 = vmul.u32 %v2914, %v2915
    %v2920 = vmul.u32 %v2914, %v2916
    %v2921 = vshll.u32 %v2918, 16
    %v2922 = vshrl.u32 %v2918, 16
    %v2923 = vshll.u32 %v2919, 16
    %v2924 = vshrl.u32 %v2919, 16
    %vm2925 = vc.u32 %v2917, %v2921
    %v2926 = vsel %vm2925, 1, 0
    %v2927 = vadd.s32 %v2917, %v2921
    %v2928 = vadd.s32 %v2920, %v2926
    %vm2929 = vc.u32 %v2927, %v2923
    %v2930 = vsel %vm2929, 1, 0
    %v2931 = vadd.s32 %v2927, %v2923
    %v2932 = vadd.s32 %v2928, %v2930
    %v2933 = vadd.s32 %v2932, %v2922
    %v2934 = vadd.s32 %v2933, %v2924
    %v2935 = vmul.u32 %v2890, %v2881
    %v2936 = vadd.s32 %v2912, %v2931
    %vm2937 = vc.u32 %v2912, %v2931
    %v2938 = vadd.s32 %v2934, 1
    %v2939 = vsel %vm2937, %v2938, %v2934
    %v2940 = vadd.s32 %v2935, %v2939
    %v2941 = vadd.s32 %v2940, 536870912
    %v2942 = vshrl.u32 %v2941, 30
    %v2943 = vshll.u32 %v2942, 30
    %v2944 = vsub.s32 %v2940, %v2943
    %vm2945 = vcmp.lt.s32.totalorder %v2944, 0
    %v2946 = vsub.s32 0, %v2944
    %v2947 = vsel %vm2945, %v2946, %v2944
    %v2948 = vclz %v2947
    %v2949 = vsub.s32 %v2948, 2
    %vm2950 = vcmp.gt.s32.totalorder 0, %v2949
    %v2951 = vsel %vm2950, 0, %v2949
    %v2952 = vsub.s32 32, %v2951
    %v2953 = vshll.u32 %v2944, %v2951
    %v2954 = vshrl.u32 %v2936, %v2952
    %v2955 = vor.u32 %v2953, %v2954
    %v2956 = vsub.s32 4294967266, %v2951
    %v2957 = vadd.s32 %v2956, 127
    %v2958 = vshll.u32 %v2957, 23
    %v2959 = vor.u32 4788187, %v2958
    %v2960 = vand.u32 2147483647, %v2959
    %v2962 = vcvt.s32.f32 %v2955
    %v2963 = vmul.f32 %v2962, %v2960
    %v2964 = vxor.u32 %v2963, 2147483648
    %v2965 = vsel %vm2844, %v2964, %v2963
    %v2966 = vsub.s32 4, %v2942
    %v2967 = vsel %vm2844, %v2966, %v2942
    %v2968 = vsel %vm2843, %v2834, %v2965
    %v2969 = vsel %vm2843, 0, %v2967
    %v2970 = vmul.f32 %v2968, %v2968
    %v2971 = vmul.f32 %v2970, -0.001358992
    %v2972 = vadd.f32 %v2971, 0.041655596
    %v2973 = vmul.f32 %v2970, %v2972
    %v2974 = vadd.f32 %v2973, -0.4999988
    %v2975 = vmul.f32 %v2970, %v2974
    %v2976 = vadd.f32 1.0, %v2975
    %v2977 = vmul.f32 %v2968, %v2968
    %v2978 = vmul.f32 %v2977, -0.00019511016
    %v2979 = vadd.f32 %v2978, 0.008332121
    %v2980 = vmul.f32 %v2977, %v2979
    %v2981 = vadd.f32 %v2980, -0.16666654
    %v2982 = vmul.f32 %v2977, %v2981
    %v2983 = vadd.f32 %v2982, 1.0
    %v2984 = vmul.f32 %v2983, %v2968
    %vm2985 = vweird.f32 %v2834
    %v2986 = vadd.s32 %v2969, 3
    %v2987 = vand.u32 %v2986, 3
    %vm2988 = vcmp.lt.s32.totalorder %v2987, 2
    %vm2989 = vcmp.eq.s32.totalorder %v2987, 0
    %v2990 = vxor.u32 %v2984, 2147483648
    %v2991 = vsel %vm2989, %v2976, %v2990
    %vm2992 = vcmp.eq.s32.totalorder %v2987, 2
    %v2993 = vxor.u32 %v2976, 2147483648
    %v2994 = vsel %vm2992, %v2993, %v2984
    %v2995 = vsel %vm2988, %v2991, %v2994
    %v2996 = vsel %vm2985, nan, %v2995
    %v2997 = vand.u32 2147483647, %v2835
    %vm2998 = vcmp.le.f32.partialorder %v2997, 0.7853982
    %vm2999 = vcmp.lt.s32.totalorder %v2835, 0
    %v3000 = vand.u32 %v2835, 2139095040
    %v3001 = vshrl.u32 %v3000, 23
    %v3002 = vsub.s32 %v3001, 127
    %v3003 = vand.u32 2147483647, %v2835
    %v3004 = vand.u32 %v3003, 8388607
    %v3005 = vor.u32 %v3004, 8388608
    %v3006 = vsub.s32 0, %v3005
    %v3007 = vadd.s32 %v3002, 1
    %vm3008 = vcmp.gt.s32.totalorder %v3007, 0
    %v3009 = vsel %vm3008, %v3007, 0
    %v3010 = vshrl.u32 %v3009, 5
    %v3011 = vand.u32 %v3009, 31
    %v3012 = vsub.s32 32, %v3011
    %v3013 = vshrl.u32 683565275, %v3012
    %v3014 = vshll.u32 683565275, %v3011
    %v3015 = vshrl.u32 2475754826, %v3012
    %v3016 = vor.u32 %v3014, %v3015
    %v3017 = vshll.u32 2475754826, %v3011
    %v3018 = vshrl.u32 2131351028, %v3012
    %v3019 = vor.u32 %v3017, %v3018
    %v3020 = vshll.u32 2131351028, %v3011
    %v3021 = vshrl.u32 2102212464, %v3012
    %v3022 = vor.u32 %v3020, %v3021
    %v3023 = vshll.u32 2102212464, %v3011
    %v3024 = vshrl.u32 920167782, %v3012
    %v3025 = vor.u32 %v3023, %v3024
    %v3026 = vshll.u32 920167782, %v3011
    %v3027 = vshrl.u32 1326507024, %v3012
    %v3028 = vor.u32 %v3026, %v3027
    %vm3029 = vcmp.lt.s32.totalorder %v3010, 1
    %vm3030 = vcmp.lt.s32.totalorder %v3010, 2
    %vm3031 = vcmp.lt.s32.totalorder %v3010, 3
    %vm3032 = vcmp.lt.s32.totalorder %v3010, 4
    %v3033 = vsel %vm3029, %v3013, %v3016
    %v3034 = vsel %vm3032, %v3022, 2102212464
    %v3035 = vsel %vm3031, %v3019, %v3034
    %v3036 = vsel %vm3030, %v3033, %v3035
    %v3037 = vsel %vm3029, %v3016, %v3019
    %v3038 = vsel %vm3032, %v3025, 920167782
    %v3039 = vsel %vm3031, %v3022, %v3038
    %v3040 = vsel %vm3030, %v3037, %v3039
    %v3041 = vsel %vm3029, %v3019, %v3022
    %v3042 = vsel %vm3032, %v3028, 1326507024
    %v3043 = vsel %vm3031, %v3025, %v3042
    %v3044 = vsel %vm3030, %v3041, %v3043
    %v3045 = vshll.u32 %v3005, 8
    %v3046 = vand.u32 %v3045, 65535
    %v3047 = vshrl.u32 %v3045, 16
    %v3048 = vand.u32 %v3044, 65535
    %v3049 = vshrl.u32 %v3044, 16
    %v3050 = vmul.u32 %v3046, %v3048
    %v3051 = vmul.u32 %v3046, %v3049
    %v3052 = vmul.u32 %v3047, %v3048
    %v3053 = vmul.u32 %v3047, %v3049
    %v3054 = vshll.u32 %v3051, 16
    %v3055 = vshrl.u32 %v3051, 16
    %v3056 = vshll.u32 %v3052, 16
    %v3057 = vshrl.u32 %v3052, 16
    %vm3058 = vc.u32 %v3050, %v3054
    %v3059 = vsel %vm3058, 1, 0
    %v3060 = vadd.s32 %v3050, %v3054
    %v3061 = vadd.s32 %v3053, %v3059
    %vm3062 = vc.u32 %v3060, %v3056
    %v3063 = vsel %vm3062, 1, 0
    %v3064 = vadd.s32 %v3060, %v3056
    %v3065 = vadd.s32 %v3061, %v3063
    %v3066 = vadd.s32 %v3065, %v3055
    %v3067 = vadd.s32 %v3066, %v3057
    %v3068 = vand.u32 %v3045, 65535
    %v3069 = vshrl.u32 %v3045, 16
    %v3070 = vand.u32 %v3040, 65535
    %v3071 = vshrl.u32 %v3040, 16
    %v3072 = vmul.u32 %v3068, %v3070
    %v3073 = vmul.u32 %v3068, %v3071
    %v3074 = vmul.u32 %v3069, %v3070
    %v3075 = vmul.u32 %v3069, %v3071
    %v3076 = vshll.u32 %v3073, 16
    %v3077 = vshrl.u32 %v3073, 16
    %v3078 = vshll.u32 %v3074, 16
    %v3079 = vshrl.u32 %v3074, 16
    %vm3080 = vc.u32 %v3072, %v3076
    %v3081 = vsel %vm3080, 1, 0
    %v3082 = vadd.s32 %v3072, %v3076
    %v3083 = vadd.s32 %v3075, %v3081
    %vm3084 = vc.u32 %v3082, %v3078
    %v3085 = vsel %vm3084, 1, 0
    %v3086 = vadd.s32 %v3082, %v3078
    %v3087 = vadd.s32 %v3083, %v3085
    %v3088 = vadd.s32 %v3087, %v3077
    %v3089 = vadd.s32 %v3088, %v3079
    %v3090 = vmul.u32 %v3045, %v3036
    %v3091 = vadd.s32 %v3067, %v3086
    %vm3092 = vc.u32 %v3067, %v3086
    %v3093 = vadd.s32 %v3089, 1
    %v3094 = vsel %vm3092, %v3093, %v3089
    %v3095 = vadd.s32 %v3090, %v3094
    %v3096 = vadd.s32 %v3095, 536870912
    %v3097 = vshrl.u32 %v3096, 30
    %v3098 = vshll.u32 %v3097, 30
    %v3099 = vsub.s32 %v3095, %v3098
    %vm3100 = vcmp.lt.s32.totalorder %v3099, 0
    %v3101 = vsub.s32 0, %v3099
    %v3102 = vsel %vm3100, %v3101, %v3099
    %v3103 = vclz %v3102
    %v3104 = vsub.s32 %v3103, 2
    %vm3105 = vcmp.gt.s32.totalorder 0, %v3104
    %v3106 = vsel %vm3105, 0, %v3104
    %v3107 = vsub.s32 32, %v3106
    %v3108 = vshll.u32 %v3099, %v3106
    %v3109 = vshrl.u32 %v3091, %v3107
    %v3110 = vor.u32 %v3108, %v3109
    %v3111 = vsub.s32 4294967266, %v3106
    %v3112 = vadd.s32 %v3111, 127
    %v3113 = vshll.u32 %v3112, 23
    %v3114 = vor.u32 4788187, %v3113
    %v3115 = vand.u32 2147483647, %v3114
    %v3117 = vcvt.s32.f32 %v3110
    %v3118 = vmul.f32 %v3117, %v3115
    %v3119 = vxor.u32 %v3118, 2147483648
    %v3120 = vsel %vm2999, %v3119, %v3118
    %v3121 = vsub.s32 4, %v3097
    %v3122 = vsel %vm2999, %v3121, %v3097
    %v3123 = vsel %vm2998, %v2835, %v3120
    %v3124 = vsel %vm2998, 0, %v3122
    %v3125 = vmul.f32 %v3123, %v3123
    %v3126 = vmul.f32 %v3125, -0.001358992
    %v3127 = vadd.f32 %v3126, 0.041655596
    %v3128 = vmul.f32 %v3125, %v3127
    %v3129 = vadd.f32 %v3128, -0.4999988
    %v3130 = vmul.f32 %v3125, %v3129
    %v3131 = vadd.f32 1.0, %v3130
    %v3132 = vmul.f32 %v3123, %v3123
    %v3133 = vmul.f32 %v3132, -0.00019511016
    %v3134 = vadd.f32 %v3133, 0.008332121
    %v3135 = vmul.f32 %v3132, %v3134
    %v3136 = vadd.f32 %v3135, -0.16666654
    %v3137 = vmul.f32 %v3132, %v3136
    %v3138 = vadd.f32 %v3137, 1.0
    %v3139 = vmul.f32 %v3138, %v3123
    %vm3140 = vweird.f32 %v2835
    %v3141 = vadd.s32 %v3124, 3
    %v3142 = vand.u32 %v3141, 3
    %vm3143 = vcmp.lt.s32.totalorder %v3142, 2
    %vm3144 = vcmp.eq.s32.totalorder %v3142, 0
    %v3145 = vxor.u32 %v3139, 2147483648
    %v3146 = vsel %vm3144, %v3131, %v3145
    %vm3147 = vcmp.eq.s32.totalorder %v3142, 2
    %v3148 = vxor.u32 %v3131, 2147483648
    %v3149 = vsel %vm3147, %v3148, %v3139
    %v3150 = vsel %vm3143, %v3146, %v3149
    %v3151 = vsel %vm3140, nan, %v3150
    %v3152 = vand.u32 2147483647, %v2836
    %vm3153 = vcmp.le.f32.partialorder %v3152, 0.7853982
    %vm3154 = vcmp.lt.s32.totalorder %v2836, 0
    %v3155 = vand.u32 %v2836, 2139095040
    %v3156 = vshrl.u32 %v3155, 23
    %v3157 = vsub.s32 %v3156, 127
    %v3158 = vand.u32 2147483647, %v2836
    %v3159 = vand.u32 %v3158, 8388607
    %v3160 = vor.u32 %v3159, 8388608
    %v3161 = vsub.s32 0, %v3160
    %v3162 = vadd.s32 %v3157, 1
    %vm3163 = vcmp.gt.s32.totalorder %v3162, 0
    %v3164 = vsel %vm3163, %v3162, 0
    %v3165 = vshrl.u32 %v3164, 5
    %v3166 = vand.u32 %v3164, 31
    %v3167 = vsub.s32 32, %v3166
    %v3168 = vshrl.u32 683565275, %v3167
    %v3169 = vshll.u32 683565275, %v3166
    %v3170 = vshrl.u32 2475754826, %v3167
    %v3171 = vor.u32 %v3169, %v3170
    %v3172 = vshll.u32 2475754826, %v3166
    %v3173 = vshrl.u32 2131351028, %v3167
    %v3174 = vor.u32 %v3172, %v3173
    %v3175 = vshll.u32 2131351028, %v3166
    %v3176 = vshrl.u32 2102212464, %v3167
    %v3177 = vor.u32 %v3175, %v3176
    %v3178 = vshll.u32 2102212464, %v3166
    %v3179 = vshrl.u32 920167782, %v3167
    %v3180 = vor.u32 %v3178, %v3179
    %v3181 = vshll.u32 920167782, %v3166
    %v3182 = vshrl.u32 1326507024, %v3167
    %v3183 = vor.u32 %v3181, %v3182
    %vm3184 = vcmp.lt.s32.totalorder %v3165, 1
    %vm3185 = vcmp.lt.s32.totalorder %v3165, 2
    %vm3186 = vcmp.lt.s32.totalorder %v3165, 3
    %vm3187 = vcmp.lt.s32.totalorder %v3165, 4
    %v3188 = vsel %vm3184, %v3168, %v3171
    %v3189 = vsel %vm3187, %v3177, 2102212464
    %v3190 = vsel %vm3186, %v3174, %v3189
    %v3191 = vsel %vm3185, %v3188, %v3190
    %v3192 = vsel %vm3184, %v3171, %v3174
    %v3193 = vsel %vm3187, %v3180, 920167782
    %v3194 = vsel %vm3186, %v3177, %v3193
    %v3195 = vsel %vm3185, %v3192, %v3194
    %v3196 = vsel %vm3184, %v3174, %v3177
    %v3197 = vsel %vm3187, %v3183, 1326507024
    %v3198 = vsel %vm3186, %v3180, %v3197
    %v3199 = vsel %vm3185, %v3196, %v3198
    %v3200 = vshll.u32 %v3160, 8
    %v3201 = vand.u32 %v3200, 65535
    %v3202 = vshrl.u32 %v3200, 16
    %v3203 = vand.u32 %v3199, 65535
    %v3204 = vshrl.u32 %v3199, 16
    %v3205 = vmul.u32 %v3201, %v3203
    %v3206 = vmul.u32 %v3201, %v3204
    %v3207 = vmul.u32 %v3202, %v3203
    %v3208 = vmul.u32 %v3202, %v3204
    %v3209 = vshll.u32 %v3206, 16
    %v3210 = vshrl.u32 %v3206, 16
    %v3211 = vshll.u32 %v3207, 16
    %v3212 = vshrl.u32 %v3207, 16
    %vm3213 = vc.u32 %v3205, %v3209
    %v3214 = vsel %vm3213, 1, 0
    %v3215 = vadd.s32 %v3205, %v3209
    %v3216 = vadd.s32 %v3208, %v3214
    %vm3217 = vc.u32 %v3215, %v3211
    %v3218 = vsel %vm3217, 1, 0
    %v3219 = vadd.s32 %v3215, %v3211
    %v3220 = vadd.s32 %v3216, %v3218
    %v3221 = vadd.s32 %v3220, %v3210
    %v3222 = vadd.s32 %v3221, %v3212
    %v3223 = vand.u32 %v3200, 65535
    %v3224 = vshrl.u32 %v3200, 16
    %v3225 = vand.u32 %v3195, 65535
    %v3226 = vshrl.u32 %v3195, 16
    %v3227 = vmul.u32 %v3223, %v3225
    %v3228 = vmul.u32 %v3223, %v3226
    %v3229 = vmul.u32 %v3224, %v3225
    %v3230 = vmul.u32 %v3224, %v3226
    %v3231 = vshll.u32 %v3228, 16
    %v3232 = vshrl.u32 %v3228, 16
    %v3233 = vshll.u32 %v3229, 16
    %v3234 = vshrl.u32 %v3229, 16
    %vm3235 = vc.u32 %v3227, %v3231
    %v3236 = vsel %vm3235, 1, 0
    %v3237 = vadd.s32 %v3227, %v3231
    %v3238 = vadd.s32 %v3230, %v3236
    %vm3239 = vc.u32 %v3237, %v3233
    %v3240 = vsel %vm3239, 1, 0
    %v3241 = vadd.s32 %v3237, %v3233
    %v3242 = vadd.s32 %v3238, %v3240
    %v3243 = vadd.s32 %v3242, %v3232
    %v3244 = vadd.s32 %v3243, %v3234
    %v3245 = vmul.u32 %v3200, %v3191
    %v3246 = vadd.s32 %v3222, %v3241
    %vm3247 = vc.u32 %v3222, %v3241
    %v3248 = vadd.s32 %v3244, 1
    %v3249 = vsel %vm3247, %v3248, %v3244
    %v3250 = vadd.s32 %v3245, %v3249
    %v3251 = vadd.s32 %v3250, 536870912
    %v3252 = vshrl.u32 %v3251, 30
    %v3253 = vshll.u32 %v3252, 30
    %v3254 = vsub.s32 %v3250, %v3253
    %vm3255 = vcmp.lt.s32.totalorder %v3254, 0
    %v3256 = vsub.s32 0, %v3254
    %v3257 = vsel %vm3255, %v3256, %v3254
    %v3258 = vclz %v3257
    %v3259 = vsub.s32 %v3258, 2
    %vm3260 = vcmp.gt.s32.totalorder 0, %v3259
    %v3261 = vsel %vm3260, 0, %v3259
    %v3262 = vsub.s32 32, %v3261
    %v3263 = vshll.u32 %v3254, %v3261
    %v3264 = vshrl.u32 %v3246, %v3262
    %v3265 = vor.u32 %v3263, %v3264
    %v3266 = vsub.s32 4294967266, %v3261
    %v3267 = vadd.s32 %v3266, 127
    %v3268 = vshll.u32 %v3267, 23
    %v3269 = vor.u32 4788187, %v3268
    %v3270 = vand.u32 2147483647, %v3269
    %v3272 = vcvt.s32.f32 %v3265
    %v3273 = vmul.f32 %v3272, %v3270
    %v3274 = vxor.u32 %v3273, 2147483648
    %v3275 = vsel %vm3154, %v3274, %v3273
    %v3276 = vsub.s32 4, %v3252
    %v3277 = vsel %vm3154, %v3276, %v3252
    %v3278 = vsel %vm3153, %v2836, %v3275
    %v3279 = vsel %vm3153, 0, %v3277
    %v3280 = vmul.f32 %v3278, %v3278
    %v3281 = vmul.f32 %v3280, -0.001358992
    %v3282 = vadd.f32 %v3281, 0.041655596
    %v3283 = vmul.f32 %v3280, %v3282
    %v3284 = vadd.f32 %v3283, -0.4999988
    %v3285 = vmul.f32 %v3280, %v3284
    %v3286 = vadd.f32 1.0, %v3285
    %v3287 = vmul.f32 %v3278, %v3278
    %v3288 = vmul.f32 %v3287, -0.00019511016
    %v3289 = vadd.f32 %v3288, 0.008332121
    %v3290 = vmul.f32 %v3287, %v3289
    %v3291 = vadd.f32 %v3290, -0.16666654
    %v3292 = vmul.f32 %v3287, %v3291
    %v3293 = vadd.f32 %v3292, 1.0
    %v3294 = vmul.f32 %v3293, %v3278
    %vm3295 = vweird.f32 %v2836
    %v3296 = vadd.s32 %v3279, 3
    %v3297 = vand.u32 %v3296, 3
    %vm3298 = vcmp.lt.s32.totalorder %v3297, 2
    %vm3299 = vcmp.eq.s32.totalorder %v3297, 0
    %v3300 = vxor.u32 %v3294, 2147483648
    %v3301 = vsel %vm3299, %v3286, %v3300
    %vm3302 = vcmp.eq.s32.totalorder %v3297, 2
    %v3303 = vxor.u32 %v3286, 2147483648
    %v3304 = vsel %vm3302, %v3303, %v3294
    %v3305 = vsel %vm3298, %v3301, %v3304
    %v3306 = vsel %vm3295, nan, %v3305
    %v3307 = vand.u32 2147483647, %v2837
    %vm3308 = vcmp.le.f32.partialorder %v3307, 0.7853982
    %vm3309 = vcmp.lt.s32.totalorder %v2837, 0
    %v3310 = vand.u32 %v2837, 2139095040
    %v3311 = vshrl.u32 %v3310, 23
    %v3312 = vsub.s32 %v3311, 127
    %v3313 = vand.u32 2147483647, %v2837
    %v3314 = vand.u32 %v3313, 8388607
    %v3315 = vor.u32 %v3314, 8388608
    %v3316 = vsub.s32 0, %v3315
    %v3317 = vadd.s32 %v3312, 1
    %vm3318 = vcmp.gt.s32.totalorder %v3317, 0
    %v3319 = vsel %vm3318, %v3317, 0
    %v3320 = vshrl.u32 %v3319, 5
    %v3321 = vand.u32 %v3319, 31
    %v3322 = vsub.s32 32, %v3321
    %v3323 = vshrl.u32 683565275, %v3322
    %v3324 = vshll.u32 683565275, %v3321
    %v3325 = vshrl.u32 2475754826, %v3322
    %v3326 = vor.u32 %v3324, %v3325
    %v3327 = vshll.u32 2475754826, %v3321
    %v3328 = vshrl.u32 2131351028, %v3322
    %v3329 = vor.u32 %v3327, %v3328
    %v3330 = vshll.u32 2131351028, %v3321
    %v3331 = vshrl.u32 2102212464, %v3322
    %v3332 = vor.u32 %v3330, %v3331
    %v3333 = vshll.u32 2102212464, %v3321
    %v3334 = vshrl.u32 920167782, %v3322
    %v3335 = vor.u32 %v3333, %v3334
    %v3336 = vshll.u32 920167782, %v3321
    %v3337 = vshrl.u32 1326507024, %v3322
    %v3338 = vor.u32 %v3336, %v3337
    %vm3339 = vcmp.lt.s32.totalorder %v3320, 1
    %vm3340 = vcmp.lt.s32.totalorder %v3320, 2
    %vm3341 = vcmp.lt.s32.totalorder %v3320, 3
    %vm3342 = vcmp.lt.s32.totalorder %v3320, 4
    %v3343 = vsel %vm3339, %v3323, %v3326
    %v3344 = vsel %vm3342, %v3332, 2102212464
    %v3345 = vsel %vm3341, %v3329, %v3344
    %v3346 = vsel %vm3340, %v3343, %v3345
    %v3347 = vsel %vm3339, %v3326, %v3329
    %v3348 = vsel %vm3342, %v3335, 920167782
    %v3349 = vsel %vm3341, %v3332, %v3348
    %v3350 = vsel %vm3340, %v3347, %v3349
    %v3351 = vsel %vm3339, %v3329, %v3332
    %v3352 = vsel %vm3342, %v3338, 1326507024
    %v3353 = vsel %vm3341, %v3335, %v3352
    %v3354 = vsel %vm3340, %v3351, %v3353
    %v3355 = vshll.u32 %v3315, 8
    %v3356 = vand.u32 %v3355, 65535
    %v3357 = vshrl.u32 %v3355, 16
    %v3358 = vand.u32 %v3354, 65535
    %v3359 = vshrl.u32 %v3354, 16
    %v3360 = vmul.u32 %v3356, %v3358
    %v3361 = vmul.u32 %v3356, %v3359
    %v3362 = vmul.u32 %v3357, %v3358
    %v3363 = vmul.u32 %v3357, %v3359
    %v3364 = vshll.u32 %v3361, 16
    %v3365 = vshrl.u32 %v3361, 16
    %v3366 = vshll.u32 %v3362, 16
    %v3367 = vshrl.u32 %v3362, 16
    %vm3368 = vc.u32 %v3360, %v3364
    %v3369 = vsel %vm3368, 1, 0
    %v3370 = vadd.s32 %v3360, %v3364
    %v3371 = vadd.s32 %v3363, %v3369
    %vm3372 = vc.u32 %v3370, %v3366
    %v3373 = vsel %vm3372, 1, 0
    %v3374 = vadd.s32 %v3370, %v3366
    %v3375 = vadd.s32 %v3371, %v3373
    %v3376 = vadd.s32 %v3375, %v3365
    %v3377 = vadd.s32 %v3376, %v3367
    %v3378 = vand.u32 %v3355, 65535
    %v3379 = vshrl.u32 %v3355, 16
    %v3380 = vand.u32 %v3350, 65535
    %v3381 = vshrl.u32 %v3350, 16
    %v3382 = vmul.u32 %v3378, %v3380
    %v3383 = vmul.u32 %v3378, %v3381
    %v3384 = vmul.u32 %v3379, %v3380
    %v3385 = vmul.u32 %v3379, %v3381
    %v3386 = vshll.u32 %v3383, 16
    %v3387 = vshrl.u32 %v3383, 16
    %v3388 = vshll.u32 %v3384, 16
    %v3389 = vshrl.u32 %v3384, 16
    %vm3390 = vc.u32 %v3382, %v3386
    %v3391 = vsel %vm3390, 1, 0
    %v3392 = vadd.s32 %v3382, %v3386
    %v3393 = vadd.s32 %v3385, %v3391
    %vm3394 = vc.u32 %v3392, %v3388
    %v3395 = vsel %vm3394, 1, 0
    %v3396 = vadd.s32 %v3392, %v3388
    %v3397 = vadd.s32 %v3393, %v3395
    %v3398 = vadd.s32 %v3397, %v3387
    %v3399 = vadd.s32 %v3398, %v3389
    %v3400 = vmul.u32 %v3355, %v3346
    %v3401 = vadd.s32 %v3377, %v3396
    %vm3402 = vc.u32 %v3377, %v3396
    %v3403 = vadd.s32 %v3399, 1
    %v3404 = vsel %vm3402, %v3403, %v3399
    %v3405 = vadd.s32 %v3400, %v3404
    %v3406 = vadd.s32 %v3405, 536870912
    %v3407 = vshrl.u32 %v3406, 30
    %v3408 = vshll.u32 %v3407, 30
    %v3409 = vsub.s32 %v3405, %v3408
    %vm3410 = vcmp.lt.s32.totalorder %v3409, 0
    %v3411 = vsub.s32 0, %v3409
    %v3412 = vsel %vm3410, %v3411, %v3409
    %v3413 = vclz %v3412
    %v3414 = vsub.s32 %v3413, 2
    %vm3415 = vcmp.gt.s32.totalorder 0, %v3414
    %v3416 = vsel %vm3415, 0, %v3414
    %v3417 = vsub.s32 32, %v3416
    %v3418 = vshll.u32 %v3409, %v3416
    %v3419 = vshrl.u32 %v3401, %v3417
    %v3420 = vor.u32 %v3418, %v3419
    %v3421 = vsub.s32 4294967266, %v3416
    %v3422 = vadd.s32 %v3421, 127
    %v3423 = vshll.u32 %v3422, 23
    %v3424 = vor.u32 4788187, %v3423
    %v3425 = vand.u32 2147483647, %v3424
    %v3427 = vcvt.s32.f32 %v3420
    %v3428 = vmul.f32 %v3427, %v3425
    %v3429 = vxor.u32 %v3428, 2147483648
    %v3430 = vsel %vm3309, %v3429, %v3428
    %v3431 = vsub.s32 4, %v3407
    %v3432 = vsel %vm3309, %v3431, %v3407
    %v3433 = vsel %vm3308, %v2837, %v3430
    %v3434 = vsel %vm3308, 0, %v3432
    %v3435 = vmul.f32 %v3433, %v3433
    %v3436 = vmul.f32 %v3435, -0.001358992
    %v3437 = vadd.f32 %v3436, 0.041655596
    %v3438 = vmul.f32 %v3435, %v3437
    %v3439 = vadd.f32 %v3438, -0.4999988
    %v3440 = vmul.f32 %v3435, %v3439
    %v3441 = vadd.f32 1.0, %v3440
    %v3442 = vmul.f32 %v3433, %v3433
    %v3443 = vmul.f32 %v3442, -0.00019511016
    %v3444 = vadd.f32 %v3443, 0.008332121
    %v3445 = vmul.f32 %v3442, %v3444
    %v3446 = vadd.f32 %v3445, -0.16666654
    %v3447 = vmul.f32 %v3442, %v3446
    %v3448 = vadd.f32 %v3447, 1.0
    %v3449 = vmul.f32 %v3448, %v3433
    %vm3450 = vweird.f32 %v2837
    %v3451 = vadd.s32 %v3434, 3
    %v3452 = vand.u32 %v3451, 3
    %vm3453 = vcmp.lt.s32.totalorder %v3452, 2
    %vm3454 = vcmp.eq.s32.totalorder %v3452, 0
    %v3455 = vxor.u32 %v3449, 2147483648
    %v3456 = vsel %vm3454, %v3441, %v3455
    %vm3457 = vcmp.eq.s32.totalorder %v3452, 2
    %v3458 = vxor.u32 %v3441, 2147483648
    %v3459 = vsel %vm3457, %v3458, %v3449
    %v3460 = vsel %vm3453, %v3456, %v3459
    %v3461 = vsel %vm3450, nan, %v3460
    %v3462 = vand.u32 2147483647, %v2838
    %vm3463 = vcmp.le.f32.partialorder %v3462, 0.7853982
    %vm3464 = vcmp.lt.s32.totalorder %v2838, 0
    %v3465 = vand.u32 %v2838, 2139095040
    %v3466 = vshrl.u32 %v3465, 23
    %v3467 = vsub.s32 %v3466, 127
    %v3468 = vand.u32 2147483647, %v2838
    %v3469 = vand.u32 %v3468, 8388607
    %v3470 = vor.u32 %v3469, 8388608
    %v3471 = vsub.s32 0, %v3470
    %v3472 = vadd.s32 %v3467, 1
    %vm3473 = vcmp.gt.s32.totalorder %v3472, 0
    %v3474 = vsel %vm3473, %v3472, 0
    %v3475 = vshrl.u32 %v3474, 5
    %v3476 = vand.u32 %v3474, 31
    %v3477 = vsub.s32 32, %v3476
    %v3478 = vshrl.u32 683565275, %v3477
    %v3479 = vshll.u32 683565275, %v3476
    %v3480 = vshrl.u32 2475754826, %v3477
    %v3481 = vor.u32 %v3479, %v3480
    %v3482 = vshll.u32 2475754826, %v3476
    %v3483 = vshrl.u32 2131351028, %v3477
    %v3484 = vor.u32 %v3482, %v3483
    %v3485 = vshll.u32 2131351028, %v3476
    %v3486 = vshrl.u32 2102212464, %v3477
    %v3487 = vor.u32 %v3485, %v3486
    %v3488 = vshll.u32 2102212464, %v3476
    %v3489 = vshrl.u32 920167782, %v3477
    %v3490 = vor.u32 %v3488, %v3489
    %v3491 = vshll.u32 920167782, %v3476
    %v3492 = vshrl.u32 1326507024, %v3477
    %v3493 = vor.u32 %v3491, %v3492
    %vm3494 = vcmp.lt.s32.totalorder %v3475, 1
    %vm3495 = vcmp.lt.s32.totalorder %v3475, 2
    %vm3496 = vcmp.lt.s32.totalorder %v3475, 3
    %vm3497 = vcmp.lt.s32.totalorder %v3475, 4
    %v3498 = vsel %vm3494, %v3478, %v3481
    %v3499 = vsel %vm3497, %v3487, 2102212464
    %v3500 = vsel %vm3496, %v3484, %v3499
    %v3501 = vsel %vm3495, %v3498, %v3500
    %v3502 = vsel %vm3494, %v3481, %v3484
    %v3503 = vsel %vm3497, %v3490, 920167782
    %v3504 = vsel %vm3496, %v3487, %v3503
    %v3505 = vsel %vm3495, %v3502, %v3504
    %v3506 = vsel %vm3494, %v3484, %v3487
    %v3507 = vsel %vm3497, %v3493, 1326507024
    %v3508 = vsel %vm3496, %v3490, %v3507
    %v3509 = vsel %vm3495, %v3506, %v3508
    %v3510 = vshll.u32 %v3470, 8
    %v3511 = vand.u32 %v3510, 65535
    %v3512 = vshrl.u32 %v3510, 16
    %v3513 = vand.u32 %v3509, 65535
    %v3514 = vshrl.u32 %v3509, 16
    %v3515 = vmul.u32 %v3511, %v3513
    %v3516 = vmul.u32 %v3511, %v3514
    %v3517 = vmul.u32 %v3512, %v3513
    %v3518 = vmul.u32 %v3512, %v3514
    %v3519 = vshll.u32 %v3516, 16
    %v3520 = vshrl.u32 %v3516, 16
    %v3521 = vshll.u32 %v3517, 16
    %v3522 = vshrl.u32 %v3517, 16
    %vm3523 = vc.u32 %v3515, %v3519
    %v3524 = vsel %vm3523, 1, 0
    %v3525 = vadd.s32 %v3515, %v3519
    %v3526 = vadd.s32 %v3518, %v3524
    %vm3527 = vc.u32 %v3525, %v3521
    %v3528 = vsel %vm3527, 1, 0
    %v3529 = vadd.s32 %v3525, %v3521
    %v3530 = vadd.s32 %v3526, %v3528
    %v3531 = vadd.s32 %v3530, %v3520
    %v3532 = vadd.s32 %v3531, %v3522
    %v3533 = vand.u32 %v3510, 65535
    %v3534 = vshrl.u32 %v3510, 16
    %v3535 = vand.u32 %v3505, 65535
    %v3536 = vshrl.u32 %v3505, 16
    %v3537 = vmul.u32 %v3533, %v3535
    %v3538 = vmul.u32 %v3533, %v3536
    %v3539 = vmul.u32 %v3534, %v3535
    %v3540 = vmul.u32 %v3534, %v3536
    %v3541 = vshll.u32 %v3538, 16
    %v3542 = vshrl.u32 %v3538, 16
    %v3543 = vshll.u32 %v3539, 16
    %v3544 = vshrl.u32 %v3539, 16
    %vm3545 = vc.u32 %v3537, %v3541
    %v3546 = vsel %vm3545, 1, 0
    %v3547 = vadd.s32 %v3537, %v3541
    %v3548 = vadd.s32 %v3540, %v3546
    %vm3549 = vc.u32 %v3547, %v3543
    %v3550 = vsel %vm3549, 1, 0
    %v3551 = vadd.s32 %v3547, %v3543
    %v3552 = vadd.s32 %v3548, %v3550
    %v3553 = vadd.s32 %v3552, %v3542
    %v3554 = vadd.s32 %v3553, %v3544
    %v3555 = vmul.u32 %v3510, %v3501
    %v3556 = vadd.s32 %v3532, %v3551
    %vm3557 = vc.u32 %v3532, %v3551
    %v3558 = vadd.s32 %v3554, 1
    %v3559 = vsel %vm3557, %v3558, %v3554
    %v3560 = vadd.s32 %v3555, %v3559
    %v3561 = vadd.s32 %v3560, 536870912
    %v3562 = vshrl.u32 %v3561, 30
    %v3563 = vshll.u32 %v3562, 30
    %v3564 = vsub.s32 %v3560, %v3563
    %vm3565 = vcmp.lt.s32.totalorder %v3564, 0
    %v3566 = vsub.s32 0, %v3564
    %v3567 = vsel %vm3565, %v3566, %v3564
    %v3568 = vclz %v3567
    %v3569 = vsub.s32 %v3568, 2
    %vm3570 = vcmp.gt.s32.totalorder 0, %v3569
    %v3571 = vsel %vm3570, 0, %v3569
    %v3572 = vsub.s32 32, %v3571
    %v3573 = vshll.u32 %v3564, %v3571
    %v3574 = vshrl.u32 %v3556, %v3572
    %v3575 = vor.u32 %v3573, %v3574
    %v3576 = vsub.s32 4294967266, %v3571
    %v3577 = vadd.s32 %v3576, 127
    %v3578 = vshll.u32 %v3577, 23
    %v3579 = vor.u32 4788187, %v3578
    %v3580 = vand.u32 2147483647, %v3579
    %v3582 = vcvt.s32.f32 %v3575
    %v3583 = vmul.f32 %v3582, %v3580
    %v3584 = vxor.u32 %v3583, 2147483648
    %v3585 = vsel %vm3464, %v3584, %v3583
    %v3586 = vsub.s32 4, %v3562
    %v3587 = vsel %vm3464, %v3586, %v3562
    %v3588 = vsel %vm3463, %v2838, %v3585
    %v3589 = vsel %vm3463, 0, %v3587
    %v3590 = vmul.f32 %v3588, %v3588
    %v3591 = vmul.f32 %v3590, -0.001358992
    %v3592 = vadd.f32 %v3591, 0.041655596
    %v3593 = vmul.f32 %v3590, %v3592
    %v3594 = vadd.f32 %v3593, -0.4999988
    %v3595 = vmul.f32 %v3590, %v3594
    %v3596 = vadd.f32 1.0, %v3595
    %v3597 = vmul.f32 %v3588, %v3588
    %v3598 = vmul.f32 %v3597, -0.00019511016
    %v3599 = vadd.f32 %v3598, 0.008332121
    %v3600 = vmul.f32 %v3597, %v3599
    %v3601 = vadd.f32 %v3600, -0.16666654
    %v3602 = vmul.f32 %v3597, %v3601
    %v3603 = vadd.f32 %v3602, 1.0
    %v3604 = vmul.f32 %v3603, %v3588
    %vm3605 = vweird.f32 %v2838
    %v3606 = vadd.s32 %v3589, 3
    %v3607 = vand.u32 %v3606, 3
    %vm3608 = vcmp.lt.s32.totalorder %v3607, 2
    %vm3609 = vcmp.eq.s32.totalorder %v3607, 0
    %v3610 = vxor.u32 %v3604, 2147483648
    %v3611 = vsel %vm3609, %v3596, %v3610
    %vm3612 = vcmp.eq.s32.totalorder %v3607, 2
    %v3613 = vxor.u32 %v3596, 2147483648
    %v3614 = vsel %vm3612, %v3613, %v3604
    %v3615 = vsel %vm3608, %v3611, %v3614
    %v3616 = vsel %vm3605, nan, %v3615
    %v3617 = vand.u32 2147483647, %v2839
    %vm3618 = vcmp.le.f32.partialorder %v3617, 0.7853982
    %vm3619 = vcmp.lt.s32.totalorder %v2839, 0
    %v3620 = vand.u32 %v2839, 2139095040
    %v3621 = vshrl.u32 %v3620, 23
    %v3622 = vsub.s32 %v3621, 127
    %v3623 = vand.u32 2147483647, %v2839
    %v3624 = vand.u32 %v3623, 8388607
    %v3625 = vor.u32 %v3624, 8388608
    %v3626 = vsub.s32 0, %v3625
    %v3627 = vadd.s32 %v3622, 1
    %vm3628 = vcmp.gt.s32.totalorder %v3627, 0
    %v3629 = vsel %vm3628, %v3627, 0
    %v3630 = vshrl.u32 %v3629, 5
    %v3631 = vand.u32 %v3629, 31
    %v3632 = vsub.s32 32, %v3631
    %v3633 = vshrl.u32 683565275, %v3632
    %v3634 = vshll.u32 683565275, %v3631
    %v3635 = vshrl.u32 2475754826, %v3632
    %v3636 = vor.u32 %v3634, %v3635
    %v3637 = vshll.u32 2475754826, %v3631
    %v3638 = vshrl.u32 2131351028, %v3632
    %v3639 = vor.u32 %v3637, %v3638
    %v3640 = vshll.u32 2131351028, %v3631
    %v3641 = vshrl.u32 2102212464, %v3632
    %v3642 = vor.u32 %v3640, %v3641
    %v3643 = vshll.u32 2102212464, %v3631
    %v3644 = vshrl.u32 920167782, %v3632
    %v3645 = vor.u32 %v3643, %v3644
    %v3646 = vshll.u32 920167782, %v3631
    %v3647 = vshrl.u32 1326507024, %v3632
    %v3648 = vor.u32 %v3646, %v3647
    %vm3649 = vcmp.lt.s32.totalorder %v3630, 1
    %vm3650 = vcmp.lt.s32.totalorder %v3630, 2
    %vm3651 = vcmp.lt.s32.totalorder %v3630, 3
    %vm3652 = vcmp.lt.s32.totalorder %v3630, 4
    %v3653 = vsel %vm3649, %v3633, %v3636
    %v3654 = vsel %vm3652, %v3642, 2102212464
    %v3655 = vsel %vm3651, %v3639, %v3654
    %v3656 = vsel %vm3650, %v3653, %v3655
    %v3657 = vsel %vm3649, %v3636, %v3639
    %v3658 = vsel %vm3652, %v3645, 920167782
    %v3659 = vsel %vm3651, %v3642, %v3658
    %v3660 = vsel %vm3650, %v3657, %v3659
    %v3661 = vsel %vm3649, %v3639, %v3642
    %v3662 = vsel %vm3652, %v3648, 1326507024
    %v3663 = vsel %vm3651, %v3645, %v3662
    %v3664 = vsel %vm3650, %v3661, %v3663
    %v3665 = vshll.u32 %v3625, 8
    %v3666 = vand.u32 %v3665, 65535
    %v3667 = vshrl.u32 %v3665, 16
    %v3668 = vand.u32 %v3664, 65535
    %v3669 = vshrl.u32 %v3664, 16
    %v3670 = vmul.u32 %v3666, %v3668
    %v3671 = vmul.u32 %v3666, %v3669
    %v3672 = vmul.u32 %v3667, %v3668
    %v3673 = vmul.u32 %v3667, %v3669
    %v3674 = vshll.u32 %v3671, 16
    %v3675 = vshrl.u32 %v3671, 16
    %v3676 = vshll.u32 %v3672, 16
    %v3677 = vshrl.u32 %v3672, 16
    %vm3678 = vc.u32 %v3670, %v3674
    %v3679 = vsel %vm3678, 1, 0
    %v3680 = vadd.s32 %v3670, %v3674
    %v3681 = vadd.s32 %v3673, %v3679
    %vm3682 = vc.u32 %v3680, %v3676
    %v3683 = vsel %vm3682, 1, 0
    %v3684 = vadd.s32 %v3680, %v3676
    %v3685 = vadd.s32 %v3681, %v3683
    %v3686 = vadd.s32 %v3685, %v3675
    %v3687 = vadd.s32 %v3686, %v3677
    %v3688 = vand.u32 %v3665, 65535
    %v3689 = vshrl.u32 %v3665, 16
    %v3690 = vand.u32 %v3660, 65535
    %v3691 = vshrl.u32 %v3660, 16
    %v3692 = vmul.u32 %v3688, %v3690
    %v3693 = vmul.u32 %v3688, %v3691
    %v3694 = vmul.u32 %v3689, %v3690
    %v3695 = vmul.u32 %v3689, %v3691
    %v3696 = vshll.u32 %v3693, 16
    %v3697 = vshrl.u32 %v3693, 16
    %v3698 = vshll.u32 %v3694, 16
    %v3699 = vshrl.u32 %v3694, 16
    %vm3700 = vc.u32 %v3692, %v3696
    %v3701 = vsel %vm3700, 1, 0
    %v3702 = vadd.s32 %v3692, %v3696
    %v3703 = vadd.s32 %v3695, %v3701
    %vm3704 = vc.u32 %v3702, %v3698
    %v3705 = vsel %vm3704, 1, 0
    %v3706 = vadd.s32 %v3702, %v3698
    %v3707 = vadd.s32 %v3703, %v3705
    %v3708 = vadd.s32 %v3707, %v3697
    %v3709 = vadd.s32 %v3708, %v3699
    %v3710 = vmul.u32 %v3665, %v3656
    %v3711 = vadd.s32 %v3687, %v3706
    %vm3712 = vc.u32 %v3687, %v3706
    %v3713 = vadd.s32 %v3709, 1
    %v3714 = vsel %vm3712, %v3713, %v3709
    %v3715 = vadd.s32 %v3710, %v3714
    %v3716 = vadd.s32 %v3715, 536870912
    %v3717 = vshrl.u32 %v3716, 30
    %v3718 = vshll.u32 %v3717, 30
    %v3719 = vsub.s32 %v3715, %v3718
    %vm3720 = vcmp.lt.s32.totalorder %v3719, 0
    %v3721 = vsub.s32 0, %v3719
    %v3722 = vsel %vm3720, %v3721, %v3719
    %v3723 = vclz %v3722
    %v3724 = vsub.s32 %v3723, 2
    %vm3725 = vcmp.gt.s32.totalorder 0, %v3724
    %v3726 = vsel %vm3725, 0, %v3724
    %v3727 = vsub.s32 32, %v3726
    %v3728 = vshll.u32 %v3719, %v3726
    %v3729 = vshrl.u32 %v3711, %v3727
    %v3730 = vor.u32 %v3728, %v3729
    %v3731 = vsub.s32 4294967266, %v3726
    %v3732 = vadd.s32 %v3731, 127
    %v3733 = vshll.u32 %v3732, 23
    %v3734 = vor.u32 4788187, %v3733
    %v3735 = vand.u32 2147483647, %v3734
    %v3737 = vcvt.s32.f32 %v3730
    %v3738 = vmul.f32 %v3737, %v3735
    %v3739 = vxor.u32 %v3738, 2147483648
    %v3740 = vsel %vm3619, %v3739, %v3738
    %v3741 = vsub.s32 4, %v3717
    %v3742 = vsel %vm3619, %v3741, %v3717
    %v3743 = vsel %vm3618, %v2839, %v3740
    %v3744 = vsel %vm3618, 0, %v3742
    %v3745 = vmul.f32 %v3743, %v3743
    %v3746 = vmul.f32 %v3745, -0.001358992
    %v3747 = vadd.f32 %v3746, 0.041655596
    %v3748 = vmul.f32 %v3745, %v3747
    %v3749 = vadd.f32 %v3748, -0.4999988
    %v3750 = vmul.f32 %v3745, %v3749
    %v3751 = vadd.f32 1.0, %v3750
    %v3752 = vmul.f32 %v3743, %v3743
    %v3753 = vmul.f32 %v3752, -0.00019511016
    %v3754 = vadd.f32 %v3753, 0.008332121
    %v3755 = vmul.f32 %v3752, %v3754
    %v3756 = vadd.f32 %v3755, -0.16666654
    %v3757 = vmul.f32 %v3752, %v3756
    %v3758 = vadd.f32 %v3757, 1.0
    %v3759 = vmul.f32 %v3758, %v3743
    %vm3760 = vweird.f32 %v2839
    %v3761 = vadd.s32 %v3744, 3
    %v3762 = vand.u32 %v3761, 3
    %vm3763 = vcmp.lt.s32.totalorder %v3762, 2
    %vm3764 = vcmp.eq.s32.totalorder %v3762, 0
    %v3765 = vxor.u32 %v3759, 2147483648
    %v3766 = vsel %vm3764, %v3751, %v3765
    %vm3767 = vcmp.eq.s32.totalorder %v3762, 2
    %v3768 = vxor.u32 %v3751, 2147483648
    %v3769 = vsel %vm3767, %v3768, %v3759
    %v3770 = vsel %vm3763, %v3766, %v3769
    %v3771 = vsel %vm3760, nan, %v3770
    %v3772 = vand.u32 2147483647, %v2840
    %vm3773 = vcmp.le.f32.partialorder %v3772, 0.7853982
    %vm3774 = vcmp.lt.s32.totalorder %v2840, 0
    %v3775 = vand.u32 %v2840, 2139095040
    %v3776 = vshrl.u32 %v3775, 23
    %v3777 = vsub.s32 %v3776, 127
    %v3778 = vand.u32 2147483647, %v2840
    %v3779 = vand.u32 %v3778, 8388607
    %v3780 = vor.u32 %v3779, 8388608
    %v3781 = vsub.s32 0, %v3780
    %v3782 = vadd.s32 %v3777, 1
    %vm3783 = vcmp.gt.s32.totalorder %v3782, 0
    %v3784 = vsel %vm3783, %v3782, 0
    %v3785 = vshrl.u32 %v3784, 5
    %v3786 = vand.u32 %v3784, 31
    %v3787 = vsub.s32 32, %v3786
    %v3788 = vshrl.u32 683565275, %v3787
    %v3789 = vshll.u32 683565275, %v3786
    %v3790 = vshrl.u32 2475754826, %v3787
    %v3791 = vor.u32 %v3789, %v3790
    %v3792 = vshll.u32 2475754826, %v3786
    %v3793 = vshrl.u32 2131351028, %v3787
    %v3794 = vor.u32 %v3792, %v3793
    %v3795 = vshll.u32 2131351028, %v3786
    %v3796 = vshrl.u32 2102212464, %v3787
    %v3797 = vor.u32 %v3795, %v3796
    %v3798 = vshll.u32 2102212464, %v3786
    %v3799 = vshrl.u32 920167782, %v3787
    %v3800 = vor.u32 %v3798, %v3799
    %v3801 = vshll.u32 920167782, %v3786
    %v3802 = vshrl.u32 1326507024, %v3787
    %v3803 = vor.u32 %v3801, %v3802
    %vm3804 = vcmp.lt.s32.totalorder %v3785, 1
    %vm3805 = vcmp.lt.s32.totalorder %v3785, 2
    %vm3806 = vcmp.lt.s32.totalorder %v3785, 3
    %vm3807 = vcmp.lt.s32.totalorder %v3785, 4
    %v3808 = vsel %vm3804, %v3788, %v3791
    %v3809 = vsel %vm3807, %v3797, 2102212464
    %v3810 = vsel %vm3806, %v3794, %v3809
    %v3811 = vsel %vm3805, %v3808, %v3810
    %v3812 = vsel %vm3804, %v3791, %v3794
    %v3813 = vsel %vm3807, %v3800, 920167782
    %v3814 = vsel %vm3806, %v3797, %v3813
    %v3815 = vsel %vm3805, %v3812, %v3814
    %v3816 = vsel %vm3804, %v3794, %v3797
    %v3817 = vsel %vm3807, %v3803, 1326507024
    %v3818 = vsel %vm3806, %v3800, %v3817
    %v3819 = vsel %vm3805, %v3816, %v3818
    %v3820 = vshll.u32 %v3780, 8
    %v3821 = vand.u32 %v3820, 65535
    %v3822 = vshrl.u32 %v3820, 16
    %v3823 = vand.u32 %v3819, 65535
    %v3824 = vshrl.u32 %v3819, 16
    %v3825 = vmul.u32 %v3821, %v3823
    %v3826 = vmul.u32 %v3821, %v3824
    %v3827 = vmul.u32 %v3822, %v3823
    %v3828 = vmul.u32 %v3822, %v3824
    %v3829 = vshll.u32 %v3826, 16
    %v3830 = vshrl.u32 %v3826, 16
    %v3831 = vshll.u32 %v3827, 16
    %v3832 = vshrl.u32 %v3827, 16
    %vm3833 = vc.u32 %v3825, %v3829
    %v3834 = vsel %vm3833, 1, 0
    %v3835 = vadd.s32 %v3825, %v3829
    %v3836 = vadd.s32 %v3828, %v3834
    %vm3837 = vc.u32 %v3835, %v3831
    %v3838 = vsel %vm3837, 1, 0
    %v3839 = vadd.s32 %v3835, %v3831
    %v3840 = vadd.s32 %v3836, %v3838
    %v3841 = vadd.s32 %v3840, %v3830
    %v3842 = vadd.s32 %v3841, %v3832
    %v3843 = vand.u32 %v3820, 65535
    %v3844 = vshrl.u32 %v3820, 16
    %v3845 = vand.u32 %v3815, 65535
    %v3846 = vshrl.u32 %v3815, 16
    %v3847 = vmul.u32 %v3843, %v3845
    %v3848 = vmul.u32 %v3843, %v3846
    %v3849 = vmul.u32 %v3844, %v3845
    %v3850 = vmul.u32 %v3844, %v3846
    %v3851 = vshll.u32 %v3848, 16
    %v3852 = vshrl.u32 %v3848, 16
    %v3853 = vshll.u32 %v3849, 16
    %v3854 = vshrl.u32 %v3849, 16
    %vm3855 = vc.u32 %v3847, %v3851
    %v3856 = vsel %vm3855, 1, 0
    %v3857 = vadd.s32 %v3847, %v3851
    %v3858 = vadd.s32 %v3850, %v3856
    %vm3859 = vc.u32 %v3857, %v3853
    %v3860 = vsel %vm3859, 1, 0
    %v3861 = vadd.s32 %v3857, %v3853
    %v3862 = vadd.s32 %v3858, %v3860
    %v3863 = vadd.s32 %v3862, %v3852
    %v3864 = vadd.s32 %v3863, %v3854
    %v3865 = vmul.u32 %v3820, %v3811
    %v3866 = vadd.s32 %v3842, %v3861
    %vm3867 = vc.u32 %v3842, %v3861
    %v3868 = vadd.s32 %v3864, 1
    %v3869 = vsel %vm3867, %v3868, %v3864
    %v3870 = vadd.s32 %v3865, %v3869
    %v3871 = vadd.s32 %v3870, 536870912
    %v3872 = vshrl.u32 %v3871, 30
    %v3873 = vshll.u32 %v3872, 30
    %v3874 = vsub.s32 %v3870, %v3873
    %vm3875 = vcmp.lt.s32.totalorder %v3874, 0
    %v3876 = vsub.s32 0, %v3874
    %v3877 = vsel %vm3875, %v3876, %v3874
    %v3878 = vclz %v3877
    %v3879 = vsub.s32 %v3878, 2
    %vm3880 = vcmp.gt.s32.totalorder 0, %v3879
    %v3881 = vsel %vm3880, 0, %v3879
    %v3882 = vsub.s32 32, %v3881
    %v3883 = vshll.u32 %v3874, %v3881
    %v3884 = vshrl.u32 %v3866, %v3882
    %v3885 = vor.u32 %v3883, %v3884
    %v3886 = vsub.s32 4294967266, %v3881
    %v3887 = vadd.s32 %v3886, 127
    %v3888 = vshll.u32 %v3887, 23
    %v3889 = vor.u32 4788187, %v3888
    %v3890 = vand.u32 2147483647, %v3889
    %v3892 = vcvt.s32.f32 %v3885
    %v3893 = vmul.f32 %v3892, %v3890
    %v3894 = vxor.u32 %v3893, 2147483648
    %v3895 = vsel %vm3774, %v3894, %v3893
    %v3896 = vsub.s32 4, %v3872
    %v3897 = vsel %vm3774, %v3896, %v3872
    %v3898 = vsel %vm3773, %v2840, %v3895
    %v3899 = vsel %vm3773, 0, %v3897
    %v3900 = vmul.f32 %v3898, %v3898
    %v3901 = vmul.f32 %v3900, -0.001358992
    %v3902 = vadd.f32 %v3901, 0.041655596
    %v3903 = vmul.f32 %v3900, %v3902
    %v3904 = vadd.f32 %v3903, -0.4999988
    %v3905 = vmul.f32 %v3900, %v3904
    %v3906 = vadd.f32 1.0, %v3905
    %v3907 = vmul.f32 %v3898, %v3898
    %v3908 = vmul.f32 %v3907, -0.00019511016
    %v3909 = vadd.f32 %v3908, 0.008332121
    %v3910 = vmul.f32 %v3907, %v3909
    %v3911 = vadd.f32 %v3910, -0.16666654
    %v3912 = vmul.f32 %v3907, %v3911
    %v3913 = vadd.f32 %v3912, 1.0
    %v3914 = vmul.f32 %v3913, %v3898
    %vm3915 = vweird.f32 %v2840
    %v3916 = vadd.s32 %v3899, 3
    %v3917 = vand.u32 %v3916, 3
    %vm3918 = vcmp.lt.s32.totalorder %v3917, 2
    %vm3919 = vcmp.eq.s32.totalorder %v3917, 0
    %v3920 = vxor.u32 %v3914, 2147483648
    %v3921 = vsel %vm3919, %v3906, %v3920
    %vm3922 = vcmp.eq.s32.totalorder %v3917, 2
    %v3923 = vxor.u32 %v3906, 2147483648
    %v3924 = vsel %vm3922, %v3923, %v3914
    %v3925 = vsel %vm3918, %v3921, %v3924
    %v3926 = vsel %vm3915, nan, %v3925
    %v3927 = vand.u32 2147483647, %v2841
    %vm3928 = vcmp.le.f32.partialorder %v3927, 0.7853982
    %vm3929 = vcmp.lt.s32.totalorder %v2841, 0
    %v3930 = vand.u32 %v2841, 2139095040
    %v3931 = vshrl.u32 %v3930, 23
    %v3932 = vsub.s32 %v3931, 127
    %v3933 = vand.u32 2147483647, %v2841
    %v3934 = vand.u32 %v3933, 8388607
    %v3935 = vor.u32 %v3934, 8388608
    %v3936 = vsub.s32 0, %v3935
    %v3937 = vadd.s32 %v3932, 1
    %vm3938 = vcmp.gt.s32.totalorder %v3937, 0
    %v3939 = vsel %vm3938, %v3937, 0
    %v3940 = vshrl.u32 %v3939, 5
    %v3941 = vand.u32 %v3939, 31
    %v3942 = vsub.s32 32, %v3941
    %v3943 = vshrl.u32 683565275, %v3942
    %v3944 = vshll.u32 683565275, %v3941
    %v3945 = vshrl.u32 2475754826, %v3942
    %v3946 = vor.u32 %v3944, %v3945
    %v3947 = vshll.u32 2475754826, %v3941
    %v3948 = vshrl.u32 2131351028, %v3942
    %v3949 = vor.u32 %v3947, %v3948
    %v3950 = vshll.u32 2131351028, %v3941
    %v3951 = vshrl.u32 2102212464, %v3942
    %v3952 = vor.u32 %v3950, %v3951
    %v3953 = vshll.u32 2102212464, %v3941
    %v3954 = vshrl.u32 920167782, %v3942
    %v3955 = vor.u32 %v3953, %v3954
    %v3956 = vshll.u32 920167782, %v3941
    %v3957 = vshrl.u32 1326507024, %v3942
    %v3958 = vor.u32 %v3956, %v3957
    %vm3959 = vcmp.lt.s32.totalorder %v3940, 1
    %vm3960 = vcmp.lt.s32.totalorder %v3940, 2
    %vm3961 = vcmp.lt.s32.totalorder %v3940, 3
    %vm3962 = vcmp.lt.s32.totalorder %v3940, 4
    %v3963 = vsel %vm3959, %v3943, %v3946
    %v3964 = vsel %vm3962, %v3952, 2102212464
    %v3965 = vsel %vm3961, %v3949, %v3964
    %v3966 = vsel %vm3960, %v3963, %v3965
    %v3967 = vsel %vm3959, %v3946, %v3949
    %v3968 = vsel %vm3962, %v3955, 920167782
    %v3969 = vsel %vm3961, %v3952, %v3968
    %v3970 = vsel %vm3960, %v3967, %v3969
    %v3971 = vsel %vm3959, %v3949, %v3952
    %v3972 = vsel %vm3962, %v3958, 1326507024
    %v3973 = vsel %vm3961, %v3955, %v3972
    %v3974 = vsel %vm3960, %v3971, %v3973
    %v3975 = vshll.u32 %v3935, 8
    %v3976 = vand.u32 %v3975, 65535
    %v3977 = vshrl.u32 %v3975, 16
    %v3978 = vand.u32 %v3974, 65535
    %v3979 = vshrl.u32 %v3974, 16
    %v3980 = vmul.u32 %v3976, %v3978
    %v3981 = vmul.u32 %v3976, %v3979
    %v3982 = vmul.u32 %v3977, %v3978
    %v3983 = vmul.u32 %v3977, %v3979
    %v3984 = vshll.u32 %v3981, 16
    %v3985 = vshrl.u32 %v3981, 16
    %v3986 = vshll.u32 %v3982, 16
    %v3987 = vshrl.u32 %v3982, 16
    %vm3988 = vc.u32 %v3980, %v3984
    %v3989 = vsel %vm3988, 1, 0
    %v3990 = vadd.s32 %v3980, %v3984
    %v3991 = vadd.s32 %v3983, %v3989
    %vm3992 = vc.u32 %v3990, %v3986
    %v3993 = vsel %vm3992, 1, 0
    %v3994 = vadd.s32 %v3990, %v3986
    %v3995 = vadd.s32 %v3991, %v3993
    %v3996 = vadd.s32 %v3995, %v3985
    %v3997 = vadd.s32 %v3996, %v3987
    %v3998 = vand.u32 %v3975, 65535
    %v3999 = vshrl.u32 %v3975, 16
    %v4000 = vand.u32 %v3970, 65535
    %v4001 = vshrl.u32 %v3970, 16
    %v4002 = vmul.u32 %v3998, %v4000
    %v4003 = vmul.u32 %v3998, %v4001
    %v4004 = vmul.u32 %v3999, %v4000
    %v4005 = vmul.u32 %v3999, %v4001
    %v4006 = vshll.u32 %v4003, 16
    %v4007 = vshrl.u32 %v4003, 16
    %v4008 = vshll.u32 %v4004, 16
    %v4009 = vshrl.u32 %v4004, 16
    %vm4010 = vc.u32 %v4002, %v4006
    %v4011 = vsel %vm4010, 1, 0
    %v4012 = vadd.s32 %v4002, %v4006
    %v4013 = vadd.s32 %v4005, %v4011
    %vm4014 = vc.u32 %v4012, %v4008
    %v4015 = vsel %vm4014, 1, 0
    %v4016 = vadd.s32 %v4012, %v4008
    %v4017 = vadd.s32 %v4013, %v4015
    %v4018 = vadd.s32 %v4017, %v4007
    %v4019 = vadd.s32 %v4018, %v4009
    %v4020 = vmul.u32 %v3975, %v3966
    %v4021 = vadd.s32 %v3997, %v4016
    %vm4022 = vc.u32 %v3997, %v4016
    %v4023 = vadd.s32 %v4019, 1
    %v4024 = vsel %vm4022, %v4023, %v4019
    %v4025 = vadd.s32 %v4020, %v4024
    %v4026 = vadd.s32 %v4025, 536870912
    %v4027 = vshrl.u32 %v4026, 30
    %v4028 = vshll.u32 %v4027, 30
    %v4029 = vsub.s32 %v4025, %v4028
    %vm4030 = vcmp.lt.s32.totalorder %v4029, 0
    %v4031 = vsub.s32 0, %v4029
    %v4032 = vsel %vm4030, %v4031, %v4029
    %v4033 = vclz %v4032
    %v4034 = vsub.s32 %v4033, 2
    %vm4035 = vcmp.gt.s32.totalorder 0, %v4034
    %v4036 = vsel %vm4035, 0, %v4034
    %v4037 = vsub.s32 32, %v4036
    %v4038 = vshll.u32 %v4029, %v4036
    %v4039 = vshrl.u32 %v4021, %v4037
    %v4040 = vor.u32 %v4038, %v4039
    %v4041 = vsub.s32 4294967266, %v4036
    %v4042 = vadd.s32 %v4041, 127
    %v4043 = vshll.u32 %v4042, 23
    %v4044 = vor.u32 4788187, %v4043
    %v4045 = vand.u32 2147483647, %v4044
    %v4047 = vcvt.s32.f32 %v4040
    %v4048 = vmul.f32 %v4047, %v4045
    %v4049 = vxor.u32 %v4048, 2147483648
    %v4050 = vsel %vm3929, %v4049, %v4048
    %v4051 = vsub.s32 4, %v4027
    %v4052 = vsel %vm3929, %v4051, %v4027
    %v4053 = vsel %vm3928, %v2841, %v4050
    %v4054 = vsel %vm3928, 0, %v4052
    %v4055 = vmul.f32 %v4053, %v4053
    %v4056 = vmul.f32 %v4055, -0.001358992
    %v4057 = vadd.f32 %v4056, 0.041655596
    %v4058 = vmul.f32 %v4055, %v4057
    %v4059 = vadd.f32 %v4058, -0.4999988
    %v4060 = vmul.f32 %v4055, %v4059
    %v4061 = vadd.f32 1.0, %v4060
    %v4062 = vmul.f32 %v4053, %v4053
    %v4063 = vmul.f32 %v4062, -0.00019511016
    %v4064 = vadd.f32 %v4063, 0.008332121
    %v4065 = vmul.f32 %v4062, %v4064
    %v4066 = vadd.f32 %v4065, -0.16666654
    %v4067 = vmul.f32 %v4062, %v4066
    %v4068 = vadd.f32 %v4067, 1.0
    %v4069 = vmul.f32 %v4068, %v4053
    %vm4070 = vweird.f32 %v2841
    %v4071 = vadd.s32 %v4054, 3
    %v4072 = vand.u32 %v4071, 3
    %vm4073 = vcmp.lt.s32.totalorder %v4072, 2
    %vm4074 = vcmp.eq.s32.totalorder %v4072, 0
    %v4075 = vxor.u32 %v4069, 2147483648
    %v4076 = vsel %vm4074, %v4061, %v4075
    %vm4077 = vcmp.eq.s32.totalorder %v4072, 2
    %v4078 = vxor.u32 %v4061, 2147483648
    %v4079 = vsel %vm4077, %v4078, %v4069
    %v4080 = vsel %vm4073, %v4076, %v4079
    %v4081 = vsel %vm4070, nan, %v4080
    %v4082 = vld [vmem:[%s5] sm:$0xff]
    %v4083 = vld [vmem:[%s5 + $0x8] sm:$0xff]
    %v4084 = vld [vmem:[%s5 + $0x10] sm:$0xff]
    %v4085 = vld [vmem:[%s5 + $0x18] sm:$0xff]
    %4087 = vset.pattern.permute.xlu0 0
    %4088 = vperm.xlu0 %4087, %v4082
    %v4089 = vpop.permute.xlu0 %4088
    %4092 = vset.pattern.permute.xlu0 0
    %4093 = vperm.xlu0 %4092, %v4083
    %v4094 = vpop.permute.xlu0 %4093
    %4097 = vset.pattern.permute.xlu0 0
    %4098 = vperm.xlu0 %4097, %v4084
    %v4099 = vpop.permute.xlu0 %4098
    %4102 = vset.pattern.permute.xlu0 0
    %4103 = vperm.xlu0 %4102, %v4085
    %v4104 = vpop.permute.xlu0 %4103
    %v4106 = vmul.f32 %v4089, %v2996
    %v4107 = vmul.f32 %v4089, %v3151
    %v4108 = vmul.f32 %v4094, %v3306
    %v4109 = vmul.f32 %v4094, %v3461
    %v4110 = vmul.f32 %v4099, %v3616
    %v4111 = vmul.f32 %v4099, %v3771
    %v4112 = vmul.f32 %v4104, %v3926
    %v4113 = vmul.f32 %v4104, %v4081
    %v4114 = vadd.f32 %v4106, %v4108
    %v4115 = vadd.f32 %v4114, %v4110
    %v4116 = vadd.f32 %v4115, %v4112
    %v4117 = vrot.slane %v4116, 4
    %v4118 = vadd.f32 %v4116, %v4117
    %v4119 = vrot.slane %v4118, 2
    %v4120 = vadd.f32 %v4118, %v4119
    %v4121 = vrot.slane %v4120, 1
    %v4122 = vadd.f32 %v4120, %v4121
    %v4123 = vadd.f32 %v4107, %v4109
    %v4124 = vadd.f32 %v4123, %v4111
    %v4125 = vadd.f32 %v4124, %v4113
    %v4126 = vrot.slane %v4125, 4
    %v4127 = vadd.f32 %v4125, %v4126
    %v4128 = vrot.slane %v4127, 2
    %v4129 = vadd.f32 %v4127, %v4128
    %v4130 = vrot.slane %v4129, 1
    %v4131 = vadd.f32 %v4129, %v4130
    %v4132 = vld [vmem:[#allocation2] sm:$0x1]
    %4134 = vset.pattern.permute.xlu0 0
    %4135 = vperm.xlu0 %4134, %v4132
    %v4136 = vpop.permute.xlu0 %4135
    %v4138 = vperm.slane %v4136, 0
    %v4139 = vadd.f32 %v4122, %v4138
    %v4140 = vadd.f32 %v4131, %v4138
    %v4141 = vmul.f32 %v4139, 30.0
    %v4142 = vmul.f32 %v4140, 30.0
    %v4143 = vand.u32 2147483647, %v4141
    %vm4144 = vcmp.le.f32.partialorder %v4143, 0.7853982
    %vm4145 = vcmp.lt.s32.totalorder %v4141, 0
    %v4146 = vand.u32 %v4141, 2139095040
    %v4147 = vshrl.u32 %v4146, 23
    %v4148 = vsub.s32 %v4147, 127
    %v4149 = vand.u32 2147483647, %v4141
    %v4150 = vand.u32 %v4149, 8388607
    %v4151 = vor.u32 %v4150, 8388608
    %v4152 = vsub.s32 0, %v4151
    %v4153 = vadd.s32 %v4148, 1
    %vm4154 = vcmp.gt.s32.totalorder %v4153, 0
    %v4155 = vsel %vm4154, %v4153, 0
    %v4156 = vshrl.u32 %v4155, 5
    %v4157 = vand.u32 %v4155, 31
    %v4158 = vsub.s32 32, %v4157
    %v4159 = vshrl.u32 683565275, %v4158
    %v4160 = vshll.u32 683565275, %v4157
    %v4161 = vshrl.u32 2475754826, %v4158
    %v4162 = vor.u32 %v4160, %v4161
    %v4163 = vshll.u32 2475754826, %v4157
    %v4164 = vshrl.u32 2131351028, %v4158
    %v4165 = vor.u32 %v4163, %v4164
    %v4166 = vshll.u32 2131351028, %v4157
    %v4167 = vshrl.u32 2102212464, %v4158
    %v4168 = vor.u32 %v4166, %v4167
    %v4169 = vshll.u32 2102212464, %v4157
    %v4170 = vshrl.u32 920167782, %v4158
    %v4171 = vor.u32 %v4169, %v4170
    %v4172 = vshll.u32 920167782, %v4157
    %v4173 = vshrl.u32 1326507024, %v4158
    %v4174 = vor.u32 %v4172, %v4173
    %vm4175 = vcmp.lt.s32.totalorder %v4156, 1
    %vm4176 = vcmp.lt.s32.totalorder %v4156, 2
    %vm4177 = vcmp.lt.s32.totalorder %v4156, 3
    %vm4178 = vcmp.lt.s32.totalorder %v4156, 4
    %v4179 = vsel %vm4175, %v4159, %v4162
    %v4180 = vsel %vm4178, %v4168, 2102212464
    %v4181 = vsel %vm4177, %v4165, %v4180
    %v4182 = vsel %vm4176, %v4179, %v4181
    %v4183 = vsel %vm4175, %v4162, %v4165
    %v4184 = vsel %vm4178, %v4171, 920167782
    %v4185 = vsel %vm4177, %v4168, %v4184
    %v4186 = vsel %vm4176, %v4183, %v4185
    %v4187 = vsel %vm4175, %v4165, %v4168
    %v4188 = vsel %vm4178, %v4174, 1326507024
    %v4189 = vsel %vm4177, %v4171, %v4188
    %v4190 = vsel %vm4176, %v4187, %v4189
    %v4191 = vshll.u32 %v4151, 8
    %v4192 = vand.u32 %v4191, 65535
    %v4193 = vshrl.u32 %v4191, 16
    %v4194 = vand.u32 %v4190, 65535
    %v4195 = vshrl.u32 %v4190, 16
    %v4196 = vmul.u32 %v4192, %v4194
    %v4197 = vmul.u32 %v4192, %v4195
    %v4198 = vmul.u32 %v4193, %v4194
    %v4199 = vmul.u32 %v4193, %v4195
    %v4200 = vshll.u32 %v4197, 16
    %v4201 = vshrl.u32 %v4197, 16
    %v4202 = vshll.u32 %v4198, 16
    %v4203 = vshrl.u32 %v4198, 16
    %vm4204 = vc.u32 %v4196, %v4200
    %v4205 = vsel %vm4204, 1, 0
    %v4206 = vadd.s32 %v4196, %v4200
    %v4207 = vadd.s32 %v4199, %v4205
    %vm4208 = vc.u32 %v4206, %v4202
    %v4209 = vsel %vm4208, 1, 0
    %v4210 = vadd.s32 %v4206, %v4202
    %v4211 = vadd.s32 %v4207, %v4209
    %v4212 = vadd.s32 %v4211, %v4201
    %v4213 = vadd.s32 %v4212, %v4203
    %v4214 = vand.u32 %v4191, 65535
    %v4215 = vshrl.u32 %v4191, 16
    %v4216 = vand.u32 %v4186, 65535
    %v4217 = vshrl.u32 %v4186, 16
    %v4218 = vmul.u32 %v4214, %v4216
    %v4219 = vmul.u32 %v4214, %v4217
    %v4220 = vmul.u32 %v4215, %v4216
    %v4221 = vmul.u32 %v4215, %v4217
    %v4222 = vshll.u32 %v4219, 16
    %v4223 = vshrl.u32 %v4219, 16
    %v4224 = vshll.u32 %v4220, 16
    %v4225 = vshrl.u32 %v4220, 16
    %vm4226 = vc.u32 %v4218, %v4222
    %v4227 = vsel %vm4226, 1, 0
    %v4228 = vadd.s32 %v4218, %v4222
    %v4229 = vadd.s32 %v4221, %v4227
    %vm4230 = vc.u32 %v4228, %v4224
    %v4231 = vsel %vm4230, 1, 0
    %v4232 = vadd.s32 %v4228, %v4224
    %v4233 = vadd.s32 %v4229, %v4231
    %v4234 = vadd.s32 %v4233, %v4223
    %v4235 = vadd.s32 %v4234, %v4225
    %v4236 = vmul.u32 %v4191, %v4182
    %v4237 = vadd.s32 %v4213, %v4232
    %vm4238 = vc.u32 %v4213, %v4232
    %v4239 = vadd.s32 %v4235, 1
    %v4240 = vsel %vm4238, %v4239, %v4235
    %v4241 = vadd.s32 %v4236, %v4240
    %v4242 = vadd.s32 %v4241, 536870912
    %v4243 = vshrl.u32 %v4242, 30
    %v4244 = vshll.u32 %v4243, 30
    %v4245 = vsub.s32 %v4241, %v4244
    %vm4246 = vcmp.lt.s32.totalorder %v4245, 0
    %v4247 = vsub.s32 0, %v4245
    %v4248 = vsel %vm4246, %v4247, %v4245
    %v4249 = vclz %v4248
    %v4250 = vsub.s32 %v4249, 2
    %vm4251 = vcmp.gt.s32.totalorder 0, %v4250
    %v4252 = vsel %vm4251, 0, %v4250
    %v4253 = vsub.s32 32, %v4252
    %v4254 = vshll.u32 %v4245, %v4252
    %v4255 = vshrl.u32 %v4237, %v4253
    %v4256 = vor.u32 %v4254, %v4255
    %v4257 = vsub.s32 4294967266, %v4252
    %v4258 = vadd.s32 %v4257, 127
    %v4259 = vshll.u32 %v4258, 23
    %v4260 = vor.u32 4788187, %v4259
    %v4261 = vand.u32 2147483647, %v4260
    %v4263 = vcvt.s32.f32 %v4256
    %v4264 = vmul.f32 %v4263, %v4261
    %v4265 = vxor.u32 %v4264, 2147483648
    %v4266 = vsel %vm4145, %v4265, %v4264
    %v4267 = vsub.s32 4, %v4243
    %v4268 = vsel %vm4145, %v4267, %v4243
    %v4269 = vsel %vm4144, %v4141, %v4266
    %v4270 = vsel %vm4144, 0, %v4268
    %v4271 = vmul.f32 %v4269, %v4269
    %v4272 = vmul.f32 %v4271, -0.001358992
    %v4273 = vadd.f32 %v4272, 0.041655596
    %v4274 = vmul.f32 %v4271, %v4273
    %v4275 = vadd.f32 %v4274, -0.4999988
    %v4276 = vmul.f32 %v4271, %v4275
    %v4277 = vadd.f32 1.0, %v4276
    %v4278 = vmul.f32 %v4269, %v4269
    %v4279 = vmul.f32 %v4278, -0.00019511016
    %v4280 = vadd.f32 %v4279, 0.008332121
    %v4281 = vmul.f32 %v4278, %v4280
    %v4282 = vadd.f32 %v4281, -0.16666654
    %v4283 = vmul.f32 %v4278, %v4282
    %v4284 = vadd.f32 %v4283, 1.0
    %v4285 = vmul.f32 %v4284, %v4269
    %vm4286 = vweird.f32 %v4141
    %v4287 = vadd.s32 %v4270, 3
    %v4288 = vand.u32 %v4287, 3
    %vm4289 = vcmp.lt.s32.totalorder %v4288, 2
    %vm4290 = vcmp.eq.s32.totalorder %v4288, 0
    %v4291 = vxor.u32 %v4285, 2147483648
    %v4292 = vsel %vm4290, %v4277, %v4291
    %vm4293 = vcmp.eq.s32.totalorder %v4288, 2
    %v4294 = vxor.u32 %v4277, 2147483648
    %v4295 = vsel %vm4293, %v4294, %v4285
    %v4296 = vsel %vm4289, %v4292, %v4295
    %v4297 = vsel %vm4286, nan, %v4296
    %v4298 = vand.u32 2147483647, %v4142
    %vm4299 = vcmp.le.f32.partialorder %v4298, 0.7853982
    %vm4300 = vcmp.lt.s32.totalorder %v4142, 0
    %v4301 = vand.u32 %v4142, 2139095040
    %v4302 = vshrl.u32 %v4301, 23
    %v4303 = vsub.s32 %v4302, 127
    %v4304 = vand.u32 2147483647, %v4142
    %v4305 = vand.u32 %v4304, 8388607
    %v4306 = vor.u32 %v4305, 8388608
    %v4307 = vsub.s32 0, %v4306
    %v4308 = vadd.s32 %v4303, 1
    %vm4309 = vcmp.gt.s32.totalorder %v4308, 0
    %v4310 = vsel %vm4309, %v4308, 0
    %v4311 = vshrl.u32 %v4310, 5
    %v4312 = vand.u32 %v4310, 31
    %v4313 = vsub.s32 32, %v4312
    %v4314 = vshrl.u32 683565275, %v4313
    %v4315 = vshll.u32 683565275, %v4312
    %v4316 = vshrl.u32 2475754826, %v4313
    %v4317 = vor.u32 %v4315, %v4316
    %v4318 = vshll.u32 2475754826, %v4312
    %v4319 = vshrl.u32 2131351028, %v4313
    %v4320 = vor.u32 %v4318, %v4319
    %v4321 = vshll.u32 2131351028, %v4312
    %v4322 = vshrl.u32 2102212464, %v4313
    %v4323 = vor.u32 %v4321, %v4322
    %v4324 = vshll.u32 2102212464, %v4312
    %v4325 = vshrl.u32 920167782, %v4313
    %v4326 = vor.u32 %v4324, %v4325
    %v4327 = vshll.u32 920167782, %v4312
    %v4328 = vshrl.u32 1326507024, %v4313
    %v4329 = vor.u32 %v4327, %v4328
    %vm4330 = vcmp.lt.s32.totalorder %v4311, 1
    %vm4331 = vcmp.lt.s32.totalorder %v4311, 2
    %vm4332 = vcmp.lt.s32.totalorder %v4311, 3
    %vm4333 = vcmp.lt.s32.totalorder %v4311, 4
    %v4334 = vsel %vm4330, %v4314, %v4317
    %v4335 = vsel %vm4333, %v4323, 2102212464
    %v4336 = vsel %vm4332, %v4320, %v4335
    %v4337 = vsel %vm4331, %v4334, %v4336
    %v4338 = vsel %vm4330, %v4317, %v4320
    %v4339 = vsel %vm4333, %v4326, 920167782
    %v4340 = vsel %vm4332, %v4323, %v4339
    %v4341 = vsel %vm4331, %v4338, %v4340
    %v4342 = vsel %vm4330, %v4320, %v4323
    %v4343 = vsel %vm4333, %v4329, 1326507024
    %v4344 = vsel %vm4332, %v4326, %v4343
    %v4345 = vsel %vm4331, %v4342, %v4344
    %v4346 = vshll.u32 %v4306, 8
    %v4347 = vand.u32 %v4346, 65535
    %v4348 = vshrl.u32 %v4346, 16
    %v4349 = vand.u32 %v4345, 65535
    %v4350 = vshrl.u32 %v4345, 16
    %v4351 = vmul.u32 %v4347, %v4349
    %v4352 = vmul.u32 %v4347, %v4350
    %v4353 = vmul.u32 %v4348, %v4349
    %v4354 = vmul.u32 %v4348, %v4350
    %v4355 = vshll.u32 %v4352, 16
    %v4356 = vshrl.u32 %v4352, 16
    %v4357 = vshll.u32 %v4353, 16
    %v4358 = vshrl.u32 %v4353, 16
    %vm4359 = vc.u32 %v4351, %v4355
    %v4360 = vsel %vm4359, 1, 0
    %v4361 = vadd.s32 %v4351, %v4355
    %v4362 = vadd.s32 %v4354, %v4360
    %vm4363 = vc.u32 %v4361, %v4357
    %v4364 = vsel %vm4363, 1, 0
    %v4365 = vadd.s32 %v4361, %v4357
    %v4366 = vadd.s32 %v4362, %v4364
    %v4367 = vadd.s32 %v4366, %v4356
    %v4368 = vadd.s32 %v4367, %v4358
    %v4369 = vand.u32 %v4346, 65535
    %v4370 = vshrl.u32 %v4346, 16
    %v4371 = vand.u32 %v4341, 65535
    %v4372 = vshrl.u32 %v4341, 16
    %v4373 = vmul.u32 %v4369, %v4371
    %v4374 = vmul.u32 %v4369, %v4372
    %v4375 = vmul.u32 %v4370, %v4371
    %v4376 = vmul.u32 %v4370, %v4372
    %v4377 = vshll.u32 %v4374, 16
    %v4378 = vshrl.u32 %v4374, 16
    %v4379 = vshll.u32 %v4375, 16
    %v4380 = vshrl.u32 %v4375, 16
    %vm4381 = vc.u32 %v4373, %v4377
    %v4382 = vsel %vm4381, 1, 0
    %v4383 = vadd.s32 %v4373, %v4377
    %v4384 = vadd.s32 %v4376, %v4382
    %vm4385 = vc.u32 %v4383, %v4379
    %v4386 = vsel %vm4385, 1, 0
    %v4387 = vadd.s32 %v4383, %v4379
    %v4388 = vadd.s32 %v4384, %v4386
    %v4389 = vadd.s32 %v4388, %v4378
    %v4390 = vadd.s32 %v4389, %v4380
    %v4391 = vmul.u32 %v4346, %v4337
    %v4392 = vadd.s32 %v4368, %v4387
    %vm4393 = vc.u32 %v4368, %v4387
    %v4394 = vadd.s32 %v4390, 1
    %v4395 = vsel %vm4393, %v4394, %v4390
    %v4396 = vadd.s32 %v4391, %v4395
    %v4397 = vadd.s32 %v4396, 536870912
    %v4398 = vshrl.u32 %v4397, 30
    %v4399 = vshll.u32 %v4398, 30
    %v4400 = vsub.s32 %v4396, %v4399
    %vm4401 = vcmp.lt.s32.totalorder %v4400, 0
    %v4402 = vsub.s32 0, %v4400
    %v4403 = vsel %vm4401, %v4402, %v4400
    %v4404 = vclz %v4403
    %v4405 = vsub.s32 %v4404, 2
    %vm4406 = vcmp.gt.s32.totalorder 0, %v4405
    %v4407 = vsel %vm4406, 0, %v4405
    %v4408 = vsub.s32 32, %v4407
    %v4409 = vshll.u32 %v4400, %v4407
    %v4410 = vshrl.u32 %v4392, %v4408
    %v4411 = vor.u32 %v4409, %v4410
    %v4412 = vsub.s32 4294967266, %v4407
    %v4413 = vadd.s32 %v4412, 127
    %v4414 = vshll.u32 %v4413, 23
    %v4415 = vor.u32 4788187, %v4414
    %v4416 = vand.u32 2147483647, %v4415
    %v4418 = vcvt.s32.f32 %v4411
    %v4419 = vmul.f32 %v4418, %v4416
    %v4420 = vxor.u32 %v4419, 2147483648
    %v4421 = vsel %vm4300, %v4420, %v4419
    %v4422 = vsub.s32 4, %v4398
    %v4423 = vsel %vm4300, %v4422, %v4398
    %v4424 = vsel %vm4299, %v4142, %v4421
    %v4425 = vsel %vm4299, 0, %v4423
    %v4426 = vmul.f32 %v4424, %v4424
    %v4427 = vmul.f32 %v4426, -0.001358992
    %v4428 = vadd.f32 %v4427, 0.041655596
    %v4429 = vmul.f32 %v4426, %v4428
    %v4430 = vadd.f32 %v4429, -0.4999988
    %v4431 = vmul.f32 %v4426, %v4430
    %v4432 = vadd.f32 1.0, %v4431
    %v4433 = vmul.f32 %v4424, %v4424
    %v4434 = vmul.f32 %v4433, -0.00019511016
    %v4435 = vadd.f32 %v4434, 0.008332121
    %v4436 = vmul.f32 %v4433, %v4435
    %v4437 = vadd.f32 %v4436, -0.16666654
    %v4438 = vmul.f32 %v4433, %v4437
    %v4439 = vadd.f32 %v4438, 1.0
    %v4440 = vmul.f32 %v4439, %v4424
    %vm4441 = vweird.f32 %v4142
    %v4442 = vadd.s32 %v4425, 3
    %v4443 = vand.u32 %v4442, 3
    %vm4444 = vcmp.lt.s32.totalorder %v4443, 2
    %vm4445 = vcmp.eq.s32.totalorder %v4443, 0
    %v4446 = vxor.u32 %v4440, 2147483648
    %v4447 = vsel %vm4445, %v4432, %v4446
    %vm4448 = vcmp.eq.s32.totalorder %v4443, 2
    %v4449 = vxor.u32 %v4432, 2147483648
    %v4450 = vsel %vm4448, %v4449, %v4440
    %v4451 = vsel %vm4444, %v4447, %v4450
    %v4452 = vsel %vm4441, nan, %v4451
    %v4455 = vrot.slane %v4452, 7
    %vm4456 = vcmask 1040384
    %v4457 = vsel %vm4456, %v4297, %v4455
    %v4459 = vlaneseq
    %vm4460 = vcmp.ge.s32.totalorder %v4459, 0
    %vm4461 = vcmp.lt.s32.totalorder %v4459, 256
    %vm4462 = vmand %vm4460, %vm4461
    %4463 = vst.msk [vmem:[#allocation3] sm:$0x3] %vm4462, %v4457
    // Predicated region
    $region30: #{tpu_custom_call.1} parent=1 // pred_check
      _
    $region31: #{tpu_custom_call.1} parent=1 // pred_check_branch
      %4465 = sbr.rel (0) target = $region33
    $region32: #{tpu_custom_call.1} parent=1 // pred_region
      %4467 = vsyncadd [#allocation4], 0
      %s4469 = sshll.u32 [#allocation3], 4
      %s4470 = int_to_ptr.vmem [resolvable:$true] %s4469
      %s4471 = sshll.u32 %s7, 4
      %s4472 = int_to_ptr.hbm [resolvable:$true] %s4471
      %4474 = dma.vmem_to_hbm [thread:$0]  %s4470, 32, %s4472, [#allocation4]
    $region33: #{tpu_custom_call.1} parent=1 // pred_fallthru
      _
    // Predicated region
    $region34: #{tpu_custom_call.1} parent=1 // pred_check
      _
    $region35: #{tpu_custom_call.1} parent=1 // pred_check_branch
      %4476 = sbr.rel (0) target = $region37
    $region36: #{tpu_custom_call.1} parent=1 // pred_region
      %4478 = dma.done [#allocation4], 32
    $region37: #{tpu_custom_call.1} parent=1 // pred_fallthru
      _
    %4479 = vsyncpa [#allocation4], 1

</llo_original>
